<compile_context>
chip_gen: v7x
topology: tpu7x:2x2x1
jax: 0.10.0
libtpu: 0.0.40
codegen_flags: <defaults>
</compile_context>

<pallas_src>
import numpy as np
import jax
import jax.numpy as jnp
from jax.experimental import pallas as pl
from jax.experimental.pallas import tpu as pltpu

D = 15
B = 2  # batch size for the example

# Logical (unpadded) layer widths, NCHW-flattened.
N_FC = 32 * 3 * 3          # 288
N_C3 = 16 * 7 * 7          # 784
N_C2 = 8 * 14 * 14         # 1568
N_C1 = 1 * 28 * 28         # 784

# Lane-padded widths (multiples of 128).
D_PAD = 128
N_FC_PAD = 384
N_C3_PAD = 896
N_C2_PAD = 1664
N_C1_PAD = 896


# ----------------------------------------------------------------------------
# Parameter setup (glue, plain numpy): dense linear map realized by a
# ConvTranspose2d.  output[b,co,oh,ow] += in[b,ci,ih,iw]*W[ci,co,kh,kw] with
# oh = ih*stride - padding + kh (same for ow), plus bias[co].
# ----------------------------------------------------------------------------
def convT_as_matrix(weight, bias, Hin, Win, stride, padding, output_padding):
    Cin, Cout, K, _ = weight.shape
    Hout = (Hin - 1) * stride - 2 * padding + K + output_padding
    Wout = (Win - 1) * stride - 2 * padding + K + output_padding
    M = np.zeros((Cin * Hin * Win, Cout * Hout * Wout), dtype=np.float32)
    for ci in range(Cin):
        for ih in range(Hin):
            for iw in range(Win):
                row = (ci * Hin + ih) * Win + iw
                for co in range(Cout):
                    for kh in range(K):
                        oh = ih * stride - padding + kh
                        if oh < 0 or oh >= Hout:
                            continue
                        for kw in range(K):
                            ow = iw * stride - padding + kw
                            if ow < 0 or ow >= Wout:
                                continue
                            col = (co * Hout + oh) * Wout + ow
                            M[row, col] += weight[ci, co, kh, kw]
    b_full = np.repeat(bias.astype(np.float32), Hout * Wout)  # (Cout*Hout*Wout,)
    return M, b_full, Hout, Wout


def _pad2(a, rows, cols):
    out = np.zeros((rows, cols), dtype=a.dtype)
    out[: a.shape[0], : a.shape[1]] = a
    return out


def init_params(key):
    """Deterministic synthetic parameters with PyTorch-style uniform init.

    Returns (kernel_params, ref_mats):
      kernel_params: lane-padded, weights in bf16, biases in f32 — fed to Pallas.
      ref_mats:      unpadded f32 matrices — pure-JAX reference for validation.
    """
    ks = jax.random.split(key, 8)

    def u(k, shape, fan_in):
        bound = 1.0 / np.sqrt(fan_in)
        return np.asarray(jax.random.uniform(k, shape, jnp.float32, -bound, bound))

    # fc1: Linear(15 -> 288).  PyTorch weight is (out, in); we store W^T (in, out).
    w_fc = u(ks[0], (N_FC, D), D).T.copy()            # (15, 288)
    b_fc = u(ks[1], (N_FC,), D)

    # conv3: ConvTranspose2d(32, 16, 3, stride=2)
    w3 = u(ks[2], (32, 16, 3, 3), 32 * 3 * 3)
    b3 = u(ks[3], (16,), 32 * 3 * 3)
    M3, b3f, H3, W3 = convT_as_matrix(w3, b3, 3, 3, stride=2, padding=0, output_padding=0)

    # conv2: ConvTranspose2d(16, 8, 3, stride=2, padding=1, output_padding=1)
    w2 = u(ks[4], (16, 8, 3, 3), 16 * 3 * 3)
    b2 = u(ks[5], (8,), 16 * 3 * 3)
    M2, b2f, H2, W2 = convT_as_matrix(w2, b2, H3, W3, stride=2, padding=1, output_padding=1)

    # conv1: ConvTranspose2d(8, 1, 3, stride=2, padding=1, output_padding=1)
    w1 = u(ks[6], (8, 1, 3, 3), 8 * 3 * 3)
    b1 = u(ks[7], (1,), 8 * 3 * 3)
    M1, b1f, H1, W1 = convT_as_matrix(w1, b1, H2, W2, stride=2, padding=1, output_padding=1)

    assert (H3, W3) == (7, 7) and (H2, W2) == (14, 14) and (H1, W1) == (28, 28)

    bf16 = lambda a: jnp.asarray(a, jnp.bfloat16)
    f32 = lambda a: jnp.asarray(a, jnp.float32)

    kernel_params = dict(
        w_fc=bf16(_pad2(w_fc, D_PAD, N_FC_PAD)),
        b_fc=f32(_pad2(b_fc[None, :], 1, N_FC_PAD)),
        m3=bf16(_pad2(M3, N_FC_PAD, N_C3_PAD)),
        b3=f32(_pad2(b3f[None, :], 1, N_C3_PAD)),
        m2=bf16(_pad2(M2, N_C3_PAD, N_C2_PAD)),
        b2=f32(_pad2(b2f[None, :], 1, N_C2_PAD)),
        m1=bf16(_pad2(M1, N_C2_PAD, N_C1_PAD)),
        b1=f32(_pad2(b1f[None, :], 1, N_C1_PAD)),
    )
    ref_mats = dict(
        w_fc=f32(w_fc), b_fc=f32(b_fc)[None, :],
        m3=f32(M3), b3=f32(b3f)[None, :],
        m2=f32(M2), b2=f32(b2f)[None, :],
        m1=f32(M1), b1=f32(b1f)[None, :],
    )
    return kernel_params, ref_mats


# ----------------------------------------------------------------------------
# Pallas kernel: whole forward pass for one batch tile.
# Weights are bf16 (MXU-native) with f32 accumulation; bias add / ReLU /
# sigmoid are f32 on the VPU/EUP.  All lane dims are multiples of 128.
# ----------------------------------------------------------------------------
def decoder_kernel(x_ref, wfc_ref, bfc_ref,
                   m3_ref, b3_ref, m2_ref, b2_ref, m1_ref, b1_ref,
                   o_ref):
    x = jnp.maximum(x_ref[...], 0.0)                                   # relu4
    h = jnp.dot(x.astype(jnp.bfloat16), wfc_ref[...],
                preferred_element_type=jnp.float32) + bfc_ref[...]     # fc1
    h = jnp.maximum(h, 0.0)                                            # relu3 (unflatten is a no-op)

    y3 = jnp.dot(h.astype(jnp.bfloat16), m3_ref[...],
                 preferred_element_type=jnp.float32) + b3_ref[...]     # conv3
    y3 = jnp.maximum(y3, 0.0)                                          # relu2

    y2 = jnp.dot(y3.astype(jnp.bfloat16), m2_ref[...],
                 preferred_element_type=jnp.float32) + b2_ref[...]     # conv2
    y2 = jnp.maximum(y2, 0.0)                                          # relu1

    y1 = jnp.dot(y2.astype(jnp.bfloat16), m1_ref[...],
                 preferred_element_type=jnp.float32) + b1_ref[...]     # conv1
    o_ref[...] = jax.nn.sigmoid(y1)                                    # sigmoid


def decoder_forward(x, params, block_b=128):
    """x: (B, 15) float32  ->  (B, 1, 28, 28) float32."""
    Bn = x.shape[0]
    TB = block_b if Bn >= block_b else 8
    Bp = ((Bn + TB - 1) // TB) * TB

    # Zero-pad batch to a TB multiple and features 15 -> 128 (lane-dense).
    xp = jnp.zeros((Bp, D_PAD), jnp.float32).at[:Bn, :D].set(x)

    def wspec(rows, cols):
        # Weight / bias blocks: constant index_map -> DMA'd once, VMEM-resident.
        return pl.BlockSpec((rows, cols), lambda i: (0, 0))

    out_flat = pl.pallas_call(
        decoder_kernel,
        out_shape=jax.ShapeDtypeStruct((Bp, N_C1_PAD), jnp.float32),
        grid_spec=pltpu.PrefetchScalarGridSpec(
            num_scalar_prefetch=0,
            grid=(Bp // TB,),
            in_specs=[
                pl.BlockSpec((TB, D_PAD), lambda i: (i, 0)),   # x: blocked over batch
                wspec(D_PAD, N_FC_PAD), wspec(1, N_FC_PAD),
                wspec(N_FC_PAD, N_C3_PAD), wspec(1, N_C3_PAD),
                wspec(N_C3_PAD, N_C2_PAD), wspec(1, N_C2_PAD),
                wspec(N_C2_PAD, N_C1_PAD), wspec(1, N_C1_PAD),
            ],
            out_specs=pl.BlockSpec((TB, N_C1_PAD), lambda i: (i, 0)),
        ),
        compiler_params=pltpu.CompilerParams(
            dimension_semantics=("parallel",),   # batch tiles -> both TCs on v7x
            vmem_limit_bytes=40 * 1024 * 1024,   # < 64 MiB physical VMEM on v7x
        ),
    )(xp,
      params["w_fc"], params["b_fc"],
      params["m3"], params["b3"],
      params["m2"], params["b2"],
      params["m1"], params["b1"])

    # Glue: drop lane/batch padding, reshape back to NCHW.
    return out_flat[:Bn, :N_C1].reshape(Bn, 1, 28, 28)


# Pure-JAX f32 reference (unpadded dense maps) for validation.
def decoder_reference(x, ref):
    h = jnp.maximum(x, 0.0)
    h = jnp.maximum(h @ ref["w_fc"] + ref["b_fc"], 0.0)
    y3 = jnp.maximum(h @ ref["m3"] + ref["b3"], 0.0)
    y2 = jnp.maximum(y3 @ ref["m2"] + ref["b2"], 0.0)
    y1 = y2 @ ref["m1"] + ref["b1"]
    return jax.nn.sigmoid(y1).reshape(x.shape[0], 1, 28, 28)


if __name__ == "__main__":
    key = jax.random.PRNGKey(0)
    k_params, k_x = jax.random.split(key)
    params, ref_mats = init_params(k_params)
    x = jax.random.normal(k_x, (B, D), dtype=jnp.float32)

    out = decoder_forward(x, params)
    out = jax.block_until_ready(out)

    assert out.shape == (B, 1, 28, 28), out.shape
    assert bool(jnp.all(jnp.isfinite(out)))
    assert bool(jnp.all((out >= 0.0) & (out <= 1.0)))  # sigmoid range

    ref_out = jax.block_until_ready(decoder_reference(x, ref_mats))
    max_err = float(jnp.max(jnp.abs(out - ref_out)))
    assert max_err < 5e-2, f"max abs err vs f32 reference: {max_err}"

    print("KERNEL_OK")
</pallas_src>

<mosaic_0001>
module attributes {stable_mosaic.version = 11 : i64} {
  func.func @decoder_kernel(%arg0: i32, %arg1: memref<8x128xf32, #tpu.memory_space<vmem>>, %arg2: memref<128x384xbf16, #tpu.memory_space<vmem>>, %arg3: memref<1x384xf32, #tpu.memory_space<vmem>>, %arg4: memref<384x896xbf16, #tpu.memory_space<vmem>>, %arg5: memref<1x896xf32, #tpu.memory_space<vmem>>, %arg6: memref<896x1664xbf16, #tpu.memory_space<vmem>>, %arg7: memref<1x1664xf32, #tpu.memory_space<vmem>>, %arg8: memref<1664x896xbf16, #tpu.memory_space<vmem>>, %arg9: memref<1x896xf32, #tpu.memory_space<vmem>>, %arg10: memref<8x896xf32, #tpu.memory_space<vmem>>) attributes {dimension_semantics = [#tpu.dimension_semantics<parallel>], iteration_bounds = array<i64: 1>, scalar_prefetch = 0 : i64, scratch_operands = 0 : i64, tpu.core_type = #tpu.core_type<tc>, window_params = [{transform_indices = @transform_0, window_bounds = array<i64: 8, 128>}, {pipeline_mode = #tpu.pipeline_mode<synchronous>, transform_indices = @transform_1, window_bounds = array<i64: 128, 384>}, {pipeline_mode = #tpu.pipeline_mode<synchronous>, transform_indices = @transform_2, window_bounds = array<i64: 1, 384>}, {pipeline_mode = #tpu.pipeline_mode<synchronous>, transform_indices = @transform_3, window_bounds = array<i64: 384, 896>}, {pipeline_mode = #tpu.pipeline_mode<synchronous>, transform_indices = @transform_4, window_bounds = array<i64: 1, 896>}, {pipeline_mode = #tpu.pipeline_mode<synchronous>, transform_indices = @transform_5, window_bounds = array<i64: 896, 1664>}, {pipeline_mode = #tpu.pipeline_mode<synchronous>, transform_indices = @transform_6, window_bounds = array<i64: 1, 1664>}, {pipeline_mode = #tpu.pipeline_mode<synchronous>, transform_indices = @transform_7, window_bounds = array<i64: 1664, 896>}, {pipeline_mode = #tpu.pipeline_mode<synchronous>, transform_indices = @transform_8, window_bounds = array<i64: 1, 896>}, {transform_indices = @transform_9, window_bounds = array<i64: 8, 896>}]} {
    %c0 = arith.constant 0 : index
    %c0_0 = arith.constant 0 : index
    %0 = vector.load %arg1[%c0, %c0_0] : memref<8x128xf32, #tpu.memory_space<vmem>>, vector<8x128xf32>
    %cst = arith.constant 0.000000e+00 : f32
    %1 = vector.broadcast %cst : f32 to vector<8x128xf32>
    %2 = arith.maximumf %0, %1 : vector<8x128xf32>
    %3 = arith.truncf %2 : vector<8x128xf32> to vector<8x128xbf16>
    %c0_1 = arith.constant 0 : index
    %c0_2 = arith.constant 0 : index
    %4 = vector.load %arg2[%c0_1, %c0_2] : memref<128x384xbf16, #tpu.memory_space<vmem>>, vector<128x384xbf16>
    %cst_3 = arith.constant dense<0.000000e+00> : vector<8x384xf32>
    %5 = tpu.matmul %3, %4, %cst_3 {dimension_numbers = #tpu.dot_dimension_numbers<[1], [0], [0], [1], [0, 0, 1, 1], [], []>} : vector<8x128xbf16>, vector<128x384xbf16>, vector<8x384xf32> -> vector<8x384xf32>
    %c0_4 = arith.constant 0 : index
    %c0_5 = arith.constant 0 : index
    %6 = vector.load %arg3[%c0_4, %c0_5] : memref<1x384xf32, #tpu.memory_space<vmem>>, vector<1x384xf32>
    %7 = vector.broadcast %6 : vector<1x384xf32> to vector<8x384xf32>
    %8 = arith.addf %5, %7 : vector<8x384xf32>
    %cst_6 = arith.constant 0.000000e+00 : f32
    %9 = vector.broadcast %cst_6 : f32 to vector<8x384xf32>
    %10 = arith.maximumf %8, %9 : vector<8x384xf32>
    %11 = arith.truncf %10 : vector<8x384xf32> to vector<8x384xbf16>
    %c0_7 = arith.constant 0 : index
    %c0_8 = arith.constant 0 : index
    %12 = vector.load %arg4[%c0_7, %c0_8] : memref<384x896xbf16, #tpu.memory_space<vmem>>, vector<384x896xbf16>
    %cst_9 = arith.constant dense<0.000000e+00> : vector<8x896xf32>
    %13 = tpu.matmul %11, %12, %cst_9 {dimension_numbers = #tpu.dot_dimension_numbers<[1], [0], [0], [1], [0, 0, 1, 1], [], []>} : vector<8x384xbf16>, vector<384x896xbf16>, vector<8x896xf32> -> vector<8x896xf32>
    %c0_10 = arith.constant 0 : index
    %c0_11 = arith.constant 0 : index
    %14 = vector.load %arg5[%c0_10, %c0_11] : memref<1x896xf32, #tpu.memory_space<vmem>>, vector<1x896xf32>
    %15 = vector.broadcast %14 : vector<1x896xf32> to vector<8x896xf32>
    %16 = arith.addf %13, %15 : vector<8x896xf32>
    %cst_12 = arith.constant 0.000000e+00 : f32
    %17 = vector.broadcast %cst_12 : f32 to vector<8x896xf32>
    %18 = arith.maximumf %16, %17 : vector<8x896xf32>
    %19 = arith.truncf %18 : vector<8x896xf32> to vector<8x896xbf16>
    %c0_13 = arith.constant 0 : index
    %c0_14 = arith.constant 0 : index
    %20 = vector.load %arg6[%c0_13, %c0_14] : memref<896x1664xbf16, #tpu.memory_space<vmem>>, vector<896x1664xbf16>
    %cst_15 = arith.constant dense<0.000000e+00> : vector<8x1664xf32>
    %21 = tpu.matmul %19, %20, %cst_15 {dimension_numbers = #tpu.dot_dimension_numbers<[1], [0], [0], [1], [0, 0, 1, 1], [], []>} : vector<8x896xbf16>, vector<896x1664xbf16>, vector<8x1664xf32> -> vector<8x1664xf32>
    %c0_16 = arith.constant 0 : index
    %c0_17 = arith.constant 0 : index
    %22 = vector.load %arg7[%c0_16, %c0_17] : memref<1x1664xf32, #tpu.memory_space<vmem>>, vector<1x1664xf32>
    %23 = vector.broadcast %22 : vector<1x1664xf32> to vector<8x1664xf32>
    %24 = arith.addf %21, %23 : vector<8x1664xf32>
    %cst_18 = arith.constant 0.000000e+00 : f32
    %25 = vector.broadcast %cst_18 : f32 to vector<8x1664xf32>
    %26 = arith.maximumf %24, %25 : vector<8x1664xf32>
    %27 = arith.truncf %26 : vector<8x1664xf32> to vector<8x1664xbf16>
    %c0_19 = arith.constant 0 : index
    %c0_20 = arith.constant 0 : index
    %28 = vector.load %arg8[%c0_19, %c0_20] : memref<1664x896xbf16, #tpu.memory_space<vmem>>, vector<1664x896xbf16>
    %cst_21 = arith.constant dense<0.000000e+00> : vector<8x896xf32>
    %29 = tpu.matmul %27, %28, %cst_21 {dimension_numbers = #tpu.dot_dimension_numbers<[1], [0], [0], [1], [0, 0, 1, 1], [], []>} : vector<8x1664xbf16>, vector<1664x896xbf16>, vector<8x896xf32> -> vector<8x896xf32>
    %c0_22 = arith.constant 0 : index
    %c0_23 = arith.constant 0 : index
    %30 = vector.load %arg9[%c0_22, %c0_23] : memref<1x896xf32, #tpu.memory_space<vmem>>, vector<1x896xf32>
    %31 = vector.broadcast %30 : vector<1x896xf32> to vector<8x896xf32>
    %32 = arith.addf %29, %31 : vector<8x896xf32>
    %33 = arith.negf %32 : vector<8x896xf32>
    %34 = math.exp %33 : vector<8x896xf32>
    %cst_24 = arith.constant 1.000000e+00 : f32
    %35 = vector.broadcast %cst_24 : f32 to vector<8x896xf32>
    %36 = arith.addf %35, %34 : vector<8x896xf32>
    %37 = arith.divf %35, %36 : vector<8x896xf32>
    %c0_25 = arith.constant 0 : index
    %c0_26 = arith.constant 0 : index
    %38 = vector.load %arg10[%c0_25, %c0_26] : memref<8x896xf32, #tpu.memory_space<vmem>>, vector<8x896xf32>
    tpu.vector_store %arg10[%c0_25, %c0_26], %37 {strides = array<i32>} : memref<8x896xf32, #tpu.memory_space<vmem>>, vector<8x896xf32>,
    return
  }
  func.func @transform_0(%arg0: i32) -> (i32, i32) {
    %c0_i32 = arith.constant 0 : i32
    %c0_i32_0 = arith.constant 0 : i32
    return %arg0, %c0_i32 : i32, i32
  }
  func.func @transform_1(%arg0: i32) -> (i32, i32) {
    %c0_i32 = arith.constant 0 : i32
    %c0_i32_0 = arith.constant 0 : i32
    %c0_i32_1 = arith.constant 0 : i32
    return %c0_i32, %c0_i32_0 : i32, i32
  }
  func.func @transform_2(%arg0: i32) -> (i32, i32) {
    %c0_i32 = arith.constant 0 : i32
    %c0_i32_0 = arith.constant 0 : i32
    %c0_i32_1 = arith.constant 0 : i32
    return %c0_i32, %c0_i32_0 : i32, i32
  }
  func.func @transform_3(%arg0: i32) -> (i32, i32) {
    %c0_i32 = arith.constant 0 : i32
    %c0_i32_0 = arith.constant 0 : i32
    %c0_i32_1 = arith.constant 0 : i32
    return %c0_i32, %c0_i32_0 : i32, i32
  }
  func.func @transform_4(%arg0: i32) -> (i32, i32) {
    %c0_i32 = arith.constant 0 : i32
    %c0_i32_0 = arith.constant 0 : i32
    %c0_i32_1 = arith.constant 0 : i32
    return %c0_i32, %c0_i32_0 : i32, i32
  }
  func.func @transform_5(%arg0: i32) -> (i32, i32) {
    %c0_i32 = arith.constant 0 : i32
    %c0_i32_0 = arith.constant 0 : i32
    %c0_i32_1 = arith.constant 0 : i32
    return %c0_i32, %c0_i32_0 : i32, i32
  }
  func.func @transform_6(%arg0: i32) -> (i32, i32) {
    %c0_i32 = arith.constant 0 : i32
    %c0_i32_0 = arith.constant 0 : i32
    %c0_i32_1 = arith.constant 0 : i32
    return %c0_i32, %c0_i32_0 : i32, i32
  }
  func.func @transform_7(%arg0: i32) -> (i32, i32) {
    %c0_i32 = arith.constant 0 : i32
    %c0_i32_0 = arith.constant 0 : i32
    %c0_i32_1 = arith.constant 0 : i32
    return %c0_i32, %c0_i32_0 : i32, i32
  }
  func.func @transform_8(%arg0: i32) -> (i32, i32) {
    %c0_i32 = arith.constant 0 : i32
    %c0_i32_0 = arith.constant 0 : i32
    %c0_i32_1 = arith.constant 0 : i32
    return %c0_i32, %c0_i32_0 : i32, i32
  }
  func.func @transform_9(%arg0: i32) -> (i32, i32) {
    %c0_i32 = arith.constant 0 : i32
    %c0_i32_0 = arith.constant 0 : i32
    return %arg0, %c0_i32 : i32, i32
  }
}

</mosaic_0001>

<llo_original>
// kernel: tpu_custom_call.1
$region0: #{tpu_custom_call.1}
  #allocation0 [shape = 'u32[]', space=smem, size = 0x4, offset = 0x4, fixed_abs, tag = 'smem constant byte address 0x4 - core index']
  #allocation1 [shape = 'u32[144,128]{1,0:T(1,128)}', space=vmem, size = 0x12000, scoped, tag = 'internal scratch']
  %s0 = inlined_call_operand.hbm [shape: f32[8,128], index: 0, kind: input, shape index: {}]
  %s1 = inlined_call_operand.hbm [shape: bf16[128,384], index: 1, kind: input, shape index: {}]
  %s2 = inlined_call_operand.hbm [shape: f32[1,384], index: 2, kind: input, shape index: {}]
  %s3 = inlined_call_operand.hbm [shape: bf16[384,896], index: 3, kind: input, shape index: {}]
  %s4 = inlined_call_operand.hbm [shape: f32[1,896], index: 4, kind: input, shape index: {}]
  %s5 = inlined_call_operand.hbm [shape: bf16[896,1664], index: 5, kind: input, shape index: {}]
  %s6 = inlined_call_operand.hbm [shape: f32[1,1664], index: 6, kind: input, shape index: {}]
  %s7 = inlined_call_operand.hbm [shape: bf16[1664,896], index: 7, kind: input, shape index: {}]
  %s8 = inlined_call_operand.hbm [shape: f32[1,896], index: 8, kind: input, shape index: {}]
  %s9 = inlined_call_operand.hbm [shape: f32[8,896], index: 9, kind: output, shape index: {}]
  %s10 = sld [smem:[#allocation0]]
  $region82: #{tpu_custom_call.1} parent=0
    _
  %s12 = ssub.s32 1, %s10
  %s13 = scalar_select 0, %s12, %s10
  $region1: #{tpu_custom_call.1} parent=0
    #allocation2 [shape = 'u8[4096]{0}', space=vmem, size = 0x1000, scoped, tag = 'input window, operand 0, single buffered']
    #allocation3 [shape = 's32[1]{0}', space=sflag, size = 0x4, scoped, tag = 'scoped memory for tpu_custom_call.1']
    #allocation4 [shape = 's32[1]{0}', space=sflag, size = 0x4, scoped, tag = 'scoped memory for tpu_custom_call.1']
    #allocation5 [shape = 'u8[98304]{0}', space=vmem, size = 0x18000, scoped, tag = 'input window, operand 1, single buffered']
    #allocation6 [shape = 's32[1]{0}', space=sflag, size = 0x4, scoped, tag = 'scoped memory for tpu_custom_call.1']
    #allocation7 [shape = 'u8[1536]{0}', space=vmem, size = 0x800, scoped, tag = 'input window, operand 2, single buffered']
    #allocation8 [shape = 'u8[688128]{0}', space=vmem, size = 0xa8000, scoped, tag = 'input window, operand 3, single buffered']
    #allocation9 [shape = 's32[1]{0}', space=sflag, size = 0x4, scoped, tag = 'scoped memory for tpu_custom_call.1']
    #allocation10 [shape = 'u8[3584]{0}', space=vmem, size = 0x1000, scoped, tag = 'input window, operand 4, single buffered']
    #allocation11 [shape = 'u8[2981888]{0}', space=vmem, size = 0x2d8000, scoped, tag = 'input window, operand 5, single buffered']
    #allocation12 [shape = 's32[1]{0}', space=sflag, size = 0x4, scoped, tag = 'scoped memory for tpu_custom_call.1']
    #allocation13 [shape = 'u8[6656]{0}', space=vmem, size = 0x1c00, scoped, tag = 'input window, operand 6, single buffered']
    #allocation14 [shape = 'u8[2981888]{0}', space=vmem, size = 0x2d8000, scoped, tag = 'input window, operand 7, single buffered']
    #allocation15 [shape = 's32[1]{0}', space=sflag, size = 0x4, scoped, tag = 'scoped memory for tpu_custom_call.1']
    #allocation16 [shape = 'u8[3584]{0}', space=vmem, size = 0x1000, scoped, tag = 'input window, operand 8, single buffered']
    #allocation17 [shape = 'u8[28672]{0}', space=vmem, size = 0x7000, scoped, tag = 'output window, operand 0, single buffered']
    %14 = vsyncpa [#allocation3], 0
    %15 = vsyncpa [#allocation6], 0
    %16 = vsyncpa [#allocation9], 0
    %17 = vsyncpa [#allocation12], 0
    %18 = vsyncpa [#allocation15], 0
    %19 = vsyncpa [#allocation4], 0
    // Predicated region
    $region2: #{tpu_custom_call.1} parent=1 // pred_check
      _
    $region3: #{tpu_custom_call.1} parent=1 // pred_check_branch
      %21 = sbr.rel (0) target = $region5
    $region4: #{tpu_custom_call.1} parent=1 // pred_region
      %s23 = ssub.s32 128, 128
      %24 = vsyncadd [#allocation3], %s23
      %s26 = sshll.u32 [#allocation2], 4
      %s27 = int_to_ptr.vmem [resolvable:$true] %s26
      %29 = dma.hbm_to_vmem [thread:$0]  %s0, 128, %s27, [#allocation3]
    $region5: #{tpu_custom_call.1} parent=1 // pred_fallthru
      _
    // Predicated region
    $region6: #{tpu_custom_call.1} parent=1 // pred_check
      _
    $region7: #{tpu_custom_call.1} parent=1 // pred_check_branch
      %31 = sbr.rel (0) target = $region9
    $region8: #{tpu_custom_call.1} parent=1 // pred_region
      %s33 = ssub.s32 3072, 3072
      %34 = vsyncadd [#allocation6], %s33
      %s35 = sshll.u32 [#allocation5], 4
      %s36 = int_to_ptr.vmem [resolvable:$true] %s35
      %41 = dma.hbm_to_vmem [thread:$0]  %s1, 3072, %s36, [#allocation6], 192, 192, 12
    $region9: #{tpu_custom_call.1} parent=1 // pred_fallthru
      _
    // Predicated region
    $region10: #{tpu_custom_call.1} parent=1 // pred_check
      _
    $region11: #{tpu_custom_call.1} parent=1 // pred_check_branch
      %43 = sbr.rel (0) target = $region13
    $region12: #{tpu_custom_call.1} parent=1 // pred_region
      %s45 = ssub.s32 48, 48
      %46 = vsyncadd [#allocation6], %s45
      %s48 = sshll.u32 [#allocation7], 4
      %s49 = int_to_ptr.vmem [resolvable:$true] %s48
      %51 = dma.hbm_to_vmem [thread:$0]  %s2, 48, %s49, [#allocation6]
    $region13: #{tpu_custom_call.1} parent=1 // pred_fallthru
      _
    // Predicated region
    $region14: #{tpu_custom_call.1} parent=1 // pred_check
      _
    $region15: #{tpu_custom_call.1} parent=1 // pred_check_branch
      %53 = sbr.rel (0) target = $region17
    $region16: #{tpu_custom_call.1} parent=1 // pred_region
      %s55 = ssub.s32 21504, 21504
      %56 = vsyncadd [#allocation9], %s55
      %s57 = sshll.u32 [#allocation8], 4
      %s58 = int_to_ptr.vmem [resolvable:$true] %s57
      %63 = dma.hbm_to_vmem [thread:$0]  %s3, 21504, %s58, [#allocation9], 448, 448, 28
    $region17: #{tpu_custom_call.1} parent=1 // pred_fallthru
      _
    // Predicated region
    $region18: #{tpu_custom_call.1} parent=1 // pred_check
      _
    $region19: #{tpu_custom_call.1} parent=1 // pred_check_branch
      %65 = sbr.rel (0) target = $region21
    $region20: #{tpu_custom_call.1} parent=1 // pred_region
      %s67 = ssub.s32 112, 112
      %68 = vsyncadd [#allocation9], %s67
      %s70 = sshll.u32 [#allocation10], 4
      %s71 = int_to_ptr.vmem [resolvable:$true] %s70
      %73 = dma.hbm_to_vmem [thread:$0]  %s4, 112, %s71, [#allocation9]
    $region21: #{tpu_custom_call.1} parent=1 // pred_fallthru
      _
    // Predicated region
    $region22: #{tpu_custom_call.1} parent=1 // pred_check
      _
    $region23: #{tpu_custom_call.1} parent=1 // pred_check_branch
      %75 = sbr.rel (0) target = $region25
    $region24: #{tpu_custom_call.1} parent=1 // pred_region
      %s77 = ssub.s32 93184, 93184
      %78 = vsyncadd [#allocation12], %s77
      %s79 = sshll.u32 [#allocation11], 4
      %s80 = int_to_ptr.vmem [resolvable:$true] %s79
      %85 = dma.hbm_to_vmem [thread:$0]  %s5, 93184, %s80, [#allocation12], 832, 832, 52
    $region25: #{tpu_custom_call.1} parent=1 // pred_fallthru
      _
    // Predicated region
    $region26: #{tpu_custom_call.1} parent=1 // pred_check
      _
    $region27: #{tpu_custom_call.1} parent=1 // pred_check_branch
      %87 = sbr.rel (0) target = $region29
    $region28: #{tpu_custom_call.1} parent=1 // pred_region
      %s89 = ssub.s32 208, 208
      %90 = vsyncadd [#allocation12], %s89
      %s92 = sshll.u32 [#allocation13], 4
      %s93 = int_to_ptr.vmem [resolvable:$true] %s92
      %95 = dma.hbm_to_vmem [thread:$0]  %s6, 208, %s93, [#allocation12]
    $region29: #{tpu_custom_call.1} parent=1 // pred_fallthru
      _
    // Predicated region
    $region30: #{tpu_custom_call.1} parent=1 // pred_check
      _
    $region31: #{tpu_custom_call.1} parent=1 // pred_check_branch
      %97 = sbr.rel (0) target = $region33
    $region32: #{tpu_custom_call.1} parent=1 // pred_region
      %s99 = ssub.s32 93184, 93184
      %100 = vsyncadd [#allocation15], %s99
      %s101 = sshll.u32 [#allocation14], 4
      %s102 = int_to_ptr.vmem [resolvable:$true] %s101
      %107 = dma.hbm_to_vmem [thread:$0]  %s7, 93184, %s102, [#allocation15], 448, 448, 28
    $region33: #{tpu_custom_call.1} parent=1 // pred_fallthru
      _
    // Predicated region
    $region34: #{tpu_custom_call.1} parent=1 // pred_check
      _
    $region35: #{tpu_custom_call.1} parent=1 // pred_check_branch
      %109 = sbr.rel (0) target = $region37
    $region36: #{tpu_custom_call.1} parent=1 // pred_region
      %s111 = ssub.s32 112, 112
      %112 = vsyncadd [#allocation15], %s111
      %s114 = sshll.u32 [#allocation16], 4
      %s115 = int_to_ptr.vmem [resolvable:$true] %s114
      %117 = dma.hbm_to_vmem [thread:$0]  %s8, 112, %s115, [#allocation15]
    $region37: #{tpu_custom_call.1} parent=1 // pred_fallthru
      _
    // Predicated region
    $region38: #{tpu_custom_call.1} parent=1 // pred_check
      _
    $region39: #{tpu_custom_call.1} parent=1 // pred_check_branch
      %119 = sbr.rel (0) target = $region41
    $region40: #{tpu_custom_call.1} parent=1 // pred_region
      %120 = dma.done [#allocation3], 128
    $region41: #{tpu_custom_call.1} parent=1 // pred_fallthru
      _
    // Predicated region
    $region42: #{tpu_custom_call.1} parent=1 // pred_check
      _
    $region43: #{tpu_custom_call.1} parent=1 // pred_check_branch
      %122 = sbr.rel (0) target = $region45
    $region44: #{tpu_custom_call.1} parent=1 // pred_region
      %123 = dma.done [#allocation6], 3072
    $region45: #{tpu_custom_call.1} parent=1 // pred_fallthru
      _
    // Predicated region
    $region46: #{tpu_custom_call.1} parent=1 // pred_check
      _
    $region47: #{tpu_custom_call.1} parent=1 // pred_check_branch
      %125 = sbr.rel (0) target = $region49
    $region48: #{tpu_custom_call.1} parent=1 // pred_region
      %126 = dma.done [#allocation6], 48
    $region49: #{tpu_custom_call.1} parent=1 // pred_fallthru
      _
    // Predicated region
    $region50: #{tpu_custom_call.1} parent=1 // pred_check
      _
    $region51: #{tpu_custom_call.1} parent=1 // pred_check_branch
      %128 = sbr.rel (0) target = $region53
    $region52: #{tpu_custom_call.1} parent=1 // pred_region
      %129 = dma.done [#allocation9], 21504
    $region53: #{tpu_custom_call.1} parent=1 // pred_fallthru
      _
    // Predicated region
    $region54: #{tpu_custom_call.1} parent=1 // pred_check
      _
    $region55: #{tpu_custom_call.1} parent=1 // pred_check_branch
      %131 = sbr.rel (0) target = $region57
    $region56: #{tpu_custom_call.1} parent=1 // pred_region
      %132 = dma.done [#allocation9], 112
    $region57: #{tpu_custom_call.1} parent=1 // pred_fallthru
      _
    // Predicated region
    $region58: #{tpu_custom_call.1} parent=1 // pred_check
      _
    $region59: #{tpu_custom_call.1} parent=1 // pred_check_branch
      %134 = sbr.rel (0) target = $region61
    $region60: #{tpu_custom_call.1} parent=1 // pred_region
      %135 = dma.done [#allocation12], 93184
    $region61: #{tpu_custom_call.1} parent=1 // pred_fallthru
      _
    // Predicated region
    $region62: #{tpu_custom_call.1} parent=1 // pred_check
      _
    $region63: #{tpu_custom_call.1} parent=1 // pred_check_branch
      %137 = sbr.rel (0) target = $region65
    $region64: #{tpu_custom_call.1} parent=1 // pred_region
      %138 = dma.done [#allocation12], 208
    $region65: #{tpu_custom_call.1} parent=1 // pred_fallthru
      _
    // Predicated region
    $region66: #{tpu_custom_call.1} parent=1 // pred_check
      _
    $region67: #{tpu_custom_call.1} parent=1 // pred_check_branch
      %140 = sbr.rel (0) target = $region69
    $region68: #{tpu_custom_call.1} parent=1 // pred_region
      %141 = dma.done [#allocation15], 93184
    $region69: #{tpu_custom_call.1} parent=1 // pred_fallthru
      _
    // Predicated region
    $region70: #{tpu_custom_call.1} parent=1 // pred_check
      _
    $region71: #{tpu_custom_call.1} parent=1 // pred_check_branch
      %143 = sbr.rel (0) target = $region73
    $region72: #{tpu_custom_call.1} parent=1 // pred_region
      %144 = dma.done [#allocation15], 112
    $region73: #{tpu_custom_call.1} parent=1 // pred_fallthru
      _
    %v146 = vld [vmem:[#allocation2] sm:$0xff]
    %v147 = vmax.f32 %v146, 0.0
    %v148 = vpack.c.bf16 %v147, %v147
    %v149 = vld [vmem:[#allocation5] sm:$0xff]
    %v150 = vld [vmem:[#allocation5 + $0x8] sm:$0xf]
    %v151 = vld [vmem:[#allocation5 + $0xc] sm:$0xff]
    %v152 = vld [vmem:[#allocation5 + $0x14] sm:$0xf]
    %v153 = vld [vmem:[#allocation5 + $0x18] sm:$0xff]
    %v154 = vld [vmem:[#allocation5 + $0x20] sm:$0xf]
    %v155 = vld [vmem:[#allocation5 + $0x24] sm:$0xff]
    %v156 = vld [vmem:[#allocation5 + $0x2c] sm:$0xf]
    %v157 = vld [vmem:[#allocation5 + $0x30] sm:$0xff]
    %v158 = vld [vmem:[#allocation5 + $0x38] sm:$0xf]
    %v159 = vld [vmem:[#allocation5 + $0x3c] sm:$0xff]
    %v160 = vld [vmem:[#allocation5 + $0x44] sm:$0xf]
    %v161 = vld [vmem:[#allocation5 + $0x48] sm:$0xff]
    %v162 = vld [vmem:[#allocation5 + $0x50] sm:$0xf]
    %v163 = vld [vmem:[#allocation5 + $0x54] sm:$0xff]
    %v164 = vld [vmem:[#allocation5 + $0x5c] sm:$0xf]
    %v165 = vld [vmem:[#allocation5 + $0x60] sm:$0xff]
    %v166 = vld [vmem:[#allocation5 + $0x68] sm:$0xf]
    %v167 = vld [vmem:[#allocation5 + $0x6c] sm:$0xff]
    %v168 = vld [vmem:[#allocation5 + $0x74] sm:$0xf]
    %v169 = vld [vmem:[#allocation5 + $0x78] sm:$0xff]
    %v170 = vld [vmem:[#allocation5 + $0x80] sm:$0xf]
    %v171 = vld [vmem:[#allocation5 + $0x84] sm:$0xff]
    %v172 = vld [vmem:[#allocation5 + $0x8c] sm:$0xf]
    %v173 = vld [vmem:[#allocation5 + $0x90] sm:$0xff]
    %v174 = vld [vmem:[#allocation5 + $0x98] sm:$0xf]
    %v175 = vld [vmem:[#allocation5 + $0x9c] sm:$0xff]
    %v176 = vld [vmem:[#allocation5 + $0xa4] sm:$0xf]
    %v177 = vld [vmem:[#allocation5 + $0xa8] sm:$0xff]
    %v178 = vld [vmem:[#allocation5 + $0xb0] sm:$0xf]
    %v179 = vld [vmem:[#allocation5 + $0xb4] sm:$0xff]
    %v180 = vld [vmem:[#allocation5 + $0xbc] sm:$0xf]
    %v181 = vld [vmem:[#allocation7] sm:$0x7]
    %v183 = vlaneseq
    %v184 = vshrl.u32 %v183, 7
    %v185 = vsub.s32 0, %v184
    %v186 = vrot.slane %v181, %v185
    %v187 = vlaneseq
    %v188 = vshrl.u32 %v187, 7
    %v189 = vsub.s32 1, %v188
    %v190 = vrot.slane %v181, %v189
    %v191 = vlaneseq
    %v192 = vshrl.u32 %v191, 7
    %v193 = vsub.s32 2, %v192
    %v194 = vrot.slane %v181, %v193
    %v230 = vunpack.c.l.b16 %v149
    %v231 = vunpack.c.h.b16 %v149
    %v232 = vunpack.c.l.b16 %v150
    %v233 = vunpack.c.l.b16 %v151
    %v234 = vunpack.c.h.b16 %v151
    %v235 = vunpack.c.l.b16 %v152
    %v236 = vunpack.c.l.b16 %v153
    %v237 = vunpack.c.h.b16 %v153
    %v238 = vunpack.c.l.b16 %v154
    %v239 = vunpack.c.l.b16 %v155
    %v240 = vunpack.c.h.b16 %v155
    %v241 = vunpack.c.l.b16 %v156
    %v242 = vunpack.c.l.b16 %v157
    %v243 = vunpack.c.h.b16 %v157
    %v244 = vunpack.c.l.b16 %v158
    %v245 = vunpack.c.l.b16 %v159
    %v246 = vunpack.c.h.b16 %v159
    %v247 = vunpack.c.l.b16 %v160
    %v248 = vunpack.c.l.b16 %v161
    %v249 = vunpack.c.h.b16 %v161
    %v250 = vunpack.c.l.b16 %v162
    %v251 = vunpack.c.l.b16 %v163
    %v252 = vunpack.c.h.b16 %v163
    %v253 = vunpack.c.l.b16 %v164
    %v254 = vunpack.c.l.b16 %v165
    %v255 = vunpack.c.h.b16 %v165
    %v256 = vunpack.c.l.b16 %v166
    %v257 = vunpack.c.l.b16 %v167
    %v258 = vunpack.c.h.b16 %v167
    %v259 = vunpack.c.l.b16 %v168
    %v260 = vunpack.c.l.b16 %v169
    %v261 = vunpack.c.h.b16 %v169
    %v262 = vunpack.c.l.b16 %v170
    %v263 = vunpack.c.l.b16 %v171
    %v264 = vunpack.c.h.b16 %v171
    %v265 = vunpack.c.l.b16 %v172
    %v266 = vunpack.c.l.b16 %v173
    %v267 = vunpack.c.h.b16 %v173
    %v268 = vunpack.c.l.b16 %v174
    %v269 = vunpack.c.l.b16 %v175
    %v270 = vunpack.c.h.b16 %v175
    %v271 = vunpack.c.l.b16 %v176
    %v272 = vunpack.c.l.b16 %v177
    %v273 = vunpack.c.h.b16 %v177
    %v274 = vunpack.c.l.b16 %v178
    %v275 = vunpack.c.l.b16 %v179
    %v276 = vunpack.c.h.b16 %v179
    %v277 = vunpack.c.l.b16 %v180
    %v278 = vpack.c.b16 %v233, %v230
    %v279 = vpack.c.b16 %v234, %v231
    %v280 = vpack.c.b16 %v235, %v232
    %v281 = vpack.c.b16 %v239, %v236
    %v282 = vpack.c.b16 %v240, %v237
    %v283 = vpack.c.b16 %v241, %v238
    %v284 = vpack.c.b16 %v245, %v242
    %v285 = vpack.c.b16 %v246, %v243
    %v286 = vpack.c.b16 %v247, %v244
    %v287 = vpack.c.b16 %v251, %v248
    %v288 = vpack.c.b16 %v252, %v249
    %v289 = vpack.c.b16 %v253, %v250
    %v290 = vpack.c.b16 %v257, %v254
    %v291 = vpack.c.b16 %v258, %v255
    %v292 = vpack.c.b16 %v259, %v256
    %v293 = vpack.c.b16 %v263, %v260
    %v294 = vpack.c.b16 %v264, %v261
    %v295 = vpack.c.b16 %v265, %v262
    %v296 = vpack.c.b16 %v269, %v266
    %v297 = vpack.c.b16 %v270, %v267
    %v298 = vpack.c.b16 %v271, %v268
    %v299 = vpack.c.b16 %v275, %v272
    %v300 = vpack.c.b16 %v276, %v273
    %v301 = vpack.c.b16 %v277, %v274
    %326 = vmatprep.subr.bf16.mxu0 %v279
    %327 = vmatpush1.bf16.msra.mxu0 %v278
    %328 = vmatprep.subr.bf16.mxu0 %v282
    %329 = vmatpush1.bf16.msra.mxu0 %v281
    %330 = vmatprep.subr.bf16.mxu0 %v285
    %331 = vmatpush1.bf16.msra.mxu0 %v284
    %332 = vmatprep.subr.bf16.mxu0 %v288
    %333 = vmatpush1.bf16.msra.mxu0 %v287
    %334 = vmatprep.subr.bf16.mxu0 %v291
    %335 = vmatpush1.bf16.msra.mxu0 %v290
    %336 = vmatprep.subr.bf16.mxu0 %v294
    %337 = vmatpush1.bf16.msra.mxu0 %v293
    %338 = vmatprep.subr.bf16.mxu0 %v297
    %339 = vmatpush1.bf16.msra.mxu0 %v296
    %340 = vmatprep.subr.bf16.mxu0 %v300
    %341 = vmatpush1.bf16.msra.mxu0 %v299
    %342 = vmatprep.subr.bf16.mxu0 0
    %343 = vmatpush1.bf16.msra.mxu0 0
    %344 = vmatprep.subr.bf16.mxu0 0
    %345 = vmatpush1.bf16.msra.mxu0 0
    %346 = vmatprep.subr.bf16.mxu0 0
    %347 = vmatpush1.bf16.msra.mxu0 0
    %348 = vmatprep.subr.bf16.mxu0 0
    %349 = vmatpush1.bf16.msra.mxu0 0
    %350 = vmatprep.subr.bf16.mxu0 0
    %351 = vmatpush1.bf16.msra.mxu0 0
    %352 = vmatprep.subr.bf16.mxu0 0
    %353 = vmatpush1.bf16.msra.mxu0 0
    %354 = vmatprep.subr.bf16.mxu0 0
    %355 = vmatpush1.bf16.msra.mxu0 0
    %356 = vmatprep.subr.bf16.mxu0 0
    %357 = vmatpush1.bf16.msra.mxu0 0
    %358 = vmatprep.mubr.bf16.mxu0 0
    %359 = vmatmul.mubr.bf16.gmra.mrb[0].mxu0 %v148
    %v360 = vpop.f32.mrb[0].mxu0
    %v361 = vadd.f32 %v186, %v360
    %v362 = vpop.f32.mrb[0].mxu0
    %v363 = vadd.f32 %v190, %v362
    %v364 = vpop.f32.mrb[0].mxu0
    %v365 = vpop.f32.mrb[0].mxu0
    %366 = vdwg.mxu0
    %367 = vmatprep.subr.bf16.mxu0 0
    %368 = vmatpush1.bf16.msra.mxu0 %v280
    %369 = vmatprep.subr.bf16.mxu0 0
    %370 = vmatpush1.bf16.msra.mxu0 %v283
    %371 = vmatprep.subr.bf16.mxu0 0
    %372 = vmatpush1.bf16.msra.mxu0 %v286
    %373 = vmatprep.subr.bf16.mxu0 0
    %374 = vmatpush1.bf16.msra.mxu0 %v289
    %375 = vmatprep.subr.bf16.mxu0 0
    %376 = vmatpush1.bf16.msra.mxu0 %v292
    %377 = vmatprep.subr.bf16.mxu0 0
    %378 = vmatpush1.bf16.msra.mxu0 %v295
    %379 = vmatprep.subr.bf16.mxu0 0
    %380 = vmatpush1.bf16.msra.mxu0 %v298
    %381 = vmatprep.subr.bf16.mxu0 0
    %382 = vmatpush1.bf16.msra.mxu0 %v301
    %383 = vmatprep.subr.bf16.mxu0 0
    %384 = vmatpush1.bf16.msra.mxu0 0
    %385 = vmatprep.subr.bf16.mxu0 0
    %386 = vmatpush1.bf16.msra.mxu0 0
    %387 = vmatprep.subr.bf16.mxu0 0
    %388 = vmatpush1.bf16.msra.mxu0 0
    %389 = vmatprep.subr.bf16.mxu0 0
    %390 = vmatpush1.bf16.msra.mxu0 0
    %391 = vmatprep.subr.bf16.mxu0 0
    %392 = vmatpush1.bf16.msra.mxu0 0
    %393 = vmatprep.subr.bf16.mxu0 0
    %394 = vmatpush1.bf16.msra.mxu0 0
    %395 = vmatprep.subr.bf16.mxu0 0
    %396 = vmatpush1.bf16.msra.mxu0 0
    %397 = vmatprep.subr.bf16.mxu0 0
    %398 = vmatpush1.bf16.msra.mxu0 0
    %399 = vmatprep.mubr.bf16.mxu0 0
    %400 = vmatmul.mubr.bf16.gmra.mrb[0].mxu0 %v148
    %v401 = vpop.f32.mrb[0].mxu0
    %v402 = vadd.f32 %v194, %v401
    %v403 = vpop.f32.mrb[0].mxu0
    %v404 = vpop.f32.mrb[0].mxu0
    %v405 = vpop.f32.mrb[0].mxu0
    %406 = vdwg.mxu0
    %v407 = vmax.f32 %v361, 0.0
    %v408 = vmax.f32 %v363, 0.0
    %v409 = vmax.f32 %v402, 0.0
    %v410 = vpack.c.bf16 %v407, %v407
    %v411 = vpack.c.bf16 %v408, %v408
    %v412 = vpack.c.bf16 %v409, %v409
    %v413 = vld [vmem:[#allocation8] sm:$0xff]
    %v414 = vld [vmem:[#allocation8 + $0x8] sm:$0xff]
    %v415 = vld [vmem:[#allocation8 + $0x10] sm:$0xff]
    %v416 = vld [vmem:[#allocation8 + $0x18] sm:$0xf]
    %v417 = vld [vmem:[#allocation8 + $0x1c] sm:$0xff]
    %v418 = vld [vmem:[#allocation8 + $0x24] sm:$0xff]
    %v419 = vld [vmem:[#allocation8 + $0x2c] sm:$0xff]
    %v420 = vld [vmem:[#allocation8 + $0x34] sm:$0xf]
    %v421 = vld [vmem:[#allocation8 + $0x38] sm:$0xff]
    %v422 = vld [vmem:[#allocation8 + $0x40] sm:$0xff]
    %v423 = vld [vmem:[#allocation8 + $0x48] sm:$0xff]
    %v424 = vld [vmem:[#allocation8 + $0x50] sm:$0xf]
    %v425 = vld [vmem:[#allocation8 + $0x54] sm:$0xff]
    %v426 = vld [vmem:[#allocation8 + $0x5c] sm:$0xff]
    %v427 = vld [vmem:[#allocation8 + $0x64] sm:$0xff]
    %v428 = vld [vmem:[#allocation8 + $0x6c] sm:$0xf]
    %v429 = vld [vmem:[#allocation8 + $0x70] sm:$0xff]
    %v430 = vld [vmem:[#allocation8 + $0x78] sm:$0xff]
    %v431 = vld [vmem:[#allocation8 + $0x80] sm:$0xff]
    %v432 = vld [vmem:[#allocation8 + $0x88] sm:$0xf]
    %v433 = vld [vmem:[#allocation8 + $0x8c] sm:$0xff]
    %v434 = vld [vmem:[#allocation8 + $0x94] sm:$0xff]
    %v435 = vld [vmem:[#allocation8 + $0x9c] sm:$0xff]
    %v436 = vld [vmem:[#allocation8 + $0xa4] sm:$0xf]
    %v437 = vld [vmem:[#allocation8 + $0xa8] sm:$0xff]
    %v438 = vld [vmem:[#allocation8 + $0xb0] sm:$0xff]
    %v439 = vld [vmem:[#allocation8 + $0xb8] sm:$0xff]
    %v440 = vld [vmem:[#allocation8 + $0xc0] sm:$0xf]
    %v441 = vld [vmem:[#allocation8 + $0xc4] sm:$0xff]
    %v442 = vld [vmem:[#allocation8 + $0xcc] sm:$0xff]
    %v443 = vld [vmem:[#allocation8 + $0xd4] sm:$0xff]
    %v444 = vld [vmem:[#allocation8 + $0xdc] sm:$0xf]
    %v445 = vld [vmem:[#allocation8 + $0xe0] sm:$0xff]
    %v446 = vld [vmem:[#allocation8 + $0xe8] sm:$0xff]
    %v447 = vld [vmem:[#allocation8 + $0xf0] sm:$0xff]
    %v448 = vld [vmem:[#allocation8 + $0xf8] sm:$0xf]
    %v449 = vld [vmem:[#allocation8 + $0xfc] sm:$0xff]
    %v450 = vld [vmem:[#allocation8 + $0x104] sm:$0xff]
    %v451 = vld [vmem:[#allocation8 + $0x10c] sm:$0xff]
    %v452 = vld [vmem:[#allocation8 + $0x114] sm:$0xf]
    %v453 = vld [vmem:[#allocation8 + $0x118] sm:$0xff]
    %v454 = vld [vmem:[#allocation8 + $0x120] sm:$0xff]
    %v455 = vld [vmem:[#allocation8 + $0x128] sm:$0xff]
    %v456 = vld [vmem:[#allocation8 + $0x130] sm:$0xf]
    %v457 = vld [vmem:[#allocation8 + $0x134] sm:$0xff]
    %v458 = vld [vmem:[#allocation8 + $0x13c] sm:$0xff]
    %v459 = vld [vmem:[#allocation8 + $0x144] sm:$0xff]
    %v460 = vld [vmem:[#allocation8 + $0x14c] sm:$0xf]
    %v461 = vld [vmem:[#allocation8 + $0x150] sm:$0xff]
    %v462 = vld [vmem:[#allocation8 + $0x158] sm:$0xff]
    %v463 = vld [vmem:[#allocation8 + $0x160] sm:$0xff]
    %v464 = vld [vmem:[#allocation8 + $0x168] sm:$0xf]
    %v465 = vld [vmem:[#allocation8 + $0x16c] sm:$0xff]
    %v466 = vld [vmem:[#allocation8 + $0x174] sm:$0xff]
    %v467 = vld [vmem:[#allocation8 + $0x17c] sm:$0xff]
    %v468 = vld [vmem:[#allocation8 + $0x184] sm:$0xf]
    %v469 = vld [vmem:[#allocation8 + $0x188] sm:$0xff]
    %v470 = vld [vmem:[#allocation8 + $0x190] sm:$0xff]
    %v471 = vld [vmem:[#allocation8 + $0x198] sm:$0xff]
    %v472 = vld [vmem:[#allocation8 + $0x1a0] sm:$0xf]
    %v473 = vld [vmem:[#allocation8 + $0x1a4] sm:$0xff]
    %v474 = vld [vmem:[#allocation8 + $0x1ac] sm:$0xff]
    %v475 = vld [vmem:[#allocation8 + $0x1b4] sm:$0xff]
    %v476 = vld [vmem:[#allocation8 + $0x1bc] sm:$0xf]
    %v477 = vld [vmem:[#allocation8 + $0x1c0] sm:$0xff]
    %v478 = vld [vmem:[#allocation8 + $0x1c8] sm:$0xff]
    %v479 = vld [vmem:[#allocation8 + $0x1d0] sm:$0xff]
    %v480 = vld [vmem:[#allocation8 + $0x1d8] sm:$0xf]
    %v481 = vld [vmem:[#allocation8 + $0x1dc] sm:$0xff]
    %v482 = vld [vmem:[#allocation8 + $0x1e4] sm:$0xff]
    %v483 = vld [vmem:[#allocation8 + $0x1ec] sm:$0xff]
    %v484 = vld [vmem:[#allocation8 + $0x1f4] sm:$0xf]
    %v485 = vld [vmem:[#allocation8 + $0x1f8] sm:$0xff]
    %v486 = vld [vmem:[#allocation8 + $0x200] sm:$0xff]
    %v487 = vld [vmem:[#allocation8 + $0x208] sm:$0xff]
    %v488 = vld [vmem:[#allocation8 + $0x210] sm:$0xf]
    %v489 = vld [vmem:[#allocation8 + $0x214] sm:$0xff]
    %v490 = vld [vmem:[#allocation8 + $0x21c] sm:$0xff]
    %v491 = vld [vmem:[#allocation8 + $0x224] sm:$0xff]
    %v492 = vld [vmem:[#allocation8 + $0x22c] sm:$0xf]
    %v493 = vld [vmem:[#allocation8 + $0x230] sm:$0xff]
    %v494 = vld [vmem:[#allocation8 + $0x238] sm:$0xff]
    %v495 = vld [vmem:[#allocation8 + $0x240] sm:$0xff]
    %v496 = vld [vmem:[#allocation8 + $0x248] sm:$0xf]
    %v497 = vld [vmem:[#allocation8 + $0x24c] sm:$0xff]
    %v498 = vld [vmem:[#allocation8 + $0x254] sm:$0xff]
    %v499 = vld [vmem:[#allocation8 + $0x25c] sm:$0xff]
    %v500 = vld [vmem:[#allocation8 + $0x264] sm:$0xf]
    %v501 = vld [vmem:[#allocation8 + $0x268] sm:$0xff]
    %v502 = vld [vmem:[#allocation8 + $0x270] sm:$0xff]
    %v503 = vld [vmem:[#allocation8 + $0x278] sm:$0xff]
    %v504 = vld [vmem:[#allocation8 + $0x280] sm:$0xf]
    %v505 = vld [vmem:[#allocation8 + $0x284] sm:$0xff]
    %v506 = vld [vmem:[#allocation8 + $0x28c] sm:$0xff]
    %v507 = vld [vmem:[#allocation8 + $0x294] sm:$0xff]
    %v508 = vld [vmem:[#allocation8 + $0x29c] sm:$0xf]
    %v509 = vld [vmem:[#allocation8 + $0x2a0] sm:$0xff]
    %v510 = vld [vmem:[#allocation8 + $0x2a8] sm:$0xff]
    %v511 = vld [vmem:[#allocation8 + $0x2b0] sm:$0xff]
    %v512 = vld [vmem:[#allocation8 + $0x2b8] sm:$0xf]
    %v513 = vld [vmem:[#allocation8 + $0x2bc] sm:$0xff]
    %v514 = vld [vmem:[#allocation8 + $0x2c4] sm:$0xff]
    %v515 = vld [vmem:[#allocation8 + $0x2cc] sm:$0xff]
    %v516 = vld [vmem:[#allocation8 + $0x2d4] sm:$0xf]
    %v517 = vld [vmem:[#allocation8 + $0x2d8] sm:$0xff]
    %v518 = vld [vmem:[#allocation8 + $0x2e0] sm:$0xff]
    %v519 = vld [vmem:[#allocation8 + $0x2e8] sm:$0xff]
    %v520 = vld [vmem:[#allocation8 + $0x2f0] sm:$0xf]
    %v521 = vld [vmem:[#allocation8 + $0x2f4] sm:$0xff]
    %v522 = vld [vmem:[#allocation8 + $0x2fc] sm:$0xff]
    %v523 = vld [vmem:[#allocation8 + $0x304] sm:$0xff]
    %v524 = vld [vmem:[#allocation8 + $0x30c] sm:$0xf]
    %v525 = vld [vmem:[#allocation8 + $0x310] sm:$0xff]
    %v526 = vld [vmem:[#allocation8 + $0x318] sm:$0xff]
    %v527 = vld [vmem:[#allocation8 + $0x320] sm:$0xff]
    %v528 = vld [vmem:[#allocation8 + $0x328] sm:$0xf]
    %v529 = vld [vmem:[#allocation8 + $0x32c] sm:$0xff]
    %v530 = vld [vmem:[#allocation8 + $0x334] sm:$0xff]
    %v531 = vld [vmem:[#allocation8 + $0x33c] sm:$0xff]
    %v532 = vld [vmem:[#allocation8 + $0x344] sm:$0xf]
    %v533 = vld [vmem:[#allocation8 + $0x348] sm:$0xff]
    %v534 = vld [vmem:[#allocation8 + $0x350] sm:$0xff]
    %v535 = vld [vmem:[#allocation8 + $0x358] sm:$0xff]
    %v536 = vld [vmem:[#allocation8 + $0x360] sm:$0xf]
    %v537 = vld [vmem:[#allocation8 + $0x364] sm:$0xff]
    %v538 = vld [vmem:[#allocation8 + $0x36c] sm:$0xff]
    %v539 = vld [vmem:[#allocation8 + $0x374] sm:$0xff]
    %v540 = vld [vmem:[#allocation8 + $0x37c] sm:$0xf]
    %v541 = vld [vmem:[#allocation8 + $0x380] sm:$0xff]
    %v542 = vld [vmem:[#allocation8 + $0x388] sm:$0xff]
    %v543 = vld [vmem:[#allocation8 + $0x390] sm:$0xff]
    %v544 = vld [vmem:[#allocation8 + $0x398] sm:$0xf]
    %v545 = vld [vmem:[#allocation8 + $0x39c] sm:$0xff]
    %v546 = vld [vmem:[#allocation8 + $0x3a4] sm:$0xff]
    %v547 = vld [vmem:[#allocation8 + $0x3ac] sm:$0xff]
    %v548 = vld [vmem:[#allocation8 + $0x3b4] sm:$0xf]
    %v549 = vld [vmem:[#allocation8 + $0x3b8] sm:$0xff]
    %v550 = vld [vmem:[#allocation8 + $0x3c0] sm:$0xff]
    %v551 = vld [vmem:[#allocation8 + $0x3c8] sm:$0xff]
    %v552 = vld [vmem:[#allocation8 + $0x3d0] sm:$0xf]
    %v553 = vld [vmem:[#allocation8 + $0x3d4] sm:$0xff]
    %v554 = vld [vmem:[#allocation8 + $0x3dc] sm:$0xff]
    %v555 = vld [vmem:[#allocation8 + $0x3e4] sm:$0xff]
    %v556 = vld [vmem:[#allocation8 + $0x3ec] sm:$0xf]
    %v557 = vld [vmem:[#allocation8 + $0x3f0] sm:$0xff]
    %v558 = vld [vmem:[#allocation8 + $0x3f8] sm:$0xff]
    %v559 = vld [vmem:[#allocation8 + $0x400] sm:$0xff]
    %v560 = vld [vmem:[#allocation8 + $0x408] sm:$0xf]
    %v561 = vld [vmem:[#allocation8 + $0x40c] sm:$0xff]
    %v562 = vld [vmem:[#allocation8 + $0x414] sm:$0xff]
    %v563 = vld [vmem:[#allocation8 + $0x41c] sm:$0xff]
    %v564 = vld [vmem:[#allocation8 + $0x424] sm:$0xf]
    %v565 = vld [vmem:[#allocation8 + $0x428] sm:$0xff]
    %v566 = vld [vmem:[#allocation8 + $0x430] sm:$0xff]
    %v567 = vld [vmem:[#allocation8 + $0x438] sm:$0xff]
    %v568 = vld [vmem:[#allocation8 + $0x440] sm:$0xf]
    %v569 = vld [vmem:[#allocation8 + $0x444] sm:$0xff]
    %v570 = vld [vmem:[#allocation8 + $0x44c] sm:$0xff]
    %v571 = vld [vmem:[#allocation8 + $0x454] sm:$0xff]
    %v572 = vld [vmem:[#allocation8 + $0x45c] sm:$0xf]
    %v573 = vld [vmem:[#allocation8 + $0x460] sm:$0xff]
    %v574 = vld [vmem:[#allocation8 + $0x468] sm:$0xff]
    %v575 = vld [vmem:[#allocation8 + $0x470] sm:$0xff]
    %v576 = vld [vmem:[#allocation8 + $0x478] sm:$0xf]
    %v577 = vld [vmem:[#allocation8 + $0x47c] sm:$0xff]
    %v578 = vld [vmem:[#allocation8 + $0x484] sm:$0xff]
    %v579 = vld [vmem:[#allocation8 + $0x48c] sm:$0xff]
    %v580 = vld [vmem:[#allocation8 + $0x494] sm:$0xf]
    %v581 = vld [vmem:[#allocation8 + $0x498] sm:$0xff]
    %v582 = vld [vmem:[#allocation8 + $0x4a0] sm:$0xff]
    %v583 = vld [vmem:[#allocation8 + $0x4a8] sm:$0xff]
    %v584 = vld [vmem:[#allocation8 + $0x4b0] sm:$0xf]
    %v585 = vld [vmem:[#allocation8 + $0x4b4] sm:$0xff]
    %v586 = vld [vmem:[#allocation8 + $0x4bc] sm:$0xff]
    %v587 = vld [vmem:[#allocation8 + $0x4c4] sm:$0xff]
    %v588 = vld [vmem:[#allocation8 + $0x4cc] sm:$0xf]
    %v589 = vld [vmem:[#allocation8 + $0x4d0] sm:$0xff]
    %v590 = vld [vmem:[#allocation8 + $0x4d8] sm:$0xff]
    %v591 = vld [vmem:[#allocation8 + $0x4e0] sm:$0xff]
    %v592 = vld [vmem:[#allocation8 + $0x4e8] sm:$0xf]
    %v593 = vld [vmem:[#allocation8 + $0x4ec] sm:$0xff]
    %v594 = vld [vmem:[#allocation8 + $0x4f4] sm:$0xff]
    %v595 = vld [vmem:[#allocation8 + $0x4fc] sm:$0xff]
    %v596 = vld [vmem:[#allocation8 + $0x504] sm:$0xf]
    %v597 = vld [vmem:[#allocation8 + $0x508] sm:$0xff]
    %v598 = vld [vmem:[#allocation8 + $0x510] sm:$0xff]
    %v599 = vld [vmem:[#allocation8 + $0x518] sm:$0xff]
    %v600 = vld [vmem:[#allocation8 + $0x520] sm:$0xf]
    %v601 = vld [vmem:[#allocation8 + $0x524] sm:$0xff]
    %v602 = vld [vmem:[#allocation8 + $0x52c] sm:$0xff]
    %v603 = vld [vmem:[#allocation8 + $0x534] sm:$0xff]
    %v604 = vld [vmem:[#allocation8 + $0x53c] sm:$0xf]
    %v605 = vld [vmem:[#allocation10] sm:$0xff]
    %v607 = vlaneseq
    %v608 = vshrl.u32 %v607, 7
    %v609 = vsub.s32 0, %v608
    %v610 = vrot.slane %v605, %v609
    %v611 = vlaneseq
    %v612 = vshrl.u32 %v611, 7
    %v613 = vsub.s32 1, %v612
    %v614 = vrot.slane %v605, %v613
    %v615 = vlaneseq
    %v616 = vshrl.u32 %v615, 7
    %v617 = vsub.s32 2, %v616
    %v618 = vrot.slane %v605, %v617
    %v619 = vlaneseq
    %v620 = vshrl.u32 %v619, 7
    %v621 = vsub.s32 3, %v620
    %v622 = vrot.slane %v605, %v621
    %v623 = vlaneseq
    %v624 = vshrl.u32 %v623, 7
    %v625 = vsub.s32 4, %v624
    %v626 = vrot.slane %v605, %v625
    %v627 = vlaneseq
    %v628 = vshrl.u32 %v627, 7
    %v629 = vsub.s32 5, %v628
    %v630 = vrot.slane %v605, %v629
    %v631 = vlaneseq
    %v632 = vshrl.u32 %v631, 7
    %v633 = vsub.s32 6, %v632
    %v634 = vrot.slane %v605, %v633
    %v834 = vunpack.c.l.b16 %v413
    %v835 = vunpack.c.h.b16 %v413
    %v836 = vunpack.c.l.b16 %v414
    %v837 = vunpack.c.h.b16 %v414
    %v838 = vunpack.c.l.b16 %v415
    %v839 = vunpack.c.h.b16 %v415
    %v840 = vunpack.c.l.b16 %v416
    %v841 = vunpack.c.l.b16 %v417
    %v842 = vunpack.c.h.b16 %v417
    %v843 = vunpack.c.l.b16 %v418
    %v844 = vunpack.c.h.b16 %v418
    %v845 = vunpack.c.l.b16 %v419
    %v846 = vunpack.c.h.b16 %v419
    %v847 = vunpack.c.l.b16 %v420
    %v848 = vunpack.c.l.b16 %v421
    %v849 = vunpack.c.h.b16 %v421
    %v850 = vunpack.c.l.b16 %v422
    %v851 = vunpack.c.h.b16 %v422
    %v852 = vunpack.c.l.b16 %v423
    %v853 = vunpack.c.h.b16 %v423
    %v854 = vunpack.c.l.b16 %v424
    %v855 = vunpack.c.l.b16 %v425
    %v856 = vunpack.c.h.b16 %v425
    %v857 = vunpack.c.l.b16 %v426
    %v858 = vunpack.c.h.b16 %v426
    %v859 = vunpack.c.l.b16 %v427
    %v860 = vunpack.c.h.b16 %v427
    %v861 = vunpack.c.l.b16 %v428
    %v862 = vunpack.c.l.b16 %v429
    %v863 = vunpack.c.h.b16 %v429
    %v864 = vunpack.c.l.b16 %v430
    %v865 = vunpack.c.h.b16 %v430
    %v866 = vunpack.c.l.b16 %v431
    %v867 = vunpack.c.h.b16 %v431
    %v868 = vunpack.c.l.b16 %v432
    %v869 = vunpack.c.l.b16 %v433
    %v870 = vunpack.c.h.b16 %v433
    %v871 = vunpack.c.l.b16 %v434
    %v872 = vunpack.c.h.b16 %v434
    %v873 = vunpack.c.l.b16 %v435
    %v874 = vunpack.c.h.b16 %v435
    %v875 = vunpack.c.l.b16 %v436
    %v876 = vunpack.c.l.b16 %v437
    %v877 = vunpack.c.h.b16 %v437
    %v878 = vunpack.c.l.b16 %v438
    %v879 = vunpack.c.h.b16 %v438
    %v880 = vunpack.c.l.b16 %v439
    %v881 = vunpack.c.h.b16 %v439
    %v882 = vunpack.c.l.b16 %v440
    %v883 = vunpack.c.l.b16 %v441
    %v884 = vunpack.c.h.b16 %v441
    %v885 = vunpack.c.l.b16 %v442
    %v886 = vunpack.c.h.b16 %v442
    %v887 = vunpack.c.l.b16 %v443
    %v888 = vunpack.c.h.b16 %v443
    %v889 = vunpack.c.l.b16 %v444
    %v890 = vunpack.c.l.b16 %v445
    %v891 = vunpack.c.h.b16 %v445
    %v892 = vunpack.c.l.b16 %v446
    %v893 = vunpack.c.h.b16 %v446
    %v894 = vunpack.c.l.b16 %v447
    %v895 = vunpack.c.h.b16 %v447
    %v896 = vunpack.c.l.b16 %v448
    %v897 = vunpack.c.l.b16 %v449
    %v898 = vunpack.c.h.b16 %v449
    %v899 = vunpack.c.l.b16 %v450
    %v900 = vunpack.c.h.b16 %v450
    %v901 = vunpack.c.l.b16 %v451
    %v902 = vunpack.c.h.b16 %v451
    %v903 = vunpack.c.l.b16 %v452
    %v904 = vunpack.c.l.b16 %v453
    %v905 = vunpack.c.h.b16 %v453
    %v906 = vunpack.c.l.b16 %v454
    %v907 = vunpack.c.h.b16 %v454
    %v908 = vunpack.c.l.b16 %v455
    %v909 = vunpack.c.h.b16 %v455
    %v910 = vunpack.c.l.b16 %v456
    %v911 = vunpack.c.l.b16 %v457
    %v912 = vunpack.c.h.b16 %v457
    %v913 = vunpack.c.l.b16 %v458
    %v914 = vunpack.c.h.b16 %v458
    %v915 = vunpack.c.l.b16 %v459
    %v916 = vunpack.c.h.b16 %v459
    %v917 = vunpack.c.l.b16 %v460
    %v918 = vunpack.c.l.b16 %v461
    %v919 = vunpack.c.h.b16 %v461
    %v920 = vunpack.c.l.b16 %v462
    %v921 = vunpack.c.h.b16 %v462
    %v922 = vunpack.c.l.b16 %v463
    %v923 = vunpack.c.h.b16 %v463
    %v924 = vunpack.c.l.b16 %v464
    %v925 = vunpack.c.l.b16 %v465
    %v926 = vunpack.c.h.b16 %v465
    %v927 = vunpack.c.l.b16 %v466
    %v928 = vunpack.c.h.b16 %v466
    %v929 = vunpack.c.l.b16 %v467
    %v930 = vunpack.c.h.b16 %v467
    %v931 = vunpack.c.l.b16 %v468
    %v932 = vunpack.c.l.b16 %v469
    %v933 = vunpack.c.h.b16 %v469
    %v934 = vunpack.c.l.b16 %v470
    %v935 = vunpack.c.h.b16 %v470
    %v936 = vunpack.c.l.b16 %v471
    %v937 = vunpack.c.h.b16 %v471
    %v938 = vunpack.c.l.b16 %v472
    %v939 = vunpack.c.l.b16 %v473
    %v940 = vunpack.c.h.b16 %v473
    %v941 = vunpack.c.l.b16 %v474
    %v942 = vunpack.c.h.b16 %v474
    %v943 = vunpack.c.l.b16 %v475
    %v944 = vunpack.c.h.b16 %v475
    %v945 = vunpack.c.l.b16 %v476
    %v946 = vunpack.c.l.b16 %v477
    %v947 = vunpack.c.h.b16 %v477
    %v948 = vunpack.c.l.b16 %v478
    %v949 = vunpack.c.h.b16 %v478
    %v950 = vunpack.c.l.b16 %v479
    %v951 = vunpack.c.h.b16 %v479
    %v952 = vunpack.c.l.b16 %v480
    %v953 = vunpack.c.l.b16 %v481
    %v954 = vunpack.c.h.b16 %v481
    %v955 = vunpack.c.l.b16 %v482
    %v956 = vunpack.c.h.b16 %v482
    %v957 = vunpack.c.l.b16 %v483
    %v958 = vunpack.c.h.b16 %v483
    %v959 = vunpack.c.l.b16 %v484
    %v960 = vunpack.c.l.b16 %v485
    %v961 = vunpack.c.h.b16 %v485
    %v962 = vunpack.c.l.b16 %v486
    %v963 = vunpack.c.h.b16 %v486
    %v964 = vunpack.c.l.b16 %v487
    %v965 = vunpack.c.h.b16 %v487
    %v966 = vunpack.c.l.b16 %v488
    %v967 = vunpack.c.l.b16 %v489
    %v968 = vunpack.c.h.b16 %v489
    %v969 = vunpack.c.l.b16 %v490
    %v970 = vunpack.c.h.b16 %v490
    %v971 = vunpack.c.l.b16 %v491
    %v972 = vunpack.c.h.b16 %v491
    %v973 = vunpack.c.l.b16 %v492
    %v974 = vunpack.c.l.b16 %v493
    %v975 = vunpack.c.h.b16 %v493
    %v976 = vunpack.c.l.b16 %v494
    %v977 = vunpack.c.h.b16 %v494
    %v978 = vunpack.c.l.b16 %v495
    %v979 = vunpack.c.h.b16 %v495
    %v980 = vunpack.c.l.b16 %v496
    %v981 = vunpack.c.l.b16 %v497
    %v982 = vunpack.c.h.b16 %v497
    %v983 = vunpack.c.l.b16 %v498
    %v984 = vunpack.c.h.b16 %v498
    %v985 = vunpack.c.l.b16 %v499
    %v986 = vunpack.c.h.b16 %v499
    %v987 = vunpack.c.l.b16 %v500
    %v988 = vunpack.c.l.b16 %v501
    %v989 = vunpack.c.h.b16 %v501
    %v990 = vunpack.c.l.b16 %v502
    %v991 = vunpack.c.h.b16 %v502
    %v992 = vunpack.c.l.b16 %v503
    %v993 = vunpack.c.h.b16 %v503
    %v994 = vunpack.c.l.b16 %v504
    %v995 = vunpack.c.l.b16 %v505
    %v996 = vunpack.c.h.b16 %v505
    %v997 = vunpack.c.l.b16 %v506
    %v998 = vunpack.c.h.b16 %v506
    %v999 = vunpack.c.l.b16 %v507
    %v1000 = vunpack.c.h.b16 %v507
    %v1001 = vunpack.c.l.b16 %v508
    %v1002 = vunpack.c.l.b16 %v509
    %v1003 = vunpack.c.h.b16 %v509
    %v1004 = vunpack.c.l.b16 %v510
    %v1005 = vunpack.c.h.b16 %v510
    %v1006 = vunpack.c.l.b16 %v511
    %v1007 = vunpack.c.h.b16 %v511
    %v1008 = vunpack.c.l.b16 %v512
    %v1009 = vunpack.c.l.b16 %v513
    %v1010 = vunpack.c.h.b16 %v513
    %v1011 = vunpack.c.l.b16 %v514
    %v1012 = vunpack.c.h.b16 %v514
    %v1013 = vunpack.c.l.b16 %v515
    %v1014 = vunpack.c.h.b16 %v515
    %v1015 = vunpack.c.l.b16 %v516
    %v1016 = vunpack.c.l.b16 %v517
    %v1017 = vunpack.c.h.b16 %v517
    %v1018 = vunpack.c.l.b16 %v518
    %v1019 = vunpack.c.h.b16 %v518
    %v1020 = vunpack.c.l.b16 %v519
    %v1021 = vunpack.c.h.b16 %v519
    %v1022 = vunpack.c.l.b16 %v520
    %v1023 = vunpack.c.l.b16 %v521
    %v1024 = vunpack.c.h.b16 %v521
    %v1025 = vunpack.c.l.b16 %v522
    %v1026 = vunpack.c.h.b16 %v522
    %v1027 = vunpack.c.l.b16 %v523
    %v1028 = vunpack.c.h.b16 %v523
    %v1029 = vunpack.c.l.b16 %v524
    %v1030 = vunpack.c.l.b16 %v525
    %v1031 = vunpack.c.h.b16 %v525
    %v1032 = vunpack.c.l.b16 %v526
    %v1033 = vunpack.c.h.b16 %v526
    %v1034 = vunpack.c.l.b16 %v527
    %v1035 = vunpack.c.h.b16 %v527
    %v1036 = vunpack.c.l.b16 %v528
    %v1037 = vunpack.c.l.b16 %v529
    %v1038 = vunpack.c.h.b16 %v529
    %v1039 = vunpack.c.l.b16 %v530
    %v1040 = vunpack.c.h.b16 %v530
    %v1041 = vunpack.c.l.b16 %v531
    %v1042 = vunpack.c.h.b16 %v531
    %v1043 = vunpack.c.l.b16 %v532
    %v1044 = vunpack.c.l.b16 %v533
    %v1045 = vunpack.c.h.b16 %v533
    %v1046 = vunpack.c.l.b16 %v534
    %v1047 = vunpack.c.h.b16 %v534
    %v1048 = vunpack.c.l.b16 %v535
    %v1049 = vunpack.c.h.b16 %v535
    %v1050 = vunpack.c.l.b16 %v536
    %v1051 = vunpack.c.l.b16 %v537
    %v1052 = vunpack.c.h.b16 %v537
    %v1053 = vunpack.c.l.b16 %v538
    %v1054 = vunpack.c.h.b16 %v538
    %v1055 = vunpack.c.l.b16 %v539
    %v1056 = vunpack.c.h.b16 %v539
    %v1057 = vunpack.c.l.b16 %v540
    %v1058 = vunpack.c.l.b16 %v541
    %v1059 = vunpack.c.h.b16 %v541
    %v1060 = vunpack.c.l.b16 %v542
    %v1061 = vunpack.c.h.b16 %v542
    %v1062 = vunpack.c.l.b16 %v543
    %v1063 = vunpack.c.h.b16 %v543
    %v1064 = vunpack.c.l.b16 %v544
    %v1065 = vunpack.c.l.b16 %v545
    %v1066 = vunpack.c.h.b16 %v545
    %v1067 = vunpack.c.l.b16 %v546
    %v1068 = vunpack.c.h.b16 %v546
    %v1069 = vunpack.c.l.b16 %v547
    %v1070 = vunpack.c.h.b16 %v547
    %v1071 = vunpack.c.l.b16 %v548
    %v1072 = vunpack.c.l.b16 %v549
    %v1073 = vunpack.c.h.b16 %v549
    %v1074 = vunpack.c.l.b16 %v550
    %v1075 = vunpack.c.h.b16 %v550
    %v1076 = vunpack.c.l.b16 %v551
    %v1077 = vunpack.c.h.b16 %v551
    %v1078 = vunpack.c.l.b16 %v552
    %v1079 = vunpack.c.l.b16 %v553
    %v1080 = vunpack.c.h.b16 %v553
    %v1081 = vunpack.c.l.b16 %v554
    %v1082 = vunpack.c.h.b16 %v554
    %v1083 = vunpack.c.l.b16 %v555
    %v1084 = vunpack.c.h.b16 %v555
    %v1085 = vunpack.c.l.b16 %v556
    %v1086 = vunpack.c.l.b16 %v557
    %v1087 = vunpack.c.h.b16 %v557
    %v1088 = vunpack.c.l.b16 %v558
    %v1089 = vunpack.c.h.b16 %v558
    %v1090 = vunpack.c.l.b16 %v559
    %v1091 = vunpack.c.h.b16 %v559
    %v1092 = vunpack.c.l.b16 %v560
    %v1093 = vunpack.c.l.b16 %v561
    %v1094 = vunpack.c.h.b16 %v561
    %v1095 = vunpack.c.l.b16 %v562
    %v1096 = vunpack.c.h.b16 %v562
    %v1097 = vunpack.c.l.b16 %v563
    %v1098 = vunpack.c.h.b16 %v563
    %v1099 = vunpack.c.l.b16 %v564
    %v1100 = vunpack.c.l.b16 %v565
    %v1101 = vunpack.c.h.b16 %v565
    %v1102 = vunpack.c.l.b16 %v566
    %v1103 = vunpack.c.h.b16 %v566
    %v1104 = vunpack.c.l.b16 %v567
    %v1105 = vunpack.c.h.b16 %v567
    %v1106 = vunpack.c.l.b16 %v568
    %v1107 = vunpack.c.l.b16 %v569
    %v1108 = vunpack.c.h.b16 %v569
    %v1109 = vunpack.c.l.b16 %v570
    %v1110 = vunpack.c.h.b16 %v570
    %v1111 = vunpack.c.l.b16 %v571
    %v1112 = vunpack.c.h.b16 %v571
    %v1113 = vunpack.c.l.b16 %v572
    %v1114 = vunpack.c.l.b16 %v573
    %v1115 = vunpack.c.h.b16 %v573
    %v1116 = vunpack.c.l.b16 %v574
    %v1117 = vunpack.c.h.b16 %v574
    %v1118 = vunpack.c.l.b16 %v575
    %v1119 = vunpack.c.h.b16 %v575
    %v1120 = vunpack.c.l.b16 %v576
    %v1121 = vunpack.c.l.b16 %v577
    %v1122 = vunpack.c.h.b16 %v577
    %v1123 = vunpack.c.l.b16 %v578
    %v1124 = vunpack.c.h.b16 %v578
    %v1125 = vunpack.c.l.b16 %v579
    %v1126 = vunpack.c.h.b16 %v579
    %v1127 = vunpack.c.l.b16 %v580
    %v1128 = vunpack.c.l.b16 %v581
    %v1129 = vunpack.c.h.b16 %v581
    %v1130 = vunpack.c.l.b16 %v582
    %v1131 = vunpack.c.h.b16 %v582
    %v1132 = vunpack.c.l.b16 %v583
    %v1133 = vunpack.c.h.b16 %v583
    %v1134 = vunpack.c.l.b16 %v584
    %v1135 = vunpack.c.l.b16 %v585
    %v1136 = vunpack.c.h.b16 %v585
    %v1137 = vunpack.c.l.b16 %v586
    %v1138 = vunpack.c.h.b16 %v586
    %v1139 = vunpack.c.l.b16 %v587
    %v1140 = vunpack.c.h.b16 %v587
    %v1141 = vunpack.c.l.b16 %v588
    %v1142 = vunpack.c.l.b16 %v589
    %v1143 = vunpack.c.h.b16 %v589
    %v1144 = vunpack.c.l.b16 %v590
    %v1145 = vunpack.c.h.b16 %v590
    %v1146 = vunpack.c.l.b16 %v591
    %v1147 = vunpack.c.h.b16 %v591
    %v1148 = vunpack.c.l.b16 %v592
    %v1149 = vunpack.c.l.b16 %v593
    %v1150 = vunpack.c.h.b16 %v593
    %v1151 = vunpack.c.l.b16 %v594
    %v1152 = vunpack.c.h.b16 %v594
    %v1153 = vunpack.c.l.b16 %v595
    %v1154 = vunpack.c.h.b16 %v595
    %v1155 = vunpack.c.l.b16 %v596
    %v1156 = vunpack.c.l.b16 %v597
    %v1157 = vunpack.c.h.b16 %v597
    %v1158 = vunpack.c.l.b16 %v598
    %v1159 = vunpack.c.h.b16 %v598
    %v1160 = vunpack.c.l.b16 %v599
    %v1161 = vunpack.c.h.b16 %v599
    %v1162 = vunpack.c.l.b16 %v600
    %v1163 = vunpack.c.l.b16 %v601
    %v1164 = vunpack.c.h.b16 %v601
    %v1165 = vunpack.c.l.b16 %v602
    %v1166 = vunpack.c.h.b16 %v602
    %v1167 = vunpack.c.l.b16 %v603
    %v1168 = vunpack.c.h.b16 %v603
    %v1169 = vunpack.c.l.b16 %v604
    %v1170 = vpack.c.b16 %v841, %v834
    %v1171 = vpack.c.b16 %v842, %v835
    %v1172 = vpack.c.b16 %v843, %v836
    %v1173 = vpack.c.b16 %v844, %v837
    %v1174 = vpack.c.b16 %v845, %v838
    %v1175 = vpack.c.b16 %v846, %v839
    %v1176 = vpack.c.b16 %v847, %v840
    %v1177 = vpack.c.b16 %v855, %v848
    %v1178 = vpack.c.b16 %v856, %v849
    %v1179 = vpack.c.b16 %v857, %v850
    %v1180 = vpack.c.b16 %v858, %v851
    %v1181 = vpack.c.b16 %v859, %v852
    %v1182 = vpack.c.b16 %v860, %v853
    %v1183 = vpack.c.b16 %v861, %v854
    %v1184 = vpack.c.b16 %v869, %v862
    %v1185 = vpack.c.b16 %v870, %v863
    %v1186 = vpack.c.b16 %v871, %v864
    %v1187 = vpack.c.b16 %v872, %v865
    %v1188 = vpack.c.b16 %v873, %v866
    %v1189 = vpack.c.b16 %v874, %v867
    %v1190 = vpack.c.b16 %v875, %v868
    %v1191 = vpack.c.b16 %v883, %v876
    %v1192 = vpack.c.b16 %v884, %v877
    %v1193 = vpack.c.b16 %v885, %v878
    %v1194 = vpack.c.b16 %v886, %v879
    %v1195 = vpack.c.b16 %v887, %v880
    %v1196 = vpack.c.b16 %v888, %v881
    %v1197 = vpack.c.b16 %v889, %v882
    %v1198 = vpack.c.b16 %v897, %v890
    %v1199 = vpack.c.b16 %v898, %v891
    %v1200 = vpack.c.b16 %v899, %v892
    %v1201 = vpack.c.b16 %v900, %v893
    %v1202 = vpack.c.b16 %v901, %v894
    %v1203 = vpack.c.b16 %v902, %v895
    %v1204 = vpack.c.b16 %v903, %v896
    %v1205 = vpack.c.b16 %v911, %v904
    %v1206 = vpack.c.b16 %v912, %v905
    %v1207 = vpack.c.b16 %v913, %v906
    %v1208 = vpack.c.b16 %v914, %v907
    %v1209 = vpack.c.b16 %v915, %v908
    %v1210 = vpack.c.b16 %v916, %v909
    %v1211 = vpack.c.b16 %v917, %v910
    %v1212 = vpack.c.b16 %v925, %v918
    %v1213 = vpack.c.b16 %v926, %v919
    %v1214 = vpack.c.b16 %v927, %v920
    %v1215 = vpack.c.b16 %v928, %v921
    %v1216 = vpack.c.b16 %v929, %v922
    %v1217 = vpack.c.b16 %v930, %v923
    %v1218 = vpack.c.b16 %v931, %v924
    %v1219 = vpack.c.b16 %v939, %v932
    %v1220 = vpack.c.b16 %v940, %v933
    %v1221 = vpack.c.b16 %v941, %v934
    %v1222 = vpack.c.b16 %v942, %v935
    %v1223 = vpack.c.b16 %v943, %v936
    %v1224 = vpack.c.b16 %v944, %v937
    %v1225 = vpack.c.b16 %v945, %v938
    %v1226 = vpack.c.b16 %v953, %v946
    %v1227 = vpack.c.b16 %v954, %v947
    %v1228 = vpack.c.b16 %v955, %v948
    %v1229 = vpack.c.b16 %v956, %v949
    %v1230 = vpack.c.b16 %v957, %v950
    %v1231 = vpack.c.b16 %v958, %v951
    %v1232 = vpack.c.b16 %v959, %v952
    %v1233 = vpack.c.b16 %v967, %v960
    %v1234 = vpack.c.b16 %v968, %v961
    %v1235 = vpack.c.b16 %v969, %v962
    %v1236 = vpack.c.b16 %v970, %v963
    %v1237 = vpack.c.b16 %v971, %v964
    %v1238 = vpack.c.b16 %v972, %v965
    %v1239 = vpack.c.b16 %v973, %v966
    %v1240 = vpack.c.b16 %v981, %v974
    %v1241 = vpack.c.b16 %v982, %v975
    %v1242 = vpack.c.b16 %v983, %v976
    %v1243 = vpack.c.b16 %v984, %v977
    %v1244 = vpack.c.b16 %v985, %v978
    %v1245 = vpack.c.b16 %v986, %v979
    %v1246 = vpack.c.b16 %v987, %v980
    %v1247 = vpack.c.b16 %v995, %v988
    %v1248 = vpack.c.b16 %v996, %v989
    %v1249 = vpack.c.b16 %v997, %v990
    %v1250 = vpack.c.b16 %v998, %v991
    %v1251 = vpack.c.b16 %v999, %v992
    %v1252 = vpack.c.b16 %v1000, %v993
    %v1253 = vpack.c.b16 %v1001, %v994
    %v1254 = vpack.c.b16 %v1009, %v1002
    %v1255 = vpack.c.b16 %v1010, %v1003
    %v1256 = vpack.c.b16 %v1011, %v1004
    %v1257 = vpack.c.b16 %v1012, %v1005
    %v1258 = vpack.c.b16 %v1013, %v1006
    %v1259 = vpack.c.b16 %v1014, %v1007
    %v1260 = vpack.c.b16 %v1015, %v1008
    %v1261 = vpack.c.b16 %v1023, %v1016
    %v1262 = vpack.c.b16 %v1024, %v1017
    %v1263 = vpack.c.b16 %v1025, %v1018
    %v1264 = vpack.c.b16 %v1026, %v1019
    %v1265 = vpack.c.b16 %v1027, %v1020
    %v1266 = vpack.c.b16 %v1028, %v1021
    %v1267 = vpack.c.b16 %v1029, %v1022
    %v1268 = vpack.c.b16 %v1037, %v1030
    %v1269 = vpack.c.b16 %v1038, %v1031
    %v1270 = vpack.c.b16 %v1039, %v1032
    %v1271 = vpack.c.b16 %v1040, %v1033
    %v1272 = vpack.c.b16 %v1041, %v1034
    %v1273 = vpack.c.b16 %v1042, %v1035
    %v1274 = vpack.c.b16 %v1043, %v1036
    %v1275 = vpack.c.b16 %v1051, %v1044
    %v1276 = vpack.c.b16 %v1052, %v1045
    %v1277 = vpack.c.b16 %v1053, %v1046
    %v1278 = vpack.c.b16 %v1054, %v1047
    %v1279 = vpack.c.b16 %v1055, %v1048
    %v1280 = vpack.c.b16 %v1056, %v1049
    %v1281 = vpack.c.b16 %v1057, %v1050
    %v1282 = vpack.c.b16 %v1065, %v1058
    %v1283 = vpack.c.b16 %v1066, %v1059
    %v1284 = vpack.c.b16 %v1067, %v1060
    %v1285 = vpack.c.b16 %v1068, %v1061
    %v1286 = vpack.c.b16 %v1069, %v1062
    %v1287 = vpack.c.b16 %v1070, %v1063
    %v1288 = vpack.c.b16 %v1071, %v1064
    %v1289 = vpack.c.b16 %v1079, %v1072
    %v1290 = vpack.c.b16 %v1080, %v1073
    %v1291 = vpack.c.b16 %v1081, %v1074
    %v1292 = vpack.c.b16 %v1082, %v1075
    %v1293 = vpack.c.b16 %v1083, %v1076
    %v1294 = vpack.c.b16 %v1084, %v1077
    %v1295 = vpack.c.b16 %v1085, %v1078
    %v1296 = vpack.c.b16 %v1093, %v1086
    %v1297 = vpack.c.b16 %v1094, %v1087
    %v1298 = vpack.c.b16 %v1095, %v1088
    %v1299 = vpack.c.b16 %v1096, %v1089
    %v1300 = vpack.c.b16 %v1097, %v1090
    %v1301 = vpack.c.b16 %v1098, %v1091
    %v1302 = vpack.c.b16 %v1099, %v1092
    %v1303 = vpack.c.b16 %v1107, %v1100
    %v1304 = vpack.c.b16 %v1108, %v1101
    %v1305 = vpack.c.b16 %v1109, %v1102
    %v1306 = vpack.c.b16 %v1110, %v1103
    %v1307 = vpack.c.b16 %v1111, %v1104
    %v1308 = vpack.c.b16 %v1112, %v1105
    %v1309 = vpack.c.b16 %v1113, %v1106
    %v1310 = vpack.c.b16 %v1121, %v1114
    %v1311 = vpack.c.b16 %v1122, %v1115
    %v1312 = vpack.c.b16 %v1123, %v1116
    %v1313 = vpack.c.b16 %v1124, %v1117
    %v1314 = vpack.c.b16 %v1125, %v1118
    %v1315 = vpack.c.b16 %v1126, %v1119
    %v1316 = vpack.c.b16 %v1127, %v1120
    %v1317 = vpack.c.b16 %v1135, %v1128
    %v1318 = vpack.c.b16 %v1136, %v1129
    %v1319 = vpack.c.b16 %v1137, %v1130
    %v1320 = vpack.c.b16 %v1138, %v1131
    %v1321 = vpack.c.b16 %v1139, %v1132
    %v1322 = vpack.c.b16 %v1140, %v1133
    %v1323 = vpack.c.b16 %v1141, %v1134
    %v1324 = vpack.c.b16 %v1149, %v1142
    %v1325 = vpack.c.b16 %v1150, %v1143
    %v1326 = vpack.c.b16 %v1151, %v1144
    %v1327 = vpack.c.b16 %v1152, %v1145
    %v1328 = vpack.c.b16 %v1153, %v1146
    %v1329 = vpack.c.b16 %v1154, %v1147
    %v1330 = vpack.c.b16 %v1155, %v1148
    %v1331 = vpack.c.b16 %v1163, %v1156
    %v1332 = vpack.c.b16 %v1164, %v1157
    %v1333 = vpack.c.b16 %v1165, %v1158
    %v1334 = vpack.c.b16 %v1166, %v1159
    %v1335 = vpack.c.b16 %v1167, %v1160
    %v1336 = vpack.c.b16 %v1168, %v1161
    %v1337 = vpack.c.b16 %v1169, %v1162
    %1506 = vmatprep.subr.bf16.mxu0 %v1171
    %1507 = vmatpush1.bf16.msra.mxu0 %v1170
    %1508 = vmatprep.subr.bf16.mxu0 %v1178
    %1509 = vmatpush1.bf16.msra.mxu0 %v1177
    %1510 = vmatprep.subr.bf16.mxu0 %v1185
    %1511 = vmatpush1.bf16.msra.mxu0 %v1184
    %1512 = vmatprep.subr.bf16.mxu0 %v1192
    %1513 = vmatpush1.bf16.msra.mxu0 %v1191
    %1514 = vmatprep.subr.bf16.mxu0 %v1199
    %1515 = vmatpush1.bf16.msra.mxu0 %v1198
    %1516 = vmatprep.subr.bf16.mxu0 %v1206
    %1517 = vmatpush1.bf16.msra.mxu0 %v1205
    %1518 = vmatprep.subr.bf16.mxu0 %v1213
    %1519 = vmatpush1.bf16.msra.mxu0 %v1212
    %1520 = vmatprep.subr.bf16.mxu0 %v1220
    %1521 = vmatpush1.bf16.msra.mxu0 %v1219
    %1522 = vmatprep.subr.bf16.mxu0 %v1227
    %1523 = vmatpush1.bf16.msra.mxu0 %v1226
    %1524 = vmatprep.subr.bf16.mxu0 %v1234
    %1525 = vmatpush1.bf16.msra.mxu0 %v1233
    %1526 = vmatprep.subr.bf16.mxu0 %v1241
    %1527 = vmatpush1.bf16.msra.mxu0 %v1240
    %1528 = vmatprep.subr.bf16.mxu0 %v1248
    %1529 = vmatpush1.bf16.msra.mxu0 %v1247
    %1530 = vmatprep.subr.bf16.mxu0 %v1255
    %1531 = vmatpush1.bf16.msra.mxu0 %v1254
    %1532 = vmatprep.subr.bf16.mxu0 %v1262
    %1533 = vmatpush1.bf16.msra.mxu0 %v1261
    %1534 = vmatprep.subr.bf16.mxu0 %v1269
    %1535 = vmatpush1.bf16.msra.mxu0 %v1268
    %1536 = vmatprep.subr.bf16.mxu0 %v1276
    %1537 = vmatpush1.bf16.msra.mxu0 %v1275
    %1538 = vmatprep.mubr.bf16.mxu0 %v411
    %1539 = vmatmul.mubr.bf16.gmra.mrb[0].mxu0 %v410
    %v1540 = vpop.f32.mrb[0].mxu0
    %v1541 = vadd.f32 %v610, %v1540
    %v1542 = vpop.f32.mrb[0].mxu0
    %v1543 = vadd.f32 %v614, %v1542
    %v1544 = vpop.f32.mrb[0].mxu0
    %v1545 = vpop.f32.mrb[0].mxu0
    %1546 = vdwg.mxu0
    %1547 = vmatprep.subr.bf16.mxu0 %v1283
    %1548 = vmatpush1.bf16.msra.mxu0 %v1282
    %1549 = vmatprep.subr.bf16.mxu0 %v1290
    %1550 = vmatpush1.bf16.msra.mxu0 %v1289
    %1551 = vmatprep.subr.bf16.mxu0 %v1297
    %1552 = vmatpush1.bf16.msra.mxu0 %v1296
    %1553 = vmatprep.subr.bf16.mxu0 %v1304
    %1554 = vmatpush1.bf16.msra.mxu0 %v1303
    %1555 = vmatprep.subr.bf16.mxu0 %v1311
    %1556 = vmatpush1.bf16.msra.mxu0 %v1310
    %1557 = vmatprep.subr.bf16.mxu0 %v1318
    %1558 = vmatpush1.bf16.msra.mxu0 %v1317
    %1559 = vmatprep.subr.bf16.mxu0 %v1325
    %1560 = vmatpush1.bf16.msra.mxu0 %v1324
    %1561 = vmatprep.subr.bf16.mxu0 %v1332
    %1562 = vmatpush1.bf16.msra.mxu0 %v1331
    %1563 = vmatprep.subr.bf16.mxu0 0
    %1564 = vmatpush1.bf16.msra.mxu0 0
    %1565 = vmatprep.subr.bf16.mxu0 0
    %1566 = vmatpush1.bf16.msra.mxu0 0
    %1567 = vmatprep.subr.bf16.mxu0 0
    %1568 = vmatpush1.bf16.msra.mxu0 0
    %1569 = vmatprep.subr.bf16.mxu0 0
    %1570 = vmatpush1.bf16.msra.mxu0 0
    %1571 = vmatprep.subr.bf16.mxu0 0
    %1572 = vmatpush1.bf16.msra.mxu0 0
    %1573 = vmatprep.subr.bf16.mxu0 0
    %1574 = vmatpush1.bf16.msra.mxu0 0
    %1575 = vmatprep.subr.bf16.mxu0 0
    %1576 = vmatpush1.bf16.msra.mxu0 0
    %1577 = vmatprep.subr.bf16.mxu0 0
    %1578 = vmatpush1.bf16.msra.mxu0 0
    %1579 = vmatprep.mubr.bf16.mxu0 0
    %1580 = vmatmul.mubr.bf16.gmra.mrb[0].mxu0 %v412
    %v1581 = vpop.f32.mrb[0].mxu0
    %v1582 = vadd.f32 %v1541, %v1581
    %v1583 = vpop.f32.mrb[0].mxu0
    %v1584 = vadd.f32 %v1543, %v1583
    %v1585 = vpop.f32.mrb[0].mxu0
    %v1586 = vpop.f32.mrb[0].mxu0
    %1587 = vdwg.mxu0
    %1588 = vmatprep.subr.bf16.mxu0 %v1173
    %1589 = vmatpush1.bf16.msra.mxu0 %v1172
    %1590 = vmatprep.subr.bf16.mxu0 %v1180
    %1591 = vmatpush1.bf16.msra.mxu0 %v1179
    %1592 = vmatprep.subr.bf16.mxu0 %v1187
    %1593 = vmatpush1.bf16.msra.mxu0 %v1186
    %1594 = vmatprep.subr.bf16.mxu0 %v1194
    %1595 = vmatpush1.bf16.msra.mxu0 %v1193
    %1596 = vmatprep.subr.bf16.mxu0 %v1201
    %1597 = vmatpush1.bf16.msra.mxu0 %v1200
    %1598 = vmatprep.subr.bf16.mxu0 %v1208
    %1599 = vmatpush1.bf16.msra.mxu0 %v1207
    %1600 = vmatprep.subr.bf16.mxu0 %v1215
    %1601 = vmatpush1.bf16.msra.mxu0 %v1214
    %1602 = vmatprep.subr.bf16.mxu0 %v1222
    %1603 = vmatpush1.bf16.msra.mxu0 %v1221
    %1604 = vmatprep.subr.bf16.mxu0 %v1229
    %1605 = vmatpush1.bf16.msra.mxu0 %v1228
    %1606 = vmatprep.subr.bf16.mxu0 %v1236
    %1607 = vmatpush1.bf16.msra.mxu0 %v1235
    %1608 = vmatprep.subr.bf16.mxu0 %v1243
    %1609 = vmatpush1.bf16.msra.mxu0 %v1242
    %1610 = vmatprep.subr.bf16.mxu0 %v1250
    %1611 = vmatpush1.bf16.msra.mxu0 %v1249
    %1612 = vmatprep.subr.bf16.mxu0 %v1257
    %1613 = vmatpush1.bf16.msra.mxu0 %v1256
    %1614 = vmatprep.subr.bf16.mxu0 %v1264
    %1615 = vmatpush1.bf16.msra.mxu0 %v1263
    %1616 = vmatprep.subr.bf16.mxu0 %v1271
    %1617 = vmatpush1.bf16.msra.mxu0 %v1270
    %1618 = vmatprep.subr.bf16.mxu0 %v1278
    %1619 = vmatpush1.bf16.msra.mxu0 %v1277
    %1620 = vmatprep.mubr.bf16.mxu0 %v411
    %1621 = vmatmul.mubr.bf16.gmra.mrb[0].mxu0 %v410
    %v1622 = vpop.f32.mrb[0].mxu0
    %v1623 = vadd.f32 %v618, %v1622
    %v1624 = vpop.f32.mrb[0].mxu0
    %v1625 = vadd.f32 %v622, %v1624
    %v1626 = vpop.f32.mrb[0].mxu0
    %v1627 = vpop.f32.mrb[0].mxu0
    %1628 = vdwg.mxu0
    %1629 = vmatprep.subr.bf16.mxu0 %v1285
    %1630 = vmatpush1.bf16.msra.mxu0 %v1284
    %1631 = vmatprep.subr.bf16.mxu0 %v1292
    %1632 = vmatpush1.bf16.msra.mxu0 %v1291
    %1633 = vmatprep.subr.bf16.mxu0 %v1299
    %1634 = vmatpush1.bf16.msra.mxu0 %v1298
    %1635 = vmatprep.subr.bf16.mxu0 %v1306
    %1636 = vmatpush1.bf16.msra.mxu0 %v1305
    %1637 = vmatprep.subr.bf16.mxu0 %v1313
    %1638 = vmatpush1.bf16.msra.mxu0 %v1312
    %1639 = vmatprep.subr.bf16.mxu0 %v1320
    %1640 = vmatpush1.bf16.msra.mxu0 %v1319
    %1641 = vmatprep.subr.bf16.mxu0 %v1327
    %1642 = vmatpush1.bf16.msra.mxu0 %v1326
    %1643 = vmatprep.subr.bf16.mxu0 %v1334
    %1644 = vmatpush1.bf16.msra.mxu0 %v1333
    %1645 = vmatprep.subr.bf16.mxu0 0
    %1646 = vmatpush1.bf16.msra.mxu0 0
    %1647 = vmatprep.subr.bf16.mxu0 0
    %1648 = vmatpush1.bf16.msra.mxu0 0
    %1649 = vmatprep.subr.bf16.mxu0 0
    %1650 = vmatpush1.bf16.msra.mxu0 0
    %1651 = vmatprep.subr.bf16.mxu0 0
    %1652 = vmatpush1.bf16.msra.mxu0 0
    %1653 = vmatprep.subr.bf16.mxu0 0
    %1654 = vmatpush1.bf16.msra.mxu0 0
    %1655 = vmatprep.subr.bf16.mxu0 0
    %1656 = vmatpush1.bf16.msra.mxu0 0
    %1657 = vmatprep.subr.bf16.mxu0 0
    %1658 = vmatpush1.bf16.msra.mxu0 0
    %1659 = vmatprep.subr.bf16.mxu0 0
    %1660 = vmatpush1.bf16.msra.mxu0 0
    %1661 = vmatprep.mubr.bf16.mxu0 0
    %1662 = vmatmul.mubr.bf16.gmra.mrb[0].mxu0 %v412
    %v1663 = vpop.f32.mrb[0].mxu0
    %v1664 = vadd.f32 %v1623, %v1663
    %v1665 = vpop.f32.mrb[0].mxu0
    %v1666 = vadd.f32 %v1625, %v1665
    %v1667 = vpop.f32.mrb[0].mxu0
    %v1668 = vpop.f32.mrb[0].mxu0
    %1669 = vdwg.mxu0
    %1670 = vmatprep.subr.bf16.mxu0 %v1175
    %1671 = vmatpush1.bf16.msra.mxu0 %v1174
    %1672 = vmatprep.subr.bf16.mxu0 %v1182
    %1673 = vmatpush1.bf16.msra.mxu0 %v1181
    %1674 = vmatprep.subr.bf16.mxu0 %v1189
    %1675 = vmatpush1.bf16.msra.mxu0 %v1188
    %1676 = vmatprep.subr.bf16.mxu0 %v1196
    %1677 = vmatpush1.bf16.msra.mxu0 %v1195
    %1678 = vmatprep.subr.bf16.mxu0 %v1203
    %1679 = vmatpush1.bf16.msra.mxu0 %v1202
    %1680 = vmatprep.subr.bf16.mxu0 %v1210
    %1681 = vmatpush1.bf16.msra.mxu0 %v1209
    %1682 = vmatprep.subr.bf16.mxu0 %v1217
    %1683 = vmatpush1.bf16.msra.mxu0 %v1216
    %1684 = vmatprep.subr.bf16.mxu0 %v1224
    %1685 = vmatpush1.bf16.msra.mxu0 %v1223
    %1686 = vmatprep.subr.bf16.mxu0 %v1231
    %1687 = vmatpush1.bf16.msra.mxu0 %v1230
    %1688 = vmatprep.subr.bf16.mxu0 %v1238
    %1689 = vmatpush1.bf16.msra.mxu0 %v1237
    %1690 = vmatprep.subr.bf16.mxu0 %v1245
    %1691 = vmatpush1.bf16.msra.mxu0 %v1244
    %1692 = vmatprep.subr.bf16.mxu0 %v1252
    %1693 = vmatpush1.bf16.msra.mxu0 %v1251
    %1694 = vmatprep.subr.bf16.mxu0 %v1259
    %1695 = vmatpush1.bf16.msra.mxu0 %v1258
    %1696 = vmatprep.subr.bf16.mxu0 %v1266
    %1697 = vmatpush1.bf16.msra.mxu0 %v1265
    %1698 = vmatprep.subr.bf16.mxu0 %v1273
    %1699 = vmatpush1.bf16.msra.mxu0 %v1272
    %1700 = vmatprep.subr.bf16.mxu0 %v1280
    %1701 = vmatpush1.bf16.msra.mxu0 %v1279
    %1702 = vmatprep.mubr.bf16.mxu0 %v411
    %1703 = vmatmul.mubr.bf16.gmra.mrb[0].mxu0 %v410
    %v1704 = vpop.f32.mrb[0].mxu0
    %v1705 = vadd.f32 %v626, %v1704
    %v1706 = vpop.f32.mrb[0].mxu0
    %v1707 = vadd.f32 %v630, %v1706
    %v1708 = vpop.f32.mrb[0].mxu0
    %v1709 = vpop.f32.mrb[0].mxu0
    %1710 = vdwg.mxu0
    %1711 = vmatprep.subr.bf16.mxu0 %v1287
    %1712 = vmatpush1.bf16.msra.mxu0 %v1286
    %1713 = vmatprep.subr.bf16.mxu0 %v1294
    %1714 = vmatpush1.bf16.msra.mxu0 %v1293
    %1715 = vmatprep.subr.bf16.mxu0 %v1301
    %1716 = vmatpush1.bf16.msra.mxu0 %v1300
    %1717 = vmatprep.subr.bf16.mxu0 %v1308
    %1718 = vmatpush1.bf16.msra.mxu0 %v1307
    %1719 = vmatprep.subr.bf16.mxu0 %v1315
    %1720 = vmatpush1.bf16.msra.mxu0 %v1314
    %1721 = vmatprep.subr.bf16.mxu0 %v1322
    %1722 = vmatpush1.bf16.msra.mxu0 %v1321
    %1723 = vmatprep.subr.bf16.mxu0 %v1329
    %1724 = vmatpush1.bf16.msra.mxu0 %v1328
    %1725 = vmatprep.subr.bf16.mxu0 %v1336
    %1726 = vmatpush1.bf16.msra.mxu0 %v1335
    %1727 = vmatprep.subr.bf16.mxu0 0
    %1728 = vmatpush1.bf16.msra.mxu0 0
    %1729 = vmatprep.subr.bf16.mxu0 0
    %1730 = vmatpush1.bf16.msra.mxu0 0
    %1731 = vmatprep.subr.bf16.mxu0 0
    %1732 = vmatpush1.bf16.msra.mxu0 0
    %1733 = vmatprep.subr.bf16.mxu0 0
    %1734 = vmatpush1.bf16.msra.mxu0 0
    %1735 = vmatprep.subr.bf16.mxu0 0
    %1736 = vmatpush1.bf16.msra.mxu0 0
    %1737 = vmatprep.subr.bf16.mxu0 0
    %1738 = vmatpush1.bf16.msra.mxu0 0
    %1739 = vmatprep.subr.bf16.mxu0 0
    %1740 = vmatpush1.bf16.msra.mxu0 0
    %1741 = vmatprep.subr.bf16.mxu0 0
    %1742 = vmatpush1.bf16.msra.mxu0 0
    %1743 = vmatprep.mubr.bf16.mxu0 0
    %1744 = vmatmul.mubr.bf16.gmra.mrb[0].mxu0 %v412
    %v1745 = vpop.f32.mrb[0].mxu0
    %v1746 = vadd.f32 %v1705, %v1745
    %v1747 = vpop.f32.mrb[0].mxu0
    %v1748 = vadd.f32 %v1707, %v1747
    %v1749 = vpop.f32.mrb[0].mxu0
    %v1750 = vpop.f32.mrb[0].mxu0
    %1751 = vdwg.mxu0
    %1752 = vmatprep.subr.bf16.mxu0 0
    %1753 = vmatpush1.bf16.msra.mxu0 %v1176
    %1754 = vmatprep.subr.bf16.mxu0 0
    %1755 = vmatpush1.bf16.msra.mxu0 %v1183
    %1756 = vmatprep.subr.bf16.mxu0 0
    %1757 = vmatpush1.bf16.msra.mxu0 %v1190
    %1758 = vmatprep.subr.bf16.mxu0 0
    %1759 = vmatpush1.bf16.msra.mxu0 %v1197
    %1760 = vmatprep.subr.bf16.mxu0 0
    %1761 = vmatpush1.bf16.msra.mxu0 %v1204
    %1762 = vmatprep.subr.bf16.mxu0 0
    %1763 = vmatpush1.bf16.msra.mxu0 %v1211
    %1764 = vmatprep.subr.bf16.mxu0 0
    %1765 = vmatpush1.bf16.msra.mxu0 %v1218
    %1766 = vmatprep.subr.bf16.mxu0 0
    %1767 = vmatpush1.bf16.msra.mxu0 %v1225
    %1768 = vmatprep.subr.bf16.mxu0 0
    %1769 = vmatpush1.bf16.msra.mxu0 %v1232
    %1770 = vmatprep.subr.bf16.mxu0 0
    %1771 = vmatpush1.bf16.msra.mxu0 %v1239
    %1772 = vmatprep.subr.bf16.mxu0 0
    %1773 = vmatpush1.bf16.msra.mxu0 %v1246
    %1774 = vmatprep.subr.bf16.mxu0 0
    %1775 = vmatpush1.bf16.msra.mxu0 %v1253
    %1776 = vmatprep.subr.bf16.mxu0 0
    %1777 = vmatpush1.bf16.msra.mxu0 %v1260
    %1778 = vmatprep.subr.bf16.mxu0 0
    %1779 = vmatpush1.bf16.msra.mxu0 %v1267
    %1780 = vmatprep.subr.bf16.mxu0 0
    %1781 = vmatpush1.bf16.msra.mxu0 %v1274
    %1782 = vmatprep.subr.bf16.mxu0 0
    %1783 = vmatpush1.bf16.msra.mxu0 %v1281
    %1784 = vmatprep.mubr.bf16.mxu0 %v411
    %1785 = vmatmul.mubr.bf16.gmra.mrb[0].mxu0 %v410
    %v1786 = vpop.f32.mrb[0].mxu0
    %v1787 = vadd.f32 %v634, %v1786
    %v1788 = vpop.f32.mrb[0].mxu0
    %v1789 = vpop.f32.mrb[0].mxu0
    %v1790 = vpop.f32.mrb[0].mxu0
    %1791 = vdwg.mxu0
    %1792 = vmatprep.subr.bf16.mxu0 0
    %1793 = vmatpush1.bf16.msra.mxu0 %v1288
    %1794 = vmatprep.subr.bf16.mxu0 0
    %1795 = vmatpush1.bf16.msra.mxu0 %v1295
    %1796 = vmatprep.subr.bf16.mxu0 0
    %1797 = vmatpush1.bf16.msra.mxu0 %v1302
    %1798 = vmatprep.subr.bf16.mxu0 0
    %1799 = vmatpush1.bf16.msra.mxu0 %v1309
    %1800 = vmatprep.subr.bf16.mxu0 0
    %1801 = vmatpush1.bf16.msra.mxu0 %v1316
    %1802 = vmatprep.subr.bf16.mxu0 0
    %1803 = vmatpush1.bf16.msra.mxu0 %v1323
    %1804 = vmatprep.subr.bf16.mxu0 0
    %1805 = vmatpush1.bf16.msra.mxu0 %v1330
    %1806 = vmatprep.subr.bf16.mxu0 0
    %1807 = vmatpush1.bf16.msra.mxu0 %v1337
    %1808 = vmatprep.subr.bf16.mxu0 0
    %1809 = vmatpush1.bf16.msra.mxu0 0
    %1810 = vmatprep.subr.bf16.mxu0 0
    %1811 = vmatpush1.bf16.msra.mxu0 0
    %1812 = vmatprep.subr.bf16.mxu0 0
    %1813 = vmatpush1.bf16.msra.mxu0 0
    %1814 = vmatprep.subr.bf16.mxu0 0
    %1815 = vmatpush1.bf16.msra.mxu0 0
    %1816 = vmatprep.subr.bf16.mxu0 0
    %1817 = vmatpush1.bf16.msra.mxu0 0
    %1818 = vmatprep.subr.bf16.mxu0 0
    %1819 = vmatpush1.bf16.msra.mxu0 0
    %1820 = vmatprep.subr.bf16.mxu0 0
    %1821 = vmatpush1.bf16.msra.mxu0 0
    %1822 = vmatprep.subr.bf16.mxu0 0
    %1823 = vmatpush1.bf16.msra.mxu0 0
    %1824 = vmatprep.mubr.bf16.mxu0 0
    %1825 = vmatmul.mubr.bf16.gmra.mrb[0].mxu0 %v412
    %v1826 = vpop.f32.mrb[0].mxu0
    %v1827 = vadd.f32 %v1787, %v1826
    %v1828 = vpop.f32.mrb[0].mxu0
    %v1829 = vpop.f32.mrb[0].mxu0
    %v1830 = vpop.f32.mrb[0].mxu0
    %1831 = vdwg.mxu0
    %v1832 = vmax.f32 %v1582, 0.0
    %v1833 = vmax.f32 %v1584, 0.0
    %v1834 = vmax.f32 %v1664, 0.0
    %v1835 = vmax.f32 %v1666, 0.0
    %v1836 = vmax.f32 %v1746, 0.0
    %v1837 = vmax.f32 %v1748, 0.0
    %v1838 = vmax.f32 %v1827, 0.0
    %v1839 = vpack.c.bf16 %v1832, %v1832
    %v1840 = vpack.c.bf16 %v1833, %v1833
    %v1841 = vpack.c.bf16 %v1834, %v1834
    %v1842 = vpack.c.bf16 %v1835, %v1835
    %v1843 = vpack.c.bf16 %v1836, %v1836
    %v1844 = vpack.c.bf16 %v1837, %v1837
    %v1845 = vpack.c.bf16 %v1838, %v1838
    %v1846 = vld [vmem:[#allocation11] sm:$0xff]
    %v1847 = vld [vmem:[#allocation11 + $0x8] sm:$0xff]
    %v1848 = vld [vmem:[#allocation11 + $0x10] sm:$0xff]
    %v1849 = vld [vmem:[#allocation11 + $0x18] sm:$0xff]
    %v1850 = vld [vmem:[#allocation11 + $0x20] sm:$0xff]
    %v1851 = vld [vmem:[#allocation11 + $0x28] sm:$0xff]
    %v1852 = vld [vmem:[#allocation11 + $0x30] sm:$0xf]
    %v1853 = vld [vmem:[#allocation11 + $0x34] sm:$0xff]
    %v1854 = vld [vmem:[#allocation11 + $0x3c] sm:$0xff]
    %v1855 = vld [vmem:[#allocation11 + $0x44] sm:$0xff]
    %v1856 = vld [vmem:[#allocation11 + $0x4c] sm:$0xff]
    %v1857 = vld [vmem:[#allocation11 + $0x54] sm:$0xff]
    %v1858 = vld [vmem:[#allocation11 + $0x5c] sm:$0xff]
    %v1859 = vld [vmem:[#allocation11 + $0x64] sm:$0xf]
    %v1860 = vld [vmem:[#allocation11 + $0x68] sm:$0xff]
    %v1861 = vld [vmem:[#allocation11 + $0x70] sm:$0xff]
    %v1862 = vld [vmem:[#allocation11 + $0x78] sm:$0xff]
    %v1863 = vld [vmem:[#allocation11 + $0x80] sm:$0xff]
    %v1864 = vld [vmem:[#allocation11 + $0x88] sm:$0xff]
    %v1865 = vld [vmem:[#allocation11 + $0x90] sm:$0xff]
    %v1866 = vld [vmem:[#allocation11 + $0x98] sm:$0xf]
    %v1867 = vld [vmem:[#allocation11 + $0x9c] sm:$0xff]
    %v1868 = vld [vmem:[#allocation11 + $0xa4] sm:$0xff]
    %v1869 = vld [vmem:[#allocation11 + $0xac] sm:$0xff]
    %v1870 = vld [vmem:[#allocation11 + $0xb4] sm:$0xff]
    %v1871 = vld [vmem:[#allocation11 + $0xbc] sm:$0xff]
    %v1872 = vld [vmem:[#allocation11 + $0xc4] sm:$0xff]
    %v1873 = vld [vmem:[#allocation11 + $0xcc] sm:$0xf]
    %v1874 = vld [vmem:[#allocation11 + $0xd0] sm:$0xff]
    %v1875 = vld [vmem:[#allocation11 + $0xd8] sm:$0xff]
    %v1876 = vld [vmem:[#allocation11 + $0xe0] sm:$0xff]
    %v1877 = vld [vmem:[#allocation11 + $0xe8] sm:$0xff]
    %v1878 = vld [vmem:[#allocation11 + $0xf0] sm:$0xff]
    %v1879 = vld [vmem:[#allocation11 + $0xf8] sm:$0xff]
    %v1880 = vld [vmem:[#allocation11 + $0x100] sm:$0xf]
    %v1881 = vld [vmem:[#allocation11 + $0x104] sm:$0xff]
    %v1882 = vld [vmem:[#allocation11 + $0x10c] sm:$0xff]
    %v1883 = vld [vmem:[#allocation11 + $0x114] sm:$0xff]
    %v1884 = vld [vmem:[#allocation11 + $0x11c] sm:$0xff]
    %v1885 = vld [vmem:[#allocation11 + $0x124] sm:$0xff]
    %v1886 = vld [vmem:[#allocation11 + $0x12c] sm:$0xff]
    %v1887 = vld [vmem:[#allocation11 + $0x134] sm:$0xf]
    %v1888 = vld [vmem:[#allocation11 + $0x138] sm:$0xff]
    %v1889 = vld [vmem:[#allocation11 + $0x140] sm:$0xff]
    %v1890 = vld [vmem:[#allocation11 + $0x148] sm:$0xff]
    %v1891 = vld [vmem:[#allocation11 + $0x150] sm:$0xff]
    %v1892 = vld [vmem:[#allocation11 + $0x158] sm:$0xff]
    %v1893 = vld [vmem:[#allocation11 + $0x160] sm:$0xff]
    %v1894 = vld [vmem:[#allocation11 + $0x168] sm:$0xf]
    %v1895 = vld [vmem:[#allocation11 + $0x16c] sm:$0xff]
    %v1896 = vld [vmem:[#allocation11 + $0x174] sm:$0xff]
    %v1897 = vld [vmem:[#allocation11 + $0x17c] sm:$0xff]
    %v1898 = vld [vmem:[#allocation11 + $0x184] sm:$0xff]
    %v1899 = vld [vmem:[#allocation11 + $0x18c] sm:$0xff]
    %v1900 = vld [vmem:[#allocation11 + $0x194] sm:$0xff]
    %v1901 = vld [vmem:[#allocation11 + $0x19c] sm:$0xf]
    %v1902 = vld [vmem:[#allocation11 + $0x1a0] sm:$0xff]
    %v1903 = vld [vmem:[#allocation11 + $0x1a8] sm:$0xff]
    %v1904 = vld [vmem:[#allocation11 + $0x1b0] sm:$0xff]
    %v1905 = vld [vmem:[#allocation11 + $0x1b8] sm:$0xff]
    %v1906 = vld [vmem:[#allocation11 + $0x1c0] sm:$0xff]
    %v1907 = vld [vmem:[#allocation11 + $0x1c8] sm:$0xff]
    %v1908 = vld [vmem:[#allocation11 + $0x1d0] sm:$0xf]
    %v1909 = vld [vmem:[#allocation11 + $0x1d4] sm:$0xff]
    %v1910 = vld [vmem:[#allocation11 + $0x1dc] sm:$0xff]
    %v1911 = vld [vmem:[#allocation11 + $0x1e4] sm:$0xff]
    %v1912 = vld [vmem:[#allocation11 + $0x1ec] sm:$0xff]
    %v1913 = vld [vmem:[#allocation11 + $0x1f4] sm:$0xff]
    %v1914 = vld [vmem:[#allocation11 + $0x1fc] sm:$0xff]
    %v1915 = vld [vmem:[#allocation11 + $0x204] sm:$0xf]
    %v1916 = vld [vmem:[#allocation11 + $0x208] sm:$0xff]
    %v1917 = vld [vmem:[#allocation11 + $0x210] sm:$0xff]
    %v1918 = vld [vmem:[#allocation11 + $0x218] sm:$0xff]
    %v1919 = vld [vmem:[#allocation11 + $0x220] sm:$0xff]
    %v1920 = vld [vmem:[#allocation11 + $0x228] sm:$0xff]
    %v1921 = vld [vmem:[#allocation11 + $0x230] sm:$0xff]
    %v1922 = vld [vmem:[#allocation11 + $0x238] sm:$0xf]
    %v1923 = vld [vmem:[#allocation11 + $0x23c] sm:$0xff]
    %v1924 = vld [vmem:[#allocation11 + $0x244] sm:$0xff]
    %v1925 = vld [vmem:[#allocation11 + $0x24c] sm:$0xff]
    %v1926 = vld [vmem:[#allocation11 + $0x254] sm:$0xff]
    %v1927 = vld [vmem:[#allocation11 + $0x25c] sm:$0xff]
    %v1928 = vld [vmem:[#allocation11 + $0x264] sm:$0xff]
    %v1929 = vld [vmem:[#allocation11 + $0x26c] sm:$0xf]
    %v1930 = vld [vmem:[#allocation11 + $0x270] sm:$0xff]
    %v1931 = vld [vmem:[#allocation11 + $0x278] sm:$0xff]
    %v1932 = vld [vmem:[#allocation11 + $0x280] sm:$0xff]
    %v1933 = vld [vmem:[#allocation11 + $0x288] sm:$0xff]
    %v1934 = vld [vmem:[#allocation11 + $0x290] sm:$0xff]
    %v1935 = vld [vmem:[#allocation11 + $0x298] sm:$0xff]
    %v1936 = vld [vmem:[#allocation11 + $0x2a0] sm:$0xf]
    %v1937 = vld [vmem:[#allocation11 + $0x2a4] sm:$0xff]
    %v1938 = vld [vmem:[#allocation11 + $0x2ac] sm:$0xff]
    %v1939 = vld [vmem:[#allocation11 + $0x2b4] sm:$0xff]
    %v1940 = vld [vmem:[#allocation11 + $0x2bc] sm:$0xff]
    %v1941 = vld [vmem:[#allocation11 + $0x2c4] sm:$0xff]
    %v1942 = vld [vmem:[#allocation11 + $0x2cc] sm:$0xff]
    %v1943 = vld [vmem:[#allocation11 + $0x2d4] sm:$0xf]
    %v1944 = vld [vmem:[#allocation11 + $0x2d8] sm:$0xff]
    %v1945 = vld [vmem:[#allocation11 + $0x2e0] sm:$0xff]
    %v1946 = vld [vmem:[#allocation11 + $0x2e8] sm:$0xff]
    %v1947 = vld [vmem:[#allocation11 + $0x2f0] sm:$0xff]
    %v1948 = vld [vmem:[#allocation11 + $0x2f8] sm:$0xff]
    %v1949 = vld [vmem:[#allocation11 + $0x300] sm:$0xff]
    %v1950 = vld [vmem:[#allocation11 + $0x308] sm:$0xf]
    %v1951 = vld [vmem:[#allocation11 + $0x30c] sm:$0xff]
    %v1952 = vld [vmem:[#allocation11 + $0x314] sm:$0xff]
    %v1953 = vld [vmem:[#allocation11 + $0x31c] sm:$0xff]
    %v1954 = vld [vmem:[#allocation11 + $0x324] sm:$0xff]
    %v1955 = vld [vmem:[#allocation11 + $0x32c] sm:$0xff]
    %v1956 = vld [vmem:[#allocation11 + $0x334] sm:$0xff]
    %v1957 = vld [vmem:[#allocation11 + $0x33c] sm:$0xf]
    %v1958 = vld [vmem:[#allocation11 + $0x340] sm:$0xff]
    %v1959 = vld [vmem:[#allocation11 + $0x348] sm:$0xff]
    %v1960 = vld [vmem:[#allocation11 + $0x350] sm:$0xff]
    %v1961 = vld [vmem:[#allocation11 + $0x358] sm:$0xff]
    %v1962 = vld [vmem:[#allocation11 + $0x360] sm:$0xff]
    %v1963 = vld [vmem:[#allocation11 + $0x368] sm:$0xff]
    %v1964 = vld [vmem:[#allocation11 + $0x370] sm:$0xf]
    %v1965 = vld [vmem:[#allocation11 + $0x374] sm:$0xff]
    %v1966 = vld [vmem:[#allocation11 + $0x37c] sm:$0xff]
    %v1967 = vld [vmem:[#allocation11 + $0x384] sm:$0xff]
    %v1968 = vld [vmem:[#allocation11 + $0x38c] sm:$0xff]
    %v1969 = vld [vmem:[#allocation11 + $0x394] sm:$0xff]
    %v1970 = vld [vmem:[#allocation11 + $0x39c] sm:$0xff]
    %v1971 = vld [vmem:[#allocation11 + $0x3a4] sm:$0xf]
    %v1972 = vld [vmem:[#allocation11 + $0x3a8] sm:$0xff]
    %v1973 = vld [vmem:[#allocation11 + $0x3b0] sm:$0xff]
    %v1974 = vld [vmem:[#allocation11 + $0x3b8] sm:$0xff]
    %v1975 = vld [vmem:[#allocation11 + $0x3c0] sm:$0xff]
    %v1976 = vld [vmem:[#allocation11 + $0x3c8] sm:$0xff]
    %v1977 = vld [vmem:[#allocation11 + $0x3d0] sm:$0xff]
    %v1978 = vld [vmem:[#allocation11 + $0x3d8] sm:$0xf]
    %v1979 = vld [vmem:[#allocation11 + $0x3dc] sm:$0xff]
    %v1980 = vld [vmem:[#allocation11 + $0x3e4] sm:$0xff]
    %v1981 = vld [vmem:[#allocation11 + $0x3ec] sm:$0xff]
    %v1982 = vld [vmem:[#allocation11 + $0x3f4] sm:$0xff]
    %v1983 = vld [vmem:[#allocation11 + $0x3fc] sm:$0xff]
    %v1984 = vld [vmem:[#allocation11 + $0x404] sm:$0xff]
    %v1985 = vld [vmem:[#allocation11 + $0x40c] sm:$0xf]
    %v1986 = vld [vmem:[#allocation11 + $0x410] sm:$0xff]
    %v1987 = vld [vmem:[#allocation11 + $0x418] sm:$0xff]
    %v1988 = vld [vmem:[#allocation11 + $0x420] sm:$0xff]
    %v1989 = vld [vmem:[#allocation11 + $0x428] sm:$0xff]
    %v1990 = vld [vmem:[#allocation11 + $0x430] sm:$0xff]
    %v1991 = vld [vmem:[#allocation11 + $0x438] sm:$0xff]
    %v1992 = vld [vmem:[#allocation11 + $0x440] sm:$0xf]
    %v1993 = vld [vmem:[#allocation11 + $0x444] sm:$0xff]
    %v1994 = vld [vmem:[#allocation11 + $0x44c] sm:$0xff]
    %v1995 = vld [vmem:[#allocation11 + $0x454] sm:$0xff]
    %v1996 = vld [vmem:[#allocation11 + $0x45c] sm:$0xff]
    %v1997 = vld [vmem:[#allocation11 + $0x464] sm:$0xff]
    %v1998 = vld [vmem:[#allocation11 + $0x46c] sm:$0xff]
    %v1999 = vld [vmem:[#allocation11 + $0x474] sm:$0xf]
    %v2000 = vld [vmem:[#allocation11 + $0x478] sm:$0xff]
    %v2001 = vld [vmem:[#allocation11 + $0x480] sm:$0xff]
    %v2002 = vld [vmem:[#allocation11 + $0x488] sm:$0xff]
    %v2003 = vld [vmem:[#allocation11 + $0x490] sm:$0xff]
    %v2004 = vld [vmem:[#allocation11 + $0x498] sm:$0xff]
    %v2005 = vld [vmem:[#allocation11 + $0x4a0] sm:$0xff]
    %v2006 = vld [vmem:[#allocation11 + $0x4a8] sm:$0xf]
    %v2007 = vld [vmem:[#allocation11 + $0x4ac] sm:$0xff]
    %v2008 = vld [vmem:[#allocation11 + $0x4b4] sm:$0xff]
    %v2009 = vld [vmem:[#allocation11 + $0x4bc] sm:$0xff]
    %v2010 = vld [vmem:[#allocation11 + $0x4c4] sm:$0xff]
    %v2011 = vld [vmem:[#allocation11 + $0x4cc] sm:$0xff]
    %v2012 = vld [vmem:[#allocation11 + $0x4d4] sm:$0xff]
    %v2013 = vld [vmem:[#allocation11 + $0x4dc] sm:$0xf]
    %v2014 = vld [vmem:[#allocation11 + $0x4e0] sm:$0xff]
    %v2015 = vld [vmem:[#allocation11 + $0x4e8] sm:$0xff]
    %v2016 = vld [vmem:[#allocation11 + $0x4f0] sm:$0xff]
    %v2017 = vld [vmem:[#allocation11 + $0x4f8] sm:$0xff]
    %v2018 = vld [vmem:[#allocation11 + $0x500] sm:$0xff]
    %v2019 = vld [vmem:[#allocation11 + $0x508] sm:$0xff]
    %v2020 = vld [vmem:[#allocation11 + $0x510] sm:$0xf]
    %v2021 = vld [vmem:[#allocation11 + $0x514] sm:$0xff]
    %v2022 = vld [vmem:[#allocation11 + $0x51c] sm:$0xff]
    %v2023 = vld [vmem:[#allocation11 + $0x524] sm:$0xff]
    %v2024 = vld [vmem:[#allocation11 + $0x52c] sm:$0xff]
    %v2025 = vld [vmem:[#allocation11 + $0x534] sm:$0xff]
    %v2026 = vld [vmem:[#allocation11 + $0x53c] sm:$0xff]
    %v2027 = vld [vmem:[#allocation11 + $0x544] sm:$0xf]
    %v2028 = vld [vmem:[#allocation11 + $0x548] sm:$0xff]
    %v2029 = vld [vmem:[#allocation11 + $0x550] sm:$0xff]
    %v2030 = vld [vmem:[#allocation11 + $0x558] sm:$0xff]
    %v2031 = vld [vmem:[#allocation11 + $0x560] sm:$0xff]
    %v2032 = vld [vmem:[#allocation11 + $0x568] sm:$0xff]
    %v2033 = vld [vmem:[#allocation11 + $0x570] sm:$0xff]
    %v2034 = vld [vmem:[#allocation11 + $0x578] sm:$0xf]
    %v2035 = vld [vmem:[#allocation11 + $0x57c] sm:$0xff]
    %v2036 = vld [vmem:[#allocation11 + $0x584] sm:$0xff]
    %v2037 = vld [vmem:[#allocation11 + $0x58c] sm:$0xff]
    %v2038 = vld [vmem:[#allocation11 + $0x594] sm:$0xff]
    %v2039 = vld [vmem:[#allocation11 + $0x59c] sm:$0xff]
    %v2040 = vld [vmem:[#allocation11 + $0x5a4] sm:$0xff]
    %v2041 = vld [vmem:[#allocation11 + $0x5ac] sm:$0xf]
    %v2042 = vld [vmem:[#allocation11 + $0x5b0] sm:$0xff]
    %v2043 = vld [vmem:[#allocation11 + $0x5b8] sm:$0xff]
    %v2044 = vld [vmem:[#allocation11 + $0x5c0] sm:$0xff]
    %v2045 = vld [vmem:[#allocation11 + $0x5c8] sm:$0xff]
    %v2046 = vld [vmem:[#allocation11 + $0x5d0] sm:$0xff]
    %v2047 = vld [vmem:[#allocation11 + $0x5d8] sm:$0xff]
    %v2048 = vld [vmem:[#allocation11 + $0x5e0] sm:$0xf]
    %v2049 = vld [vmem:[#allocation11 + $0x5e4] sm:$0xff]
    %v2050 = vld [vmem:[#allocation11 + $0x5ec] sm:$0xff]
    %v2051 = vld [vmem:[#allocation11 + $0x5f4] sm:$0xff]
    %v2052 = vld [vmem:[#allocation11 + $0x5fc] sm:$0xff]
    %v2053 = vld [vmem:[#allocation11 + $0x604] sm:$0xff]
    %v2054 = vld [vmem:[#allocation11 + $0x60c] sm:$0xff]
    %v2055 = vld [vmem:[#allocation11 + $0x614] sm:$0xf]
    %v2056 = vld [vmem:[#allocation11 + $0x618] sm:$0xff]
    %v2057 = vld [vmem:[#allocation11 + $0x620] sm:$0xff]
    %v2058 = vld [vmem:[#allocation11 + $0x628] sm:$0xff]
    %v2059 = vld [vmem:[#allocation11 + $0x630] sm:$0xff]
    %v2060 = vld [vmem:[#allocation11 + $0x638] sm:$0xff]
    %v2061 = vld [vmem:[#allocation11 + $0x640] sm:$0xff]
    %v2062 = vld [vmem:[#allocation11 + $0x648] sm:$0xf]
    %v2063 = vld [vmem:[#allocation11 + $0x64c] sm:$0xff]
    %v2064 = vld [vmem:[#allocation11 + $0x654] sm:$0xff]
    %v2065 = vld [vmem:[#allocation11 + $0x65c] sm:$0xff]
    %v2066 = vld [vmem:[#allocation11 + $0x664] sm:$0xff]
    %v2067 = vld [vmem:[#allocation11 + $0x66c] sm:$0xff]
    %v2068 = vld [vmem:[#allocation11 + $0x674] sm:$0xff]
    %v2069 = vld [vmem:[#allocation11 + $0x67c] sm:$0xf]
    %v2070 = vld [vmem:[#allocation11 + $0x680] sm:$0xff]
    %v2071 = vld [vmem:[#allocation11 + $0x688] sm:$0xff]
    %v2072 = vld [vmem:[#allocation11 + $0x690] sm:$0xff]
    %v2073 = vld [vmem:[#allocation11 + $0x698] sm:$0xff]
    %v2074 = vld [vmem:[#allocation11 + $0x6a0] sm:$0xff]
    %v2075 = vld [vmem:[#allocation11 + $0x6a8] sm:$0xff]
    %v2076 = vld [vmem:[#allocation11 + $0x6b0] sm:$0xf]
    %v2077 = vld [vmem:[#allocation11 + $0x6b4] sm:$0xff]
    %v2078 = vld [vmem:[#allocation11 + $0x6bc] sm:$0xff]
    %v2079 = vld [vmem:[#allocation11 + $0x6c4] sm:$0xff]
    %v2080 = vld [vmem:[#allocation11 + $0x6cc] sm:$0xff]
    %v2081 = vld [vmem:[#allocation11 + $0x6d4] sm:$0xff]
    %v2082 = vld [vmem:[#allocation11 + $0x6dc] sm:$0xff]
    %v2083 = vld [vmem:[#allocation11 + $0x6e4] sm:$0xf]
    %v2084 = vld [vmem:[#allocation11 + $0x6e8] sm:$0xff]
    %v2085 = vld [vmem:[#allocation11 + $0x6f0] sm:$0xff]
    %v2086 = vld [vmem:[#allocation11 + $0x6f8] sm:$0xff]
    %v2087 = vld [vmem:[#allocation11 + $0x700] sm:$0xff]
    %v2088 = vld [vmem:[#allocation11 + $0x708] sm:$0xff]
    %v2089 = vld [vmem:[#allocation11 + $0x710] sm:$0xff]
    %v2090 = vld [vmem:[#allocation11 + $0x718] sm:$0xf]
    %v2091 = vld [vmem:[#allocation11 + $0x71c] sm:$0xff]
    %v2092 = vld [vmem:[#allocation11 + $0x724] sm:$0xff]
    %v2093 = vld [vmem:[#allocation11 + $0x72c] sm:$0xff]
    %v2094 = vld [vmem:[#allocation11 + $0x734] sm:$0xff]
    %v2095 = vld [vmem:[#allocation11 + $0x73c] sm:$0xff]
    %v2096 = vld [vmem:[#allocation11 + $0x744] sm:$0xff]
    %v2097 = vld [vmem:[#allocation11 + $0x74c] sm:$0xf]
    %v2098 = vld [vmem:[#allocation11 + $0x750] sm:$0xff]
    %v2099 = vld [vmem:[#allocation11 + $0x758] sm:$0xff]
    %v2100 = vld [vmem:[#allocation11 + $0x760] sm:$0xff]
    %v2101 = vld [vmem:[#allocation11 + $0x768] sm:$0xff]
    %v2102 = vld [vmem:[#allocation11 + $0x770] sm:$0xff]
    %v2103 = vld [vmem:[#allocation11 + $0x778] sm:$0xff]
    %v2104 = vld [vmem:[#allocation11 + $0x780] sm:$0xf]
    %v2105 = vld [vmem:[#allocation11 + $0x784] sm:$0xff]
    %v2106 = vld [vmem:[#allocation11 + $0x78c] sm:$0xff]
    %v2107 = vld [vmem:[#allocation11 + $0x794] sm:$0xff]
    %v2108 = vld [vmem:[#allocation11 + $0x79c] sm:$0xff]
    %v2109 = vld [vmem:[#allocation11 + $0x7a4] sm:$0xff]
    %v2110 = vld [vmem:[#allocation11 + $0x7ac] sm:$0xff]
    %v2111 = vld [vmem:[#allocation11 + $0x7b4] sm:$0xf]
    %v2112 = vld [vmem:[#allocation11 + $0x7b8] sm:$0xff]
    %v2113 = vld [vmem:[#allocation11 + $0x7c0] sm:$0xff]
    %v2114 = vld [vmem:[#allocation11 + $0x7c8] sm:$0xff]
    %v2115 = vld [vmem:[#allocation11 + $0x7d0] sm:$0xff]
    %v2116 = vld [vmem:[#allocation11 + $0x7d8] sm:$0xff]
    %v2117 = vld [vmem:[#allocation11 + $0x7e0] sm:$0xff]
    %v2118 = vld [vmem:[#allocation11 + $0x7e8] sm:$0xf]
    %v2119 = vld [vmem:[#allocation11 + $0x7ec] sm:$0xff]
    %v2120 = vld [vmem:[#allocation11 + $0x7f4] sm:$0xff]
    %v2121 = vld [vmem:[#allocation11 + $0x7fc] sm:$0xff]
    %v2122 = vld [vmem:[#allocation11 + $0x804] sm:$0xff]
    %v2123 = vld [vmem:[#allocation11 + $0x80c] sm:$0xff]
    %v2124 = vld [vmem:[#allocation11 + $0x814] sm:$0xff]
    %v2125 = vld [vmem:[#allocation11 + $0x81c] sm:$0xf]
    %v2126 = vld [vmem:[#allocation11 + $0x820] sm:$0xff]
    %v2127 = vld [vmem:[#allocation11 + $0x828] sm:$0xff]
    %v2128 = vld [vmem:[#allocation11 + $0x830] sm:$0xff]
    %v2129 = vld [vmem:[#allocation11 + $0x838] sm:$0xff]
    %v2130 = vld [vmem:[#allocation11 + $0x840] sm:$0xff]
    %v2131 = vld [vmem:[#allocation11 + $0x848] sm:$0xff]
    %v2132 = vld [vmem:[#allocation11 + $0x850] sm:$0xf]
    %v2133 = vld [vmem:[#allocation11 + $0x854] sm:$0xff]
    %v2134 = vld [vmem:[#allocation11 + $0x85c] sm:$0xff]
    %v2135 = vld [vmem:[#allocation11 + $0x864] sm:$0xff]
    %v2136 = vld [vmem:[#allocation11 + $0x86c] sm:$0xff]
    %v2137 = vld [vmem:[#allocation11 + $0x874] sm:$0xff]
    %v2138 = vld [vmem:[#allocation11 + $0x87c] sm:$0xff]
    %v2139 = vld [vmem:[#allocation11 + $0x884] sm:$0xf]
    %v2140 = vld [vmem:[#allocation11 + $0x888] sm:$0xff]
    %v2141 = vld [vmem:[#allocation11 + $0x890] sm:$0xff]
    %v2142 = vld [vmem:[#allocation11 + $0x898] sm:$0xff]
    %v2143 = vld [vmem:[#allocation11 + $0x8a0] sm:$0xff]
    %v2144 = vld [vmem:[#allocation11 + $0x8a8] sm:$0xff]
    %v2145 = vld [vmem:[#allocation11 + $0x8b0] sm:$0xff]
    %v2146 = vld [vmem:[#allocation11 + $0x8b8] sm:$0xf]
    %v2147 = vld [vmem:[#allocation11 + $0x8bc] sm:$0xff]
    %v2148 = vld [vmem:[#allocation11 + $0x8c4] sm:$0xff]
    %v2149 = vld [vmem:[#allocation11 + $0x8cc] sm:$0xff]
    %v2150 = vld [vmem:[#allocation11 + $0x8d4] sm:$0xff]
    %v2151 = vld [vmem:[#allocation11 + $0x8dc] sm:$0xff]
    %v2152 = vld [vmem:[#allocation11 + $0x8e4] sm:$0xff]
    %v2153 = vld [vmem:[#allocation11 + $0x8ec] sm:$0xf]
    %v2154 = vld [vmem:[#allocation11 + $0x8f0] sm:$0xff]
    %v2155 = vld [vmem:[#allocation11 + $0x8f8] sm:$0xff]
    %v2156 = vld [vmem:[#allocation11 + $0x900] sm:$0xff]
    %v2157 = vld [vmem:[#allocation11 + $0x908] sm:$0xff]
    %v2158 = vld [vmem:[#allocation11 + $0x910] sm:$0xff]
    %v2159 = vld [vmem:[#allocation11 + $0x918] sm:$0xff]
    %v2160 = vld [vmem:[#allocation11 + $0x920] sm:$0xf]
    %v2161 = vld [vmem:[#allocation11 + $0x924] sm:$0xff]
    %v2162 = vld [vmem:[#allocation11 + $0x92c] sm:$0xff]
    %v2163 = vld [vmem:[#allocation11 + $0x934] sm:$0xff]
    %v2164 = vld [vmem:[#allocation11 + $0x93c] sm:$0xff]
    %v2165 = vld [vmem:[#allocation11 + $0x944] sm:$0xff]
    %v2166 = vld [vmem:[#allocation11 + $0x94c] sm:$0xff]
    %v2167 = vld [vmem:[#allocation11 + $0x954] sm:$0xf]
    %v2168 = vld [vmem:[#allocation11 + $0x958] sm:$0xff]
    %v2169 = vld [vmem:[#allocation11 + $0x960] sm:$0xff]
    %v2170 = vld [vmem:[#allocation11 + $0x968] sm:$0xff]
    %v2171 = vld [vmem:[#allocation11 + $0x970] sm:$0xff]
    %v2172 = vld [vmem:[#allocation11 + $0x978] sm:$0xff]
    %v2173 = vld [vmem:[#allocation11 + $0x980] sm:$0xff]
    %v2174 = vld [vmem:[#allocation11 + $0x988] sm:$0xf]
    %v2175 = vld [vmem:[#allocation11 + $0x98c] sm:$0xff]
    %v2176 = vld [vmem:[#allocation11 + $0x994] sm:$0xff]
    %v2177 = vld [vmem:[#allocation11 + $0x99c] sm:$0xff]
    %v2178 = vld [vmem:[#allocation11 + $0x9a4] sm:$0xff]
    %v2179 = vld [vmem:[#allocation11 + $0x9ac] sm:$0xff]
    %v2180 = vld [vmem:[#allocation11 + $0x9b4] sm:$0xff]
    %v2181 = vld [vmem:[#allocation11 + $0x9bc] sm:$0xf]
    %v2182 = vld [vmem:[#allocation11 + $0x9c0] sm:$0xff]
    %v2183 = vld [vmem:[#allocation11 + $0x9c8] sm:$0xff]
    %v2184 = vld [vmem:[#allocation11 + $0x9d0] sm:$0xff]
    %v2185 = vld [vmem:[#allocation11 + $0x9d8] sm:$0xff]
    %v2186 = vld [vmem:[#allocation11 + $0x9e0] sm:$0xff]
    %v2187 = vld [vmem:[#allocation11 + $0x9e8] sm:$0xff]
    %v2188 = vld [vmem:[#allocation11 + $0x9f0] sm:$0xf]
    %v2189 = vld [vmem:[#allocation11 + $0x9f4] sm:$0xff]
    %v2190 = vld [vmem:[#allocation11 + $0x9fc] sm:$0xff]
    %v2191 = vld [vmem:[#allocation11 + $0xa04] sm:$0xff]
    %v2192 = vld [vmem:[#allocation11 + $0xa0c] sm:$0xff]
    %v2193 = vld [vmem:[#allocation11 + $0xa14] sm:$0xff]
    %v2194 = vld [vmem:[#allocation11 + $0xa1c] sm:$0xff]
    %v2195 = vld [vmem:[#allocation11 + $0xa24] sm:$0xf]
    %v2196 = vld [vmem:[#allocation11 + $0xa28] sm:$0xff]
    %v2197 = vld [vmem:[#allocation11 + $0xa30] sm:$0xff]
    %v2198 = vld [vmem:[#allocation11 + $0xa38] sm:$0xff]
    %v2199 = vld [vmem:[#allocation11 + $0xa40] sm:$0xff]
    %v2200 = vld [vmem:[#allocation11 + $0xa48] sm:$0xff]
    %v2201 = vld [vmem:[#allocation11 + $0xa50] sm:$0xff]
    %v2202 = vld [vmem:[#allocation11 + $0xa58] sm:$0xf]
    %v2203 = vld [vmem:[#allocation11 + $0xa5c] sm:$0xff]
    %v2204 = vld [vmem:[#allocation11 + $0xa64] sm:$0xff]
    %v2205 = vld [vmem:[#allocation11 + $0xa6c] sm:$0xff]
    %v2206 = vld [vmem:[#allocation11 + $0xa74] sm:$0xff]
    %v2207 = vld [vmem:[#allocation11 + $0xa7c] sm:$0xff]
    %v2208 = vld [vmem:[#allocation11 + $0xa84] sm:$0xff]
    %v2209 = vld [vmem:[#allocation11 + $0xa8c] sm:$0xf]
    %v2210 = vld [vmem:[#allocation11 + $0xa90] sm:$0xff]
    %v2211 = vld [vmem:[#allocation11 + $0xa98] sm:$0xff]
    %v2212 = vld [vmem:[#allocation11 + $0xaa0] sm:$0xff]
    %v2213 = vld [vmem:[#allocation11 + $0xaa8] sm:$0xff]
    %v2214 = vld [vmem:[#allocation11 + $0xab0] sm:$0xff]
    %v2215 = vld [vmem:[#allocation11 + $0xab8] sm:$0xff]
    %v2216 = vld [vmem:[#allocation11 + $0xac0] sm:$0xf]
    %v2217 = vld [vmem:[#allocation11 + $0xac4] sm:$0xff]
    %v2218 = vld [vmem:[#allocation11 + $0xacc] sm:$0xff]
    %v2219 = vld [vmem:[#allocation11 + $0xad4] sm:$0xff]
    %v2220 = vld [vmem:[#allocation11 + $0xadc] sm:$0xff]
    %v2221 = vld [vmem:[#allocation11 + $0xae4] sm:$0xff]
    %v2222 = vld [vmem:[#allocation11 + $0xaec] sm:$0xff]
    %v2223 = vld [vmem:[#allocation11 + $0xaf4] sm:$0xf]
    %v2224 = vld [vmem:[#allocation11 + $0xaf8] sm:$0xff]
    %v2225 = vld [vmem:[#allocation11 + $0xb00] sm:$0xff]
    %v2226 = vld [vmem:[#allocation11 + $0xb08] sm:$0xff]
    %v2227 = vld [vmem:[#allocation11 + $0xb10] sm:$0xff]
    %v2228 = vld [vmem:[#allocation11 + $0xb18] sm:$0xff]
    %v2229 = vld [vmem:[#allocation11 + $0xb20] sm:$0xff]
    %v2230 = vld [vmem:[#allocation11 + $0xb28] sm:$0xf]
    %v2231 = vld [vmem:[#allocation11 + $0xb2c] sm:$0xff]
    %v2232 = vld [vmem:[#allocation11 + $0xb34] sm:$0xff]
    %v2233 = vld [vmem:[#allocation11 + $0xb3c] sm:$0xff]
    %v2234 = vld [vmem:[#allocation11 + $0xb44] sm:$0xff]
    %v2235 = vld [vmem:[#allocation11 + $0xb4c] sm:$0xff]
    %v2236 = vld [vmem:[#allocation11 + $0xb54] sm:$0xff]
    %v2237 = vld [vmem:[#allocation11 + $0xb5c] sm:$0xf]
    %v2238 = vld [vmem:[#allocation11 + $0xb60] sm:$0xff]
    %v2239 = vld [vmem:[#allocation11 + $0xb68] sm:$0xff]
    %v2240 = vld [vmem:[#allocation11 + $0xb70] sm:$0xff]
    %v2241 = vld [vmem:[#allocation11 + $0xb78] sm:$0xff]
    %v2242 = vld [vmem:[#allocation11 + $0xb80] sm:$0xff]
    %v2243 = vld [vmem:[#allocation11 + $0xb88] sm:$0xff]
    %v2244 = vld [vmem:[#allocation11 + $0xb90] sm:$0xf]
    %v2245 = vld [vmem:[#allocation11 + $0xb94] sm:$0xff]
    %v2246 = vld [vmem:[#allocation11 + $0xb9c] sm:$0xff]
    %v2247 = vld [vmem:[#allocation11 + $0xba4] sm:$0xff]
    %v2248 = vld [vmem:[#allocation11 + $0xbac] sm:$0xff]
    %v2249 = vld [vmem:[#allocation11 + $0xbb4] sm:$0xff]
    %v2250 = vld [vmem:[#allocation11 + $0xbbc] sm:$0xff]
    %v2251 = vld [vmem:[#allocation11 + $0xbc4] sm:$0xf]
    %v2252 = vld [vmem:[#allocation11 + $0xbc8] sm:$0xff]
    %v2253 = vld [vmem:[#allocation11 + $0xbd0] sm:$0xff]
    %v2254 = vld [vmem:[#allocation11 + $0xbd8] sm:$0xff]
    %v2255 = vld [vmem:[#allocation11 + $0xbe0] sm:$0xff]
    %v2256 = vld [vmem:[#allocation11 + $0xbe8] sm:$0xff]
    %v2257 = vld [vmem:[#allocation11 + $0xbf0] sm:$0xff]
    %v2258 = vld [vmem:[#allocation11 + $0xbf8] sm:$0xf]
    %v2259 = vld [vmem:[#allocation11 + $0xbfc] sm:$0xff]
    %v2260 = vld [vmem:[#allocation11 + $0xc04] sm:$0xff]
    %v2261 = vld [vmem:[#allocation11 + $0xc0c] sm:$0xff]
    %v2262 = vld [vmem:[#allocation11 + $0xc14] sm:$0xff]
    %v2263 = vld [vmem:[#allocation11 + $0xc1c] sm:$0xff]
    %v2264 = vld [vmem:[#allocation11 + $0xc24] sm:$0xff]
    %v2265 = vld [vmem:[#allocation11 + $0xc2c] sm:$0xf]
    %v2266 = vld [vmem:[#allocation11 + $0xc30] sm:$0xff]
    %v2267 = vld [vmem:[#allocation11 + $0xc38] sm:$0xff]
    %v2268 = vld [vmem:[#allocation11 + $0xc40] sm:$0xff]
    %v2269 = vld [vmem:[#allocation11 + $0xc48] sm:$0xff]
    %v2270 = vld [vmem:[#allocation11 + $0xc50] sm:$0xff]
    %v2271 = vld [vmem:[#allocation11 + $0xc58] sm:$0xff]
    %v2272 = vld [vmem:[#allocation11 + $0xc60] sm:$0xf]
    %v2273 = vld [vmem:[#allocation11 + $0xc64] sm:$0xff]
    %v2274 = vld [vmem:[#allocation11 + $0xc6c] sm:$0xff]
    %v2275 = vld [vmem:[#allocation11 + $0xc74] sm:$0xff]
    %v2276 = vld [vmem:[#allocation11 + $0xc7c] sm:$0xff]
    %v2277 = vld [vmem:[#allocation11 + $0xc84] sm:$0xff]
    %v2278 = vld [vmem:[#allocation11 + $0xc8c] sm:$0xff]
    %v2279 = vld [vmem:[#allocation11 + $0xc94] sm:$0xf]
    %v2280 = vld [vmem:[#allocation11 + $0xc98] sm:$0xff]
    %v2281 = vld [vmem:[#allocation11 + $0xca0] sm:$0xff]
    %v2282 = vld [vmem:[#allocation11 + $0xca8] sm:$0xff]
    %v2283 = vld [vmem:[#allocation11 + $0xcb0] sm:$0xff]
    %v2284 = vld [vmem:[#allocation11 + $0xcb8] sm:$0xff]
    %v2285 = vld [vmem:[#allocation11 + $0xcc0] sm:$0xff]
    %v2286 = vld [vmem:[#allocation11 + $0xcc8] sm:$0xf]
    %v2287 = vld [vmem:[#allocation11 + $0xccc] sm:$0xff]
    %v2288 = vld [vmem:[#allocation11 + $0xcd4] sm:$0xff]
    %v2289 = vld [vmem:[#allocation11 + $0xcdc] sm:$0xff]
    %v2290 = vld [vmem:[#allocation11 + $0xce4] sm:$0xff]
    %v2291 = vld [vmem:[#allocation11 + $0xcec] sm:$0xff]
    %v2292 = vld [vmem:[#allocation11 + $0xcf4] sm:$0xff]
    %v2293 = vld [vmem:[#allocation11 + $0xcfc] sm:$0xf]
    %v2294 = vld [vmem:[#allocation11 + $0xd00] sm:$0xff]
    %v2295 = vld [vmem:[#allocation11 + $0xd08] sm:$0xff]
    %v2296 = vld [vmem:[#allocation11 + $0xd10] sm:$0xff]
    %v2297 = vld [vmem:[#allocation11 + $0xd18] sm:$0xff]
    %v2298 = vld [vmem:[#allocation11 + $0xd20] sm:$0xff]
    %v2299 = vld [vmem:[#allocation11 + $0xd28] sm:$0xff]
    %v2300 = vld [vmem:[#allocation11 + $0xd30] sm:$0xf]
    %v2301 = vld [vmem:[#allocation11 + $0xd34] sm:$0xff]
    %v2302 = vld [vmem:[#allocation11 + $0xd3c] sm:$0xff]
    %v2303 = vld [vmem:[#allocation11 + $0xd44] sm:$0xff]
    %v2304 = vld [vmem:[#allocation11 + $0xd4c] sm:$0xff]
    %v2305 = vld [vmem:[#allocation11 + $0xd54] sm:$0xff]
    %v2306 = vld [vmem:[#allocation11 + $0xd5c] sm:$0xff]
    %v2307 = vld [vmem:[#allocation11 + $0xd64] sm:$0xf]
    %v2308 = vld [vmem:[#allocation11 + $0xd68] sm:$0xff]
    %v2309 = vld [vmem:[#allocation11 + $0xd70] sm:$0xff]
    %v2310 = vld [vmem:[#allocation11 + $0xd78] sm:$0xff]
    %v2311 = vld [vmem:[#allocation11 + $0xd80] sm:$0xff]
    %v2312 = vld [vmem:[#allocation11 + $0xd88] sm:$0xff]
    %v2313 = vld [vmem:[#allocation11 + $0xd90] sm:$0xff]
    %v2314 = vld [vmem:[#allocation11 + $0xd98] sm:$0xf]
    %v2315 = vld [vmem:[#allocation11 + $0xd9c] sm:$0xff]
    %v2316 = vld [vmem:[#allocation11 + $0xda4] sm:$0xff]
    %v2317 = vld [vmem:[#allocation11 + $0xdac] sm:$0xff]
    %v2318 = vld [vmem:[#allocation11 + $0xdb4] sm:$0xff]
    %v2319 = vld [vmem:[#allocation11 + $0xdbc] sm:$0xff]
    %v2320 = vld [vmem:[#allocation11 + $0xdc4] sm:$0xff]
    %v2321 = vld [vmem:[#allocation11 + $0xdcc] sm:$0xf]
    %v2322 = vld [vmem:[#allocation11 + $0xdd0] sm:$0xff]
    %v2323 = vld [vmem:[#allocation11 + $0xdd8] sm:$0xff]
    %v2324 = vld [vmem:[#allocation11 + $0xde0] sm:$0xff]
    %v2325 = vld [vmem:[#allocation11 + $0xde8] sm:$0xff]
    %v2326 = vld [vmem:[#allocation11 + $0xdf0] sm:$0xff]
    %v2327 = vld [vmem:[#allocation11 + $0xdf8] sm:$0xff]
    %v2328 = vld [vmem:[#allocation11 + $0xe00] sm:$0xf]
    %v2329 = vld [vmem:[#allocation11 + $0xe04] sm:$0xff]
    %v2330 = vld [vmem:[#allocation11 + $0xe0c] sm:$0xff]
    %v2331 = vld [vmem:[#allocation11 + $0xe14] sm:$0xff]
    %v2332 = vld [vmem:[#allocation11 + $0xe1c] sm:$0xff]
    %v2333 = vld [vmem:[#allocation11 + $0xe24] sm:$0xff]
    %v2334 = vld [vmem:[#allocation11 + $0xe2c] sm:$0xff]
    %v2335 = vld [vmem:[#allocation11 + $0xe34] sm:$0xf]
    %v2336 = vld [vmem:[#allocation11 + $0xe38] sm:$0xff]
    %v2337 = vld [vmem:[#allocation11 + $0xe40] sm:$0xff]
    %v2338 = vld [vmem:[#allocation11 + $0xe48] sm:$0xff]
    %v2339 = vld [vmem:[#allocation11 + $0xe50] sm:$0xff]
    %v2340 = vld [vmem:[#allocation11 + $0xe58] sm:$0xff]
    %v2341 = vld [vmem:[#allocation11 + $0xe60] sm:$0xff]
    %v2342 = vld [vmem:[#allocation11 + $0xe68] sm:$0xf]
    %v2343 = vld [vmem:[#allocation11 + $0xe6c] sm:$0xff]
    %v2344 = vld [vmem:[#allocation11 + $0xe74] sm:$0xff]
    %v2345 = vld [vmem:[#allocation11 + $0xe7c] sm:$0xff]
    %v2346 = vld [vmem:[#allocation11 + $0xe84] sm:$0xff]
    %v2347 = vld [vmem:[#allocation11 + $0xe8c] sm:$0xff]
    %v2348 = vld [vmem:[#allocation11 + $0xe94] sm:$0xff]
    %v2349 = vld [vmem:[#allocation11 + $0xe9c] sm:$0xf]
    %v2350 = vld [vmem:[#allocation11 + $0xea0] sm:$0xff]
    %v2351 = vld [vmem:[#allocation11 + $0xea8] sm:$0xff]
    %v2352 = vld [vmem:[#allocation11 + $0xeb0] sm:$0xff]
    %v2353 = vld [vmem:[#allocation11 + $0xeb8] sm:$0xff]
    %v2354 = vld [vmem:[#allocation11 + $0xec0] sm:$0xff]
    %v2355 = vld [vmem:[#allocation11 + $0xec8] sm:$0xff]
    %v2356 = vld [vmem:[#allocation11 + $0xed0] sm:$0xf]
    %v2357 = vld [vmem:[#allocation11 + $0xed4] sm:$0xff]
    %v2358 = vld [vmem:[#allocation11 + $0xedc] sm:$0xff]
    %v2359 = vld [vmem:[#allocation11 + $0xee4] sm:$0xff]
    %v2360 = vld [vmem:[#allocation11 + $0xeec] sm:$0xff]
    %v2361 = vld [vmem:[#allocation11 + $0xef4] sm:$0xff]
    %v2362 = vld [vmem:[#allocation11 + $0xefc] sm:$0xff]
    %v2363 = vld [vmem:[#allocation11 + $0xf04] sm:$0xf]
    %v2364 = vld [vmem:[#allocation11 + $0xf08] sm:$0xff]
    %v2365 = vld [vmem:[#allocation11 + $0xf10] sm:$0xff]
    %v2366 = vld [vmem:[#allocation11 + $0xf18] sm:$0xff]
    %v2367 = vld [vmem:[#allocation11 + $0xf20] sm:$0xff]
    %v2368 = vld [vmem:[#allocation11 + $0xf28] sm:$0xff]
    %v2369 = vld [vmem:[#allocation11 + $0xf30] sm:$0xff]
    %v2370 = vld [vmem:[#allocation11 + $0xf38] sm:$0xf]
    %v2371 = vld [vmem:[#allocation11 + $0xf3c] sm:$0xff]
    %v2372 = vld [vmem:[#allocation11 + $0xf44] sm:$0xff]
    %v2373 = vld [vmem:[#allocation11 + $0xf4c] sm:$0xff]
    %v2374 = vld [vmem:[#allocation11 + $0xf54] sm:$0xff]
    %v2375 = vld [vmem:[#allocation11 + $0xf5c] sm:$0xff]
    %v2376 = vld [vmem:[#allocation11 + $0xf64] sm:$0xff]
    %v2377 = vld [vmem:[#allocation11 + $0xf6c] sm:$0xf]
    %v2378 = vld [vmem:[#allocation11 + $0xf70] sm:$0xff]
    %v2379 = vld [vmem:[#allocation11 + $0xf78] sm:$0xff]
    %v2380 = vld [vmem:[#allocation11 + $0xf80] sm:$0xff]
    %v2381 = vld [vmem:[#allocation11 + $0xf88] sm:$0xff]
    %v2382 = vld [vmem:[#allocation11 + $0xf90] sm:$0xff]
    %v2383 = vld [vmem:[#allocation11 + $0xf98] sm:$0xff]
    %v2384 = vld [vmem:[#allocation11 + $0xfa0] sm:$0xf]
    %v2385 = vld [vmem:[#allocation11 + $0xfa4] sm:$0xff]
    %v2386 = vld [vmem:[#allocation11 + $0xfac] sm:$0xff]
    %v2387 = vld [vmem:[#allocation11 + $0xfb4] sm:$0xff]
    %v2388 = vld [vmem:[#allocation11 + $0xfbc] sm:$0xff]
    %v2389 = vld [vmem:[#allocation11 + $0xfc4] sm:$0xff]
    %v2390 = vld [vmem:[#allocation11 + $0xfcc] sm:$0xff]
    %v2391 = vld [vmem:[#allocation11 + $0xfd4] sm:$0xf]
    %v2392 = vld [vmem:[#allocation11 + $0xfd8] sm:$0xff]
    %v2393 = vld [vmem:[#allocation11 + $0xfe0] sm:$0xff]
    %v2394 = vld [vmem:[#allocation11 + $0xfe8] sm:$0xff]
    %v2395 = vld [vmem:[#allocation11 + $0xff0] sm:$0xff]
    %v2396 = vld [vmem:[#allocation11 + $0xff8] sm:$0xff]
    %v2397 = vld [vmem:[#allocation11 + $0x1000] sm:$0xff]
    %v2398 = vld [vmem:[#allocation11 + $0x1008] sm:$0xf]
    %v2399 = vld [vmem:[#allocation11 + $0x100c] sm:$0xff]
    %v2400 = vld [vmem:[#allocation11 + $0x1014] sm:$0xff]
    %v2401 = vld [vmem:[#allocation11 + $0x101c] sm:$0xff]
    %v2402 = vld [vmem:[#allocation11 + $0x1024] sm:$0xff]
    %v2403 = vld [vmem:[#allocation11 + $0x102c] sm:$0xff]
    %v2404 = vld [vmem:[#allocation11 + $0x1034] sm:$0xff]
    %v2405 = vld [vmem:[#allocation11 + $0x103c] sm:$0xf]
    %v2406 = vld [vmem:[#allocation11 + $0x1040] sm:$0xff]
    %v2407 = vld [vmem:[#allocation11 + $0x1048] sm:$0xff]
    %v2408 = vld [vmem:[#allocation11 + $0x1050] sm:$0xff]
    %v2409 = vld [vmem:[#allocation11 + $0x1058] sm:$0xff]
    %v2410 = vld [vmem:[#allocation11 + $0x1060] sm:$0xff]
    %v2411 = vld [vmem:[#allocation11 + $0x1068] sm:$0xff]
    %v2412 = vld [vmem:[#allocation11 + $0x1070] sm:$0xf]
    %v2413 = vld [vmem:[#allocation11 + $0x1074] sm:$0xff]
    %v2414 = vld [vmem:[#allocation11 + $0x107c] sm:$0xff]
    %v2415 = vld [vmem:[#allocation11 + $0x1084] sm:$0xff]
    %v2416 = vld [vmem:[#allocation11 + $0x108c] sm:$0xff]
    %v2417 = vld [vmem:[#allocation11 + $0x1094] sm:$0xff]
    %v2418 = vld [vmem:[#allocation11 + $0x109c] sm:$0xff]
    %v2419 = vld [vmem:[#allocation11 + $0x10a4] sm:$0xf]
    %v2420 = vld [vmem:[#allocation11 + $0x10a8] sm:$0xff]
    %v2421 = vld [vmem:[#allocation11 + $0x10b0] sm:$0xff]
    %v2422 = vld [vmem:[#allocation11 + $0x10b8] sm:$0xff]
    %v2423 = vld [vmem:[#allocation11 + $0x10c0] sm:$0xff]
    %v2424 = vld [vmem:[#allocation11 + $0x10c8] sm:$0xff]
    %v2425 = vld [vmem:[#allocation11 + $0x10d0] sm:$0xff]
    %v2426 = vld [vmem:[#allocation11 + $0x10d8] sm:$0xf]
    %v2427 = vld [vmem:[#allocation11 + $0x10dc] sm:$0xff]
    %v2428 = vld [vmem:[#allocation11 + $0x10e4] sm:$0xff]
    %v2429 = vld [vmem:[#allocation11 + $0x10ec] sm:$0xff]
    %v2430 = vld [vmem:[#allocation11 + $0x10f4] sm:$0xff]
    %v2431 = vld [vmem:[#allocation11 + $0x10fc] sm:$0xff]
    %v2432 = vld [vmem:[#allocation11 + $0x1104] sm:$0xff]
    %v2433 = vld [vmem:[#allocation11 + $0x110c] sm:$0xf]
    %v2434 = vld [vmem:[#allocation11 + $0x1110] sm:$0xff]
    %v2435 = vld [vmem:[#allocation11 + $0x1118] sm:$0xff]
    %v2436 = vld [vmem:[#allocation11 + $0x1120] sm:$0xff]
    %v2437 = vld [vmem:[#allocation11 + $0x1128] sm:$0xff]
    %v2438 = vld [vmem:[#allocation11 + $0x1130] sm:$0xff]
    %v2439 = vld [vmem:[#allocation11 + $0x1138] sm:$0xff]
    %v2440 = vld [vmem:[#allocation11 + $0x1140] sm:$0xf]
    %v2441 = vld [vmem:[#allocation11 + $0x1144] sm:$0xff]
    %v2442 = vld [vmem:[#allocation11 + $0x114c] sm:$0xff]
    %v2443 = vld [vmem:[#allocation11 + $0x1154] sm:$0xff]
    %v2444 = vld [vmem:[#allocation11 + $0x115c] sm:$0xff]
    %v2445 = vld [vmem:[#allocation11 + $0x1164] sm:$0xff]
    %v2446 = vld [vmem:[#allocation11 + $0x116c] sm:$0xff]
    %v2447 = vld [vmem:[#allocation11 + $0x1174] sm:$0xf]
    %v2448 = vld [vmem:[#allocation11 + $0x1178] sm:$0xff]
    %v2449 = vld [vmem:[#allocation11 + $0x1180] sm:$0xff]
    %v2450 = vld [vmem:[#allocation11 + $0x1188] sm:$0xff]
    %v2451 = vld [vmem:[#allocation11 + $0x1190] sm:$0xff]
    %v2452 = vld [vmem:[#allocation11 + $0x1198] sm:$0xff]
    %v2453 = vld [vmem:[#allocation11 + $0x11a0] sm:$0xff]
    %v2454 = vld [vmem:[#allocation11 + $0x11a8] sm:$0xf]
    %v2455 = vld [vmem:[#allocation11 + $0x11ac] sm:$0xff]
    %v2456 = vld [vmem:[#allocation11 + $0x11b4] sm:$0xff]
    %v2457 = vld [vmem:[#allocation11 + $0x11bc] sm:$0xff]
    %v2458 = vld [vmem:[#allocation11 + $0x11c4] sm:$0xff]
    %v2459 = vld [vmem:[#allocation11 + $0x11cc] sm:$0xff]
    %v2460 = vld [vmem:[#allocation11 + $0x11d4] sm:$0xff]
    %v2461 = vld [vmem:[#allocation11 + $0x11dc] sm:$0xf]
    %v2462 = vld [vmem:[#allocation11 + $0x11e0] sm:$0xff]
    %v2463 = vld [vmem:[#allocation11 + $0x11e8] sm:$0xff]
    %v2464 = vld [vmem:[#allocation11 + $0x11f0] sm:$0xff]
    %v2465 = vld [vmem:[#allocation11 + $0x11f8] sm:$0xff]
    %v2466 = vld [vmem:[#allocation11 + $0x1200] sm:$0xff]
    %v2467 = vld [vmem:[#allocation11 + $0x1208] sm:$0xff]
    %v2468 = vld [vmem:[#allocation11 + $0x1210] sm:$0xf]
    %v2469 = vld [vmem:[#allocation11 + $0x1214] sm:$0xff]
    %v2470 = vld [vmem:[#allocation11 + $0x121c] sm:$0xff]
    %v2471 = vld [vmem:[#allocation11 + $0x1224] sm:$0xff]
    %v2472 = vld [vmem:[#allocation11 + $0x122c] sm:$0xff]
    %v2473 = vld [vmem:[#allocation11 + $0x1234] sm:$0xff]
    %v2474 = vld [vmem:[#allocation11 + $0x123c] sm:$0xff]
    %v2475 = vld [vmem:[#allocation11 + $0x1244] sm:$0xf]
    %v2476 = vld [vmem:[#allocation11 + $0x1248] sm:$0xff]
    %v2477 = vld [vmem:[#allocation11 + $0x1250] sm:$0xff]
    %v2478 = vld [vmem:[#allocation11 + $0x1258] sm:$0xff]
    %v2479 = vld [vmem:[#allocation11 + $0x1260] sm:$0xff]
    %v2480 = vld [vmem:[#allocation11 + $0x1268] sm:$0xff]
    %v2481 = vld [vmem:[#allocation11 + $0x1270] sm:$0xff]
    %v2482 = vld [vmem:[#allocation11 + $0x1278] sm:$0xf]
    %v2483 = vld [vmem:[#allocation11 + $0x127c] sm:$0xff]
    %v2484 = vld [vmem:[#allocation11 + $0x1284] sm:$0xff]
    %v2485 = vld [vmem:[#allocation11 + $0x128c] sm:$0xff]
    %v2486 = vld [vmem:[#allocation11 + $0x1294] sm:$0xff]
    %v2487 = vld [vmem:[#allocation11 + $0x129c] sm:$0xff]
    %v2488 = vld [vmem:[#allocation11 + $0x12a4] sm:$0xff]
    %v2489 = vld [vmem:[#allocation11 + $0x12ac] sm:$0xf]
    %v2490 = vld [vmem:[#allocation11 + $0x12b0] sm:$0xff]
    %v2491 = vld [vmem:[#allocation11 + $0x12b8] sm:$0xff]
    %v2492 = vld [vmem:[#allocation11 + $0x12c0] sm:$0xff]
    %v2493 = vld [vmem:[#allocation11 + $0x12c8] sm:$0xff]
    %v2494 = vld [vmem:[#allocation11 + $0x12d0] sm:$0xff]
    %v2495 = vld [vmem:[#allocation11 + $0x12d8] sm:$0xff]
    %v2496 = vld [vmem:[#allocation11 + $0x12e0] sm:$0xf]
    %v2497 = vld [vmem:[#allocation11 + $0x12e4] sm:$0xff]
    %v2498 = vld [vmem:[#allocation11 + $0x12ec] sm:$0xff]
    %v2499 = vld [vmem:[#allocation11 + $0x12f4] sm:$0xff]
    %v2500 = vld [vmem:[#allocation11 + $0x12fc] sm:$0xff]
    %v2501 = vld [vmem:[#allocation11 + $0x1304] sm:$0xff]
    %v2502 = vld [vmem:[#allocation11 + $0x130c] sm:$0xff]
    %v2503 = vld [vmem:[#allocation11 + $0x1314] sm:$0xf]
    %v2504 = vld [vmem:[#allocation11 + $0x1318] sm:$0xff]
    %v2505 = vld [vmem:[#allocation11 + $0x1320] sm:$0xff]
    %v2506 = vld [vmem:[#allocation11 + $0x1328] sm:$0xff]
    %v2507 = vld [vmem:[#allocation11 + $0x1330] sm:$0xff]
    %v2508 = vld [vmem:[#allocation11 + $0x1338] sm:$0xff]
    %v2509 = vld [vmem:[#allocation11 + $0x1340] sm:$0xff]
    %v2510 = vld [vmem:[#allocation11 + $0x1348] sm:$0xf]
    %v2511 = vld [vmem:[#allocation11 + $0x134c] sm:$0xff]
    %v2512 = vld [vmem:[#allocation11 + $0x1354] sm:$0xff]
    %v2513 = vld [vmem:[#allocation11 + $0x135c] sm:$0xff]
    %v2514 = vld [vmem:[#allocation11 + $0x1364] sm:$0xff]
    %v2515 = vld [vmem:[#allocation11 + $0x136c] sm:$0xff]
    %v2516 = vld [vmem:[#allocation11 + $0x1374] sm:$0xff]
    %v2517 = vld [vmem:[#allocation11 + $0x137c] sm:$0xf]
    %v2518 = vld [vmem:[#allocation11 + $0x1380] sm:$0xff]
    %v2519 = vld [vmem:[#allocation11 + $0x1388] sm:$0xff]
    %v2520 = vld [vmem:[#allocation11 + $0x1390] sm:$0xff]
    %v2521 = vld [vmem:[#allocation11 + $0x1398] sm:$0xff]
    %v2522 = vld [vmem:[#allocation11 + $0x13a0] sm:$0xff]
    %v2523 = vld [vmem:[#allocation11 + $0x13a8] sm:$0xff]
    %v2524 = vld [vmem:[#allocation11 + $0x13b0] sm:$0xf]
    %v2525 = vld [vmem:[#allocation11 + $0x13b4] sm:$0xff]
    %v2526 = vld [vmem:[#allocation11 + $0x13bc] sm:$0xff]
    %v2527 = vld [vmem:[#allocation11 + $0x13c4] sm:$0xff]
    %v2528 = vld [vmem:[#allocation11 + $0x13cc] sm:$0xff]
    %v2529 = vld [vmem:[#allocation11 + $0x13d4] sm:$0xff]
    %v2530 = vld [vmem:[#allocation11 + $0x13dc] sm:$0xff]
    %v2531 = vld [vmem:[#allocation11 + $0x13e4] sm:$0xf]
    %v2532 = vld [vmem:[#allocation11 + $0x13e8] sm:$0xff]
    %v2533 = vld [vmem:[#allocation11 + $0x13f0] sm:$0xff]
    %v2534 = vld [vmem:[#allocation11 + $0x13f8] sm:$0xff]
    %v2535 = vld [vmem:[#allocation11 + $0x1400] sm:$0xff]
    %v2536 = vld [vmem:[#allocation11 + $0x1408] sm:$0xff]
    %v2537 = vld [vmem:[#allocation11 + $0x1410] sm:$0xff]
    %v2538 = vld [vmem:[#allocation11 + $0x1418] sm:$0xf]
    %v2539 = vld [vmem:[#allocation11 + $0x141c] sm:$0xff]
    %v2540 = vld [vmem:[#allocation11 + $0x1424] sm:$0xff]
    %v2541 = vld [vmem:[#allocation11 + $0x142c] sm:$0xff]
    %v2542 = vld [vmem:[#allocation11 + $0x1434] sm:$0xff]
    %v2543 = vld [vmem:[#allocation11 + $0x143c] sm:$0xff]
    %v2544 = vld [vmem:[#allocation11 + $0x1444] sm:$0xff]
    %v2545 = vld [vmem:[#allocation11 + $0x144c] sm:$0xf]
    %v2546 = vld [vmem:[#allocation11 + $0x1450] sm:$0xff]
    %v2547 = vld [vmem:[#allocation11 + $0x1458] sm:$0xff]
    %v2548 = vld [vmem:[#allocation11 + $0x1460] sm:$0xff]
    %v2549 = vld [vmem:[#allocation11 + $0x1468] sm:$0xff]
    %v2550 = vld [vmem:[#allocation11 + $0x1470] sm:$0xff]
    %v2551 = vld [vmem:[#allocation11 + $0x1478] sm:$0xff]
    %v2552 = vld [vmem:[#allocation11 + $0x1480] sm:$0xf]
    %v2553 = vld [vmem:[#allocation11 + $0x1484] sm:$0xff]
    %v2554 = vld [vmem:[#allocation11 + $0x148c] sm:$0xff]
    %v2555 = vld [vmem:[#allocation11 + $0x1494] sm:$0xff]
    %v2556 = vld [vmem:[#allocation11 + $0x149c] sm:$0xff]
    %v2557 = vld [vmem:[#allocation11 + $0x14a4] sm:$0xff]
    %v2558 = vld [vmem:[#allocation11 + $0x14ac] sm:$0xff]
    %v2559 = vld [vmem:[#allocation11 + $0x14b4] sm:$0xf]
    %v2560 = vld [vmem:[#allocation11 + $0x14b8] sm:$0xff]
    %v2561 = vld [vmem:[#allocation11 + $0x14c0] sm:$0xff]
    %v2562 = vld [vmem:[#allocation11 + $0x14c8] sm:$0xff]
    %v2563 = vld [vmem:[#allocation11 + $0x14d0] sm:$0xff]
    %v2564 = vld [vmem:[#allocation11 + $0x14d8] sm:$0xff]
    %v2565 = vld [vmem:[#allocation11 + $0x14e0] sm:$0xff]
    %v2566 = vld [vmem:[#allocation11 + $0x14e8] sm:$0xf]
    %v2567 = vld [vmem:[#allocation11 + $0x14ec] sm:$0xff]
    %v2568 = vld [vmem:[#allocation11 + $0x14f4] sm:$0xff]
    %v2569 = vld [vmem:[#allocation11 + $0x14fc] sm:$0xff]
    %v2570 = vld [vmem:[#allocation11 + $0x1504] sm:$0xff]
    %v2571 = vld [vmem:[#allocation11 + $0x150c] sm:$0xff]
    %v2572 = vld [vmem:[#allocation11 + $0x1514] sm:$0xff]
    %v2573 = vld [vmem:[#allocation11 + $0x151c] sm:$0xf]
    %v2574 = vld [vmem:[#allocation11 + $0x1520] sm:$0xff]
    %v2575 = vld [vmem:[#allocation11 + $0x1528] sm:$0xff]
    %v2576 = vld [vmem:[#allocation11 + $0x1530] sm:$0xff]
    %v2577 = vld [vmem:[#allocation11 + $0x1538] sm:$0xff]
    %v2578 = vld [vmem:[#allocation11 + $0x1540] sm:$0xff]
    %v2579 = vld [vmem:[#allocation11 + $0x1548] sm:$0xff]
    %v2580 = vld [vmem:[#allocation11 + $0x1550] sm:$0xf]
    %v2581 = vld [vmem:[#allocation11 + $0x1554] sm:$0xff]
    %v2582 = vld [vmem:[#allocation11 + $0x155c] sm:$0xff]
    %v2583 = vld [vmem:[#allocation11 + $0x1564] sm:$0xff]
    %v2584 = vld [vmem:[#allocation11 + $0x156c] sm:$0xff]
    %v2585 = vld [vmem:[#allocation11 + $0x1574] sm:$0xff]
    %v2586 = vld [vmem:[#allocation11 + $0x157c] sm:$0xff]
    %v2587 = vld [vmem:[#allocation11 + $0x1584] sm:$0xf]
    %v2588 = vld [vmem:[#allocation11 + $0x1588] sm:$0xff]
    %v2589 = vld [vmem:[#allocation11 + $0x1590] sm:$0xff]
    %v2590 = vld [vmem:[#allocation11 + $0x1598] sm:$0xff]
    %v2591 = vld [vmem:[#allocation11 + $0x15a0] sm:$0xff]
    %v2592 = vld [vmem:[#allocation11 + $0x15a8] sm:$0xff]
    %v2593 = vld [vmem:[#allocation11 + $0x15b0] sm:$0xff]
    %v2594 = vld [vmem:[#allocation11 + $0x15b8] sm:$0xf]
    %v2595 = vld [vmem:[#allocation11 + $0x15bc] sm:$0xff]
    %v2596 = vld [vmem:[#allocation11 + $0x15c4] sm:$0xff]
    %v2597 = vld [vmem:[#allocation11 + $0x15cc] sm:$0xff]
    %v2598 = vld [vmem:[#allocation11 + $0x15d4] sm:$0xff]
    %v2599 = vld [vmem:[#allocation11 + $0x15dc] sm:$0xff]
    %v2600 = vld [vmem:[#allocation11 + $0x15e4] sm:$0xff]
    %v2601 = vld [vmem:[#allocation11 + $0x15ec] sm:$0xf]
    %v2602 = vld [vmem:[#allocation11 + $0x15f0] sm:$0xff]
    %v2603 = vld [vmem:[#allocation11 + $0x15f8] sm:$0xff]
    %v2604 = vld [vmem:[#allocation11 + $0x1600] sm:$0xff]
    %v2605 = vld [vmem:[#allocation11 + $0x1608] sm:$0xff]
    %v2606 = vld [vmem:[#allocation11 + $0x1610] sm:$0xff]
    %v2607 = vld [vmem:[#allocation11 + $0x1618] sm:$0xff]
    %v2608 = vld [vmem:[#allocation11 + $0x1620] sm:$0xf]
    %v2609 = vld [vmem:[#allocation11 + $0x1624] sm:$0xff]
    %v2610 = vld [vmem:[#allocation11 + $0x162c] sm:$0xff]
    %v2611 = vld [vmem:[#allocation11 + $0x1634] sm:$0xff]
    %v2612 = vld [vmem:[#allocation11 + $0x163c] sm:$0xff]
    %v2613 = vld [vmem:[#allocation11 + $0x1644] sm:$0xff]
    %v2614 = vld [vmem:[#allocation11 + $0x164c] sm:$0xff]
    %v2615 = vld [vmem:[#allocation11 + $0x1654] sm:$0xf]
    %v2616 = vld [vmem:[#allocation11 + $0x1658] sm:$0xff]
    %v2617 = vld [vmem:[#allocation11 + $0x1660] sm:$0xff]
    %v2618 = vld [vmem:[#allocation11 + $0x1668] sm:$0xff]
    %v2619 = vld [vmem:[#allocation11 + $0x1670] sm:$0xff]
    %v2620 = vld [vmem:[#allocation11 + $0x1678] sm:$0xff]
    %v2621 = vld [vmem:[#allocation11 + $0x1680] sm:$0xff]
    %v2622 = vld [vmem:[#allocation11 + $0x1688] sm:$0xf]
    %v2623 = vld [vmem:[#allocation11 + $0x168c] sm:$0xff]
    %v2624 = vld [vmem:[#allocation11 + $0x1694] sm:$0xff]
    %v2625 = vld [vmem:[#allocation11 + $0x169c] sm:$0xff]
    %v2626 = vld [vmem:[#allocation11 + $0x16a4] sm:$0xff]
    %v2627 = vld [vmem:[#allocation11 + $0x16ac] sm:$0xff]
    %v2628 = vld [vmem:[#allocation11 + $0x16b4] sm:$0xff]
    %v2629 = vld [vmem:[#allocation11 + $0x16bc] sm:$0xf]
    %v2630 = vld [vmem:[#allocation13] sm:$0xff]
    %v2631 = vld [vmem:[#allocation13 + $0x8] sm:$0x1f]
    %v2634 = vlaneseq
    %v2635 = vshrl.u32 %v2634, 7
    %v2636 = vsub.s32 0, %v2635
    %v2637 = vrot.slane %v2630, %v2636
    %v2638 = vlaneseq
    %v2639 = vshrl.u32 %v2638, 7
    %v2640 = vsub.s32 1, %v2639
    %v2641 = vrot.slane %v2630, %v2640
    %v2642 = vlaneseq
    %v2643 = vshrl.u32 %v2642, 7
    %v2644 = vsub.s32 2, %v2643
    %v2645 = vrot.slane %v2630, %v2644
    %v2646 = vlaneseq
    %v2647 = vshrl.u32 %v2646, 7
    %v2648 = vsub.s32 3, %v2647
    %v2649 = vrot.slane %v2630, %v2648
    %v2650 = vlaneseq
    %v2651 = vshrl.u32 %v2650, 7
    %v2652 = vsub.s32 4, %v2651
    %v2653 = vrot.slane %v2630, %v2652
    %v2654 = vlaneseq
    %v2655 = vshrl.u32 %v2654, 7
    %v2656 = vsub.s32 5, %v2655
    %v2657 = vrot.slane %v2630, %v2656
    %v2658 = vlaneseq
    %v2659 = vshrl.u32 %v2658, 7
    %v2660 = vsub.s32 6, %v2659
    %v2661 = vrot.slane %v2630, %v2660
    %v2662 = vlaneseq
    %v2663 = vshrl.u32 %v2662, 7
    %v2664 = vsub.s32 7, %v2663
    %v2665 = vrot.slane %v2630, %v2664
    %v2666 = vlaneseq
    %v2667 = vshrl.u32 %v2666, 7
    %v2668 = vsub.s32 0, %v2667
    %v2669 = vrot.slane %v2631, %v2668
    %v2670 = vlaneseq
    %v2671 = vshrl.u32 %v2670, 7
    %v2672 = vsub.s32 1, %v2671
    %v2673 = vrot.slane %v2631, %v2672
    %v2674 = vlaneseq
    %v2675 = vshrl.u32 %v2674, 7
    %v2676 = vsub.s32 2, %v2675
    %v2677 = vrot.slane %v2631, %v2676
    %v2678 = vlaneseq
    %v2679 = vshrl.u32 %v2678, 7
    %v2680 = vsub.s32 3, %v2679
    %v2681 = vrot.slane %v2631, %v2680
    %v2682 = vlaneseq
    %v2683 = vshrl.u32 %v2682, 7
    %v2684 = vsub.s32 4, %v2683
    %v2685 = vrot.slane %v2631, %v2684
    %v3483 = vunpack.c.l.b16 %v1846
    %v3484 = vunpack.c.h.b16 %v1846
    %v3485 = vunpack.c.l.b16 %v1847
    %v3486 = vunpack.c.h.b16 %v1847
    %v3487 = vunpack.c.l.b16 %v1848
    %v3488 = vunpack.c.h.b16 %v1848
    %v3489 = vunpack.c.l.b16 %v1849
    %v3490 = vunpack.c.h.b16 %v1849
    %v3491 = vunpack.c.l.b16 %v1850
    %v3492 = vunpack.c.h.b16 %v1850
    %v3493 = vunpack.c.l.b16 %v1851
    %v3494 = vunpack.c.h.b16 %v1851
    %v3495 = vunpack.c.l.b16 %v1852
    %v3496 = vunpack.c.l.b16 %v1853
    %v3497 = vunpack.c.h.b16 %v1853
    %v3498 = vunpack.c.l.b16 %v1854
    %v3499 = vunpack.c.h.b16 %v1854
    %v3500 = vunpack.c.l.b16 %v1855
    %v3501 = vunpack.c.h.b16 %v1855
    %v3502 = vunpack.c.l.b16 %v1856
    %v3503 = vunpack.c.h.b16 %v1856
    %v3504 = vunpack.c.l.b16 %v1857
    %v3505 = vunpack.c.h.b16 %v1857
    %v3506 = vunpack.c.l.b16 %v1858
    %v3507 = vunpack.c.h.b16 %v1858
    %v3508 = vunpack.c.l.b16 %v1859
    %v3509 = vunpack.c.l.b16 %v1860
    %v3510 = vunpack.c.h.b16 %v1860
    %v3511 = vunpack.c.l.b16 %v1861
    %v3512 = vunpack.c.h.b16 %v1861
    %v3513 = vunpack.c.l.b16 %v1862
    %v3514 = vunpack.c.h.b16 %v1862
    %v3515 = vunpack.c.l.b16 %v1863
    %v3516 = vunpack.c.h.b16 %v1863
    %v3517 = vunpack.c.l.b16 %v1864
    %v3518 = vunpack.c.h.b16 %v1864
    %v3519 = vunpack.c.l.b16 %v1865
    %v3520 = vunpack.c.h.b16 %v1865
    %v3521 = vunpack.c.l.b16 %v1866
    %v3522 = vunpack.c.l.b16 %v1867
    %v3523 = vunpack.c.h.b16 %v1867
    %v3524 = vunpack.c.l.b16 %v1868
    %v3525 = vunpack.c.h.b16 %v1868
    %v3526 = vunpack.c.l.b16 %v1869
    %v3527 = vunpack.c.h.b16 %v1869
    %v3528 = vunpack.c.l.b16 %v1870
    %v3529 = vunpack.c.h.b16 %v1870
    %v3530 = vunpack.c.l.b16 %v1871
    %v3531 = vunpack.c.h.b16 %v1871
    %v3532 = vunpack.c.l.b16 %v1872
    %v3533 = vunpack.c.h.b16 %v1872
    %v3534 = vunpack.c.l.b16 %v1873
    %v3535 = vunpack.c.l.b16 %v1874
    %v3536 = vunpack.c.h.b16 %v1874
    %v3537 = vunpack.c.l.b16 %v1875
    %v3538 = vunpack.c.h.b16 %v1875
    %v3539 = vunpack.c.l.b16 %v1876
    %v3540 = vunpack.c.h.b16 %v1876
    %v3541 = vunpack.c.l.b16 %v1877
    %v3542 = vunpack.c.h.b16 %v1877
    %v3543 = vunpack.c.l.b16 %v1878
    %v3544 = vunpack.c.h.b16 %v1878
    %v3545 = vunpack.c.l.b16 %v1879
    %v3546 = vunpack.c.h.b16 %v1879
    %v3547 = vunpack.c.l.b16 %v1880
    %v3548 = vunpack.c.l.b16 %v1881
    %v3549 = vunpack.c.h.b16 %v1881
    %v3550 = vunpack.c.l.b16 %v1882
    %v3551 = vunpack.c.h.b16 %v1882
    %v3552 = vunpack.c.l.b16 %v1883
    %v3553 = vunpack.c.h.b16 %v1883
    %v3554 = vunpack.c.l.b16 %v1884
    %v3555 = vunpack.c.h.b16 %v1884
    %v3556 = vunpack.c.l.b16 %v1885
    %v3557 = vunpack.c.h.b16 %v1885
    %v3558 = vunpack.c.l.b16 %v1886
    %v3559 = vunpack.c.h.b16 %v1886
    %v3560 = vunpack.c.l.b16 %v1887
    %v3561 = vunpack.c.l.b16 %v1888
    %v3562 = vunpack.c.h.b16 %v1888
    %v3563 = vunpack.c.l.b16 %v1889
    %v3564 = vunpack.c.h.b16 %v1889
    %v3565 = vunpack.c.l.b16 %v1890
    %v3566 = vunpack.c.h.b16 %v1890
    %v3567 = vunpack.c.l.b16 %v1891
    %v3568 = vunpack.c.h.b16 %v1891
    %v3569 = vunpack.c.l.b16 %v1892
    %v3570 = vunpack.c.h.b16 %v1892
    %v3571 = vunpack.c.l.b16 %v1893
    %v3572 = vunpack.c.h.b16 %v1893
    %v3573 = vunpack.c.l.b16 %v1894
    %v3574 = vunpack.c.l.b16 %v1895
    %v3575 = vunpack.c.h.b16 %v1895
    %v3576 = vunpack.c.l.b16 %v1896
    %v3577 = vunpack.c.h.b16 %v1896
    %v3578 = vunpack.c.l.b16 %v1897
    %v3579 = vunpack.c.h.b16 %v1897
    %v3580 = vunpack.c.l.b16 %v1898
    %v3581 = vunpack.c.h.b16 %v1898
    %v3582 = vunpack.c.l.b16 %v1899
    %v3583 = vunpack.c.h.b16 %v1899
    %v3584 = vunpack.c.l.b16 %v1900
    %v3585 = vunpack.c.h.b16 %v1900
    %v3586 = vunpack.c.l.b16 %v1901
    %v3587 = vunpack.c.l.b16 %v1902
    %v3588 = vunpack.c.h.b16 %v1902
    %v3589 = vunpack.c.l.b16 %v1903
    %v3590 = vunpack.c.h.b16 %v1903
    %v3591 = vunpack.c.l.b16 %v1904
    %v3592 = vunpack.c.h.b16 %v1904
    %v3593 = vunpack.c.l.b16 %v1905
    %v3594 = vunpack.c.h.b16 %v1905
    %v3595 = vunpack.c.l.b16 %v1906
    %v3596 = vunpack.c.h.b16 %v1906
    %v3597 = vunpack.c.l.b16 %v1907
    %v3598 = vunpack.c.h.b16 %v1907
    %v3599 = vunpack.c.l.b16 %v1908
    %v3600 = vunpack.c.l.b16 %v1909
    %v3601 = vunpack.c.h.b16 %v1909
    %v3602 = vunpack.c.l.b16 %v1910
    %v3603 = vunpack.c.h.b16 %v1910
    %v3604 = vunpack.c.l.b16 %v1911
    %v3605 = vunpack.c.h.b16 %v1911
    %v3606 = vunpack.c.l.b16 %v1912
    %v3607 = vunpack.c.h.b16 %v1912
    %v3608 = vunpack.c.l.b16 %v1913
    %v3609 = vunpack.c.h.b16 %v1913
    %v3610 = vunpack.c.l.b16 %v1914
    %v3611 = vunpack.c.h.b16 %v1914
    %v3612 = vunpack.c.l.b16 %v1915
    %v3613 = vunpack.c.l.b16 %v1916
    %v3614 = vunpack.c.h.b16 %v1916
    %v3615 = vunpack.c.l.b16 %v1917
    %v3616 = vunpack.c.h.b16 %v1917
    %v3617 = vunpack.c.l.b16 %v1918
    %v3618 = vunpack.c.h.b16 %v1918
    %v3619 = vunpack.c.l.b16 %v1919
    %v3620 = vunpack.c.h.b16 %v1919
    %v3621 = vunpack.c.l.b16 %v1920
    %v3622 = vunpack.c.h.b16 %v1920
    %v3623 = vunpack.c.l.b16 %v1921
    %v3624 = vunpack.c.h.b16 %v1921
    %v3625 = vunpack.c.l.b16 %v1922
    %v3626 = vunpack.c.l.b16 %v1923
    %v3627 = vunpack.c.h.b16 %v1923
    %v3628 = vunpack.c.l.b16 %v1924
    %v3629 = vunpack.c.h.b16 %v1924
    %v3630 = vunpack.c.l.b16 %v1925
    %v3631 = vunpack.c.h.b16 %v1925
    %v3632 = vunpack.c.l.b16 %v1926
    %v3633 = vunpack.c.h.b16 %v1926
    %v3634 = vunpack.c.l.b16 %v1927
    %v3635 = vunpack.c.h.b16 %v1927
    %v3636 = vunpack.c.l.b16 %v1928
    %v3637 = vunpack.c.h.b16 %v1928
    %v3638 = vunpack.c.l.b16 %v1929
    %v3639 = vunpack.c.l.b16 %v1930
    %v3640 = vunpack.c.h.b16 %v1930
    %v3641 = vunpack.c.l.b16 %v1931
    %v3642 = vunpack.c.h.b16 %v1931
    %v3643 = vunpack.c.l.b16 %v1932
    %v3644 = vunpack.c.h.b16 %v1932
    %v3645 = vunpack.c.l.b16 %v1933
    %v3646 = vunpack.c.h.b16 %v1933
    %v3647 = vunpack.c.l.b16 %v1934
    %v3648 = vunpack.c.h.b16 %v1934
    %v3649 = vunpack.c.l.b16 %v1935
    %v3650 = vunpack.c.h.b16 %v1935
    %v3651 = vunpack.c.l.b16 %v1936
    %v3652 = vunpack.c.l.b16 %v1937
    %v3653 = vunpack.c.h.b16 %v1937
    %v3654 = vunpack.c.l.b16 %v1938
    %v3655 = vunpack.c.h.b16 %v1938
    %v3656 = vunpack.c.l.b16 %v1939
    %v3657 = vunpack.c.h.b16 %v1939
    %v3658 = vunpack.c.l.b16 %v1940
    %v3659 = vunpack.c.h.b16 %v1940
    %v3660 = vunpack.c.l.b16 %v1941
    %v3661 = vunpack.c.h.b16 %v1941
    %v3662 = vunpack.c.l.b16 %v1942
    %v3663 = vunpack.c.h.b16 %v1942
    %v3664 = vunpack.c.l.b16 %v1943
    %v3665 = vunpack.c.l.b16 %v1944
    %v3666 = vunpack.c.h.b16 %v1944
    %v3667 = vunpack.c.l.b16 %v1945
    %v3668 = vunpack.c.h.b16 %v1945
    %v3669 = vunpack.c.l.b16 %v1946
    %v3670 = vunpack.c.h.b16 %v1946
    %v3671 = vunpack.c.l.b16 %v1947
    %v3672 = vunpack.c.h.b16 %v1947
    %v3673 = vunpack.c.l.b16 %v1948
    %v3674 = vunpack.c.h.b16 %v1948
    %v3675 = vunpack.c.l.b16 %v1949
    %v3676 = vunpack.c.h.b16 %v1949
    %v3677 = vunpack.c.l.b16 %v1950
    %v3678 = vunpack.c.l.b16 %v1951
    %v3679 = vunpack.c.h.b16 %v1951
    %v3680 = vunpack.c.l.b16 %v1952
    %v3681 = vunpack.c.h.b16 %v1952
    %v3682 = vunpack.c.l.b16 %v1953
    %v3683 = vunpack.c.h.b16 %v1953
    %v3684 = vunpack.c.l.b16 %v1954
    %v3685 = vunpack.c.h.b16 %v1954
    %v3686 = vunpack.c.l.b16 %v1955
    %v3687 = vunpack.c.h.b16 %v1955
    %v3688 = vunpack.c.l.b16 %v1956
    %v3689 = vunpack.c.h.b16 %v1956
    %v3690 = vunpack.c.l.b16 %v1957
    %v3691 = vunpack.c.l.b16 %v1958
    %v3692 = vunpack.c.h.b16 %v1958
    %v3693 = vunpack.c.l.b16 %v1959
    %v3694 = vunpack.c.h.b16 %v1959
    %v3695 = vunpack.c.l.b16 %v1960
    %v3696 = vunpack.c.h.b16 %v1960
    %v3697 = vunpack.c.l.b16 %v1961
    %v3698 = vunpack.c.h.b16 %v1961
    %v3699 = vunpack.c.l.b16 %v1962
    %v3700 = vunpack.c.h.b16 %v1962
    %v3701 = vunpack.c.l.b16 %v1963
    %v3702 = vunpack.c.h.b16 %v1963
    %v3703 = vunpack.c.l.b16 %v1964
    %v3704 = vunpack.c.l.b16 %v1965
    %v3705 = vunpack.c.h.b16 %v1965
    %v3706 = vunpack.c.l.b16 %v1966
    %v3707 = vunpack.c.h.b16 %v1966
    %v3708 = vunpack.c.l.b16 %v1967
    %v3709 = vunpack.c.h.b16 %v1967
    %v3710 = vunpack.c.l.b16 %v1968
    %v3711 = vunpack.c.h.b16 %v1968
    %v3712 = vunpack.c.l.b16 %v1969
    %v3713 = vunpack.c.h.b16 %v1969
    %v3714 = vunpack.c.l.b16 %v1970
    %v3715 = vunpack.c.h.b16 %v1970
    %v3716 = vunpack.c.l.b16 %v1971
    %v3717 = vunpack.c.l.b16 %v1972
    %v3718 = vunpack.c.h.b16 %v1972
    %v3719 = vunpack.c.l.b16 %v1973
    %v3720 = vunpack.c.h.b16 %v1973
    %v3721 = vunpack.c.l.b16 %v1974
    %v3722 = vunpack.c.h.b16 %v1974
    %v3723 = vunpack.c.l.b16 %v1975
    %v3724 = vunpack.c.h.b16 %v1975
    %v3725 = vunpack.c.l.b16 %v1976
    %v3726 = vunpack.c.h.b16 %v1976
    %v3727 = vunpack.c.l.b16 %v1977
    %v3728 = vunpack.c.h.b16 %v1977
    %v3729 = vunpack.c.l.b16 %v1978
    %v3730 = vunpack.c.l.b16 %v1979
    %v3731 = vunpack.c.h.b16 %v1979
    %v3732 = vunpack.c.l.b16 %v1980
    %v3733 = vunpack.c.h.b16 %v1980
    %v3734 = vunpack.c.l.b16 %v1981
    %v3735 = vunpack.c.h.b16 %v1981
    %v3736 = vunpack.c.l.b16 %v1982
    %v3737 = vunpack.c.h.b16 %v1982
    %v3738 = vunpack.c.l.b16 %v1983
    %v3739 = vunpack.c.h.b16 %v1983
    %v3740 = vunpack.c.l.b16 %v1984
    %v3741 = vunpack.c.h.b16 %v1984
    %v3742 = vunpack.c.l.b16 %v1985
    %v3743 = vunpack.c.l.b16 %v1986
    %v3744 = vunpack.c.h.b16 %v1986
    %v3745 = vunpack.c.l.b16 %v1987
    %v3746 = vunpack.c.h.b16 %v1987
    %v3747 = vunpack.c.l.b16 %v1988
    %v3748 = vunpack.c.h.b16 %v1988
    %v3749 = vunpack.c.l.b16 %v1989
    %v3750 = vunpack.c.h.b16 %v1989
    %v3751 = vunpack.c.l.b16 %v1990
    %v3752 = vunpack.c.h.b16 %v1990
    %v3753 = vunpack.c.l.b16 %v1991
    %v3754 = vunpack.c.h.b16 %v1991
    %v3755 = vunpack.c.l.b16 %v1992
    %v3756 = vunpack.c.l.b16 %v1993
    %v3757 = vunpack.c.h.b16 %v1993
    %v3758 = vunpack.c.l.b16 %v1994
    %v3759 = vunpack.c.h.b16 %v1994
    %v3760 = vunpack.c.l.b16 %v1995
    %v3761 = vunpack.c.h.b16 %v1995
    %v3762 = vunpack.c.l.b16 %v1996
    %v3763 = vunpack.c.h.b16 %v1996
    %v3764 = vunpack.c.l.b16 %v1997
    %v3765 = vunpack.c.h.b16 %v1997
    %v3766 = vunpack.c.l.b16 %v1998
    %v3767 = vunpack.c.h.b16 %v1998
    %v3768 = vunpack.c.l.b16 %v1999
    %v3769 = vunpack.c.l.b16 %v2000
    %v3770 = vunpack.c.h.b16 %v2000
    %v3771 = vunpack.c.l.b16 %v2001
    %v3772 = vunpack.c.h.b16 %v2001
    %v3773 = vunpack.c.l.b16 %v2002
    %v3774 = vunpack.c.h.b16 %v2002
    %v3775 = vunpack.c.l.b16 %v2003
    %v3776 = vunpack.c.h.b16 %v2003
    %v3777 = vunpack.c.l.b16 %v2004
    %v3778 = vunpack.c.h.b16 %v2004
    %v3779 = vunpack.c.l.b16 %v2005
    %v3780 = vunpack.c.h.b16 %v2005
    %v3781 = vunpack.c.l.b16 %v2006
    %v3782 = vunpack.c.l.b16 %v2007
    %v3783 = vunpack.c.h.b16 %v2007
    %v3784 = vunpack.c.l.b16 %v2008
    %v3785 = vunpack.c.h.b16 %v2008
    %v3786 = vunpack.c.l.b16 %v2009
    %v3787 = vunpack.c.h.b16 %v2009
    %v3788 = vunpack.c.l.b16 %v2010
    %v3789 = vunpack.c.h.b16 %v2010
    %v3790 = vunpack.c.l.b16 %v2011
    %v3791 = vunpack.c.h.b16 %v2011
    %v3792 = vunpack.c.l.b16 %v2012
    %v3793 = vunpack.c.h.b16 %v2012
    %v3794 = vunpack.c.l.b16 %v2013
    %v3795 = vunpack.c.l.b16 %v2014
    %v3796 = vunpack.c.h.b16 %v2014
    %v3797 = vunpack.c.l.b16 %v2015
    %v3798 = vunpack.c.h.b16 %v2015
    %v3799 = vunpack.c.l.b16 %v2016
    %v3800 = vunpack.c.h.b16 %v2016
    %v3801 = vunpack.c.l.b16 %v2017
    %v3802 = vunpack.c.h.b16 %v2017
    %v3803 = vunpack.c.l.b16 %v2018
    %v3804 = vunpack.c.h.b16 %v2018
    %v3805 = vunpack.c.l.b16 %v2019
    %v3806 = vunpack.c.h.b16 %v2019
    %v3807 = vunpack.c.l.b16 %v2020
    %v3808 = vunpack.c.l.b16 %v2021
    %v3809 = vunpack.c.h.b16 %v2021
    %v3810 = vunpack.c.l.b16 %v2022
    %v3811 = vunpack.c.h.b16 %v2022
    %v3812 = vunpack.c.l.b16 %v2023
    %v3813 = vunpack.c.h.b16 %v2023
    %v3814 = vunpack.c.l.b16 %v2024
    %v3815 = vunpack.c.h.b16 %v2024
    %v3816 = vunpack.c.l.b16 %v2025
    %v3817 = vunpack.c.h.b16 %v2025
    %v3818 = vunpack.c.l.b16 %v2026
    %v3819 = vunpack.c.h.b16 %v2026
    %v3820 = vunpack.c.l.b16 %v2027
    %v3821 = vunpack.c.l.b16 %v2028
    %v3822 = vunpack.c.h.b16 %v2028
    %v3823 = vunpack.c.l.b16 %v2029
    %v3824 = vunpack.c.h.b16 %v2029
    %v3825 = vunpack.c.l.b16 %v2030
    %v3826 = vunpack.c.h.b16 %v2030
    %v3827 = vunpack.c.l.b16 %v2031
    %v3828 = vunpack.c.h.b16 %v2031
    %v3829 = vunpack.c.l.b16 %v2032
    %v3830 = vunpack.c.h.b16 %v2032
    %v3831 = vunpack.c.l.b16 %v2033
    %v3832 = vunpack.c.h.b16 %v2033
    %v3833 = vunpack.c.l.b16 %v2034
    %v3834 = vunpack.c.l.b16 %v2035
    %v3835 = vunpack.c.h.b16 %v2035
    %v3836 = vunpack.c.l.b16 %v2036
    %v3837 = vunpack.c.h.b16 %v2036
    %v3838 = vunpack.c.l.b16 %v2037
    %v3839 = vunpack.c.h.b16 %v2037
    %v3840 = vunpack.c.l.b16 %v2038
    %v3841 = vunpack.c.h.b16 %v2038
    %v3842 = vunpack.c.l.b16 %v2039
    %v3843 = vunpack.c.h.b16 %v2039
    %v3844 = vunpack.c.l.b16 %v2040
    %v3845 = vunpack.c.h.b16 %v2040
    %v3846 = vunpack.c.l.b16 %v2041
    %v3847 = vunpack.c.l.b16 %v2042
    %v3848 = vunpack.c.h.b16 %v2042
    %v3849 = vunpack.c.l.b16 %v2043
    %v3850 = vunpack.c.h.b16 %v2043
    %v3851 = vunpack.c.l.b16 %v2044
    %v3852 = vunpack.c.h.b16 %v2044
    %v3853 = vunpack.c.l.b16 %v2045
    %v3854 = vunpack.c.h.b16 %v2045
    %v3855 = vunpack.c.l.b16 %v2046
    %v3856 = vunpack.c.h.b16 %v2046
    %v3857 = vunpack.c.l.b16 %v2047
    %v3858 = vunpack.c.h.b16 %v2047
    %v3859 = vunpack.c.l.b16 %v2048
    %v3860 = vunpack.c.l.b16 %v2049
    %v3861 = vunpack.c.h.b16 %v2049
    %v3862 = vunpack.c.l.b16 %v2050
    %v3863 = vunpack.c.h.b16 %v2050
    %v3864 = vunpack.c.l.b16 %v2051
    %v3865 = vunpack.c.h.b16 %v2051
    %v3866 = vunpack.c.l.b16 %v2052
    %v3867 = vunpack.c.h.b16 %v2052
    %v3868 = vunpack.c.l.b16 %v2053
    %v3869 = vunpack.c.h.b16 %v2053
    %v3870 = vunpack.c.l.b16 %v2054
    %v3871 = vunpack.c.h.b16 %v2054
    %v3872 = vunpack.c.l.b16 %v2055
    %v3873 = vunpack.c.l.b16 %v2056
    %v3874 = vunpack.c.h.b16 %v2056
    %v3875 = vunpack.c.l.b16 %v2057
    %v3876 = vunpack.c.h.b16 %v2057
    %v3877 = vunpack.c.l.b16 %v2058
    %v3878 = vunpack.c.h.b16 %v2058
    %v3879 = vunpack.c.l.b16 %v2059
    %v3880 = vunpack.c.h.b16 %v2059
    %v3881 = vunpack.c.l.b16 %v2060
    %v3882 = vunpack.c.h.b16 %v2060
    %v3883 = vunpack.c.l.b16 %v2061
    %v3884 = vunpack.c.h.b16 %v2061
    %v3885 = vunpack.c.l.b16 %v2062
    %v3886 = vunpack.c.l.b16 %v2063
    %v3887 = vunpack.c.h.b16 %v2063
    %v3888 = vunpack.c.l.b16 %v2064
    %v3889 = vunpack.c.h.b16 %v2064
    %v3890 = vunpack.c.l.b16 %v2065
    %v3891 = vunpack.c.h.b16 %v2065
    %v3892 = vunpack.c.l.b16 %v2066
    %v3893 = vunpack.c.h.b16 %v2066
    %v3894 = vunpack.c.l.b16 %v2067
    %v3895 = vunpack.c.h.b16 %v2067
    %v3896 = vunpack.c.l.b16 %v2068
    %v3897 = vunpack.c.h.b16 %v2068
    %v3898 = vunpack.c.l.b16 %v2069
    %v3899 = vunpack.c.l.b16 %v2070
    %v3900 = vunpack.c.h.b16 %v2070
    %v3901 = vunpack.c.l.b16 %v2071
    %v3902 = vunpack.c.h.b16 %v2071
    %v3903 = vunpack.c.l.b16 %v2072
    %v3904 = vunpack.c.h.b16 %v2072
    %v3905 = vunpack.c.l.b16 %v2073
    %v3906 = vunpack.c.h.b16 %v2073
    %v3907 = vunpack.c.l.b16 %v2074
    %v3908 = vunpack.c.h.b16 %v2074
    %v3909 = vunpack.c.l.b16 %v2075
    %v3910 = vunpack.c.h.b16 %v2075
    %v3911 = vunpack.c.l.b16 %v2076
    %v3912 = vunpack.c.l.b16 %v2077
    %v3913 = vunpack.c.h.b16 %v2077
    %v3914 = vunpack.c.l.b16 %v2078
    %v3915 = vunpack.c.h.b16 %v2078
    %v3916 = vunpack.c.l.b16 %v2079
    %v3917 = vunpack.c.h.b16 %v2079
    %v3918 = vunpack.c.l.b16 %v2080
    %v3919 = vunpack.c.h.b16 %v2080
    %v3920 = vunpack.c.l.b16 %v2081
    %v3921 = vunpack.c.h.b16 %v2081
    %v3922 = vunpack.c.l.b16 %v2082
    %v3923 = vunpack.c.h.b16 %v2082
    %v3924 = vunpack.c.l.b16 %v2083
    %v3925 = vunpack.c.l.b16 %v2084
    %v3926 = vunpack.c.h.b16 %v2084
    %v3927 = vunpack.c.l.b16 %v2085
    %v3928 = vunpack.c.h.b16 %v2085
    %v3929 = vunpack.c.l.b16 %v2086
    %v3930 = vunpack.c.h.b16 %v2086
    %v3931 = vunpack.c.l.b16 %v2087
    %v3932 = vunpack.c.h.b16 %v2087
    %v3933 = vunpack.c.l.b16 %v2088
    %v3934 = vunpack.c.h.b16 %v2088
    %v3935 = vunpack.c.l.b16 %v2089
    %v3936 = vunpack.c.h.b16 %v2089
    %v3937 = vunpack.c.l.b16 %v2090
    %v3938 = vunpack.c.l.b16 %v2091
    %v3939 = vunpack.c.h.b16 %v2091
    %v3940 = vunpack.c.l.b16 %v2092
    %v3941 = vunpack.c.h.b16 %v2092
    %v3942 = vunpack.c.l.b16 %v2093
    %v3943 = vunpack.c.h.b16 %v2093
    %v3944 = vunpack.c.l.b16 %v2094
    %v3945 = vunpack.c.h.b16 %v2094
    %v3946 = vunpack.c.l.b16 %v2095
    %v3947 = vunpack.c.h.b16 %v2095
    %v3948 = vunpack.c.l.b16 %v2096
    %v3949 = vunpack.c.h.b16 %v2096
    %v3950 = vunpack.c.l.b16 %v2097
    %v3951 = vunpack.c.l.b16 %v2098
    %v3952 = vunpack.c.h.b16 %v2098
    %v3953 = vunpack.c.l.b16 %v2099
    %v3954 = vunpack.c.h.b16 %v2099
    %v3955 = vunpack.c.l.b16 %v2100
    %v3956 = vunpack.c.h.b16 %v2100
    %v3957 = vunpack.c.l.b16 %v2101
    %v3958 = vunpack.c.h.b16 %v2101
    %v3959 = vunpack.c.l.b16 %v2102
    %v3960 = vunpack.c.h.b16 %v2102
    %v3961 = vunpack.c.l.b16 %v2103
    %v3962 = vunpack.c.h.b16 %v2103
    %v3963 = vunpack.c.l.b16 %v2104
    %v3964 = vunpack.c.l.b16 %v2105
    %v3965 = vunpack.c.h.b16 %v2105
    %v3966 = vunpack.c.l.b16 %v2106
    %v3967 = vunpack.c.h.b16 %v2106
    %v3968 = vunpack.c.l.b16 %v2107
    %v3969 = vunpack.c.h.b16 %v2107
    %v3970 = vunpack.c.l.b16 %v2108
    %v3971 = vunpack.c.h.b16 %v2108
    %v3972 = vunpack.c.l.b16 %v2109
    %v3973 = vunpack.c.h.b16 %v2109
    %v3974 = vunpack.c.l.b16 %v2110
    %v3975 = vunpack.c.h.b16 %v2110
    %v3976 = vunpack.c.l.b16 %v2111
    %v3977 = vunpack.c.l.b16 %v2112
    %v3978 = vunpack.c.h.b16 %v2112
    %v3979 = vunpack.c.l.b16 %v2113
    %v3980 = vunpack.c.h.b16 %v2113
    %v3981 = vunpack.c.l.b16 %v2114
    %v3982 = vunpack.c.h.b16 %v2114
    %v3983 = vunpack.c.l.b16 %v2115
    %v3984 = vunpack.c.h.b16 %v2115
    %v3985 = vunpack.c.l.b16 %v2116
    %v3986 = vunpack.c.h.b16 %v2116
    %v3987 = vunpack.c.l.b16 %v2117
    %v3988 = vunpack.c.h.b16 %v2117
    %v3989 = vunpack.c.l.b16 %v2118
    %v3990 = vunpack.c.l.b16 %v2119
    %v3991 = vunpack.c.h.b16 %v2119
    %v3992 = vunpack.c.l.b16 %v2120
    %v3993 = vunpack.c.h.b16 %v2120
    %v3994 = vunpack.c.l.b16 %v2121
    %v3995 = vunpack.c.h.b16 %v2121
    %v3996 = vunpack.c.l.b16 %v2122
    %v3997 = vunpack.c.h.b16 %v2122
    %v3998 = vunpack.c.l.b16 %v2123
    %v3999 = vunpack.c.h.b16 %v2123
    %v4000 = vunpack.c.l.b16 %v2124
    %v4001 = vunpack.c.h.b16 %v2124
    %v4002 = vunpack.c.l.b16 %v2125
    %v4003 = vunpack.c.l.b16 %v2126
    %v4004 = vunpack.c.h.b16 %v2126
    %v4005 = vunpack.c.l.b16 %v2127
    %v4006 = vunpack.c.h.b16 %v2127
    %v4007 = vunpack.c.l.b16 %v2128
    %v4008 = vunpack.c.h.b16 %v2128
    %v4009 = vunpack.c.l.b16 %v2129
    %v4010 = vunpack.c.h.b16 %v2129
    %v4011 = vunpack.c.l.b16 %v2130
    %v4012 = vunpack.c.h.b16 %v2130
    %v4013 = vunpack.c.l.b16 %v2131
    %v4014 = vunpack.c.h.b16 %v2131
    %v4015 = vunpack.c.l.b16 %v2132
    %v4016 = vunpack.c.l.b16 %v2133
    %v4017 = vunpack.c.h.b16 %v2133
    %v4018 = vunpack.c.l.b16 %v2134
    %v4019 = vunpack.c.h.b16 %v2134
    %v4020 = vunpack.c.l.b16 %v2135
    %v4021 = vunpack.c.h.b16 %v2135
    %v4022 = vunpack.c.l.b16 %v2136
    %v4023 = vunpack.c.h.b16 %v2136
    %v4024 = vunpack.c.l.b16 %v2137
    %v4025 = vunpack.c.h.b16 %v2137
    %v4026 = vunpack.c.l.b16 %v2138
    %v4027 = vunpack.c.h.b16 %v2138
    %v4028 = vunpack.c.l.b16 %v2139
    %v4029 = vunpack.c.l.b16 %v2140
    %v4030 = vunpack.c.h.b16 %v2140
    %v4031 = vunpack.c.l.b16 %v2141
    %v4032 = vunpack.c.h.b16 %v2141
    %v4033 = vunpack.c.l.b16 %v2142
    %v4034 = vunpack.c.h.b16 %v2142
    %v4035 = vunpack.c.l.b16 %v2143
    %v4036 = vunpack.c.h.b16 %v2143
    %v4037 = vunpack.c.l.b16 %v2144
    %v4038 = vunpack.c.h.b16 %v2144
    %v4039 = vunpack.c.l.b16 %v2145
    %v4040 = vunpack.c.h.b16 %v2145
    %v4041 = vunpack.c.l.b16 %v2146
    %v4042 = vunpack.c.l.b16 %v2147
    %v4043 = vunpack.c.h.b16 %v2147
    %v4044 = vunpack.c.l.b16 %v2148
    %v4045 = vunpack.c.h.b16 %v2148
    %v4046 = vunpack.c.l.b16 %v2149
    %v4047 = vunpack.c.h.b16 %v2149
    %v4048 = vunpack.c.l.b16 %v2150
    %v4049 = vunpack.c.h.b16 %v2150
    %v4050 = vunpack.c.l.b16 %v2151
    %v4051 = vunpack.c.h.b16 %v2151
    %v4052 = vunpack.c.l.b16 %v2152
    %v4053 = vunpack.c.h.b16 %v2152
    %v4054 = vunpack.c.l.b16 %v2153
    %v4055 = vunpack.c.l.b16 %v2154
    %v4056 = vunpack.c.h.b16 %v2154
    %v4057 = vunpack.c.l.b16 %v2155
    %v4058 = vunpack.c.h.b16 %v2155
    %v4059 = vunpack.c.l.b16 %v2156
    %v4060 = vunpack.c.h.b16 %v2156
    %v4061 = vunpack.c.l.b16 %v2157
    %v4062 = vunpack.c.h.b16 %v2157
    %v4063 = vunpack.c.l.b16 %v2158
    %v4064 = vunpack.c.h.b16 %v2158
    %v4065 = vunpack.c.l.b16 %v2159
    %v4066 = vunpack.c.h.b16 %v2159
    %v4067 = vunpack.c.l.b16 %v2160
    %v4068 = vunpack.c.l.b16 %v2161
    %v4069 = vunpack.c.h.b16 %v2161
    %v4070 = vunpack.c.l.b16 %v2162
    %v4071 = vunpack.c.h.b16 %v2162
    %v4072 = vunpack.c.l.b16 %v2163
    %v4073 = vunpack.c.h.b16 %v2163
    %v4074 = vunpack.c.l.b16 %v2164
    %v4075 = vunpack.c.h.b16 %v2164
    %v4076 = vunpack.c.l.b16 %v2165
    %v4077 = vunpack.c.h.b16 %v2165
    %v4078 = vunpack.c.l.b16 %v2166
    %v4079 = vunpack.c.h.b16 %v2166
    %v4080 = vunpack.c.l.b16 %v2167
    %v4081 = vunpack.c.l.b16 %v2168
    %v4082 = vunpack.c.h.b16 %v2168
    %v4083 = vunpack.c.l.b16 %v2169
    %v4084 = vunpack.c.h.b16 %v2169
    %v4085 = vunpack.c.l.b16 %v2170
    %v4086 = vunpack.c.h.b16 %v2170
    %v4087 = vunpack.c.l.b16 %v2171
    %v4088 = vunpack.c.h.b16 %v2171
    %v4089 = vunpack.c.l.b16 %v2172
    %v4090 = vunpack.c.h.b16 %v2172
    %v4091 = vunpack.c.l.b16 %v2173
    %v4092 = vunpack.c.h.b16 %v2173
    %v4093 = vunpack.c.l.b16 %v2174
    %v4094 = vunpack.c.l.b16 %v2175
    %v4095 = vunpack.c.h.b16 %v2175
    %v4096 = vunpack.c.l.b16 %v2176
    %v4097 = vunpack.c.h.b16 %v2176
    %v4098 = vunpack.c.l.b16 %v2177
    %v4099 = vunpack.c.h.b16 %v2177
    %v4100 = vunpack.c.l.b16 %v2178
    %v4101 = vunpack.c.h.b16 %v2178
    %v4102 = vunpack.c.l.b16 %v2179
    %v4103 = vunpack.c.h.b16 %v2179
    %v4104 = vunpack.c.l.b16 %v2180
    %v4105 = vunpack.c.h.b16 %v2180
    %v4106 = vunpack.c.l.b16 %v2181
    %v4107 = vunpack.c.l.b16 %v2182
    %v4108 = vunpack.c.h.b16 %v2182
    %v4109 = vunpack.c.l.b16 %v2183
    %v4110 = vunpack.c.h.b16 %v2183
    %v4111 = vunpack.c.l.b16 %v2184
    %v4112 = vunpack.c.h.b16 %v2184
    %v4113 = vunpack.c.l.b16 %v2185
    %v4114 = vunpack.c.h.b16 %v2185
    %v4115 = vunpack.c.l.b16 %v2186
    %v4116 = vunpack.c.h.b16 %v2186
    %v4117 = vunpack.c.l.b16 %v2187
    %v4118 = vunpack.c.h.b16 %v2187
    %v4119 = vunpack.c.l.b16 %v2188
    %v4120 = vunpack.c.l.b16 %v2189
    %v4121 = vunpack.c.h.b16 %v2189
    %v4122 = vunpack.c.l.b16 %v2190
    %v4123 = vunpack.c.h.b16 %v2190
    %v4124 = vunpack.c.l.b16 %v2191
    %v4125 = vunpack.c.h.b16 %v2191
    %v4126 = vunpack.c.l.b16 %v2192
    %v4127 = vunpack.c.h.b16 %v2192
    %v4128 = vunpack.c.l.b16 %v2193
    %v4129 = vunpack.c.h.b16 %v2193
    %v4130 = vunpack.c.l.b16 %v2194
    %v4131 = vunpack.c.h.b16 %v2194
    %v4132 = vunpack.c.l.b16 %v2195
    %v4133 = vunpack.c.l.b16 %v2196
    %v4134 = vunpack.c.h.b16 %v2196
    %v4135 = vunpack.c.l.b16 %v2197
    %v4136 = vunpack.c.h.b16 %v2197
    %v4137 = vunpack.c.l.b16 %v2198
    %v4138 = vunpack.c.h.b16 %v2198
    %v4139 = vunpack.c.l.b16 %v2199
    %v4140 = vunpack.c.h.b16 %v2199
    %v4141 = vunpack.c.l.b16 %v2200
    %v4142 = vunpack.c.h.b16 %v2200
    %v4143 = vunpack.c.l.b16 %v2201
    %v4144 = vunpack.c.h.b16 %v2201
    %v4145 = vunpack.c.l.b16 %v2202
    %v4146 = vunpack.c.l.b16 %v2203
    %v4147 = vunpack.c.h.b16 %v2203
    %v4148 = vunpack.c.l.b16 %v2204
    %v4149 = vunpack.c.h.b16 %v2204
    %v4150 = vunpack.c.l.b16 %v2205
    %v4151 = vunpack.c.h.b16 %v2205
    %v4152 = vunpack.c.l.b16 %v2206
    %v4153 = vunpack.c.h.b16 %v2206
    %v4154 = vunpack.c.l.b16 %v2207
    %v4155 = vunpack.c.h.b16 %v2207
    %v4156 = vunpack.c.l.b16 %v2208
    %v4157 = vunpack.c.h.b16 %v2208
    %v4158 = vunpack.c.l.b16 %v2209
    %v4159 = vunpack.c.l.b16 %v2210
    %v4160 = vunpack.c.h.b16 %v2210
    %v4161 = vunpack.c.l.b16 %v2211
    %v4162 = vunpack.c.h.b16 %v2211
    %v4163 = vunpack.c.l.b16 %v2212
    %v4164 = vunpack.c.h.b16 %v2212
    %v4165 = vunpack.c.l.b16 %v2213
    %v4166 = vunpack.c.h.b16 %v2213
    %v4167 = vunpack.c.l.b16 %v2214
    %v4168 = vunpack.c.h.b16 %v2214
    %v4169 = vunpack.c.l.b16 %v2215
    %v4170 = vunpack.c.h.b16 %v2215
    %v4171 = vunpack.c.l.b16 %v2216
    %v4172 = vunpack.c.l.b16 %v2217
    %v4173 = vunpack.c.h.b16 %v2217
    %v4174 = vunpack.c.l.b16 %v2218
    %v4175 = vunpack.c.h.b16 %v2218
    %v4176 = vunpack.c.l.b16 %v2219
    %v4177 = vunpack.c.h.b16 %v2219
    %v4178 = vunpack.c.l.b16 %v2220
    %v4179 = vunpack.c.h.b16 %v2220
    %v4180 = vunpack.c.l.b16 %v2221
    %v4181 = vunpack.c.h.b16 %v2221
    %v4182 = vunpack.c.l.b16 %v2222
    %v4183 = vunpack.c.h.b16 %v2222
    %v4184 = vunpack.c.l.b16 %v2223
    %v4185 = vunpack.c.l.b16 %v2224
    %v4186 = vunpack.c.h.b16 %v2224
    %v4187 = vunpack.c.l.b16 %v2225
    %v4188 = vunpack.c.h.b16 %v2225
    %v4189 = vunpack.c.l.b16 %v2226
    %v4190 = vunpack.c.h.b16 %v2226
    %v4191 = vunpack.c.l.b16 %v2227
    %v4192 = vunpack.c.h.b16 %v2227
    %v4193 = vunpack.c.l.b16 %v2228
    %v4194 = vunpack.c.h.b16 %v2228
    %v4195 = vunpack.c.l.b16 %v2229
    %v4196 = vunpack.c.h.b16 %v2229
    %v4197 = vunpack.c.l.b16 %v2230
    %v4198 = vunpack.c.l.b16 %v2231
    %v4199 = vunpack.c.h.b16 %v2231
    %v4200 = vunpack.c.l.b16 %v2232
    %v4201 = vunpack.c.h.b16 %v2232
    %v4202 = vunpack.c.l.b16 %v2233
    %v4203 = vunpack.c.h.b16 %v2233
    %v4204 = vunpack.c.l.b16 %v2234
    %v4205 = vunpack.c.h.b16 %v2234
    %v4206 = vunpack.c.l.b16 %v2235
    %v4207 = vunpack.c.h.b16 %v2235
    %v4208 = vunpack.c.l.b16 %v2236
    %v4209 = vunpack.c.h.b16 %v2236
    %v4210 = vunpack.c.l.b16 %v2237
    %v4211 = vunpack.c.l.b16 %v2238
    %v4212 = vunpack.c.h.b16 %v2238
    %v4213 = vunpack.c.l.b16 %v2239
    %v4214 = vunpack.c.h.b16 %v2239
    %v4215 = vunpack.c.l.b16 %v2240
    %v4216 = vunpack.c.h.b16 %v2240
    %v4217 = vunpack.c.l.b16 %v2241
    %v4218 = vunpack.c.h.b16 %v2241
    %v4219 = vunpack.c.l.b16 %v2242
    %v4220 = vunpack.c.h.b16 %v2242
    %v4221 = vunpack.c.l.b16 %v2243
    %v4222 = vunpack.c.h.b16 %v2243
    %v4223 = vunpack.c.l.b16 %v2244
    %v4224 = vunpack.c.l.b16 %v2245
    %v4225 = vunpack.c.h.b16 %v2245
    %v4226 = vunpack.c.l.b16 %v2246
    %v4227 = vunpack.c.h.b16 %v2246
    %v4228 = vunpack.c.l.b16 %v2247
    %v4229 = vunpack.c.h.b16 %v2247
    %v4230 = vunpack.c.l.b16 %v2248
    %v4231 = vunpack.c.h.b16 %v2248
    %v4232 = vunpack.c.l.b16 %v2249
    %v4233 = vunpack.c.h.b16 %v2249
    %v4234 = vunpack.c.l.b16 %v2250
    %v4235 = vunpack.c.h.b16 %v2250
    %v4236 = vunpack.c.l.b16 %v2251
    %v4237 = vunpack.c.l.b16 %v2252
    %v4238 = vunpack.c.h.b16 %v2252
    %v4239 = vunpack.c.l.b16 %v2253
    %v4240 = vunpack.c.h.b16 %v2253
    %v4241 = vunpack.c.l.b16 %v2254
    %v4242 = vunpack.c.h.b16 %v2254
    %v4243 = vunpack.c.l.b16 %v2255
    %v4244 = vunpack.c.h.b16 %v2255
    %v4245 = vunpack.c.l.b16 %v2256
    %v4246 = vunpack.c.h.b16 %v2256
    %v4247 = vunpack.c.l.b16 %v2257
    %v4248 = vunpack.c.h.b16 %v2257
    %v4249 = vunpack.c.l.b16 %v2258
    %v4250 = vunpack.c.l.b16 %v2259
    %v4251 = vunpack.c.h.b16 %v2259
    %v4252 = vunpack.c.l.b16 %v2260
    %v4253 = vunpack.c.h.b16 %v2260
    %v4254 = vunpack.c.l.b16 %v2261
    %v4255 = vunpack.c.h.b16 %v2261
    %v4256 = vunpack.c.l.b16 %v2262
    %v4257 = vunpack.c.h.b16 %v2262
    %v4258 = vunpack.c.l.b16 %v2263
    %v4259 = vunpack.c.h.b16 %v2263
    %v4260 = vunpack.c.l.b16 %v2264
    %v4261 = vunpack.c.h.b16 %v2264
    %v4262 = vunpack.c.l.b16 %v2265
    %v4263 = vunpack.c.l.b16 %v2266
    %v4264 = vunpack.c.h.b16 %v2266
    %v4265 = vunpack.c.l.b16 %v2267
    %v4266 = vunpack.c.h.b16 %v2267
    %v4267 = vunpack.c.l.b16 %v2268
    %v4268 = vunpack.c.h.b16 %v2268
    %v4269 = vunpack.c.l.b16 %v2269
    %v4270 = vunpack.c.h.b16 %v2269
    %v4271 = vunpack.c.l.b16 %v2270
    %v4272 = vunpack.c.h.b16 %v2270
    %v4273 = vunpack.c.l.b16 %v2271
    %v4274 = vunpack.c.h.b16 %v2271
    %v4275 = vunpack.c.l.b16 %v2272
    %v4276 = vunpack.c.l.b16 %v2273
    %v4277 = vunpack.c.h.b16 %v2273
    %v4278 = vunpack.c.l.b16 %v2274
    %v4279 = vunpack.c.h.b16 %v2274
    %v4280 = vunpack.c.l.b16 %v2275
    %v4281 = vunpack.c.h.b16 %v2275
    %v4282 = vunpack.c.l.b16 %v2276
    %v4283 = vunpack.c.h.b16 %v2276
    %v4284 = vunpack.c.l.b16 %v2277
    %v4285 = vunpack.c.h.b16 %v2277
    %v4286 = vunpack.c.l.b16 %v2278
    %v4287 = vunpack.c.h.b16 %v2278
    %v4288 = vunpack.c.l.b16 %v2279
    %v4289 = vunpack.c.l.b16 %v2280
    %v4290 = vunpack.c.h.b16 %v2280
    %v4291 = vunpack.c.l.b16 %v2281
    %v4292 = vunpack.c.h.b16 %v2281
    %v4293 = vunpack.c.l.b16 %v2282
    %v4294 = vunpack.c.h.b16 %v2282
    %v4295 = vunpack.c.l.b16 %v2283
    %v4296 = vunpack.c.h.b16 %v2283
    %v4297 = vunpack.c.l.b16 %v2284
    %v4298 = vunpack.c.h.b16 %v2284
    %v4299 = vunpack.c.l.b16 %v2285
    %v4300 = vunpack.c.h.b16 %v2285
    %v4301 = vunpack.c.l.b16 %v2286
    %v4302 = vunpack.c.l.b16 %v2287
    %v4303 = vunpack.c.h.b16 %v2287
    %v4304 = vunpack.c.l.b16 %v2288
    %v4305 = vunpack.c.h.b16 %v2288
    %v4306 = vunpack.c.l.b16 %v2289
    %v4307 = vunpack.c.h.b16 %v2289
    %v4308 = vunpack.c.l.b16 %v2290
    %v4309 = vunpack.c.h.b16 %v2290
    %v4310 = vunpack.c.l.b16 %v2291
    %v4311 = vunpack.c.h.b16 %v2291
    %v4312 = vunpack.c.l.b16 %v2292
    %v4313 = vunpack.c.h.b16 %v2292
    %v4314 = vunpack.c.l.b16 %v2293
    %v4315 = vunpack.c.l.b16 %v2294
    %v4316 = vunpack.c.h.b16 %v2294
    %v4317 = vunpack.c.l.b16 %v2295
    %v4318 = vunpack.c.h.b16 %v2295
    %v4319 = vunpack.c.l.b16 %v2296
    %v4320 = vunpack.c.h.b16 %v2296
    %v4321 = vunpack.c.l.b16 %v2297
    %v4322 = vunpack.c.h.b16 %v2297
    %v4323 = vunpack.c.l.b16 %v2298
    %v4324 = vunpack.c.h.b16 %v2298
    %v4325 = vunpack.c.l.b16 %v2299
    %v4326 = vunpack.c.h.b16 %v2299
    %v4327 = vunpack.c.l.b16 %v2300
    %v4328 = vunpack.c.l.b16 %v2301
    %v4329 = vunpack.c.h.b16 %v2301
    %v4330 = vunpack.c.l.b16 %v2302
    %v4331 = vunpack.c.h.b16 %v2302
    %v4332 = vunpack.c.l.b16 %v2303
    %v4333 = vunpack.c.h.b16 %v2303
    %v4334 = vunpack.c.l.b16 %v2304
    %v4335 = vunpack.c.h.b16 %v2304
    %v4336 = vunpack.c.l.b16 %v2305
    %v4337 = vunpack.c.h.b16 %v2305
    %v4338 = vunpack.c.l.b16 %v2306
    %v4339 = vunpack.c.h.b16 %v2306
    %v4340 = vunpack.c.l.b16 %v2307
    %v4341 = vunpack.c.l.b16 %v2308
    %v4342 = vunpack.c.h.b16 %v2308
    %v4343 = vunpack.c.l.b16 %v2309
    %v4344 = vunpack.c.h.b16 %v2309
    %v4345 = vunpack.c.l.b16 %v2310
    %v4346 = vunpack.c.h.b16 %v2310
    %v4347 = vunpack.c.l.b16 %v2311
    %v4348 = vunpack.c.h.b16 %v2311
    %v4349 = vunpack.c.l.b16 %v2312
    %v4350 = vunpack.c.h.b16 %v2312
    %v4351 = vunpack.c.l.b16 %v2313
    %v4352 = vunpack.c.h.b16 %v2313
    %v4353 = vunpack.c.l.b16 %v2314
    %v4354 = vunpack.c.l.b16 %v2315
    %v4355 = vunpack.c.h.b16 %v2315
    %v4356 = vunpack.c.l.b16 %v2316
    %v4357 = vunpack.c.h.b16 %v2316
    %v4358 = vunpack.c.l.b16 %v2317
    %v4359 = vunpack.c.h.b16 %v2317
    %v4360 = vunpack.c.l.b16 %v2318
    %v4361 = vunpack.c.h.b16 %v2318
    %v4362 = vunpack.c.l.b16 %v2319
    %v4363 = vunpack.c.h.b16 %v2319
    %v4364 = vunpack.c.l.b16 %v2320
    %v4365 = vunpack.c.h.b16 %v2320
    %v4366 = vunpack.c.l.b16 %v2321
    %v4367 = vunpack.c.l.b16 %v2322
    %v4368 = vunpack.c.h.b16 %v2322
    %v4369 = vunpack.c.l.b16 %v2323
    %v4370 = vunpack.c.h.b16 %v2323
    %v4371 = vunpack.c.l.b16 %v2324
    %v4372 = vunpack.c.h.b16 %v2324
    %v4373 = vunpack.c.l.b16 %v2325
    %v4374 = vunpack.c.h.b16 %v2325
    %v4375 = vunpack.c.l.b16 %v2326
    %v4376 = vunpack.c.h.b16 %v2326
    %v4377 = vunpack.c.l.b16 %v2327
    %v4378 = vunpack.c.h.b16 %v2327
    %v4379 = vunpack.c.l.b16 %v2328
    %v4380 = vunpack.c.l.b16 %v2329
    %v4381 = vunpack.c.h.b16 %v2329
    %v4382 = vunpack.c.l.b16 %v2330
    %v4383 = vunpack.c.h.b16 %v2330
    %v4384 = vunpack.c.l.b16 %v2331
    %v4385 = vunpack.c.h.b16 %v2331
    %v4386 = vunpack.c.l.b16 %v2332
    %v4387 = vunpack.c.h.b16 %v2332
    %v4388 = vunpack.c.l.b16 %v2333
    %v4389 = vunpack.c.h.b16 %v2333
    %v4390 = vunpack.c.l.b16 %v2334
    %v4391 = vunpack.c.h.b16 %v2334
    %v4392 = vunpack.c.l.b16 %v2335
    %v4393 = vunpack.c.l.b16 %v2336
    %v4394 = vunpack.c.h.b16 %v2336
    %v4395 = vunpack.c.l.b16 %v2337
    %v4396 = vunpack.c.h.b16 %v2337
    %v4397 = vunpack.c.l.b16 %v2338
    %v4398 = vunpack.c.h.b16 %v2338
    %v4399 = vunpack.c.l.b16 %v2339
    %v4400 = vunpack.c.h.b16 %v2339
    %v4401 = vunpack.c.l.b16 %v2340
    %v4402 = vunpack.c.h.b16 %v2340
    %v4403 = vunpack.c.l.b16 %v2341
    %v4404 = vunpack.c.h.b16 %v2341
    %v4405 = vunpack.c.l.b16 %v2342
    %v4406 = vunpack.c.l.b16 %v2343
    %v4407 = vunpack.c.h.b16 %v2343
    %v4408 = vunpack.c.l.b16 %v2344
    %v4409 = vunpack.c.h.b16 %v2344
    %v4410 = vunpack.c.l.b16 %v2345
    %v4411 = vunpack.c.h.b16 %v2345
    %v4412 = vunpack.c.l.b16 %v2346
    %v4413 = vunpack.c.h.b16 %v2346
    %v4414 = vunpack.c.l.b16 %v2347
    %v4415 = vunpack.c.h.b16 %v2347
    %v4416 = vunpack.c.l.b16 %v2348
    %v4417 = vunpack.c.h.b16 %v2348
    %v4418 = vunpack.c.l.b16 %v2349
    %v4419 = vunpack.c.l.b16 %v2350
    %v4420 = vunpack.c.h.b16 %v2350
    %v4421 = vunpack.c.l.b16 %v2351
    %v4422 = vunpack.c.h.b16 %v2351
    %v4423 = vunpack.c.l.b16 %v2352
    %v4424 = vunpack.c.h.b16 %v2352
    %v4425 = vunpack.c.l.b16 %v2353
    %v4426 = vunpack.c.h.b16 %v2353
    %v4427 = vunpack.c.l.b16 %v2354
    %v4428 = vunpack.c.h.b16 %v2354
    %v4429 = vunpack.c.l.b16 %v2355
    %v4430 = vunpack.c.h.b16 %v2355
    %v4431 = vunpack.c.l.b16 %v2356
    %v4432 = vunpack.c.l.b16 %v2357
    %v4433 = vunpack.c.h.b16 %v2357
    %v4434 = vunpack.c.l.b16 %v2358
    %v4435 = vunpack.c.h.b16 %v2358
    %v4436 = vunpack.c.l.b16 %v2359
    %v4437 = vunpack.c.h.b16 %v2359
    %v4438 = vunpack.c.l.b16 %v2360
    %v4439 = vunpack.c.h.b16 %v2360
    %v4440 = vunpack.c.l.b16 %v2361
    %v4441 = vunpack.c.h.b16 %v2361
    %v4442 = vunpack.c.l.b16 %v2362
    %v4443 = vunpack.c.h.b16 %v2362
    %v4444 = vunpack.c.l.b16 %v2363
    %v4445 = vunpack.c.l.b16 %v2364
    %v4446 = vunpack.c.h.b16 %v2364
    %v4447 = vunpack.c.l.b16 %v2365
    %v4448 = vunpack.c.h.b16 %v2365
    %v4449 = vunpack.c.l.b16 %v2366
    %v4450 = vunpack.c.h.b16 %v2366
    %v4451 = vunpack.c.l.b16 %v2367
    %v4452 = vunpack.c.h.b16 %v2367
    %v4453 = vunpack.c.l.b16 %v2368
    %v4454 = vunpack.c.h.b16 %v2368
    %v4455 = vunpack.c.l.b16 %v2369
    %v4456 = vunpack.c.h.b16 %v2369
    %v4457 = vunpack.c.l.b16 %v2370
    %v4458 = vunpack.c.l.b16 %v2371
    %v4459 = vunpack.c.h.b16 %v2371
    %v4460 = vunpack.c.l.b16 %v2372
    %v4461 = vunpack.c.h.b16 %v2372
    %v4462 = vunpack.c.l.b16 %v2373
    %v4463 = vunpack.c.h.b16 %v2373
    %v4464 = vunpack.c.l.b16 %v2374
    %v4465 = vunpack.c.h.b16 %v2374
    %v4466 = vunpack.c.l.b16 %v2375
    %v4467 = vunpack.c.h.b16 %v2375
    %v4468 = vunpack.c.l.b16 %v2376
    %v4469 = vunpack.c.h.b16 %v2376
    %v4470 = vunpack.c.l.b16 %v2377
    %v4471 = vunpack.c.l.b16 %v2378
    %v4472 = vunpack.c.h.b16 %v2378
    %v4473 = vunpack.c.l.b16 %v2379
    %v4474 = vunpack.c.h.b16 %v2379
    %v4475 = vunpack.c.l.b16 %v2380
    %v4476 = vunpack.c.h.b16 %v2380
    %v4477 = vunpack.c.l.b16 %v2381
    %v4478 = vunpack.c.h.b16 %v2381
    %v4479 = vunpack.c.l.b16 %v2382
    %v4480 = vunpack.c.h.b16 %v2382
    %v4481 = vunpack.c.l.b16 %v2383
    %v4482 = vunpack.c.h.b16 %v2383
    %v4483 = vunpack.c.l.b16 %v2384
    %v4484 = vunpack.c.l.b16 %v2385
    %v4485 = vunpack.c.h.b16 %v2385
    %v4486 = vunpack.c.l.b16 %v2386
    %v4487 = vunpack.c.h.b16 %v2386
    %v4488 = vunpack.c.l.b16 %v2387
    %v4489 = vunpack.c.h.b16 %v2387
    %v4490 = vunpack.c.l.b16 %v2388
    %v4491 = vunpack.c.h.b16 %v2388
    %v4492 = vunpack.c.l.b16 %v2389
    %v4493 = vunpack.c.h.b16 %v2389
    %v4494 = vunpack.c.l.b16 %v2390
    %v4495 = vunpack.c.h.b16 %v2390
    %v4496 = vunpack.c.l.b16 %v2391
    %v4497 = vunpack.c.l.b16 %v2392
    %v4498 = vunpack.c.h.b16 %v2392
    %v4499 = vunpack.c.l.b16 %v2393
    %v4500 = vunpack.c.h.b16 %v2393
    %v4501 = vunpack.c.l.b16 %v2394
    %v4502 = vunpack.c.h.b16 %v2394
    %v4503 = vunpack.c.l.b16 %v2395
    %v4504 = vunpack.c.h.b16 %v2395
    %v4505 = vunpack.c.l.b16 %v2396
    %v4506 = vunpack.c.h.b16 %v2396
    %v4507 = vunpack.c.l.b16 %v2397
    %v4508 = vunpack.c.h.b16 %v2397
    %v4509 = vunpack.c.l.b16 %v2398
    %v4510 = vunpack.c.l.b16 %v2399
    %v4511 = vunpack.c.h.b16 %v2399
    %v4512 = vunpack.c.l.b16 %v2400
    %v4513 = vunpack.c.h.b16 %v2400
    %v4514 = vunpack.c.l.b16 %v2401
    %v4515 = vunpack.c.h.b16 %v2401
    %v4516 = vunpack.c.l.b16 %v2402
    %v4517 = vunpack.c.h.b16 %v2402
    %v4518 = vunpack.c.l.b16 %v2403
    %v4519 = vunpack.c.h.b16 %v2403
    %v4520 = vunpack.c.l.b16 %v2404
    %v4521 = vunpack.c.h.b16 %v2404
    %v4522 = vunpack.c.l.b16 %v2405
    %v4523 = vunpack.c.l.b16 %v2406
    %v4524 = vunpack.c.h.b16 %v2406
    %v4525 = vunpack.c.l.b16 %v2407
    %v4526 = vunpack.c.h.b16 %v2407
    %v4527 = vunpack.c.l.b16 %v2408
    %v4528 = vunpack.c.h.b16 %v2408
    %v4529 = vunpack.c.l.b16 %v2409
    %v4530 = vunpack.c.h.b16 %v2409
    %v4531 = vunpack.c.l.b16 %v2410
    %v4532 = vunpack.c.h.b16 %v2410
    %v4533 = vunpack.c.l.b16 %v2411
    %v4534 = vunpack.c.h.b16 %v2411
    %v4535 = vunpack.c.l.b16 %v2412
    %v4536 = vunpack.c.l.b16 %v2413
    %v4537 = vunpack.c.h.b16 %v2413
    %v4538 = vunpack.c.l.b16 %v2414
    %v4539 = vunpack.c.h.b16 %v2414
    %v4540 = vunpack.c.l.b16 %v2415
    %v4541 = vunpack.c.h.b16 %v2415
    %v4542 = vunpack.c.l.b16 %v2416
    %v4543 = vunpack.c.h.b16 %v2416
    %v4544 = vunpack.c.l.b16 %v2417
    %v4545 = vunpack.c.h.b16 %v2417
    %v4546 = vunpack.c.l.b16 %v2418
    %v4547 = vunpack.c.h.b16 %v2418
    %v4548 = vunpack.c.l.b16 %v2419
    %v4549 = vunpack.c.l.b16 %v2420
    %v4550 = vunpack.c.h.b16 %v2420
    %v4551 = vunpack.c.l.b16 %v2421
    %v4552 = vunpack.c.h.b16 %v2421
    %v4553 = vunpack.c.l.b16 %v2422
    %v4554 = vunpack.c.h.b16 %v2422
    %v4555 = vunpack.c.l.b16 %v2423
    %v4556 = vunpack.c.h.b16 %v2423
    %v4557 = vunpack.c.l.b16 %v2424
    %v4558 = vunpack.c.h.b16 %v2424
    %v4559 = vunpack.c.l.b16 %v2425
    %v4560 = vunpack.c.h.b16 %v2425
    %v4561 = vunpack.c.l.b16 %v2426
    %v4562 = vunpack.c.l.b16 %v2427
    %v4563 = vunpack.c.h.b16 %v2427
    %v4564 = vunpack.c.l.b16 %v2428
    %v4565 = vunpack.c.h.b16 %v2428
    %v4566 = vunpack.c.l.b16 %v2429
    %v4567 = vunpack.c.h.b16 %v2429
    %v4568 = vunpack.c.l.b16 %v2430
    %v4569 = vunpack.c.h.b16 %v2430
    %v4570 = vunpack.c.l.b16 %v2431
    %v4571 = vunpack.c.h.b16 %v2431
    %v4572 = vunpack.c.l.b16 %v2432
    %v4573 = vunpack.c.h.b16 %v2432
    %v4574 = vunpack.c.l.b16 %v2433
    %v4575 = vunpack.c.l.b16 %v2434
    %v4576 = vunpack.c.h.b16 %v2434
    %v4577 = vunpack.c.l.b16 %v2435
    %v4578 = vunpack.c.h.b16 %v2435
    %v4579 = vunpack.c.l.b16 %v2436
    %v4580 = vunpack.c.h.b16 %v2436
    %v4581 = vunpack.c.l.b16 %v2437
    %v4582 = vunpack.c.h.b16 %v2437
    %v4583 = vunpack.c.l.b16 %v2438
    %v4584 = vunpack.c.h.b16 %v2438
    %v4585 = vunpack.c.l.b16 %v2439
    %v4586 = vunpack.c.h.b16 %v2439
    %v4587 = vunpack.c.l.b16 %v2440
    %v4588 = vunpack.c.l.b16 %v2441
    %v4589 = vunpack.c.h.b16 %v2441
    %v4590 = vunpack.c.l.b16 %v2442
    %v4591 = vunpack.c.h.b16 %v2442
    %v4592 = vunpack.c.l.b16 %v2443
    %v4593 = vunpack.c.h.b16 %v2443
    %v4594 = vunpack.c.l.b16 %v2444
    %v4595 = vunpack.c.h.b16 %v2444
    %v4596 = vunpack.c.l.b16 %v2445
    %v4597 = vunpack.c.h.b16 %v2445
    %v4598 = vunpack.c.l.b16 %v2446
    %v4599 = vunpack.c.h.b16 %v2446
    %v4600 = vunpack.c.l.b16 %v2447
    %v4601 = vunpack.c.l.b16 %v2448
    %v4602 = vunpack.c.h.b16 %v2448
    %v4603 = vunpack.c.l.b16 %v2449
    %v4604 = vunpack.c.h.b16 %v2449
    %v4605 = vunpack.c.l.b16 %v2450
    %v4606 = vunpack.c.h.b16 %v2450
    %v4607 = vunpack.c.l.b16 %v2451
    %v4608 = vunpack.c.h.b16 %v2451
    %v4609 = vunpack.c.l.b16 %v2452
    %v4610 = vunpack.c.h.b16 %v2452
    %v4611 = vunpack.c.l.b16 %v2453
    %v4612 = vunpack.c.h.b16 %v2453
    %v4613 = vunpack.c.l.b16 %v2454
    %v4614 = vunpack.c.l.b16 %v2455
    %v4615 = vunpack.c.h.b16 %v2455
    %v4616 = vunpack.c.l.b16 %v2456
    %v4617 = vunpack.c.h.b16 %v2456
    %v4618 = vunpack.c.l.b16 %v2457
    %v4619 = vunpack.c.h.b16 %v2457
    %v4620 = vunpack.c.l.b16 %v2458
    %v4621 = vunpack.c.h.b16 %v2458
    %v4622 = vunpack.c.l.b16 %v2459
    %v4623 = vunpack.c.h.b16 %v2459
    %v4624 = vunpack.c.l.b16 %v2460
    %v4625 = vunpack.c.h.b16 %v2460
    %v4626 = vunpack.c.l.b16 %v2461
    %v4627 = vunpack.c.l.b16 %v2462
    %v4628 = vunpack.c.h.b16 %v2462
    %v4629 = vunpack.c.l.b16 %v2463
    %v4630 = vunpack.c.h.b16 %v2463
    %v4631 = vunpack.c.l.b16 %v2464
    %v4632 = vunpack.c.h.b16 %v2464
    %v4633 = vunpack.c.l.b16 %v2465
    %v4634 = vunpack.c.h.b16 %v2465
    %v4635 = vunpack.c.l.b16 %v2466
    %v4636 = vunpack.c.h.b16 %v2466
    %v4637 = vunpack.c.l.b16 %v2467
    %v4638 = vunpack.c.h.b16 %v2467
    %v4639 = vunpack.c.l.b16 %v2468
    %v4640 = vunpack.c.l.b16 %v2469
    %v4641 = vunpack.c.h.b16 %v2469
    %v4642 = vunpack.c.l.b16 %v2470
    %v4643 = vunpack.c.h.b16 %v2470
    %v4644 = vunpack.c.l.b16 %v2471
    %v4645 = vunpack.c.h.b16 %v2471
    %v4646 = vunpack.c.l.b16 %v2472
    %v4647 = vunpack.c.h.b16 %v2472
    %v4648 = vunpack.c.l.b16 %v2473
    %v4649 = vunpack.c.h.b16 %v2473
    %v4650 = vunpack.c.l.b16 %v2474
    %v4651 = vunpack.c.h.b16 %v2474
    %v4652 = vunpack.c.l.b16 %v2475
    %v4653 = vunpack.c.l.b16 %v2476
    %v4654 = vunpack.c.h.b16 %v2476
    %v4655 = vunpack.c.l.b16 %v2477
    %v4656 = vunpack.c.h.b16 %v2477
    %v4657 = vunpack.c.l.b16 %v2478
    %v4658 = vunpack.c.h.b16 %v2478
    %v4659 = vunpack.c.l.b16 %v2479
    %v4660 = vunpack.c.h.b16 %v2479
    %v4661 = vunpack.c.l.b16 %v2480
    %v4662 = vunpack.c.h.b16 %v2480
    %v4663 = vunpack.c.l.b16 %v2481
    %v4664 = vunpack.c.h.b16 %v2481
    %v4665 = vunpack.c.l.b16 %v2482
    %v4666 = vunpack.c.l.b16 %v2483
    %v4667 = vunpack.c.h.b16 %v2483
    %v4668 = vunpack.c.l.b16 %v2484
    %v4669 = vunpack.c.h.b16 %v2484
    %v4670 = vunpack.c.l.b16 %v2485
    %v4671 = vunpack.c.h.b16 %v2485
    %v4672 = vunpack.c.l.b16 %v2486
    %v4673 = vunpack.c.h.b16 %v2486
    %v4674 = vunpack.c.l.b16 %v2487
    %v4675 = vunpack.c.h.b16 %v2487
    %v4676 = vunpack.c.l.b16 %v2488
    %v4677 = vunpack.c.h.b16 %v2488
    %v4678 = vunpack.c.l.b16 %v2489
    %v4679 = vunpack.c.l.b16 %v2490
    %v4680 = vunpack.c.h.b16 %v2490
    %v4681 = vunpack.c.l.b16 %v2491
    %v4682 = vunpack.c.h.b16 %v2491
    %v4683 = vunpack.c.l.b16 %v2492
    %v4684 = vunpack.c.h.b16 %v2492
    %v4685 = vunpack.c.l.b16 %v2493
    %v4686 = vunpack.c.h.b16 %v2493
    %v4687 = vunpack.c.l.b16 %v2494
    %v4688 = vunpack.c.h.b16 %v2494
    %v4689 = vunpack.c.l.b16 %v2495
    %v4690 = vunpack.c.h.b16 %v2495
    %v4691 = vunpack.c.l.b16 %v2496
    %v4692 = vunpack.c.l.b16 %v2497
    %v4693 = vunpack.c.h.b16 %v2497
    %v4694 = vunpack.c.l.b16 %v2498
    %v4695 = vunpack.c.h.b16 %v2498
    %v4696 = vunpack.c.l.b16 %v2499
    %v4697 = vunpack.c.h.b16 %v2499
    %v4698 = vunpack.c.l.b16 %v2500
    %v4699 = vunpack.c.h.b16 %v2500
    %v4700 = vunpack.c.l.b16 %v2501
    %v4701 = vunpack.c.h.b16 %v2501
    %v4702 = vunpack.c.l.b16 %v2502
    %v4703 = vunpack.c.h.b16 %v2502
    %v4704 = vunpack.c.l.b16 %v2503
    %v4705 = vunpack.c.l.b16 %v2504
    %v4706 = vunpack.c.h.b16 %v2504
    %v4707 = vunpack.c.l.b16 %v2505
    %v4708 = vunpack.c.h.b16 %v2505
    %v4709 = vunpack.c.l.b16 %v2506
    %v4710 = vunpack.c.h.b16 %v2506
    %v4711 = vunpack.c.l.b16 %v2507
    %v4712 = vunpack.c.h.b16 %v2507
    %v4713 = vunpack.c.l.b16 %v2508
    %v4714 = vunpack.c.h.b16 %v2508
    %v4715 = vunpack.c.l.b16 %v2509
    %v4716 = vunpack.c.h.b16 %v2509
    %v4717 = vunpack.c.l.b16 %v2510
    %v4718 = vunpack.c.l.b16 %v2511
    %v4719 = vunpack.c.h.b16 %v2511
    %v4720 = vunpack.c.l.b16 %v2512
    %v4721 = vunpack.c.h.b16 %v2512
    %v4722 = vunpack.c.l.b16 %v2513
    %v4723 = vunpack.c.h.b16 %v2513
    %v4724 = vunpack.c.l.b16 %v2514
    %v4725 = vunpack.c.h.b16 %v2514
    %v4726 = vunpack.c.l.b16 %v2515
    %v4727 = vunpack.c.h.b16 %v2515
    %v4728 = vunpack.c.l.b16 %v2516
    %v4729 = vunpack.c.h.b16 %v2516
    %v4730 = vunpack.c.l.b16 %v2517
    %v4731 = vunpack.c.l.b16 %v2518
    %v4732 = vunpack.c.h.b16 %v2518
    %v4733 = vunpack.c.l.b16 %v2519
    %v4734 = vunpack.c.h.b16 %v2519
    %v4735 = vunpack.c.l.b16 %v2520
    %v4736 = vunpack.c.h.b16 %v2520
    %v4737 = vunpack.c.l.b16 %v2521
    %v4738 = vunpack.c.h.b16 %v2521
    %v4739 = vunpack.c.l.b16 %v2522
    %v4740 = vunpack.c.h.b16 %v2522
    %v4741 = vunpack.c.l.b16 %v2523
    %v4742 = vunpack.c.h.b16 %v2523
    %v4743 = vunpack.c.l.b16 %v2524
    %v4744 = vunpack.c.l.b16 %v2525
    %v4745 = vunpack.c.h.b16 %v2525
    %v4746 = vunpack.c.l.b16 %v2526
    %v4747 = vunpack.c.h.b16 %v2526
    %v4748 = vunpack.c.l.b16 %v2527
    %v4749 = vunpack.c.h.b16 %v2527
    %v4750 = vunpack.c.l.b16 %v2528
    %v4751 = vunpack.c.h.b16 %v2528
    %v4752 = vunpack.c.l.b16 %v2529
    %v4753 = vunpack.c.h.b16 %v2529
    %v4754 = vunpack.c.l.b16 %v2530
    %v4755 = vunpack.c.h.b16 %v2530
    %v4756 = vunpack.c.l.b16 %v2531
    %v4757 = vunpack.c.l.b16 %v2532
    %v4758 = vunpack.c.h.b16 %v2532
    %v4759 = vunpack.c.l.b16 %v2533
    %v4760 = vunpack.c.h.b16 %v2533
    %v4761 = vunpack.c.l.b16 %v2534
    %v4762 = vunpack.c.h.b16 %v2534
    %v4763 = vunpack.c.l.b16 %v2535
    %v4764 = vunpack.c.h.b16 %v2535
    %v4765 = vunpack.c.l.b16 %v2536
    %v4766 = vunpack.c.h.b16 %v2536
    %v4767 = vunpack.c.l.b16 %v2537
    %v4768 = vunpack.c.h.b16 %v2537
    %v4769 = vunpack.c.l.b16 %v2538
    %v4770 = vunpack.c.l.b16 %v2539
    %v4771 = vunpack.c.h.b16 %v2539
    %v4772 = vunpack.c.l.b16 %v2540
    %v4773 = vunpack.c.h.b16 %v2540
    %v4774 = vunpack.c.l.b16 %v2541
    %v4775 = vunpack.c.h.b16 %v2541
    %v4776 = vunpack.c.l.b16 %v2542
    %v4777 = vunpack.c.h.b16 %v2542
    %v4778 = vunpack.c.l.b16 %v2543
    %v4779 = vunpack.c.h.b16 %v2543
    %v4780 = vunpack.c.l.b16 %v2544
    %v4781 = vunpack.c.h.b16 %v2544
    %v4782 = vunpack.c.l.b16 %v2545
    %v4783 = vunpack.c.l.b16 %v2546
    %v4784 = vunpack.c.h.b16 %v2546
    %v4785 = vunpack.c.l.b16 %v2547
    %v4786 = vunpack.c.h.b16 %v2547
    %v4787 = vunpack.c.l.b16 %v2548
    %v4788 = vunpack.c.h.b16 %v2548
    %v4789 = vunpack.c.l.b16 %v2549
    %v4790 = vunpack.c.h.b16 %v2549
    %v4791 = vunpack.c.l.b16 %v2550
    %v4792 = vunpack.c.h.b16 %v2550
    %v4793 = vunpack.c.l.b16 %v2551
    %v4794 = vunpack.c.h.b16 %v2551
    %v4795 = vunpack.c.l.b16 %v2552
    %v4796 = vunpack.c.l.b16 %v2553
    %v4797 = vunpack.c.h.b16 %v2553
    %v4798 = vunpack.c.l.b16 %v2554
    %v4799 = vunpack.c.h.b16 %v2554
    %v4800 = vunpack.c.l.b16 %v2555
    %v4801 = vunpack.c.h.b16 %v2555
    %v4802 = vunpack.c.l.b16 %v2556
    %v4803 = vunpack.c.h.b16 %v2556
    %v4804 = vunpack.c.l.b16 %v2557
    %v4805 = vunpack.c.h.b16 %v2557
    %v4806 = vunpack.c.l.b16 %v2558
    %v4807 = vunpack.c.h.b16 %v2558
    %v4808 = vunpack.c.l.b16 %v2559
    %v4809 = vunpack.c.l.b16 %v2560
    %v4810 = vunpack.c.h.b16 %v2560
    %v4811 = vunpack.c.l.b16 %v2561
    %v4812 = vunpack.c.h.b16 %v2561
    %v4813 = vunpack.c.l.b16 %v2562
    %v4814 = vunpack.c.h.b16 %v2562
    %v4815 = vunpack.c.l.b16 %v2563
    %v4816 = vunpack.c.h.b16 %v2563
    %v4817 = vunpack.c.l.b16 %v2564
    %v4818 = vunpack.c.h.b16 %v2564
    %v4819 = vunpack.c.l.b16 %v2565
    %v4820 = vunpack.c.h.b16 %v2565
    %v4821 = vunpack.c.l.b16 %v2566
    %v4822 = vunpack.c.l.b16 %v2567
    %v4823 = vunpack.c.h.b16 %v2567
    %v4824 = vunpack.c.l.b16 %v2568
    %v4825 = vunpack.c.h.b16 %v2568
    %v4826 = vunpack.c.l.b16 %v2569
    %v4827 = vunpack.c.h.b16 %v2569
    %v4828 = vunpack.c.l.b16 %v2570
    %v4829 = vunpack.c.h.b16 %v2570
    %v4830 = vunpack.c.l.b16 %v2571
    %v4831 = vunpack.c.h.b16 %v2571
    %v4832 = vunpack.c.l.b16 %v2572
    %v4833 = vunpack.c.h.b16 %v2572
    %v4834 = vunpack.c.l.b16 %v2573
    %v4835 = vunpack.c.l.b16 %v2574
    %v4836 = vunpack.c.h.b16 %v2574
    %v4837 = vunpack.c.l.b16 %v2575
    %v4838 = vunpack.c.h.b16 %v2575
    %v4839 = vunpack.c.l.b16 %v2576
    %v4840 = vunpack.c.h.b16 %v2576
    %v4841 = vunpack.c.l.b16 %v2577
    %v4842 = vunpack.c.h.b16 %v2577
    %v4843 = vunpack.c.l.b16 %v2578
    %v4844 = vunpack.c.h.b16 %v2578
    %v4845 = vunpack.c.l.b16 %v2579
    %v4846 = vunpack.c.h.b16 %v2579
    %v4847 = vunpack.c.l.b16 %v2580
    %v4848 = vunpack.c.l.b16 %v2581
    %v4849 = vunpack.c.h.b16 %v2581
    %v4850 = vunpack.c.l.b16 %v2582
    %v4851 = vunpack.c.h.b16 %v2582
    %v4852 = vunpack.c.l.b16 %v2583
    %v4853 = vunpack.c.h.b16 %v2583
    %v4854 = vunpack.c.l.b16 %v2584
    %v4855 = vunpack.c.h.b16 %v2584
    %v4856 = vunpack.c.l.b16 %v2585
    %v4857 = vunpack.c.h.b16 %v2585
    %v4858 = vunpack.c.l.b16 %v2586
    %v4859 = vunpack.c.h.b16 %v2586
    %v4860 = vunpack.c.l.b16 %v2587
    %v4861 = vunpack.c.l.b16 %v2588
    %v4862 = vunpack.c.h.b16 %v2588
    %v4863 = vunpack.c.l.b16 %v2589
    %v4864 = vunpack.c.h.b16 %v2589
    %v4865 = vunpack.c.l.b16 %v2590
    %v4866 = vunpack.c.h.b16 %v2590
    %v4867 = vunpack.c.l.b16 %v2591
    %v4868 = vunpack.c.h.b16 %v2591
    %v4869 = vunpack.c.l.b16 %v2592
    %v4870 = vunpack.c.h.b16 %v2592
    %v4871 = vunpack.c.l.b16 %v2593
    %v4872 = vunpack.c.h.b16 %v2593
    %v4873 = vunpack.c.l.b16 %v2594
    %v4874 = vunpack.c.l.b16 %v2595
    %v4875 = vunpack.c.h.b16 %v2595
    %v4876 = vunpack.c.l.b16 %v2596
    %v4877 = vunpack.c.h.b16 %v2596
    %v4878 = vunpack.c.l.b16 %v2597
    %v4879 = vunpack.c.h.b16 %v2597
    %v4880 = vunpack.c.l.b16 %v2598
    %v4881 = vunpack.c.h.b16 %v2598
    %v4882 = vunpack.c.l.b16 %v2599
    %v4883 = vunpack.c.h.b16 %v2599
    %v4884 = vunpack.c.l.b16 %v2600
    %v4885 = vunpack.c.h.b16 %v2600
    %v4886 = vunpack.c.l.b16 %v2601
    %v4887 = vunpack.c.l.b16 %v2602
    %v4888 = vunpack.c.h.b16 %v2602
    %v4889 = vunpack.c.l.b16 %v2603
    %v4890 = vunpack.c.h.b16 %v2603
    %v4891 = vunpack.c.l.b16 %v2604
    %v4892 = vunpack.c.h.b16 %v2604
    %v4893 = vunpack.c.l.b16 %v2605
    %v4894 = vunpack.c.h.b16 %v2605
    %v4895 = vunpack.c.l.b16 %v2606
    %v4896 = vunpack.c.h.b16 %v2606
    %v4897 = vunpack.c.l.b16 %v2607
    %v4898 = vunpack.c.h.b16 %v2607
    %v4899 = vunpack.c.l.b16 %v2608
    %v4900 = vunpack.c.l.b16 %v2609
    %v4901 = vunpack.c.h.b16 %v2609
    %v4902 = vunpack.c.l.b16 %v2610
    %v4903 = vunpack.c.h.b16 %v2610
    %v4904 = vunpack.c.l.b16 %v2611
    %v4905 = vunpack.c.h.b16 %v2611
    %v4906 = vunpack.c.l.b16 %v2612
    %v4907 = vunpack.c.h.b16 %v2612
    %v4908 = vunpack.c.l.b16 %v2613
    %v4909 = vunpack.c.h.b16 %v2613
    %v4910 = vunpack.c.l.b16 %v2614
    %v4911 = vunpack.c.h.b16 %v2614
    %v4912 = vunpack.c.l.b16 %v2615
    %v4913 = vunpack.c.l.b16 %v2616
    %v4914 = vunpack.c.h.b16 %v2616
    %v4915 = vunpack.c.l.b16 %v2617
    %v4916 = vunpack.c.h.b16 %v2617
    %v4917 = vunpack.c.l.b16 %v2618
    %v4918 = vunpack.c.h.b16 %v2618
    %v4919 = vunpack.c.l.b16 %v2619
    %v4920 = vunpack.c.h.b16 %v2619
    %v4921 = vunpack.c.l.b16 %v2620
    %v4922 = vunpack.c.h.b16 %v2620
    %v4923 = vunpack.c.l.b16 %v2621
    %v4924 = vunpack.c.h.b16 %v2621
    %v4925 = vunpack.c.l.b16 %v2622
    %v4926 = vunpack.c.l.b16 %v2623
    %v4927 = vunpack.c.h.b16 %v2623
    %v4928 = vunpack.c.l.b16 %v2624
    %v4929 = vunpack.c.h.b16 %v2624
    %v4930 = vunpack.c.l.b16 %v2625
    %v4931 = vunpack.c.h.b16 %v2625
    %v4932 = vunpack.c.l.b16 %v2626
    %v4933 = vunpack.c.h.b16 %v2626
    %v4934 = vunpack.c.l.b16 %v2627
    %v4935 = vunpack.c.h.b16 %v2627
    %v4936 = vunpack.c.l.b16 %v2628
    %v4937 = vunpack.c.h.b16 %v2628
    %v4938 = vunpack.c.l.b16 %v2629
    %v4939 = vpack.c.b16 %v3496, %v3483
    %v4940 = vpack.c.b16 %v3497, %v3484
    %v4941 = vpack.c.b16 %v3498, %v3485
    %v4942 = vpack.c.b16 %v3499, %v3486
    %v4943 = vpack.c.b16 %v3500, %v3487
    %v4944 = vpack.c.b16 %v3501, %v3488
    %v4945 = vpack.c.b16 %v3502, %v3489
    %v4946 = vpack.c.b16 %v3503, %v3490
    %v4947 = vpack.c.b16 %v3504, %v3491
    %v4948 = vpack.c.b16 %v3505, %v3492
    %v4949 = vpack.c.b16 %v3506, %v3493
    %v4950 = vpack.c.b16 %v3507, %v3494
    %v4951 = vpack.c.b16 %v3508, %v3495
    %v4952 = vpack.c.b16 %v3522, %v3509
    %v4953 = vpack.c.b16 %v3523, %v3510
    %v4954 = vpack.c.b16 %v3524, %v3511
    %v4955 = vpack.c.b16 %v3525, %v3512
    %v4956 = vpack.c.b16 %v3526, %v3513
    %v4957 = vpack.c.b16 %v3527, %v3514
    %v4958 = vpack.c.b16 %v3528, %v3515
    %v4959 = vpack.c.b16 %v3529, %v3516
    %v4960 = vpack.c.b16 %v3530, %v3517
    %v4961 = vpack.c.b16 %v3531, %v3518
    %v4962 = vpack.c.b16 %v3532, %v3519
    %v4963 = vpack.c.b16 %v3533, %v3520
    %v4964 = vpack.c.b16 %v3534, %v3521
    %v4965 = vpack.c.b16 %v3548, %v3535
    %v4966 = vpack.c.b16 %v3549, %v3536
    %v4967 = vpack.c.b16 %v3550, %v3537
    %v4968 = vpack.c.b16 %v3551, %v3538
    %v4969 = vpack.c.b16 %v3552, %v3539
    %v4970 = vpack.c.b16 %v3553, %v3540
    %v4971 = vpack.c.b16 %v3554, %v3541
    %v4972 = vpack.c.b16 %v3555, %v3542
    %v4973 = vpack.c.b16 %v3556, %v3543
    %v4974 = vpack.c.b16 %v3557, %v3544
    %v4975 = vpack.c.b16 %v3558, %v3545
    %v4976 = vpack.c.b16 %v3559, %v3546
    %v4977 = vpack.c.b16 %v3560, %v3547
    %v4978 = vpack.c.b16 %v3574, %v3561
    %v4979 = vpack.c.b16 %v3575, %v3562
    %v4980 = vpack.c.b16 %v3576, %v3563
    %v4981 = vpack.c.b16 %v3577, %v3564
    %v4982 = vpack.c.b16 %v3578, %v3565
    %v4983 = vpack.c.b16 %v3579, %v3566
    %v4984 = vpack.c.b16 %v3580, %v3567
    %v4985 = vpack.c.b16 %v3581, %v3568
    %v4986 = vpack.c.b16 %v3582, %v3569
    %v4987 = vpack.c.b16 %v3583, %v3570
    %v4988 = vpack.c.b16 %v3584, %v3571
    %v4989 = vpack.c.b16 %v3585, %v3572
    %v4990 = vpack.c.b16 %v3586, %v3573
    %v4991 = vpack.c.b16 %v3600, %v3587
    %v4992 = vpack.c.b16 %v3601, %v3588
    %v4993 = vpack.c.b16 %v3602, %v3589
    %v4994 = vpack.c.b16 %v3603, %v3590
    %v4995 = vpack.c.b16 %v3604, %v3591
    %v4996 = vpack.c.b16 %v3605, %v3592
    %v4997 = vpack.c.b16 %v3606, %v3593
    %v4998 = vpack.c.b16 %v3607, %v3594
    %v4999 = vpack.c.b16 %v3608, %v3595
    %v5000 = vpack.c.b16 %v3609, %v3596
    %v5001 = vpack.c.b16 %v3610, %v3597
    %v5002 = vpack.c.b16 %v3611, %v3598
    %v5003 = vpack.c.b16 %v3612, %v3599
    %v5004 = vpack.c.b16 %v3626, %v3613
    %v5005 = vpack.c.b16 %v3627, %v3614
    %v5006 = vpack.c.b16 %v3628, %v3615
    %v5007 = vpack.c.b16 %v3629, %v3616
    %v5008 = vpack.c.b16 %v3630, %v3617
    %v5009 = vpack.c.b16 %v3631, %v3618
    %v5010 = vpack.c.b16 %v3632, %v3619
    %v5011 = vpack.c.b16 %v3633, %v3620
    %v5012 = vpack.c.b16 %v3634, %v3621
    %v5013 = vpack.c.b16 %v3635, %v3622
    %v5014 = vpack.c.b16 %v3636, %v3623
    %v5015 = vpack.c.b16 %v3637, %v3624
    %v5016 = vpack.c.b16 %v3638, %v3625
    %v5017 = vpack.c.b16 %v3652, %v3639
    %v5018 = vpack.c.b16 %v3653, %v3640
    %v5019 = vpack.c.b16 %v3654, %v3641
    %v5020 = vpack.c.b16 %v3655, %v3642
    %v5021 = vpack.c.b16 %v3656, %v3643
    %v5022 = vpack.c.b16 %v3657, %v3644
    %v5023 = vpack.c.b16 %v3658, %v3645
    %v5024 = vpack.c.b16 %v3659, %v3646
    %v5025 = vpack.c.b16 %v3660, %v3647
    %v5026 = vpack.c.b16 %v3661, %v3648
    %v5027 = vpack.c.b16 %v3662, %v3649
    %v5028 = vpack.c.b16 %v3663, %v3650
    %v5029 = vpack.c.b16 %v3664, %v3651
    %v5030 = vpack.c.b16 %v3678, %v3665
    %v5031 = vpack.c.b16 %v3679, %v3666
    %v5032 = vpack.c.b16 %v3680, %v3667
    %v5033 = vpack.c.b16 %v3681, %v3668
    %v5034 = vpack.c.b16 %v3682, %v3669
    %v5035 = vpack.c.b16 %v3683, %v3670
    %v5036 = vpack.c.b16 %v3684, %v3671
    %v5037 = vpack.c.b16 %v3685, %v3672
    %v5038 = vpack.c.b16 %v3686, %v3673
    %v5039 = vpack.c.b16 %v3687, %v3674
    %v5040 = vpack.c.b16 %v3688, %v3675
    %v5041 = vpack.c.b16 %v3689, %v3676
    %v5042 = vpack.c.b16 %v3690, %v3677
    %v5043 = vpack.c.b16 %v3704, %v3691
    %v5044 = vpack.c.b16 %v3705, %v3692
    %v5045 = vpack.c.b16 %v3706, %v3693
    %v5046 = vpack.c.b16 %v3707, %v3694
    %v5047 = vpack.c.b16 %v3708, %v3695
    %v5048 = vpack.c.b16 %v3709, %v3696
    %v5049 = vpack.c.b16 %v3710, %v3697
    %v5050 = vpack.c.b16 %v3711, %v3698
    %v5051 = vpack.c.b16 %v3712, %v3699
    %v5052 = vpack.c.b16 %v3713, %v3700
    %v5053 = vpack.c.b16 %v3714, %v3701
    %v5054 = vpack.c.b16 %v3715, %v3702
    %v5055 = vpack.c.b16 %v3716, %v3703
    %v5056 = vpack.c.b16 %v3730, %v3717
    %v5057 = vpack.c.b16 %v3731, %v3718
    %v5058 = vpack.c.b16 %v3732, %v3719
    %v5059 = vpack.c.b16 %v3733, %v3720
    %v5060 = vpack.c.b16 %v3734, %v3721
    %v5061 = vpack.c.b16 %v3735, %v3722
    %v5062 = vpack.c.b16 %v3736, %v3723
    %v5063 = vpack.c.b16 %v3737, %v3724
    %v5064 = vpack.c.b16 %v3738, %v3725
    %v5065 = vpack.c.b16 %v3739, %v3726
    %v5066 = vpack.c.b16 %v3740, %v3727
    %v5067 = vpack.c.b16 %v3741, %v3728
    %v5068 = vpack.c.b16 %v3742, %v3729
    %v5069 = vpack.c.b16 %v3756, %v3743
    %v5070 = vpack.c.b16 %v3757, %v3744
    %v5071 = vpack.c.b16 %v3758, %v3745
    %v5072 = vpack.c.b16 %v3759, %v3746
    %v5073 = vpack.c.b16 %v3760, %v3747
    %v5074 = vpack.c.b16 %v3761, %v3748
    %v5075 = vpack.c.b16 %v3762, %v3749
    %v5076 = vpack.c.b16 %v3763, %v3750
    %v5077 = vpack.c.b16 %v3764, %v3751
    %v5078 = vpack.c.b16 %v3765, %v3752
    %v5079 = vpack.c.b16 %v3766, %v3753
    %v5080 = vpack.c.b16 %v3767, %v3754
    %v5081 = vpack.c.b16 %v3768, %v3755
    %v5082 = vpack.c.b16 %v3782, %v3769
    %v5083 = vpack.c.b16 %v3783, %v3770
    %v5084 = vpack.c.b16 %v3784, %v3771
    %v5085 = vpack.c.b16 %v3785, %v3772
    %v5086 = vpack.c.b16 %v3786, %v3773
    %v5087 = vpack.c.b16 %v3787, %v3774
    %v5088 = vpack.c.b16 %v3788, %v3775
    %v5089 = vpack.c.b16 %v3789, %v3776
    %v5090 = vpack.c.b16 %v3790, %v3777
    %v5091 = vpack.c.b16 %v3791, %v3778
    %v5092 = vpack.c.b16 %v3792, %v3779
    %v5093 = vpack.c.b16 %v3793, %v3780
    %v5094 = vpack.c.b16 %v3794, %v3781
    %v5095 = vpack.c.b16 %v3808, %v3795
    %v5096 = vpack.c.b16 %v3809, %v3796
    %v5097 = vpack.c.b16 %v3810, %v3797
    %v5098 = vpack.c.b16 %v3811, %v3798
    %v5099 = vpack.c.b16 %v3812, %v3799
    %v5100 = vpack.c.b16 %v3813, %v3800
    %v5101 = vpack.c.b16 %v3814, %v3801
    %v5102 = vpack.c.b16 %v3815, %v3802
    %v5103 = vpack.c.b16 %v3816, %v3803
    %v5104 = vpack.c.b16 %v3817, %v3804
    %v5105 = vpack.c.b16 %v3818, %v3805
    %v5106 = vpack.c.b16 %v3819, %v3806
    %v5107 = vpack.c.b16 %v3820, %v3807
    %v5108 = vpack.c.b16 %v3834, %v3821
    %v5109 = vpack.c.b16 %v3835, %v3822
    %v5110 = vpack.c.b16 %v3836, %v3823
    %v5111 = vpack.c.b16 %v3837, %v3824
    %v5112 = vpack.c.b16 %v3838, %v3825
    %v5113 = vpack.c.b16 %v3839, %v3826
    %v5114 = vpack.c.b16 %v3840, %v3827
    %v5115 = vpack.c.b16 %v3841, %v3828
    %v5116 = vpack.c.b16 %v3842, %v3829
    %v5117 = vpack.c.b16 %v3843, %v3830
    %v5118 = vpack.c.b16 %v3844, %v3831
    %v5119 = vpack.c.b16 %v3845, %v3832
    %v5120 = vpack.c.b16 %v3846, %v3833
    %v5121 = vpack.c.b16 %v3860, %v3847
    %v5122 = vpack.c.b16 %v3861, %v3848
    %v5123 = vpack.c.b16 %v3862, %v3849
    %v5124 = vpack.c.b16 %v3863, %v3850
    %v5125 = vpack.c.b16 %v3864, %v3851
    %v5126 = vpack.c.b16 %v3865, %v3852
    %v5127 = vpack.c.b16 %v3866, %v3853
    %v5128 = vpack.c.b16 %v3867, %v3854
    %v5129 = vpack.c.b16 %v3868, %v3855
    %v5130 = vpack.c.b16 %v3869, %v3856
    %v5131 = vpack.c.b16 %v3870, %v3857
    %v5132 = vpack.c.b16 %v3871, %v3858
    %v5133 = vpack.c.b16 %v3872, %v3859
    %v5134 = vpack.c.b16 %v3886, %v3873
    %v5135 = vpack.c.b16 %v3887, %v3874
    %v5136 = vpack.c.b16 %v3888, %v3875
    %v5137 = vpack.c.b16 %v3889, %v3876
    %v5138 = vpack.c.b16 %v3890, %v3877
    %v5139 = vpack.c.b16 %v3891, %v3878
    %v5140 = vpack.c.b16 %v3892, %v3879
    %v5141 = vpack.c.b16 %v3893, %v3880
    %v5142 = vpack.c.b16 %v3894, %v3881
    %v5143 = vpack.c.b16 %v3895, %v3882
    %v5144 = vpack.c.b16 %v3896, %v3883
    %v5145 = vpack.c.b16 %v3897, %v3884
    %v5146 = vpack.c.b16 %v3898, %v3885
    %v5147 = vpack.c.b16 %v3912, %v3899
    %v5148 = vpack.c.b16 %v3913, %v3900
    %v5149 = vpack.c.b16 %v3914, %v3901
    %v5150 = vpack.c.b16 %v3915, %v3902
    %v5151 = vpack.c.b16 %v3916, %v3903
    %v5152 = vpack.c.b16 %v3917, %v3904
    %v5153 = vpack.c.b16 %v3918, %v3905
    %v5154 = vpack.c.b16 %v3919, %v3906
    %v5155 = vpack.c.b16 %v3920, %v3907
    %v5156 = vpack.c.b16 %v3921, %v3908
    %v5157 = vpack.c.b16 %v3922, %v3909
    %v5158 = vpack.c.b16 %v3923, %v3910
    %v5159 = vpack.c.b16 %v3924, %v3911
    %v5160 = vpack.c.b16 %v3938, %v3925
    %v5161 = vpack.c.b16 %v3939, %v3926
    %v5162 = vpack.c.b16 %v3940, %v3927
    %v5163 = vpack.c.b16 %v3941, %v3928
    %v5164 = vpack.c.b16 %v3942, %v3929
    %v5165 = vpack.c.b16 %v3943, %v3930
    %v5166 = vpack.c.b16 %v3944, %v3931
    %v5167 = vpack.c.b16 %v3945, %v3932
    %v5168 = vpack.c.b16 %v3946, %v3933
    %v5169 = vpack.c.b16 %v3947, %v3934
    %v5170 = vpack.c.b16 %v3948, %v3935
    %v5171 = vpack.c.b16 %v3949, %v3936
    %v5172 = vpack.c.b16 %v3950, %v3937
    %v5173 = vpack.c.b16 %v3964, %v3951
    %v5174 = vpack.c.b16 %v3965, %v3952
    %v5175 = vpack.c.b16 %v3966, %v3953
    %v5176 = vpack.c.b16 %v3967, %v3954
    %v5177 = vpack.c.b16 %v3968, %v3955
    %v5178 = vpack.c.b16 %v3969, %v3956
    %v5179 = vpack.c.b16 %v3970, %v3957
    %v5180 = vpack.c.b16 %v3971, %v3958
    %v5181 = vpack.c.b16 %v3972, %v3959
    %v5182 = vpack.c.b16 %v3973, %v3960
    %v5183 = vpack.c.b16 %v3974, %v3961
    %v5184 = vpack.c.b16 %v3975, %v3962
    %v5185 = vpack.c.b16 %v3976, %v3963
    %v5186 = vpack.c.b16 %v3990, %v3977
    %v5187 = vpack.c.b16 %v3991, %v3978
    %v5188 = vpack.c.b16 %v3992, %v3979
    %v5189 = vpack.c.b16 %v3993, %v3980
    %v5190 = vpack.c.b16 %v3994, %v3981
    %v5191 = vpack.c.b16 %v3995, %v3982
    %v5192 = vpack.c.b16 %v3996, %v3983
    %v5193 = vpack.c.b16 %v3997, %v3984
    %v5194 = vpack.c.b16 %v3998, %v3985
    %v5195 = vpack.c.b16 %v3999, %v3986
    %v5196 = vpack.c.b16 %v4000, %v3987
    %v5197 = vpack.c.b16 %v4001, %v3988
    %v5198 = vpack.c.b16 %v4002, %v3989
    %v5199 = vpack.c.b16 %v4016, %v4003
    %v5200 = vpack.c.b16 %v4017, %v4004
    %v5201 = vpack.c.b16 %v4018, %v4005
    %v5202 = vpack.c.b16 %v4019, %v4006
    %v5203 = vpack.c.b16 %v4020, %v4007
    %v5204 = vpack.c.b16 %v4021, %v4008
    %v5205 = vpack.c.b16 %v4022, %v4009
    %v5206 = vpack.c.b16 %v4023, %v4010
    %v5207 = vpack.c.b16 %v4024, %v4011
    %v5208 = vpack.c.b16 %v4025, %v4012
    %v5209 = vpack.c.b16 %v4026, %v4013
    %v5210 = vpack.c.b16 %v4027, %v4014
    %v5211 = vpack.c.b16 %v4028, %v4015
    %v5212 = vpack.c.b16 %v4042, %v4029
    %v5213 = vpack.c.b16 %v4043, %v4030
    %v5214 = vpack.c.b16 %v4044, %v4031
    %v5215 = vpack.c.b16 %v4045, %v4032
    %v5216 = vpack.c.b16 %v4046, %v4033
    %v5217 = vpack.c.b16 %v4047, %v4034
    %v5218 = vpack.c.b16 %v4048, %v4035
    %v5219 = vpack.c.b16 %v4049, %v4036
    %v5220 = vpack.c.b16 %v4050, %v4037
    %v5221 = vpack.c.b16 %v4051, %v4038
    %v5222 = vpack.c.b16 %v4052, %v4039
    %v5223 = vpack.c.b16 %v4053, %v4040
    %v5224 = vpack.c.b16 %v4054, %v4041
    %v5225 = vpack.c.b16 %v4068, %v4055
    %v5226 = vpack.c.b16 %v4069, %v4056
    %v5227 = vpack.c.b16 %v4070, %v4057
    %v5228 = vpack.c.b16 %v4071, %v4058
    %v5229 = vpack.c.b16 %v4072, %v4059
    %v5230 = vpack.c.b16 %v4073, %v4060
    %v5231 = vpack.c.b16 %v4074, %v4061
    %v5232 = vpack.c.b16 %v4075, %v4062
    %v5233 = vpack.c.b16 %v4076, %v4063
    %v5234 = vpack.c.b16 %v4077, %v4064
    %v5235 = vpack.c.b16 %v4078, %v4065
    %v5236 = vpack.c.b16 %v4079, %v4066
    %v5237 = vpack.c.b16 %v4080, %v4067
    %v5238 = vpack.c.b16 %v4094, %v4081
    %v5239 = vpack.c.b16 %v4095, %v4082
    %v5240 = vpack.c.b16 %v4096, %v4083
    %v5241 = vpack.c.b16 %v4097, %v4084
    %v5242 = vpack.c.b16 %v4098, %v4085
    %v5243 = vpack.c.b16 %v4099, %v4086
    %v5244 = vpack.c.b16 %v4100, %v4087
    %v5245 = vpack.c.b16 %v4101, %v4088
    %v5246 = vpack.c.b16 %v4102, %v4089
    %v5247 = vpack.c.b16 %v4103, %v4090
    %v5248 = vpack.c.b16 %v4104, %v4091
    %v5249 = vpack.c.b16 %v4105, %v4092
    %v5250 = vpack.c.b16 %v4106, %v4093
    %v5251 = vpack.c.b16 %v4120, %v4107
    %v5252 = vpack.c.b16 %v4121, %v4108
    %v5253 = vpack.c.b16 %v4122, %v4109
    %v5254 = vpack.c.b16 %v4123, %v4110
    %v5255 = vpack.c.b16 %v4124, %v4111
    %v5256 = vpack.c.b16 %v4125, %v4112
    %v5257 = vpack.c.b16 %v4126, %v4113
    %v5258 = vpack.c.b16 %v4127, %v4114
    %v5259 = vpack.c.b16 %v4128, %v4115
    %v5260 = vpack.c.b16 %v4129, %v4116
    %v5261 = vpack.c.b16 %v4130, %v4117
    %v5262 = vpack.c.b16 %v4131, %v4118
    %v5263 = vpack.c.b16 %v4132, %v4119
    %v5264 = vpack.c.b16 %v4146, %v4133
    %v5265 = vpack.c.b16 %v4147, %v4134
    %v5266 = vpack.c.b16 %v4148, %v4135
    %v5267 = vpack.c.b16 %v4149, %v4136
    %v5268 = vpack.c.b16 %v4150, %v4137
    %v5269 = vpack.c.b16 %v4151, %v4138
    %v5270 = vpack.c.b16 %v4152, %v4139
    %v5271 = vpack.c.b16 %v4153, %v4140
    %v5272 = vpack.c.b16 %v4154, %v4141
    %v5273 = vpack.c.b16 %v4155, %v4142
    %v5274 = vpack.c.b16 %v4156, %v4143
    %v5275 = vpack.c.b16 %v4157, %v4144
    %v5276 = vpack.c.b16 %v4158, %v4145
    %v5277 = vpack.c.b16 %v4172, %v4159
    %v5278 = vpack.c.b16 %v4173, %v4160
    %v5279 = vpack.c.b16 %v4174, %v4161
    %v5280 = vpack.c.b16 %v4175, %v4162
    %v5281 = vpack.c.b16 %v4176, %v4163
    %v5282 = vpack.c.b16 %v4177, %v4164
    %v5283 = vpack.c.b16 %v4178, %v4165
    %v5284 = vpack.c.b16 %v4179, %v4166
    %v5285 = vpack.c.b16 %v4180, %v4167
    %v5286 = vpack.c.b16 %v4181, %v4168
    %v5287 = vpack.c.b16 %v4182, %v4169
    %v5288 = vpack.c.b16 %v4183, %v4170
    %v5289 = vpack.c.b16 %v4184, %v4171
    %v5290 = vpack.c.b16 %v4198, %v4185
    %v5291 = vpack.c.b16 %v4199, %v4186
    %v5292 = vpack.c.b16 %v4200, %v4187
    %v5293 = vpack.c.b16 %v4201, %v4188
    %v5294 = vpack.c.b16 %v4202, %v4189
    %v5295 = vpack.c.b16 %v4203, %v4190
    %v5296 = vpack.c.b16 %v4204, %v4191
    %v5297 = vpack.c.b16 %v4205, %v4192
    %v5298 = vpack.c.b16 %v4206, %v4193
    %v5299 = vpack.c.b16 %v4207, %v4194
    %v5300 = vpack.c.b16 %v4208, %v4195
    %v5301 = vpack.c.b16 %v4209, %v4196
    %v5302 = vpack.c.b16 %v4210, %v4197
    %v5303 = vpack.c.b16 %v4224, %v4211
    %v5304 = vpack.c.b16 %v4225, %v4212
    %v5305 = vpack.c.b16 %v4226, %v4213
    %v5306 = vpack.c.b16 %v4227, %v4214
    %v5307 = vpack.c.b16 %v4228, %v4215
    %v5308 = vpack.c.b16 %v4229, %v4216
    %v5309 = vpack.c.b16 %v4230, %v4217
    %v5310 = vpack.c.b16 %v4231, %v4218
    %v5311 = vpack.c.b16 %v4232, %v4219
    %v5312 = vpack.c.b16 %v4233, %v4220
    %v5313 = vpack.c.b16 %v4234, %v4221
    %v5314 = vpack.c.b16 %v4235, %v4222
    %v5315 = vpack.c.b16 %v4236, %v4223
    %v5316 = vpack.c.b16 %v4250, %v4237
    %v5317 = vpack.c.b16 %v4251, %v4238
    %v5318 = vpack.c.b16 %v4252, %v4239
    %v5319 = vpack.c.b16 %v4253, %v4240
    %v5320 = vpack.c.b16 %v4254, %v4241
    %v5321 = vpack.c.b16 %v4255, %v4242
    %v5322 = vpack.c.b16 %v4256, %v4243
    %v5323 = vpack.c.b16 %v4257, %v4244
    %v5324 = vpack.c.b16 %v4258, %v4245
    %v5325 = vpack.c.b16 %v4259, %v4246
    %v5326 = vpack.c.b16 %v4260, %v4247
    %v5327 = vpack.c.b16 %v4261, %v4248
    %v5328 = vpack.c.b16 %v4262, %v4249
    %v5329 = vpack.c.b16 %v4276, %v4263
    %v5330 = vpack.c.b16 %v4277, %v4264
    %v5331 = vpack.c.b16 %v4278, %v4265
    %v5332 = vpack.c.b16 %v4279, %v4266
    %v5333 = vpack.c.b16 %v4280, %v4267
    %v5334 = vpack.c.b16 %v4281, %v4268
    %v5335 = vpack.c.b16 %v4282, %v4269
    %v5336 = vpack.c.b16 %v4283, %v4270
    %v5337 = vpack.c.b16 %v4284, %v4271
    %v5338 = vpack.c.b16 %v4285, %v4272
    %v5339 = vpack.c.b16 %v4286, %v4273
    %v5340 = vpack.c.b16 %v4287, %v4274
    %v5341 = vpack.c.b16 %v4288, %v4275
    %v5342 = vpack.c.b16 %v4302, %v4289
    %v5343 = vpack.c.b16 %v4303, %v4290
    %v5344 = vpack.c.b16 %v4304, %v4291
    %v5345 = vpack.c.b16 %v4305, %v4292
    %v5346 = vpack.c.b16 %v4306, %v4293
    %v5347 = vpack.c.b16 %v4307, %v4294
    %v5348 = vpack.c.b16 %v4308, %v4295
    %v5349 = vpack.c.b16 %v4309, %v4296
    %v5350 = vpack.c.b16 %v4310, %v4297
    %v5351 = vpack.c.b16 %v4311, %v4298
    %v5352 = vpack.c.b16 %v4312, %v4299
    %v5353 = vpack.c.b16 %v4313, %v4300
    %v5354 = vpack.c.b16 %v4314, %v4301
    %v5355 = vpack.c.b16 %v4328, %v4315
    %v5356 = vpack.c.b16 %v4329, %v4316
    %v5357 = vpack.c.b16 %v4330, %v4317
    %v5358 = vpack.c.b16 %v4331, %v4318
    %v5359 = vpack.c.b16 %v4332, %v4319
    %v5360 = vpack.c.b16 %v4333, %v4320
    %v5361 = vpack.c.b16 %v4334, %v4321
    %v5362 = vpack.c.b16 %v4335, %v4322
    %v5363 = vpack.c.b16 %v4336, %v4323
    %v5364 = vpack.c.b16 %v4337, %v4324
    %v5365 = vpack.c.b16 %v4338, %v4325
    %v5366 = vpack.c.b16 %v4339, %v4326
    %v5367 = vpack.c.b16 %v4340, %v4327
    %v5368 = vpack.c.b16 %v4354, %v4341
    %v5369 = vpack.c.b16 %v4355, %v4342
    %v5370 = vpack.c.b16 %v4356, %v4343
    %v5371 = vpack.c.b16 %v4357, %v4344
    %v5372 = vpack.c.b16 %v4358, %v4345
    %v5373 = vpack.c.b16 %v4359, %v4346
    %v5374 = vpack.c.b16 %v4360, %v4347
    %v5375 = vpack.c.b16 %v4361, %v4348
    %v5376 = vpack.c.b16 %v4362, %v4349
    %v5377 = vpack.c.b16 %v4363, %v4350
    %v5378 = vpack.c.b16 %v4364, %v4351
    %v5379 = vpack.c.b16 %v4365, %v4352
    %v5380 = vpack.c.b16 %v4366, %v4353
    %v5381 = vpack.c.b16 %v4380, %v4367
    %v5382 = vpack.c.b16 %v4381, %v4368
    %v5383 = vpack.c.b16 %v4382, %v4369
    %v5384 = vpack.c.b16 %v4383, %v4370
    %v5385 = vpack.c.b16 %v4384, %v4371
    %v5386 = vpack.c.b16 %v4385, %v4372
    %v5387 = vpack.c.b16 %v4386, %v4373
    %v5388 = vpack.c.b16 %v4387, %v4374
    %v5389 = vpack.c.b16 %v4388, %v4375
    %v5390 = vpack.c.b16 %v4389, %v4376
    %v5391 = vpack.c.b16 %v4390, %v4377
    %v5392 = vpack.c.b16 %v4391, %v4378
    %v5393 = vpack.c.b16 %v4392, %v4379
    %v5394 = vpack.c.b16 %v4406, %v4393
    %v5395 = vpack.c.b16 %v4407, %v4394
    %v5396 = vpack.c.b16 %v4408, %v4395
    %v5397 = vpack.c.b16 %v4409, %v4396
    %v5398 = vpack.c.b16 %v4410, %v4397
    %v5399 = vpack.c.b16 %v4411, %v4398
    %v5400 = vpack.c.b16 %v4412, %v4399
    %v5401 = vpack.c.b16 %v4413, %v4400
    %v5402 = vpack.c.b16 %v4414, %v4401
    %v5403 = vpack.c.b16 %v4415, %v4402
    %v5404 = vpack.c.b16 %v4416, %v4403
    %v5405 = vpack.c.b16 %v4417, %v4404
    %v5406 = vpack.c.b16 %v4418, %v4405
    %v5407 = vpack.c.b16 %v4432, %v4419
    %v5408 = vpack.c.b16 %v4433, %v4420
    %v5409 = vpack.c.b16 %v4434, %v4421
    %v5410 = vpack.c.b16 %v4435, %v4422
    %v5411 = vpack.c.b16 %v4436, %v4423
    %v5412 = vpack.c.b16 %v4437, %v4424
    %v5413 = vpack.c.b16 %v4438, %v4425
    %v5414 = vpack.c.b16 %v4439, %v4426
    %v5415 = vpack.c.b16 %v4440, %v4427
    %v5416 = vpack.c.b16 %v4441, %v4428
    %v5417 = vpack.c.b16 %v4442, %v4429
    %v5418 = vpack.c.b16 %v4443, %v4430
    %v5419 = vpack.c.b16 %v4444, %v4431
    %v5420 = vpack.c.b16 %v4458, %v4445
    %v5421 = vpack.c.b16 %v4459, %v4446
    %v5422 = vpack.c.b16 %v4460, %v4447
    %v5423 = vpack.c.b16 %v4461, %v4448
    %v5424 = vpack.c.b16 %v4462, %v4449
    %v5425 = vpack.c.b16 %v4463, %v4450
    %v5426 = vpack.c.b16 %v4464, %v4451
    %v5427 = vpack.c.b16 %v4465, %v4452
    %v5428 = vpack.c.b16 %v4466, %v4453
    %v5429 = vpack.c.b16 %v4467, %v4454
    %v5430 = vpack.c.b16 %v4468, %v4455
    %v5431 = vpack.c.b16 %v4469, %v4456
    %v5432 = vpack.c.b16 %v4470, %v4457
    %v5433 = vpack.c.b16 %v4484, %v4471
    %v5434 = vpack.c.b16 %v4485, %v4472
    %v5435 = vpack.c.b16 %v4486, %v4473
    %v5436 = vpack.c.b16 %v4487, %v4474
    %v5437 = vpack.c.b16 %v4488, %v4475
    %v5438 = vpack.c.b16 %v4489, %v4476
    %v5439 = vpack.c.b16 %v4490, %v4477
    %v5440 = vpack.c.b16 %v4491, %v4478
    %v5441 = vpack.c.b16 %v4492, %v4479
    %v5442 = vpack.c.b16 %v4493, %v4480
    %v5443 = vpack.c.b16 %v4494, %v4481
    %v5444 = vpack.c.b16 %v4495, %v4482
    %v5445 = vpack.c.b16 %v4496, %v4483
    %v5446 = vpack.c.b16 %v4510, %v4497
    %v5447 = vpack.c.b16 %v4511, %v4498
    %v5448 = vpack.c.b16 %v4512, %v4499
    %v5449 = vpack.c.b16 %v4513, %v4500
    %v5450 = vpack.c.b16 %v4514, %v4501
    %v5451 = vpack.c.b16 %v4515, %v4502
    %v5452 = vpack.c.b16 %v4516, %v4503
    %v5453 = vpack.c.b16 %v4517, %v4504
    %v5454 = vpack.c.b16 %v4518, %v4505
    %v5455 = vpack.c.b16 %v4519, %v4506
    %v5456 = vpack.c.b16 %v4520, %v4507
    %v5457 = vpack.c.b16 %v4521, %v4508
    %v5458 = vpack.c.b16 %v4522, %v4509
    %v5459 = vpack.c.b16 %v4536, %v4523
    %v5460 = vpack.c.b16 %v4537, %v4524
    %v5461 = vpack.c.b16 %v4538, %v4525
    %v5462 = vpack.c.b16 %v4539, %v4526
    %v5463 = vpack.c.b16 %v4540, %v4527
    %v5464 = vpack.c.b16 %v4541, %v4528
    %v5465 = vpack.c.b16 %v4542, %v4529
    %v5466 = vpack.c.b16 %v4543, %v4530
    %v5467 = vpack.c.b16 %v4544, %v4531
    %v5468 = vpack.c.b16 %v4545, %v4532
    %v5469 = vpack.c.b16 %v4546, %v4533
    %v5470 = vpack.c.b16 %v4547, %v4534
    %v5471 = vpack.c.b16 %v4548, %v4535
    %v5472 = vpack.c.b16 %v4562, %v4549
    %v5473 = vpack.c.b16 %v4563, %v4550
    %v5474 = vpack.c.b16 %v4564, %v4551
    %v5475 = vpack.c.b16 %v4565, %v4552
    %v5476 = vpack.c.b16 %v4566, %v4553
    %v5477 = vpack.c.b16 %v4567, %v4554
    %v5478 = vpack.c.b16 %v4568, %v4555
    %v5479 = vpack.c.b16 %v4569, %v4556
    %v5480 = vpack.c.b16 %v4570, %v4557
    %v5481 = vpack.c.b16 %v4571, %v4558
    %v5482 = vpack.c.b16 %v4572, %v4559
    %v5483 = vpack.c.b16 %v4573, %v4560
    %v5484 = vpack.c.b16 %v4574, %v4561
    %v5485 = vpack.c.b16 %v4588, %v4575
    %v5486 = vpack.c.b16 %v4589, %v4576
    %v5487 = vpack.c.b16 %v4590, %v4577
    %v5488 = vpack.c.b16 %v4591, %v4578
    %v5489 = vpack.c.b16 %v4592, %v4579
    %v5490 = vpack.c.b16 %v4593, %v4580
    %v5491 = vpack.c.b16 %v4594, %v4581
    %v5492 = vpack.c.b16 %v4595, %v4582
    %v5493 = vpack.c.b16 %v4596, %v4583
    %v5494 = vpack.c.b16 %v4597, %v4584
    %v5495 = vpack.c.b16 %v4598, %v4585
    %v5496 = vpack.c.b16 %v4599, %v4586
    %v5497 = vpack.c.b16 %v4600, %v4587
    %v5498 = vpack.c.b16 %v4614, %v4601
    %v5499 = vpack.c.b16 %v4615, %v4602
    %v5500 = vpack.c.b16 %v4616, %v4603
    %v5501 = vpack.c.b16 %v4617, %v4604
    %v5502 = vpack.c.b16 %v4618, %v4605
    %v5503 = vpack.c.b16 %v4619, %v4606
    %v5504 = vpack.c.b16 %v4620, %v4607
    %v5505 = vpack.c.b16 %v4621, %v4608
    %v5506 = vpack.c.b16 %v4622, %v4609
    %v5507 = vpack.c.b16 %v4623, %v4610
    %v5508 = vpack.c.b16 %v4624, %v4611
    %v5509 = vpack.c.b16 %v4625, %v4612
    %v5510 = vpack.c.b16 %v4626, %v4613
    %v5511 = vpack.c.b16 %v4640, %v4627
    %v5512 = vpack.c.b16 %v4641, %v4628
    %v5513 = vpack.c.b16 %v4642, %v4629
    %v5514 = vpack.c.b16 %v4643, %v4630
    %v5515 = vpack.c.b16 %v4644, %v4631
    %v5516 = vpack.c.b16 %v4645, %v4632
    %v5517 = vpack.c.b16 %v4646, %v4633
    %v5518 = vpack.c.b16 %v4647, %v4634
    %v5519 = vpack.c.b16 %v4648, %v4635
    %v5520 = vpack.c.b16 %v4649, %v4636
    %v5521 = vpack.c.b16 %v4650, %v4637
    %v5522 = vpack.c.b16 %v4651, %v4638
    %v5523 = vpack.c.b16 %v4652, %v4639
    %v5524 = vpack.c.b16 %v4666, %v4653
    %v5525 = vpack.c.b16 %v4667, %v4654
    %v5526 = vpack.c.b16 %v4668, %v4655
    %v5527 = vpack.c.b16 %v4669, %v4656
    %v5528 = vpack.c.b16 %v4670, %v4657
    %v5529 = vpack.c.b16 %v4671, %v4658
    %v5530 = vpack.c.b16 %v4672, %v4659
    %v5531 = vpack.c.b16 %v4673, %v4660
    %v5532 = vpack.c.b16 %v4674, %v4661
    %v5533 = vpack.c.b16 %v4675, %v4662
    %v5534 = vpack.c.b16 %v4676, %v4663
    %v5535 = vpack.c.b16 %v4677, %v4664
    %v5536 = vpack.c.b16 %v4678, %v4665
    %v5537 = vpack.c.b16 %v4692, %v4679
    %v5538 = vpack.c.b16 %v4693, %v4680
    %v5539 = vpack.c.b16 %v4694, %v4681
    %v5540 = vpack.c.b16 %v4695, %v4682
    %v5541 = vpack.c.b16 %v4696, %v4683
    %v5542 = vpack.c.b16 %v4697, %v4684
    %v5543 = vpack.c.b16 %v4698, %v4685
    %v5544 = vpack.c.b16 %v4699, %v4686
    %v5545 = vpack.c.b16 %v4700, %v4687
    %v5546 = vpack.c.b16 %v4701, %v4688
    %v5547 = vpack.c.b16 %v4702, %v4689
    %v5548 = vpack.c.b16 %v4703, %v4690
    %v5549 = vpack.c.b16 %v4704, %v4691
    %v5550 = vpack.c.b16 %v4718, %v4705
    %v5551 = vpack.c.b16 %v4719, %v4706
    %v5552 = vpack.c.b16 %v4720, %v4707
    %v5553 = vpack.c.b16 %v4721, %v4708
    %v5554 = vpack.c.b16 %v4722, %v4709
    %v5555 = vpack.c.b16 %v4723, %v4710
    %v5556 = vpack.c.b16 %v4724, %v4711
    %v5557 = vpack.c.b16 %v4725, %v4712
    %v5558 = vpack.c.b16 %v4726, %v4713
    %v5559 = vpack.c.b16 %v4727, %v4714
    %v5560 = vpack.c.b16 %v4728, %v4715
    %v5561 = vpack.c.b16 %v4729, %v4716
    %v5562 = vpack.c.b16 %v4730, %v4717
    %v5563 = vpack.c.b16 %v4744, %v4731
    %v5564 = vpack.c.b16 %v4745, %v4732
    %v5565 = vpack.c.b16 %v4746, %v4733
    %v5566 = vpack.c.b16 %v4747, %v4734
    %v5567 = vpack.c.b16 %v4748, %v4735
    %v5568 = vpack.c.b16 %v4749, %v4736
    %v5569 = vpack.c.b16 %v4750, %v4737
    %v5570 = vpack.c.b16 %v4751, %v4738
    %v5571 = vpack.c.b16 %v4752, %v4739
    %v5572 = vpack.c.b16 %v4753, %v4740
    %v5573 = vpack.c.b16 %v4754, %v4741
    %v5574 = vpack.c.b16 %v4755, %v4742
    %v5575 = vpack.c.b16 %v4756, %v4743
    %v5576 = vpack.c.b16 %v4770, %v4757
    %v5577 = vpack.c.b16 %v4771, %v4758
    %v5578 = vpack.c.b16 %v4772, %v4759
    %v5579 = vpack.c.b16 %v4773, %v4760
    %v5580 = vpack.c.b16 %v4774, %v4761
    %v5581 = vpack.c.b16 %v4775, %v4762
    %v5582 = vpack.c.b16 %v4776, %v4763
    %v5583 = vpack.c.b16 %v4777, %v4764
    %v5584 = vpack.c.b16 %v4778, %v4765
    %v5585 = vpack.c.b16 %v4779, %v4766
    %v5586 = vpack.c.b16 %v4780, %v4767
    %v5587 = vpack.c.b16 %v4781, %v4768
    %v5588 = vpack.c.b16 %v4782, %v4769
    %v5589 = vpack.c.b16 %v4796, %v4783
    %v5590 = vpack.c.b16 %v4797, %v4784
    %v5591 = vpack.c.b16 %v4798, %v4785
    %v5592 = vpack.c.b16 %v4799, %v4786
    %v5593 = vpack.c.b16 %v4800, %v4787
    %v5594 = vpack.c.b16 %v4801, %v4788
    %v5595 = vpack.c.b16 %v4802, %v4789
    %v5596 = vpack.c.b16 %v4803, %v4790
    %v5597 = vpack.c.b16 %v4804, %v4791
    %v5598 = vpack.c.b16 %v4805, %v4792
    %v5599 = vpack.c.b16 %v4806, %v4793
    %v5600 = vpack.c.b16 %v4807, %v4794
    %v5601 = vpack.c.b16 %v4808, %v4795
    %v5602 = vpack.c.b16 %v4822, %v4809
    %v5603 = vpack.c.b16 %v4823, %v4810
    %v5604 = vpack.c.b16 %v4824, %v4811
    %v5605 = vpack.c.b16 %v4825, %v4812
    %v5606 = vpack.c.b16 %v4826, %v4813
    %v5607 = vpack.c.b16 %v4827, %v4814
    %v5608 = vpack.c.b16 %v4828, %v4815
    %v5609 = vpack.c.b16 %v4829, %v4816
    %v5610 = vpack.c.b16 %v4830, %v4817
    %v5611 = vpack.c.b16 %v4831, %v4818
    %v5612 = vpack.c.b16 %v4832, %v4819
    %v5613 = vpack.c.b16 %v4833, %v4820
    %v5614 = vpack.c.b16 %v4834, %v4821
    %v5615 = vpack.c.b16 %v4848, %v4835
    %v5616 = vpack.c.b16 %v4849, %v4836
    %v5617 = vpack.c.b16 %v4850, %v4837
    %v5618 = vpack.c.b16 %v4851, %v4838
    %v5619 = vpack.c.b16 %v4852, %v4839
    %v5620 = vpack.c.b16 %v4853, %v4840
    %v5621 = vpack.c.b16 %v4854, %v4841
    %v5622 = vpack.c.b16 %v4855, %v4842
    %v5623 = vpack.c.b16 %v4856, %v4843
    %v5624 = vpack.c.b16 %v4857, %v4844
    %v5625 = vpack.c.b16 %v4858, %v4845
    %v5626 = vpack.c.b16 %v4859, %v4846
    %v5627 = vpack.c.b16 %v4860, %v4847
    %v5628 = vpack.c.b16 %v4874, %v4861
    %v5629 = vpack.c.b16 %v4875, %v4862
    %v5630 = vpack.c.b16 %v4876, %v4863
    %v5631 = vpack.c.b16 %v4877, %v4864
    %v5632 = vpack.c.b16 %v4878, %v4865
    %v5633 = vpack.c.b16 %v4879, %v4866
    %v5634 = vpack.c.b16 %v4880, %v4867
    %v5635 = vpack.c.b16 %v4881, %v4868
    %v5636 = vpack.c.b16 %v4882, %v4869
    %v5637 = vpack.c.b16 %v4883, %v4870
    %v5638 = vpack.c.b16 %v4884, %v4871
    %v5639 = vpack.c.b16 %v4885, %v4872
    %v5640 = vpack.c.b16 %v4886, %v4873
    %v5641 = vpack.c.b16 %v4900, %v4887
    %v5642 = vpack.c.b16 %v4901, %v4888
    %v5643 = vpack.c.b16 %v4902, %v4889
    %v5644 = vpack.c.b16 %v4903, %v4890
    %v5645 = vpack.c.b16 %v4904, %v4891
    %v5646 = vpack.c.b16 %v4905, %v4892
    %v5647 = vpack.c.b16 %v4906, %v4893
    %v5648 = vpack.c.b16 %v4907, %v4894
    %v5649 = vpack.c.b16 %v4908, %v4895
    %v5650 = vpack.c.b16 %v4909, %v4896
    %v5651 = vpack.c.b16 %v4910, %v4897
    %v5652 = vpack.c.b16 %v4911, %v4898
    %v5653 = vpack.c.b16 %v4912, %v4899
    %v5654 = vpack.c.b16 %v4926, %v4913
    %v5655 = vpack.c.b16 %v4927, %v4914
    %v5656 = vpack.c.b16 %v4928, %v4915
    %v5657 = vpack.c.b16 %v4929, %v4916
    %v5658 = vpack.c.b16 %v4930, %v4917
    %v5659 = vpack.c.b16 %v4931, %v4918
    %v5660 = vpack.c.b16 %v4932, %v4919
    %v5661 = vpack.c.b16 %v4933, %v4920
    %v5662 = vpack.c.b16 %v4934, %v4921
    %v5663 = vpack.c.b16 %v4935, %v4922
    %v5664 = vpack.c.b16 %v4936, %v4923
    %v5665 = vpack.c.b16 %v4937, %v4924
    %v5666 = vpack.c.b16 %v4938, %v4925
    %6395 = vmatprep.subr.bf16.mxu0 %v4940
    %6396 = vmatpush1.bf16.msra.mxu0 %v4939
    %6397 = vmatprep.subr.bf16.mxu0 %v4953
    %6398 = vmatpush1.bf16.msra.mxu0 %v4952
    %6399 = vmatprep.subr.bf16.mxu0 %v4966
    %6400 = vmatpush1.bf16.msra.mxu0 %v4965
    %6401 = vmatprep.subr.bf16.mxu0 %v4979
    %6402 = vmatpush1.bf16.msra.mxu0 %v4978
    %6403 = vmatprep.subr.bf16.mxu0 %v4992
    %6404 = vmatpush1.bf16.msra.mxu0 %v4991
    %6405 = vmatprep.subr.bf16.mxu0 %v5005
    %6406 = vmatpush1.bf16.msra.mxu0 %v5004
    %6407 = vmatprep.subr.bf16.mxu0 %v5018
    %6408 = vmatpush1.bf16.msra.mxu0 %v5017
    %6409 = vmatprep.subr.bf16.mxu0 %v5031
    %6410 = vmatpush1.bf16.msra.mxu0 %v5030
    %6411 = vmatprep.subr.bf16.mxu0 %v5044
    %6412 = vmatpush1.bf16.msra.mxu0 %v5043
    %6413 = vmatprep.subr.bf16.mxu0 %v5057
    %6414 = vmatpush1.bf16.msra.mxu0 %v5056
    %6415 = vmatprep.subr.bf16.mxu0 %v5070
    %6416 = vmatpush1.bf16.msra.mxu0 %v5069
    %6417 = vmatprep.subr.bf16.mxu0 %v5083
    %6418 = vmatpush1.bf16.msra.mxu0 %v5082
    %6419 = vmatprep.subr.bf16.mxu0 %v5096
    %6420 = vmatpush1.bf16.msra.mxu0 %v5095
    %6421 = vmatprep.subr.bf16.mxu0 %v5109
    %6422 = vmatpush1.bf16.msra.mxu0 %v5108
    %6423 = vmatprep.subr.bf16.mxu0 %v5122
    %6424 = vmatpush1.bf16.msra.mxu0 %v5121
    %6425 = vmatprep.subr.bf16.mxu0 %v5135
    %6426 = vmatpush1.bf16.msra.mxu0 %v5134
    %6427 = vmatprep.mubr.bf16.mxu0 %v1840
    %6428 = vmatmul.mubr.bf16.gmra.mrb[0].mxu0 %v1839
    %v6429 = vpop.f32.mrb[0].mxu0
    %v6430 = vadd.f32 %v2637, %v6429
    %v6431 = vpop.f32.mrb[0].mxu0
    %v6432 = vadd.f32 %v2641, %v6431
    %v6433 = vpop.f32.mrb[0].mxu0
    %v6434 = vpop.f32.mrb[0].mxu0
    %6435 = vdwg.mxu0
    %6436 = vmatprep.subr.bf16.mxu0 %v5148
    %6437 = vmatpush1.bf16.msra.mxu0 %v5147
    %6438 = vmatprep.subr.bf16.mxu0 %v5161
    %6439 = vmatpush1.bf16.msra.mxu0 %v5160
    %6440 = vmatprep.subr.bf16.mxu0 %v5174
    %6441 = vmatpush1.bf16.msra.mxu0 %v5173
    %6442 = vmatprep.subr.bf16.mxu0 %v5187
    %6443 = vmatpush1.bf16.msra.mxu0 %v5186
    %6444 = vmatprep.subr.bf16.mxu0 %v5200
    %6445 = vmatpush1.bf16.msra.mxu0 %v5199
    %6446 = vmatprep.subr.bf16.mxu0 %v5213
    %6447 = vmatpush1.bf16.msra.mxu0 %v5212
    %6448 = vmatprep.subr.bf16.mxu0 %v5226
    %6449 = vmatpush1.bf16.msra.mxu0 %v5225
    %6450 = vmatprep.subr.bf16.mxu0 %v5239
    %6451 = vmatpush1.bf16.msra.mxu0 %v5238
    %6452 = vmatprep.subr.bf16.mxu0 %v5252
    %6453 = vmatpush1.bf16.msra.mxu0 %v5251
    %6454 = vmatprep.subr.bf16.mxu0 %v5265
    %6455 = vmatpush1.bf16.msra.mxu0 %v5264
    %6456 = vmatprep.subr.bf16.mxu0 %v5278
    %6457 = vmatpush1.bf16.msra.mxu0 %v5277
    %6458 = vmatprep.subr.bf16.mxu0 %v5291
    %6459 = vmatpush1.bf16.msra.mxu0 %v5290
    %6460 = vmatprep.subr.bf16.mxu0 %v5304
    %6461 = vmatpush1.bf16.msra.mxu0 %v5303
    %6462 = vmatprep.subr.bf16.mxu0 %v5317
    %6463 = vmatpush1.bf16.msra.mxu0 %v5316
    %6464 = vmatprep.subr.bf16.mxu0 %v5330
    %6465 = vmatpush1.bf16.msra.mxu0 %v5329
    %6466 = vmatprep.subr.bf16.mxu0 %v5343
    %6467 = vmatpush1.bf16.msra.mxu0 %v5342
    %6468 = vmatprep.mubr.bf16.mxu0 %v1842
    %6469 = vmatmul.mubr.bf16.gmra.mrb[0].mxu0 %v1841
    %v6470 = vpop.f32.mrb[0].mxu0
    %v6471 = vadd.f32 %v6430, %v6470
    %v6472 = vpop.f32.mrb[0].mxu0
    %v6473 = vadd.f32 %v6432, %v6472
    %v6474 = vpop.f32.mrb[0].mxu0
    %v6475 = vpop.f32.mrb[0].mxu0
    %6476 = vdwg.mxu0
    %6477 = vmatprep.subr.bf16.mxu0 %v5356
    %6478 = vmatpush1.bf16.msra.mxu0 %v5355
    %6479 = vmatprep.subr.bf16.mxu0 %v5369
    %6480 = vmatpush1.bf16.msra.mxu0 %v5368
    %6481 = vmatprep.subr.bf16.mxu0 %v5382
    %6482 = vmatpush1.bf16.msra.mxu0 %v5381
    %6483 = vmatprep.subr.bf16.mxu0 %v5395
    %6484 = vmatpush1.bf16.msra.mxu0 %v5394
    %6485 = vmatprep.subr.bf16.mxu0 %v5408
    %6486 = vmatpush1.bf16.msra.mxu0 %v5407
    %6487 = vmatprep.subr.bf16.mxu0 %v5421
    %6488 = vmatpush1.bf16.msra.mxu0 %v5420
    %6489 = vmatprep.subr.bf16.mxu0 %v5434
    %6490 = vmatpush1.bf16.msra.mxu0 %v5433
    %6491 = vmatprep.subr.bf16.mxu0 %v5447
    %6492 = vmatpush1.bf16.msra.mxu0 %v5446
    %6493 = vmatprep.subr.bf16.mxu0 %v5460
    %6494 = vmatpush1.bf16.msra.mxu0 %v5459
    %6495 = vmatprep.subr.bf16.mxu0 %v5473
    %6496 = vmatpush1.bf16.msra.mxu0 %v5472
    %6497 = vmatprep.subr.bf16.mxu0 %v5486
    %6498 = vmatpush1.bf16.msra.mxu0 %v5485
    %6499 = vmatprep.subr.bf16.mxu0 %v5499
    %6500 = vmatpush1.bf16.msra.mxu0 %v5498
    %6501 = vmatprep.subr.bf16.mxu0 %v5512
    %6502 = vmatpush1.bf16.msra.mxu0 %v5511
    %6503 = vmatprep.subr.bf16.mxu0 %v5525
    %6504 = vmatpush1.bf16.msra.mxu0 %v5524
    %6505 = vmatprep.subr.bf16.mxu0 %v5538
    %6506 = vmatpush1.bf16.msra.mxu0 %v5537
    %6507 = vmatprep.subr.bf16.mxu0 %v5551
    %6508 = vmatpush1.bf16.msra.mxu0 %v5550
    %6509 = vmatprep.mubr.bf16.mxu0 %v1844
    %6510 = vmatmul.mubr.bf16.gmra.mrb[0].mxu0 %v1843
    %v6511 = vpop.f32.mrb[0].mxu0
    %v6512 = vadd.f32 %v6471, %v6511
    %v6513 = vpop.f32.mrb[0].mxu0
    %v6514 = vadd.f32 %v6473, %v6513
    %v6515 = vpop.f32.mrb[0].mxu0
    %v6516 = vpop.f32.mrb[0].mxu0
    %6517 = vdwg.mxu0
    %6518 = vmatprep.subr.bf16.mxu0 %v5564
    %6519 = vmatpush1.bf16.msra.mxu0 %v5563
    %6520 = vmatprep.subr.bf16.mxu0 %v5577
    %6521 = vmatpush1.bf16.msra.mxu0 %v5576
    %6522 = vmatprep.subr.bf16.mxu0 %v5590
    %6523 = vmatpush1.bf16.msra.mxu0 %v5589
    %6524 = vmatprep.subr.bf16.mxu0 %v5603
    %6525 = vmatpush1.bf16.msra.mxu0 %v5602
    %6526 = vmatprep.subr.bf16.mxu0 %v5616
    %6527 = vmatpush1.bf16.msra.mxu0 %v5615
    %6528 = vmatprep.subr.bf16.mxu0 %v5629
    %6529 = vmatpush1.bf16.msra.mxu0 %v5628
    %6530 = vmatprep.subr.bf16.mxu0 %v5642
    %6531 = vmatpush1.bf16.msra.mxu0 %v5641
    %6532 = vmatprep.subr.bf16.mxu0 %v5655
    %6533 = vmatpush1.bf16.msra.mxu0 %v5654
    %6534 = vmatprep.subr.bf16.mxu0 0
    %6535 = vmatpush1.bf16.msra.mxu0 0
    %6536 = vmatprep.subr.bf16.mxu0 0
    %6537 = vmatpush1.bf16.msra.mxu0 0
    %6538 = vmatprep.subr.bf16.mxu0 0
    %6539 = vmatpush1.bf16.msra.mxu0 0
    %6540 = vmatprep.subr.bf16.mxu0 0
    %6541 = vmatpush1.bf16.msra.mxu0 0
    %6542 = vmatprep.subr.bf16.mxu0 0
    %6543 = vmatpush1.bf16.msra.mxu0 0
    %6544 = vmatprep.subr.bf16.mxu0 0
    %6545 = vmatpush1.bf16.msra.mxu0 0
    %6546 = vmatprep.subr.bf16.mxu0 0
    %6547 = vmatpush1.bf16.msra.mxu0 0
    %6548 = vmatprep.subr.bf16.mxu0 0
    %6549 = vmatpush1.bf16.msra.mxu0 0
    %6550 = vmatprep.mubr.bf16.mxu0 0
    %6551 = vmatmul.mubr.bf16.gmra.mrb[0].mxu0 %v1845
    %v6552 = vpop.f32.mrb[0].mxu0
    %v6553 = vadd.f32 %v6512, %v6552
    %v6554 = vpop.f32.mrb[0].mxu0
    %v6555 = vadd.f32 %v6514, %v6554
    %v6556 = vpop.f32.mrb[0].mxu0
    %v6557 = vpop.f32.mrb[0].mxu0
    %6558 = vdwg.mxu0
    %6559 = vmatprep.subr.bf16.mxu0 %v4942
    %6560 = vmatpush1.bf16.msra.mxu0 %v4941
    %6561 = vmatprep.subr.bf16.mxu0 %v4955
    %6562 = vmatpush1.bf16.msra.mxu0 %v4954
    %6563 = vmatprep.subr.bf16.mxu0 %v4968
    %6564 = vmatpush1.bf16.msra.mxu0 %v4967
    %6565 = vmatprep.subr.bf16.mxu0 %v4981
    %6566 = vmatpush1.bf16.msra.mxu0 %v4980
    %6567 = vmatprep.subr.bf16.mxu0 %v4994
    %6568 = vmatpush1.bf16.msra.mxu0 %v4993
    %6569 = vmatprep.subr.bf16.mxu0 %v5007
    %6570 = vmatpush1.bf16.msra.mxu0 %v5006
    %6571 = vmatprep.subr.bf16.mxu0 %v5020
    %6572 = vmatpush1.bf16.msra.mxu0 %v5019
    %6573 = vmatprep.subr.bf16.mxu0 %v5033
    %6574 = vmatpush1.bf16.msra.mxu0 %v5032
    %6575 = vmatprep.subr.bf16.mxu0 %v5046
    %6576 = vmatpush1.bf16.msra.mxu0 %v5045
    %6577 = vmatprep.subr.bf16.mxu0 %v5059
    %6578 = vmatpush1.bf16.msra.mxu0 %v5058
    %6579 = vmatprep.subr.bf16.mxu0 %v5072
    %6580 = vmatpush1.bf16.msra.mxu0 %v5071
    %6581 = vmatprep.subr.bf16.mxu0 %v5085
    %6582 = vmatpush1.bf16.msra.mxu0 %v5084
    %6583 = vmatprep.subr.bf16.mxu0 %v5098
    %6584 = vmatpush1.bf16.msra.mxu0 %v5097
    %6585 = vmatprep.subr.bf16.mxu0 %v5111
    %6586 = vmatpush1.bf16.msra.mxu0 %v5110
    %6587 = vmatprep.subr.bf16.mxu0 %v5124
    %6588 = vmatpush1.bf16.msra.mxu0 %v5123
    %6589 = vmatprep.subr.bf16.mxu0 %v5137
    %6590 = vmatpush1.bf16.msra.mxu0 %v5136
    %6591 = vmatprep.mubr.bf16.mxu0 %v1840
    %6592 = vmatmul.mubr.bf16.gmra.mrb[0].mxu0 %v1839
    %v6593 = vpop.f32.mrb[0].mxu0
    %v6594 = vadd.f32 %v2645, %v6593
    %v6595 = vpop.f32.mrb[0].mxu0
    %v6596 = vadd.f32 %v2649, %v6595
    %v6597 = vpop.f32.mrb[0].mxu0
    %v6598 = vpop.f32.mrb[0].mxu0
    %6599 = vdwg.mxu0
    %6600 = vmatprep.subr.bf16.mxu0 %v5150
    %6601 = vmatpush1.bf16.msra.mxu0 %v5149
    %6602 = vmatprep.subr.bf16.mxu0 %v5163
    %6603 = vmatpush1.bf16.msra.mxu0 %v5162
    %6604 = vmatprep.subr.bf16.mxu0 %v5176
    %6605 = vmatpush1.bf16.msra.mxu0 %v5175
    %6606 = vmatprep.subr.bf16.mxu0 %v5189
    %6607 = vmatpush1.bf16.msra.mxu0 %v5188
    %6608 = vmatprep.subr.bf16.mxu0 %v5202
    %6609 = vmatpush1.bf16.msra.mxu0 %v5201
    %6610 = vmatprep.subr.bf16.mxu0 %v5215
    %6611 = vmatpush1.bf16.msra.mxu0 %v5214
    %6612 = vmatprep.subr.bf16.mxu0 %v5228
    %6613 = vmatpush1.bf16.msra.mxu0 %v5227
    %6614 = vmatprep.subr.bf16.mxu0 %v5241
    %6615 = vmatpush1.bf16.msra.mxu0 %v5240
    %6616 = vmatprep.subr.bf16.mxu0 %v5254
    %6617 = vmatpush1.bf16.msra.mxu0 %v5253
    %6618 = vmatprep.subr.bf16.mxu0 %v5267
    %6619 = vmatpush1.bf16.msra.mxu0 %v5266
    %6620 = vmatprep.subr.bf16.mxu0 %v5280
    %6621 = vmatpush1.bf16.msra.mxu0 %v5279
    %6622 = vmatprep.subr.bf16.mxu0 %v5293
    %6623 = vmatpush1.bf16.msra.mxu0 %v5292
    %6624 = vmatprep.subr.bf16.mxu0 %v5306
    %6625 = vmatpush1.bf16.msra.mxu0 %v5305
    %6626 = vmatprep.subr.bf16.mxu0 %v5319
    %6627 = vmatpush1.bf16.msra.mxu0 %v5318
    %6628 = vmatprep.subr.bf16.mxu0 %v5332
    %6629 = vmatpush1.bf16.msra.mxu0 %v5331
    %6630 = vmatprep.subr.bf16.mxu0 %v5345
    %6631 = vmatpush1.bf16.msra.mxu0 %v5344
    %6632 = vmatprep.mubr.bf16.mxu0 %v1842
    %6633 = vmatmul.mubr.bf16.gmra.mrb[0].mxu0 %v1841
    %v6634 = vpop.f32.mrb[0].mxu0
    %v6635 = vadd.f32 %v6594, %v6634
    %v6636 = vpop.f32.mrb[0].mxu0
    %v6637 = vadd.f32 %v6596, %v6636
    %v6638 = vpop.f32.mrb[0].mxu0
    %v6639 = vpop.f32.mrb[0].mxu0
    %6640 = vdwg.mxu0
    %6641 = vmatprep.subr.bf16.mxu0 %v5358
    %6642 = vmatpush1.bf16.msra.mxu0 %v5357
    %6643 = vmatprep.subr.bf16.mxu0 %v5371
    %6644 = vmatpush1.bf16.msra.mxu0 %v5370
    %6645 = vmatprep.subr.bf16.mxu0 %v5384
    %6646 = vmatpush1.bf16.msra.mxu0 %v5383
    %6647 = vmatprep.subr.bf16.mxu0 %v5397
    %6648 = vmatpush1.bf16.msra.mxu0 %v5396
    %6649 = vmatprep.subr.bf16.mxu0 %v5410
    %6650 = vmatpush1.bf16.msra.mxu0 %v5409
    %6651 = vmatprep.subr.bf16.mxu0 %v5423
    %6652 = vmatpush1.bf16.msra.mxu0 %v5422
    %6653 = vmatprep.subr.bf16.mxu0 %v5436
    %6654 = vmatpush1.bf16.msra.mxu0 %v5435
    %6655 = vmatprep.subr.bf16.mxu0 %v5449
    %6656 = vmatpush1.bf16.msra.mxu0 %v5448
    %6657 = vmatprep.subr.bf16.mxu0 %v5462
    %6658 = vmatpush1.bf16.msra.mxu0 %v5461
    %6659 = vmatprep.subr.bf16.mxu0 %v5475
    %6660 = vmatpush1.bf16.msra.mxu0 %v5474
    %6661 = vmatprep.subr.bf16.mxu0 %v5488
    %6662 = vmatpush1.bf16.msra.mxu0 %v5487
    %6663 = vmatprep.subr.bf16.mxu0 %v5501
    %6664 = vmatpush1.bf16.msra.mxu0 %v5500
    %6665 = vmatprep.subr.bf16.mxu0 %v5514
    %6666 = vmatpush1.bf16.msra.mxu0 %v5513
    %6667 = vmatprep.subr.bf16.mxu0 %v5527
    %6668 = vmatpush1.bf16.msra.mxu0 %v5526
    %6669 = vmatprep.subr.bf16.mxu0 %v5540
    %6670 = vmatpush1.bf16.msra.mxu0 %v5539
    %6671 = vmatprep.subr.bf16.mxu0 %v5553
    %6672 = vmatpush1.bf16.msra.mxu0 %v5552
    %6673 = vmatprep.mubr.bf16.mxu0 %v1844
    %6674 = vmatmul.mubr.bf16.gmra.mrb[0].mxu0 %v1843
    %v6675 = vpop.f32.mrb[0].mxu0
    %v6676 = vadd.f32 %v6635, %v6675
    %v6677 = vpop.f32.mrb[0].mxu0
    %v6678 = vadd.f32 %v6637, %v6677
    %v6679 = vpop.f32.mrb[0].mxu0
    %v6680 = vpop.f32.mrb[0].mxu0
    %6681 = vdwg.mxu0
    %6682 = vmatprep.subr.bf16.mxu0 %v5566
    %6683 = vmatpush1.bf16.msra.mxu0 %v5565
    %6684 = vmatprep.subr.bf16.mxu0 %v5579
    %6685 = vmatpush1.bf16.msra.mxu0 %v5578
    %6686 = vmatprep.subr.bf16.mxu0 %v5592
    %6687 = vmatpush1.bf16.msra.mxu0 %v5591
    %6688 = vmatprep.subr.bf16.mxu0 %v5605
    %6689 = vmatpush1.bf16.msra.mxu0 %v5604
    %6690 = vmatprep.subr.bf16.mxu0 %v5618
    %6691 = vmatpush1.bf16.msra.mxu0 %v5617
    %6692 = vmatprep.subr.bf16.mxu0 %v5631
    %6693 = vmatpush1.bf16.msra.mxu0 %v5630
    %6694 = vmatprep.subr.bf16.mxu0 %v5644
    %6695 = vmatpush1.bf16.msra.mxu0 %v5643
    %6696 = vmatprep.subr.bf16.mxu0 %v5657
    %6697 = vmatpush1.bf16.msra.mxu0 %v5656
    %6698 = vmatprep.subr.bf16.mxu0 0
    %6699 = vmatpush1.bf16.msra.mxu0 0
    %6700 = vmatprep.subr.bf16.mxu0 0
    %6701 = vmatpush1.bf16.msra.mxu0 0
    %6702 = vmatprep.subr.bf16.mxu0 0
    %6703 = vmatpush1.bf16.msra.mxu0 0
    %6704 = vmatprep.subr.bf16.mxu0 0
    %6705 = vmatpush1.bf16.msra.mxu0 0
    %6706 = vmatprep.subr.bf16.mxu0 0
    %6707 = vmatpush1.bf16.msra.mxu0 0
    %6708 = vmatprep.subr.bf16.mxu0 0
    %6709 = vmatpush1.bf16.msra.mxu0 0
    %6710 = vmatprep.subr.bf16.mxu0 0
    %6711 = vmatpush1.bf16.msra.mxu0 0
    %6712 = vmatprep.subr.bf16.mxu0 0
    %6713 = vmatpush1.bf16.msra.mxu0 0
    %6714 = vmatprep.mubr.bf16.mxu0 0
    %6715 = vmatmul.mubr.bf16.gmra.mrb[0].mxu0 %v1845
    %v6716 = vpop.f32.mrb[0].mxu0
    %v6717 = vadd.f32 %v6676, %v6716
    %v6718 = vpop.f32.mrb[0].mxu0
    %v6719 = vadd.f32 %v6678, %v6718
    %v6720 = vpop.f32.mrb[0].mxu0
    %v6721 = vpop.f32.mrb[0].mxu0
    %6722 = vdwg.mxu0
    %6723 = vmatprep.subr.bf16.mxu0 %v4944
    %6724 = vmatpush1.bf16.msra.mxu0 %v4943
    %6725 = vmatprep.subr.bf16.mxu0 %v4957
    %6726 = vmatpush1.bf16.msra.mxu0 %v4956
    %6727 = vmatprep.subr.bf16.mxu0 %v4970
    %6728 = vmatpush1.bf16.msra.mxu0 %v4969
    %6729 = vmatprep.subr.bf16.mxu0 %v4983
    %6730 = vmatpush1.bf16.msra.mxu0 %v4982
    %6731 = vmatprep.subr.bf16.mxu0 %v4996
    %6732 = vmatpush1.bf16.msra.mxu0 %v4995
    %6733 = vmatprep.subr.bf16.mxu0 %v5009
    %6734 = vmatpush1.bf16.msra.mxu0 %v5008
    %6735 = vmatprep.subr.bf16.mxu0 %v5022
    %6736 = vmatpush1.bf16.msra.mxu0 %v5021
    %6737 = vmatprep.subr.bf16.mxu0 %v5035
    %6738 = vmatpush1.bf16.msra.mxu0 %v5034
    %6739 = vmatprep.subr.bf16.mxu0 %v5048
    %6740 = vmatpush1.bf16.msra.mxu0 %v5047
    %6741 = vmatprep.subr.bf16.mxu0 %v5061
    %6742 = vmatpush1.bf16.msra.mxu0 %v5060
    %6743 = vmatprep.subr.bf16.mxu0 %v5074
    %6744 = vmatpush1.bf16.msra.mxu0 %v5073
    %6745 = vmatprep.subr.bf16.mxu0 %v5087
    %6746 = vmatpush1.bf16.msra.mxu0 %v5086
    %6747 = vmatprep.subr.bf16.mxu0 %v5100
    %6748 = vmatpush1.bf16.msra.mxu0 %v5099
    %6749 = vmatprep.subr.bf16.mxu0 %v5113
    %6750 = vmatpush1.bf16.msra.mxu0 %v5112
    %6751 = vmatprep.subr.bf16.mxu0 %v5126
    %6752 = vmatpush1.bf16.msra.mxu0 %v5125
    %6753 = vmatprep.subr.bf16.mxu0 %v5139
    %6754 = vmatpush1.bf16.msra.mxu0 %v5138
    %6755 = vmatprep.mubr.bf16.mxu0 %v1840
    %6756 = vmatmul.mubr.bf16.gmra.mrb[0].mxu0 %v1839
    %v6757 = vpop.f32.mrb[0].mxu0
    %v6758 = vadd.f32 %v2653, %v6757
    %v6759 = vpop.f32.mrb[0].mxu0
    %v6760 = vadd.f32 %v2657, %v6759
    %v6761 = vpop.f32.mrb[0].mxu0
    %v6762 = vpop.f32.mrb[0].mxu0
    %6763 = vdwg.mxu0
    %6764 = vmatprep.subr.bf16.mxu0 %v5152
    %6765 = vmatpush1.bf16.msra.mxu0 %v5151
    %6766 = vmatprep.subr.bf16.mxu0 %v5165
    %6767 = vmatpush1.bf16.msra.mxu0 %v5164
    %6768 = vmatprep.subr.bf16.mxu0 %v5178
    %6769 = vmatpush1.bf16.msra.mxu0 %v5177
    %6770 = vmatprep.subr.bf16.mxu0 %v5191
    %6771 = vmatpush1.bf16.msra.mxu0 %v5190
    %6772 = vmatprep.subr.bf16.mxu0 %v5204
    %6773 = vmatpush1.bf16.msra.mxu0 %v5203
    %6774 = vmatprep.subr.bf16.mxu0 %v5217
    %6775 = vmatpush1.bf16.msra.mxu0 %v5216
    %6776 = vmatprep.subr.bf16.mxu0 %v5230
    %6777 = vmatpush1.bf16.msra.mxu0 %v5229
    %6778 = vmatprep.subr.bf16.mxu0 %v5243
    %6779 = vmatpush1.bf16.msra.mxu0 %v5242
    %6780 = vmatprep.subr.bf16.mxu0 %v5256
    %6781 = vmatpush1.bf16.msra.mxu0 %v5255
    %6782 = vmatprep.subr.bf16.mxu0 %v5269
    %6783 = vmatpush1.bf16.msra.mxu0 %v5268
    %6784 = vmatprep.subr.bf16.mxu0 %v5282
    %6785 = vmatpush1.bf16.msra.mxu0 %v5281
    %6786 = vmatprep.subr.bf16.mxu0 %v5295
    %6787 = vmatpush1.bf16.msra.mxu0 %v5294
    %6788 = vmatprep.subr.bf16.mxu0 %v5308
    %6789 = vmatpush1.bf16.msra.mxu0 %v5307
    %6790 = vmatprep.subr.bf16.mxu0 %v5321
    %6791 = vmatpush1.bf16.msra.mxu0 %v5320
    %6792 = vmatprep.subr.bf16.mxu0 %v5334
    %6793 = vmatpush1.bf16.msra.mxu0 %v5333
    %6794 = vmatprep.subr.bf16.mxu0 %v5347
    %6795 = vmatpush1.bf16.msra.mxu0 %v5346
    %6796 = vmatprep.mubr.bf16.mxu0 %v1842
    %6797 = vmatmul.mubr.bf16.gmra.mrb[0].mxu0 %v1841
    %v6798 = vpop.f32.mrb[0].mxu0
    %v6799 = vadd.f32 %v6758, %v6798
    %v6800 = vpop.f32.mrb[0].mxu0
    %v6801 = vadd.f32 %v6760, %v6800
    %v6802 = vpop.f32.mrb[0].mxu0
    %v6803 = vpop.f32.mrb[0].mxu0
    %6804 = vdwg.mxu0
    %6805 = vmatprep.subr.bf16.mxu0 %v5360
    %6806 = vmatpush1.bf16.msra.mxu0 %v5359
    %6807 = vmatprep.subr.bf16.mxu0 %v5373
    %6808 = vmatpush1.bf16.msra.mxu0 %v5372
    %6809 = vmatprep.subr.bf16.mxu0 %v5386
    %6810 = vmatpush1.bf16.msra.mxu0 %v5385
    %6811 = vmatprep.subr.bf16.mxu0 %v5399
    %6812 = vmatpush1.bf16.msra.mxu0 %v5398
    %6813 = vmatprep.subr.bf16.mxu0 %v5412
    %6814 = vmatpush1.bf16.msra.mxu0 %v5411
    %6815 = vmatprep.subr.bf16.mxu0 %v5425
    %6816 = vmatpush1.bf16.msra.mxu0 %v5424
    %6817 = vmatprep.subr.bf16.mxu0 %v5438
    %6818 = vmatpush1.bf16.msra.mxu0 %v5437
    %6819 = vmatprep.subr.bf16.mxu0 %v5451
    %6820 = vmatpush1.bf16.msra.mxu0 %v5450
    %6821 = vmatprep.subr.bf16.mxu0 %v5464
    %6822 = vmatpush1.bf16.msra.mxu0 %v5463
    %6823 = vmatprep.subr.bf16.mxu0 %v5477
    %6824 = vmatpush1.bf16.msra.mxu0 %v5476
    %6825 = vmatprep.subr.bf16.mxu0 %v5490
    %6826 = vmatpush1.bf16.msra.mxu0 %v5489
    %6827 = vmatprep.subr.bf16.mxu0 %v5503
    %6828 = vmatpush1.bf16.msra.mxu0 %v5502
    %6829 = vmatprep.subr.bf16.mxu0 %v5516
    %6830 = vmatpush1.bf16.msra.mxu0 %v5515
    %6831 = vmatprep.subr.bf16.mxu0 %v5529
    %6832 = vmatpush1.bf16.msra.mxu0 %v5528
    %6833 = vmatprep.subr.bf16.mxu0 %v5542
    %6834 = vmatpush1.bf16.msra.mxu0 %v5541
    %6835 = vmatprep.subr.bf16.mxu0 %v5555
    %6836 = vmatpush1.bf16.msra.mxu0 %v5554
    %6837 = vmatprep.mubr.bf16.mxu0 %v1844
    %6838 = vmatmul.mubr.bf16.gmra.mrb[0].mxu0 %v1843
    %v6839 = vpop.f32.mrb[0].mxu0
    %v6840 = vadd.f32 %v6799, %v6839
    %v6841 = vpop.f32.mrb[0].mxu0
    %v6842 = vadd.f32 %v6801, %v6841
    %v6843 = vpop.f32.mrb[0].mxu0
    %v6844 = vpop.f32.mrb[0].mxu0
    %6845 = vdwg.mxu0
    %6846 = vmatprep.subr.bf16.mxu0 %v5568
    %6847 = vmatpush1.bf16.msra.mxu0 %v5567
    %6848 = vmatprep.subr.bf16.mxu0 %v5581
    %6849 = vmatpush1.bf16.msra.mxu0 %v5580
    %6850 = vmatprep.subr.bf16.mxu0 %v5594
    %6851 = vmatpush1.bf16.msra.mxu0 %v5593
    %6852 = vmatprep.subr.bf16.mxu0 %v5607
    %6853 = vmatpush1.bf16.msra.mxu0 %v5606
    %6854 = vmatprep.subr.bf16.mxu0 %v5620
    %6855 = vmatpush1.bf16.msra.mxu0 %v5619
    %6856 = vmatprep.subr.bf16.mxu0 %v5633
    %6857 = vmatpush1.bf16.msra.mxu0 %v5632
    %6858 = vmatprep.subr.bf16.mxu0 %v5646
    %6859 = vmatpush1.bf16.msra.mxu0 %v5645
    %6860 = vmatprep.subr.bf16.mxu0 %v5659
    %6861 = vmatpush1.bf16.msra.mxu0 %v5658
    %6862 = vmatprep.subr.bf16.mxu0 0
    %6863 = vmatpush1.bf16.msra.mxu0 0
    %6864 = vmatprep.subr.bf16.mxu0 0
    %6865 = vmatpush1.bf16.msra.mxu0 0
    %6866 = vmatprep.subr.bf16.mxu0 0
    %6867 = vmatpush1.bf16.msra.mxu0 0
    %6868 = vmatprep.subr.bf16.mxu0 0
    %6869 = vmatpush1.bf16.msra.mxu0 0
    %6870 = vmatprep.subr.bf16.mxu0 0
    %6871 = vmatpush1.bf16.msra.mxu0 0
    %6872 = vmatprep.subr.bf16.mxu0 0
    %6873 = vmatpush1.bf16.msra.mxu0 0
    %6874 = vmatprep.subr.bf16.mxu0 0
    %6875 = vmatpush1.bf16.msra.mxu0 0
    %6876 = vmatprep.subr.bf16.mxu0 0
    %6877 = vmatpush1.bf16.msra.mxu0 0
    %6878 = vmatprep.mubr.bf16.mxu0 0
    %6879 = vmatmul.mubr.bf16.gmra.mrb[0].mxu0 %v1845
    %v6880 = vpop.f32.mrb[0].mxu0
    %v6881 = vadd.f32 %v6840, %v6880
    %v6882 = vpop.f32.mrb[0].mxu0
    %v6883 = vadd.f32 %v6842, %v6882
    %v6884 = vpop.f32.mrb[0].mxu0
    %v6885 = vpop.f32.mrb[0].mxu0
    %6886 = vdwg.mxu0
    %6887 = vmatprep.subr.bf16.mxu0 %v4946
    %6888 = vmatpush1.bf16.msra.mxu0 %v4945
    %6889 = vmatprep.subr.bf16.mxu0 %v4959
    %6890 = vmatpush1.bf16.msra.mxu0 %v4958
    %6891 = vmatprep.subr.bf16.mxu0 %v4972
    %6892 = vmatpush1.bf16.msra.mxu0 %v4971
    %6893 = vmatprep.subr.bf16.mxu0 %v4985
    %6894 = vmatpush1.bf16.msra.mxu0 %v4984
    %6895 = vmatprep.subr.bf16.mxu0 %v4998
    %6896 = vmatpush1.bf16.msra.mxu0 %v4997
    %6897 = vmatprep.subr.bf16.mxu0 %v5011
    %6898 = vmatpush1.bf16.msra.mxu0 %v5010
    %6899 = vmatprep.subr.bf16.mxu0 %v5024
    %6900 = vmatpush1.bf16.msra.mxu0 %v5023
    %6901 = vmatprep.subr.bf16.mxu0 %v5037
    %6902 = vmatpush1.bf16.msra.mxu0 %v5036
    %6903 = vmatprep.subr.bf16.mxu0 %v5050
    %6904 = vmatpush1.bf16.msra.mxu0 %v5049
    %6905 = vmatprep.subr.bf16.mxu0 %v5063
    %6906 = vmatpush1.bf16.msra.mxu0 %v5062
    %6907 = vmatprep.subr.bf16.mxu0 %v5076
    %6908 = vmatpush1.bf16.msra.mxu0 %v5075
    %6909 = vmatprep.subr.bf16.mxu0 %v5089
    %6910 = vmatpush1.bf16.msra.mxu0 %v5088
    %6911 = vmatprep.subr.bf16.mxu0 %v5102
    %6912 = vmatpush1.bf16.msra.mxu0 %v5101
    %6913 = vmatprep.subr.bf16.mxu0 %v5115
    %6914 = vmatpush1.bf16.msra.mxu0 %v5114
    %6915 = vmatprep.subr.bf16.mxu0 %v5128
    %6916 = vmatpush1.bf16.msra.mxu0 %v5127
    %6917 = vmatprep.subr.bf16.mxu0 %v5141
    %6918 = vmatpush1.bf16.msra.mxu0 %v5140
    %6919 = vmatprep.mubr.bf16.mxu0 %v1840
    %6920 = vmatmul.mubr.bf16.gmra.mrb[0].mxu0 %v1839
    %v6921 = vpop.f32.mrb[0].mxu0
    %v6922 = vadd.f32 %v2661, %v6921
    %v6923 = vpop.f32.mrb[0].mxu0
    %v6924 = vadd.f32 %v2665, %v6923
    %v6925 = vpop.f32.mrb[0].mxu0
    %v6926 = vpop.f32.mrb[0].mxu0
    %6927 = vdwg.mxu0
    %6928 = vmatprep.subr.bf16.mxu0 %v5154
    %6929 = vmatpush1.bf16.msra.mxu0 %v5153
    %6930 = vmatprep.subr.bf16.mxu0 %v5167
    %6931 = vmatpush1.bf16.msra.mxu0 %v5166
    %6932 = vmatprep.subr.bf16.mxu0 %v5180
    %6933 = vmatpush1.bf16.msra.mxu0 %v5179
    %6934 = vmatprep.subr.bf16.mxu0 %v5193
    %6935 = vmatpush1.bf16.msra.mxu0 %v5192
    %6936 = vmatprep.subr.bf16.mxu0 %v5206
    %6937 = vmatpush1.bf16.msra.mxu0 %v5205
    %6938 = vmatprep.subr.bf16.mxu0 %v5219
    %6939 = vmatpush1.bf16.msra.mxu0 %v5218
    %6940 = vmatprep.subr.bf16.mxu0 %v5232
    %6941 = vmatpush1.bf16.msra.mxu0 %v5231
    %6942 = vmatprep.subr.bf16.mxu0 %v5245
    %6943 = vmatpush1.bf16.msra.mxu0 %v5244
    %6944 = vmatprep.subr.bf16.mxu0 %v5258
    %6945 = vmatpush1.bf16.msra.mxu0 %v5257
    %6946 = vmatprep.subr.bf16.mxu0 %v5271
    %6947 = vmatpush1.bf16.msra.mxu0 %v5270
    %6948 = vmatprep.subr.bf16.mxu0 %v5284
    %6949 = vmatpush1.bf16.msra.mxu0 %v5283
    %6950 = vmatprep.subr.bf16.mxu0 %v5297
    %6951 = vmatpush1.bf16.msra.mxu0 %v5296
    %6952 = vmatprep.subr.bf16.mxu0 %v5310
    %6953 = vmatpush1.bf16.msra.mxu0 %v5309
    %6954 = vmatprep.subr.bf16.mxu0 %v5323
    %6955 = vmatpush1.bf16.msra.mxu0 %v5322
    %6956 = vmatprep.subr.bf16.mxu0 %v5336
    %6957 = vmatpush1.bf16.msra.mxu0 %v5335
    %6958 = vmatprep.subr.bf16.mxu0 %v5349
    %6959 = vmatpush1.bf16.msra.mxu0 %v5348
    %6960 = vmatprep.mubr.bf16.mxu0 %v1842
    %6961 = vmatmul.mubr.bf16.gmra.mrb[0].mxu0 %v1841
    %v6962 = vpop.f32.mrb[0].mxu0
    %v6963 = vadd.f32 %v6922, %v6962
    %v6964 = vpop.f32.mrb[0].mxu0
    %v6965 = vadd.f32 %v6924, %v6964
    %v6966 = vpop.f32.mrb[0].mxu0
    %v6967 = vpop.f32.mrb[0].mxu0
    %6968 = vdwg.mxu0
    %6969 = vmatprep.subr.bf16.mxu0 %v5362
    %6970 = vmatpush1.bf16.msra.mxu0 %v5361
    %6971 = vmatprep.subr.bf16.mxu0 %v5375
    %6972 = vmatpush1.bf16.msra.mxu0 %v5374
    %6973 = vmatprep.subr.bf16.mxu0 %v5388
    %6974 = vmatpush1.bf16.msra.mxu0 %v5387
    %6975 = vmatprep.subr.bf16.mxu0 %v5401
    %6976 = vmatpush1.bf16.msra.mxu0 %v5400
    %6977 = vmatprep.subr.bf16.mxu0 %v5414
    %6978 = vmatpush1.bf16.msra.mxu0 %v5413
    %6979 = vmatprep.subr.bf16.mxu0 %v5427
    %6980 = vmatpush1.bf16.msra.mxu0 %v5426
    %6981 = vmatprep.subr.bf16.mxu0 %v5440
    %6982 = vmatpush1.bf16.msra.mxu0 %v5439
    %6983 = vmatprep.subr.bf16.mxu0 %v5453
    %6984 = vmatpush1.bf16.msra.mxu0 %v5452
    %6985 = vmatprep.subr.bf16.mxu0 %v5466
    %6986 = vmatpush1.bf16.msra.mxu0 %v5465
    %6987 = vmatprep.subr.bf16.mxu0 %v5479
    %6988 = vmatpush1.bf16.msra.mxu0 %v5478
    %6989 = vmatprep.subr.bf16.mxu0 %v5492
    %6990 = vmatpush1.bf16.msra.mxu0 %v5491
    %6991 = vmatprep.subr.bf16.mxu0 %v5505
    %6992 = vmatpush1.bf16.msra.mxu0 %v5504
    %6993 = vmatprep.subr.bf16.mxu0 %v5518
    %6994 = vmatpush1.bf16.msra.mxu0 %v5517
    %6995 = vmatprep.subr.bf16.mxu0 %v5531
    %6996 = vmatpush1.bf16.msra.mxu0 %v5530
    %6997 = vmatprep.subr.bf16.mxu0 %v5544
    %6998 = vmatpush1.bf16.msra.mxu0 %v5543
    %6999 = vmatprep.subr.bf16.mxu0 %v5557
    %7000 = vmatpush1.bf16.msra.mxu0 %v5556
    %7001 = vmatprep.mubr.bf16.mxu0 %v1844
    %7002 = vmatmul.mubr.bf16.gmra.mrb[0].mxu0 %v1843
    %v7003 = vpop.f32.mrb[0].mxu0
    %v7004 = vadd.f32 %v6963, %v7003
    %v7005 = vpop.f32.mrb[0].mxu0
    %v7006 = vadd.f32 %v6965, %v7005
    %v7007 = vpop.f32.mrb[0].mxu0
    %v7008 = vpop.f32.mrb[0].mxu0
    %7009 = vdwg.mxu0
    %7010 = vmatprep.subr.bf16.mxu0 %v5570
    %7011 = vmatpush1.bf16.msra.mxu0 %v5569
    %7012 = vmatprep.subr.bf16.mxu0 %v5583
    %7013 = vmatpush1.bf16.msra.mxu0 %v5582
    %7014 = vmatprep.subr.bf16.mxu0 %v5596
    %7015 = vmatpush1.bf16.msra.mxu0 %v5595
    %7016 = vmatprep.subr.bf16.mxu0 %v5609
    %7017 = vmatpush1.bf16.msra.mxu0 %v5608
    %7018 = vmatprep.subr.bf16.mxu0 %v5622
    %7019 = vmatpush1.bf16.msra.mxu0 %v5621
    %7020 = vmatprep.subr.bf16.mxu0 %v5635
    %7021 = vmatpush1.bf16.msra.mxu0 %v5634
    %7022 = vmatprep.subr.bf16.mxu0 %v5648
    %7023 = vmatpush1.bf16.msra.mxu0 %v5647
    %7024 = vmatprep.subr.bf16.mxu0 %v5661
    %7025 = vmatpush1.bf16.msra.mxu0 %v5660
    %7026 = vmatprep.subr.bf16.mxu0 0
    %7027 = vmatpush1.bf16.msra.mxu0 0
    %7028 = vmatprep.subr.bf16.mxu0 0
    %7029 = vmatpush1.bf16.msra.mxu0 0
    %7030 = vmatprep.subr.bf16.mxu0 0
    %7031 = vmatpush1.bf16.msra.mxu0 0
    %7032 = vmatprep.subr.bf16.mxu0 0
    %7033 = vmatpush1.bf16.msra.mxu0 0
    %7034 = vmatprep.subr.bf16.mxu0 0
    %7035 = vmatpush1.bf16.msra.mxu0 0
    %7036 = vmatprep.subr.bf16.mxu0 0
    %7037 = vmatpush1.bf16.msra.mxu0 0
    %7038 = vmatprep.subr.bf16.mxu0 0
    %7039 = vmatpush1.bf16.msra.mxu0 0
    %7040 = vmatprep.subr.bf16.mxu0 0
    %7041 = vmatpush1.bf16.msra.mxu0 0
    %7042 = vmatprep.mubr.bf16.mxu0 0
    %7043 = vmatmul.mubr.bf16.gmra.mrb[0].mxu0 %v1845
    %v7044 = vpop.f32.mrb[0].mxu0
    %v7045 = vadd.f32 %v7004, %v7044
    %v7046 = vpop.f32.mrb[0].mxu0
    %v7047 = vadd.f32 %v7006, %v7046
    %v7048 = vpop.f32.mrb[0].mxu0
    %v7049 = vpop.f32.mrb[0].mxu0
    %7050 = vdwg.mxu0
    %7051 = vmatprep.subr.bf16.mxu0 %v4948
    %7052 = vmatpush1.bf16.msra.mxu0 %v4947
    %7053 = vmatprep.subr.bf16.mxu0 %v4961
    %7054 = vmatpush1.bf16.msra.mxu0 %v4960
    %7055 = vmatprep.subr.bf16.mxu0 %v4974
    %7056 = vmatpush1.bf16.msra.mxu0 %v4973
    %7057 = vmatprep.subr.bf16.mxu0 %v4987
    %7058 = vmatpush1.bf16.msra.mxu0 %v4986
    %7059 = vmatprep.subr.bf16.mxu0 %v5000
    %7060 = vmatpush1.bf16.msra.mxu0 %v4999
    %7061 = vmatprep.subr.bf16.mxu0 %v5013
    %7062 = vmatpush1.bf16.msra.mxu0 %v5012
    %7063 = vmatprep.subr.bf16.mxu0 %v5026
    %7064 = vmatpush1.bf16.msra.mxu0 %v5025
    %7065 = vmatprep.subr.bf16.mxu0 %v5039
    %7066 = vmatpush1.bf16.msra.mxu0 %v5038
    %7067 = vmatprep.subr.bf16.mxu0 %v5052
    %7068 = vmatpush1.bf16.msra.mxu0 %v5051
    %7069 = vmatprep.subr.bf16.mxu0 %v5065
    %7070 = vmatpush1.bf16.msra.mxu0 %v5064
    %7071 = vmatprep.subr.bf16.mxu0 %v5078
    %7072 = vmatpush1.bf16.msra.mxu0 %v5077
    %7073 = vmatprep.subr.bf16.mxu0 %v5091
    %7074 = vmatpush1.bf16.msra.mxu0 %v5090
    %7075 = vmatprep.subr.bf16.mxu0 %v5104
    %7076 = vmatpush1.bf16.msra.mxu0 %v5103
    %7077 = vmatprep.subr.bf16.mxu0 %v5117
    %7078 = vmatpush1.bf16.msra.mxu0 %v5116
    %7079 = vmatprep.subr.bf16.mxu0 %v5130
    %7080 = vmatpush1.bf16.msra.mxu0 %v5129
    %7081 = vmatprep.subr.bf16.mxu0 %v5143
    %7082 = vmatpush1.bf16.msra.mxu0 %v5142
    %7083 = vmatprep.mubr.bf16.mxu0 %v1840
    %7084 = vmatmul.mubr.bf16.gmra.mrb[0].mxu0 %v1839
    %v7085 = vpop.f32.mrb[0].mxu0
    %v7086 = vadd.f32 %v2669, %v7085
    %v7087 = vpop.f32.mrb[0].mxu0
    %v7088 = vadd.f32 %v2673, %v7087
    %v7089 = vpop.f32.mrb[0].mxu0
    %v7090 = vpop.f32.mrb[0].mxu0
    %7091 = vdwg.mxu0
    %7092 = vmatprep.subr.bf16.mxu0 %v5156
    %7093 = vmatpush1.bf16.msra.mxu0 %v5155
    %7094 = vmatprep.subr.bf16.mxu0 %v5169
    %7095 = vmatpush1.bf16.msra.mxu0 %v5168
    %7096 = vmatprep.subr.bf16.mxu0 %v5182
    %7097 = vmatpush1.bf16.msra.mxu0 %v5181
    %7098 = vmatprep.subr.bf16.mxu0 %v5195
    %7099 = vmatpush1.bf16.msra.mxu0 %v5194
    %7100 = vmatprep.subr.bf16.mxu0 %v5208
    %7101 = vmatpush1.bf16.msra.mxu0 %v5207
    %7102 = vmatprep.subr.bf16.mxu0 %v5221
    %7103 = vmatpush1.bf16.msra.mxu0 %v5220
    %7104 = vmatprep.subr.bf16.mxu0 %v5234
    %7105 = vmatpush1.bf16.msra.mxu0 %v5233
    %7106 = vmatprep.subr.bf16.mxu0 %v5247
    %7107 = vmatpush1.bf16.msra.mxu0 %v5246
    %7108 = vmatprep.subr.bf16.mxu0 %v5260
    %7109 = vmatpush1.bf16.msra.mxu0 %v5259
    %7110 = vmatprep.subr.bf16.mxu0 %v5273
    %7111 = vmatpush1.bf16.msra.mxu0 %v5272
    %7112 = vmatprep.subr.bf16.mxu0 %v5286
    %7113 = vmatpush1.bf16.msra.mxu0 %v5285
    %7114 = vmatprep.subr.bf16.mxu0 %v5299
    %7115 = vmatpush1.bf16.msra.mxu0 %v5298
    %7116 = vmatprep.subr.bf16.mxu0 %v5312
    %7117 = vmatpush1.bf16.msra.mxu0 %v5311
    %7118 = vmatprep.subr.bf16.mxu0 %v5325
    %7119 = vmatpush1.bf16.msra.mxu0 %v5324
    %7120 = vmatprep.subr.bf16.mxu0 %v5338
    %7121 = vmatpush1.bf16.msra.mxu0 %v5337
    %7122 = vmatprep.subr.bf16.mxu0 %v5351
    %7123 = vmatpush1.bf16.msra.mxu0 %v5350
    %7124 = vmatprep.mubr.bf16.mxu0 %v1842
    %7125 = vmatmul.mubr.bf16.gmra.mrb[0].mxu0 %v1841
    %v7126 = vpop.f32.mrb[0].mxu0
    %v7127 = vadd.f32 %v7086, %v7126
    %v7128 = vpop.f32.mrb[0].mxu0
    %v7129 = vadd.f32 %v7088, %v7128
    %v7130 = vpop.f32.mrb[0].mxu0
    %v7131 = vpop.f32.mrb[0].mxu0
    %7132 = vdwg.mxu0
    %7133 = vmatprep.subr.bf16.mxu0 %v5364
    %7134 = vmatpush1.bf16.msra.mxu0 %v5363
    %7135 = vmatprep.subr.bf16.mxu0 %v5377
    %7136 = vmatpush1.bf16.msra.mxu0 %v5376
    %7137 = vmatprep.subr.bf16.mxu0 %v5390
    %7138 = vmatpush1.bf16.msra.mxu0 %v5389
    %7139 = vmatprep.subr.bf16.mxu0 %v5403
    %7140 = vmatpush1.bf16.msra.mxu0 %v5402
    %7141 = vmatprep.subr.bf16.mxu0 %v5416
    %7142 = vmatpush1.bf16.msra.mxu0 %v5415
    %7143 = vmatprep.subr.bf16.mxu0 %v5429
    %7144 = vmatpush1.bf16.msra.mxu0 %v5428
    %7145 = vmatprep.subr.bf16.mxu0 %v5442
    %7146 = vmatpush1.bf16.msra.mxu0 %v5441
    %7147 = vmatprep.subr.bf16.mxu0 %v5455
    %7148 = vmatpush1.bf16.msra.mxu0 %v5454
    %7149 = vmatprep.subr.bf16.mxu0 %v5468
    %7150 = vmatpush1.bf16.msra.mxu0 %v5467
    %7151 = vmatprep.subr.bf16.mxu0 %v5481
    %7152 = vmatpush1.bf16.msra.mxu0 %v5480
    %7153 = vmatprep.subr.bf16.mxu0 %v5494
    %7154 = vmatpush1.bf16.msra.mxu0 %v5493
    %7155 = vmatprep.subr.bf16.mxu0 %v5507
    %7156 = vmatpush1.bf16.msra.mxu0 %v5506
    %7157 = vmatprep.subr.bf16.mxu0 %v5520
    %7158 = vmatpush1.bf16.msra.mxu0 %v5519
    %7159 = vmatprep.subr.bf16.mxu0 %v5533
    %7160 = vmatpush1.bf16.msra.mxu0 %v5532
    %7161 = vmatprep.subr.bf16.mxu0 %v5546
    %7162 = vmatpush1.bf16.msra.mxu0 %v5545
    %7163 = vmatprep.subr.bf16.mxu0 %v5559
    %7164 = vmatpush1.bf16.msra.mxu0 %v5558
    %7165 = vmatprep.mubr.bf16.mxu0 %v1844
    %7166 = vmatmul.mubr.bf16.gmra.mrb[0].mxu0 %v1843
    %v7167 = vpop.f32.mrb[0].mxu0
    %v7168 = vadd.f32 %v7127, %v7167
    %v7169 = vpop.f32.mrb[0].mxu0
    %v7170 = vadd.f32 %v7129, %v7169
    %v7171 = vpop.f32.mrb[0].mxu0
    %v7172 = vpop.f32.mrb[0].mxu0
    %7173 = vdwg.mxu0
    %7174 = vmatprep.subr.bf16.mxu0 %v5572
    %7175 = vmatpush1.bf16.msra.mxu0 %v5571
    %7176 = vmatprep.subr.bf16.mxu0 %v5585
    %7177 = vmatpush1.bf16.msra.mxu0 %v5584
    %7178 = vmatprep.subr.bf16.mxu0 %v5598
    %7179 = vmatpush1.bf16.msra.mxu0 %v5597
    %7180 = vmatprep.subr.bf16.mxu0 %v5611
    %7181 = vmatpush1.bf16.msra.mxu0 %v5610
    %7182 = vmatprep.subr.bf16.mxu0 %v5624
    %7183 = vmatpush1.bf16.msra.mxu0 %v5623
    %7184 = vmatprep.subr.bf16.mxu0 %v5637
    %7185 = vmatpush1.bf16.msra.mxu0 %v5636
    %7186 = vmatprep.subr.bf16.mxu0 %v5650
    %7187 = vmatpush1.bf16.msra.mxu0 %v5649
    %7188 = vmatprep.subr.bf16.mxu0 %v5663
    %7189 = vmatpush1.bf16.msra.mxu0 %v5662
    %7190 = vmatprep.subr.bf16.mxu0 0
    %7191 = vmatpush1.bf16.msra.mxu0 0
    %7192 = vmatprep.subr.bf16.mxu0 0
    %7193 = vmatpush1.bf16.msra.mxu0 0
    %7194 = vmatprep.subr.bf16.mxu0 0
    %7195 = vmatpush1.bf16.msra.mxu0 0
    %7196 = vmatprep.subr.bf16.mxu0 0
    %7197 = vmatpush1.bf16.msra.mxu0 0
    %7198 = vmatprep.subr.bf16.mxu0 0
    %7199 = vmatpush1.bf16.msra.mxu0 0
    %7200 = vmatprep.subr.bf16.mxu0 0
    %7201 = vmatpush1.bf16.msra.mxu0 0
    %7202 = vmatprep.subr.bf16.mxu0 0
    %7203 = vmatpush1.bf16.msra.mxu0 0
    %7204 = vmatprep.subr.bf16.mxu0 0
    %7205 = vmatpush1.bf16.msra.mxu0 0
    %7206 = vmatprep.mubr.bf16.mxu0 0
    %7207 = vmatmul.mubr.bf16.gmra.mrb[0].mxu0 %v1845
    %v7208 = vpop.f32.mrb[0].mxu0
    %v7209 = vadd.f32 %v7168, %v7208
    %v7210 = vpop.f32.mrb[0].mxu0
    %v7211 = vadd.f32 %v7170, %v7210
    %v7212 = vpop.f32.mrb[0].mxu0
    %v7213 = vpop.f32.mrb[0].mxu0
    %7214 = vdwg.mxu0
    %7215 = vmatprep.subr.bf16.mxu0 %v4950
    %7216 = vmatpush1.bf16.msra.mxu0 %v4949
    %7217 = vmatprep.subr.bf16.mxu0 %v4963
    %7218 = vmatpush1.bf16.msra.mxu0 %v4962
    %7219 = vmatprep.subr.bf16.mxu0 %v4976
    %7220 = vmatpush1.bf16.msra.mxu0 %v4975
    %7221 = vmatprep.subr.bf16.mxu0 %v4989
    %7222 = vmatpush1.bf16.msra.mxu0 %v4988
    %7223 = vmatprep.subr.bf16.mxu0 %v5002
    %7224 = vmatpush1.bf16.msra.mxu0 %v5001
    %7225 = vmatprep.subr.bf16.mxu0 %v5015
    %7226 = vmatpush1.bf16.msra.mxu0 %v5014
    %7227 = vmatprep.subr.bf16.mxu0 %v5028
    %7228 = vmatpush1.bf16.msra.mxu0 %v5027
    %7229 = vmatprep.subr.bf16.mxu0 %v5041
    %7230 = vmatpush1.bf16.msra.mxu0 %v5040
    %7231 = vmatprep.subr.bf16.mxu0 %v5054
    %7232 = vmatpush1.bf16.msra.mxu0 %v5053
    %7233 = vmatprep.subr.bf16.mxu0 %v5067
    %7234 = vmatpush1.bf16.msra.mxu0 %v5066
    %7235 = vmatprep.subr.bf16.mxu0 %v5080
    %7236 = vmatpush1.bf16.msra.mxu0 %v5079
    %7237 = vmatprep.subr.bf16.mxu0 %v5093
    %7238 = vmatpush1.bf16.msra.mxu0 %v5092
    %7239 = vmatprep.subr.bf16.mxu0 %v5106
    %7240 = vmatpush1.bf16.msra.mxu0 %v5105
    %7241 = vmatprep.subr.bf16.mxu0 %v5119
    %7242 = vmatpush1.bf16.msra.mxu0 %v5118
    %7243 = vmatprep.subr.bf16.mxu0 %v5132
    %7244 = vmatpush1.bf16.msra.mxu0 %v5131
    %7245 = vmatprep.subr.bf16.mxu0 %v5145
    %7246 = vmatpush1.bf16.msra.mxu0 %v5144
    %7247 = vmatprep.mubr.bf16.mxu0 %v1840
    %7248 = vmatmul.mubr.bf16.gmra.mrb[0].mxu0 %v1839
    %v7249 = vpop.f32.mrb[0].mxu0
    %v7250 = vadd.f32 %v2677, %v7249
    %v7251 = vpop.f32.mrb[0].mxu0
    %v7252 = vadd.f32 %v2681, %v7251
    %v7253 = vpop.f32.mrb[0].mxu0
    %v7254 = vpop.f32.mrb[0].mxu0
    %7255 = vdwg.mxu0
    %7256 = vmatprep.subr.bf16.mxu0 %v5158
    %7257 = vmatpush1.bf16.msra.mxu0 %v5157
    %7258 = vmatprep.subr.bf16.mxu0 %v5171
    %7259 = vmatpush1.bf16.msra.mxu0 %v5170
    %7260 = vmatprep.subr.bf16.mxu0 %v5184
    %7261 = vmatpush1.bf16.msra.mxu0 %v5183
    %7262 = vmatprep.subr.bf16.mxu0 %v5197
    %7263 = vmatpush1.bf16.msra.mxu0 %v5196
    %7264 = vmatprep.subr.bf16.mxu0 %v5210
    %7265 = vmatpush1.bf16.msra.mxu0 %v5209
    %7266 = vmatprep.subr.bf16.mxu0 %v5223
    %7267 = vmatpush1.bf16.msra.mxu0 %v5222
    %7268 = vmatprep.subr.bf16.mxu0 %v5236
    %7269 = vmatpush1.bf16.msra.mxu0 %v5235
    %7270 = vmatprep.subr.bf16.mxu0 %v5249
    %7271 = vmatpush1.bf16.msra.mxu0 %v5248
    %7272 = vmatprep.subr.bf16.mxu0 %v5262
    %7273 = vmatpush1.bf16.msra.mxu0 %v5261
    %7274 = vmatprep.subr.bf16.mxu0 %v5275
    %7275 = vmatpush1.bf16.msra.mxu0 %v5274
    %7276 = vmatprep.subr.bf16.mxu0 %v5288
    %7277 = vmatpush1.bf16.msra.mxu0 %v5287
    %7278 = vmatprep.subr.bf16.mxu0 %v5301
    %7279 = vmatpush1.bf16.msra.mxu0 %v5300
    %7280 = vmatprep.subr.bf16.mxu0 %v5314
    %7281 = vmatpush1.bf16.msra.mxu0 %v5313
    %7282 = vmatprep.subr.bf16.mxu0 %v5327
    %7283 = vmatpush1.bf16.msra.mxu0 %v5326
    %7284 = vmatprep.subr.bf16.mxu0 %v5340
    %7285 = vmatpush1.bf16.msra.mxu0 %v5339
    %7286 = vmatprep.subr.bf16.mxu0 %v5353
    %7287 = vmatpush1.bf16.msra.mxu0 %v5352
    %7288 = vmatprep.mubr.bf16.mxu0 %v1842
    %7289 = vmatmul.mubr.bf16.gmra.mrb[0].mxu0 %v1841
    %v7290 = vpop.f32.mrb[0].mxu0
    %v7291 = vadd.f32 %v7250, %v7290
    %v7292 = vpop.f32.mrb[0].mxu0
    %v7293 = vadd.f32 %v7252, %v7292
    %v7294 = vpop.f32.mrb[0].mxu0
    %v7295 = vpop.f32.mrb[0].mxu0
    %7296 = vdwg.mxu0
    %7297 = vmatprep.subr.bf16.mxu0 %v5366
    %7298 = vmatpush1.bf16.msra.mxu0 %v5365
    %7299 = vmatprep.subr.bf16.mxu0 %v5379
    %7300 = vmatpush1.bf16.msra.mxu0 %v5378
    %7301 = vmatprep.subr.bf16.mxu0 %v5392
    %7302 = vmatpush1.bf16.msra.mxu0 %v5391
    %7303 = vmatprep.subr.bf16.mxu0 %v5405
    %7304 = vmatpush1.bf16.msra.mxu0 %v5404
    %7305 = vmatprep.subr.bf16.mxu0 %v5418
    %7306 = vmatpush1.bf16.msra.mxu0 %v5417
    %7307 = vmatprep.subr.bf16.mxu0 %v5431
    %7308 = vmatpush1.bf16.msra.mxu0 %v5430
    %7309 = vmatprep.subr.bf16.mxu0 %v5444
    %7310 = vmatpush1.bf16.msra.mxu0 %v5443
    %7311 = vmatprep.subr.bf16.mxu0 %v5457
    %7312 = vmatpush1.bf16.msra.mxu0 %v5456
    %7313 = vmatprep.subr.bf16.mxu0 %v5470
    %7314 = vmatpush1.bf16.msra.mxu0 %v5469
    %7315 = vmatprep.subr.bf16.mxu0 %v5483
    %7316 = vmatpush1.bf16.msra.mxu0 %v5482
    %7317 = vmatprep.subr.bf16.mxu0 %v5496
    %7318 = vmatpush1.bf16.msra.mxu0 %v5495
    %7319 = vmatprep.subr.bf16.mxu0 %v5509
    %7320 = vmatpush1.bf16.msra.mxu0 %v5508
    %7321 = vmatprep.subr.bf16.mxu0 %v5522
    %7322 = vmatpush1.bf16.msra.mxu0 %v5521
    %7323 = vmatprep.subr.bf16.mxu0 %v5535
    %7324 = vmatpush1.bf16.msra.mxu0 %v5534
    %7325 = vmatprep.subr.bf16.mxu0 %v5548
    %7326 = vmatpush1.bf16.msra.mxu0 %v5547
    %7327 = vmatprep.subr.bf16.mxu0 %v5561
    %7328 = vmatpush1.bf16.msra.mxu0 %v5560
    %7329 = vmatprep.mubr.bf16.mxu0 %v1844
    %7330 = vmatmul.mubr.bf16.gmra.mrb[0].mxu0 %v1843
    %v7331 = vpop.f32.mrb[0].mxu0
    %v7332 = vadd.f32 %v7291, %v7331
    %v7333 = vpop.f32.mrb[0].mxu0
    %v7334 = vadd.f32 %v7293, %v7333
    %v7335 = vpop.f32.mrb[0].mxu0
    %v7336 = vpop.f32.mrb[0].mxu0
    %7337 = vdwg.mxu0
    %7338 = vmatprep.subr.bf16.mxu0 %v5574
    %7339 = vmatpush1.bf16.msra.mxu0 %v5573
    %7340 = vmatprep.subr.bf16.mxu0 %v5587
    %7341 = vmatpush1.bf16.msra.mxu0 %v5586
    %7342 = vmatprep.subr.bf16.mxu0 %v5600
    %7343 = vmatpush1.bf16.msra.mxu0 %v5599
    %7344 = vmatprep.subr.bf16.mxu0 %v5613
    %7345 = vmatpush1.bf16.msra.mxu0 %v5612
    %7346 = vmatprep.subr.bf16.mxu0 %v5626
    %7347 = vmatpush1.bf16.msra.mxu0 %v5625
    %7348 = vmatprep.subr.bf16.mxu0 %v5639
    %7349 = vmatpush1.bf16.msra.mxu0 %v5638
    %7350 = vmatprep.subr.bf16.mxu0 %v5652
    %7351 = vmatpush1.bf16.msra.mxu0 %v5651
    %7352 = vmatprep.subr.bf16.mxu0 %v5665
    %7353 = vmatpush1.bf16.msra.mxu0 %v5664
    %7354 = vmatprep.subr.bf16.mxu0 0
    %7355 = vmatpush1.bf16.msra.mxu0 0
    %7356 = vmatprep.subr.bf16.mxu0 0
    %7357 = vmatpush1.bf16.msra.mxu0 0
    %7358 = vmatprep.subr.bf16.mxu0 0
    %7359 = vmatpush1.bf16.msra.mxu0 0
    %7360 = vmatprep.subr.bf16.mxu0 0
    %7361 = vmatpush1.bf16.msra.mxu0 0
    %7362 = vmatprep.subr.bf16.mxu0 0
    %7363 = vmatpush1.bf16.msra.mxu0 0
    %7364 = vmatprep.subr.bf16.mxu0 0
    %7365 = vmatpush1.bf16.msra.mxu0 0
    %7366 = vmatprep.subr.bf16.mxu0 0
    %7367 = vmatpush1.bf16.msra.mxu0 0
    %7368 = vmatprep.subr.bf16.mxu0 0
    %7369 = vmatpush1.bf16.msra.mxu0 0
    %7370 = vmatprep.mubr.bf16.mxu0 0
    %7371 = vmatmul.mubr.bf16.gmra.mrb[0].mxu0 %v1845
    %v7372 = vpop.f32.mrb[0].mxu0
    %v7373 = vadd.f32 %v7332, %v7372
    %v7374 = vpop.f32.mrb[0].mxu0
    %v7375 = vadd.f32 %v7334, %v7374
    %v7376 = vpop.f32.mrb[0].mxu0
    %v7377 = vpop.f32.mrb[0].mxu0
    %7378 = vdwg.mxu0
    %7379 = vmatprep.subr.bf16.mxu0 0
    %7380 = vmatpush1.bf16.msra.mxu0 %v4951
    %7381 = vmatprep.subr.bf16.mxu0 0
    %7382 = vmatpush1.bf16.msra.mxu0 %v4964
    %7383 = vmatprep.subr.bf16.mxu0 0
    %7384 = vmatpush1.bf16.msra.mxu0 %v4977
    %7385 = vmatprep.subr.bf16.mxu0 0
    %7386 = vmatpush1.bf16.msra.mxu0 %v4990
    %7387 = vmatprep.subr.bf16.mxu0 0
    %7388 = vmatpush1.bf16.msra.mxu0 %v5003
    %7389 = vmatprep.subr.bf16.mxu0 0
    %7390 = vmatpush1.bf16.msra.mxu0 %v5016
    %7391 = vmatprep.subr.bf16.mxu0 0
    %7392 = vmatpush1.bf16.msra.mxu0 %v5029
    %7393 = vmatprep.subr.bf16.mxu0 0
    %7394 = vmatpush1.bf16.msra.mxu0 %v5042
    %7395 = vmatprep.subr.bf16.mxu0 0
    %7396 = vmatpush1.bf16.msra.mxu0 %v5055
    %7397 = vmatprep.subr.bf16.mxu0 0
    %7398 = vmatpush1.bf16.msra.mxu0 %v5068
    %7399 = vmatprep.subr.bf16.mxu0 0
    %7400 = vmatpush1.bf16.msra.mxu0 %v5081
    %7401 = vmatprep.subr.bf16.mxu0 0
    %7402 = vmatpush1.bf16.msra.mxu0 %v5094
    %7403 = vmatprep.subr.bf16.mxu0 0
    %7404 = vmatpush1.bf16.msra.mxu0 %v5107
    %7405 = vmatprep.subr.bf16.mxu0 0
    %7406 = vmatpush1.bf16.msra.mxu0 %v5120
    %7407 = vmatprep.subr.bf16.mxu0 0
    %7408 = vmatpush1.bf16.msra.mxu0 %v5133
    %7409 = vmatprep.subr.bf16.mxu0 0
    %7410 = vmatpush1.bf16.msra.mxu0 %v5146
    %7411 = vmatprep.mubr.bf16.mxu0 %v1840
    %7412 = vmatmul.mubr.bf16.gmra.mrb[0].mxu0 %v1839
    %v7413 = vpop.f32.mrb[0].mxu0
    %v7414 = vadd.f32 %v2685, %v7413
    %v7415 = vpop.f32.mrb[0].mxu0
    %v7416 = vpop.f32.mrb[0].mxu0
    %v7417 = vpop.f32.mrb[0].mxu0
    %7418 = vdwg.mxu0
    %7419 = vmatprep.subr.bf16.mxu0 0
    %7420 = vmatpush1.bf16.msra.mxu0 %v5159
    %7421 = vmatprep.subr.bf16.mxu0 0
    %7422 = vmatpush1.bf16.msra.mxu0 %v5172
    %7423 = vmatprep.subr.bf16.mxu0 0
    %7424 = vmatpush1.bf16.msra.mxu0 %v5185
    %7425 = vmatprep.subr.bf16.mxu0 0
    %7426 = vmatpush1.bf16.msra.mxu0 %v5198
    %7427 = vmatprep.subr.bf16.mxu0 0
    %7428 = vmatpush1.bf16.msra.mxu0 %v5211
    %7429 = vmatprep.subr.bf16.mxu0 0
    %7430 = vmatpush1.bf16.msra.mxu0 %v5224
    %7431 = vmatprep.subr.bf16.mxu0 0
    %7432 = vmatpush1.bf16.msra.mxu0 %v5237
    %7433 = vmatprep.subr.bf16.mxu0 0
    %7434 = vmatpush1.bf16.msra.mxu0 %v5250
    %7435 = vmatprep.subr.bf16.mxu0 0
    %7436 = vmatpush1.bf16.msra.mxu0 %v5263
    %7437 = vmatprep.subr.bf16.mxu0 0
    %7438 = vmatpush1.bf16.msra.mxu0 %v5276
    %7439 = vmatprep.subr.bf16.mxu0 0
    %7440 = vmatpush1.bf16.msra.mxu0 %v5289
    %7441 = vmatprep.subr.bf16.mxu0 0
    %7442 = vmatpush1.bf16.msra.mxu0 %v5302
    %7443 = vmatprep.subr.bf16.mxu0 0
    %7444 = vmatpush1.bf16.msra.mxu0 %v5315
    %7445 = vmatprep.subr.bf16.mxu0 0
    %7446 = vmatpush1.bf16.msra.mxu0 %v5328
    %7447 = vmatprep.subr.bf16.mxu0 0
    %7448 = vmatpush1.bf16.msra.mxu0 %v5341
    %7449 = vmatprep.subr.bf16.mxu0 0
    %7450 = vmatpush1.bf16.msra.mxu0 %v5354
    %7451 = vmatprep.mubr.bf16.mxu0 %v1842
    %7452 = vmatmul.mubr.bf16.gmra.mrb[0].mxu0 %v1841
    %v7453 = vpop.f32.mrb[0].mxu0
    %v7454 = vadd.f32 %v7414, %v7453
    %v7455 = vpop.f32.mrb[0].mxu0
    %v7456 = vpop.f32.mrb[0].mxu0
    %v7457 = vpop.f32.mrb[0].mxu0
    %7458 = vdwg.mxu0
    %7459 = vmatprep.subr.bf16.mxu0 0
    %7460 = vmatpush1.bf16.msra.mxu0 %v5367
    %7461 = vmatprep.subr.bf16.mxu0 0
    %7462 = vmatpush1.bf16.msra.mxu0 %v5380
    %7463 = vmatprep.subr.bf16.mxu0 0
    %7464 = vmatpush1.bf16.msra.mxu0 %v5393
    %7465 = vmatprep.subr.bf16.mxu0 0
    %7466 = vmatpush1.bf16.msra.mxu0 %v5406
    %7467 = vmatprep.subr.bf16.mxu0 0
    %7468 = vmatpush1.bf16.msra.mxu0 %v5419
    %7469 = vmatprep.subr.bf16.mxu0 0
    %7470 = vmatpush1.bf16.msra.mxu0 %v5432
    %7471 = vmatprep.subr.bf16.mxu0 0
    %7472 = vmatpush1.bf16.msra.mxu0 %v5445
    %7473 = vmatprep.subr.bf16.mxu0 0
    %7474 = vmatpush1.bf16.msra.mxu0 %v5458
    %7475 = vmatprep.subr.bf16.mxu0 0
    %7476 = vmatpush1.bf16.msra.mxu0 %v5471
    %7477 = vmatprep.subr.bf16.mxu0 0
    %7478 = vmatpush1.bf16.msra.mxu0 %v5484
    %7479 = vmatprep.subr.bf16.mxu0 0
    %7480 = vmatpush1.bf16.msra.mxu0 %v5497
    %7481 = vmatprep.subr.bf16.mxu0 0
    %7482 = vmatpush1.bf16.msra.mxu0 %v5510
    %7483 = vmatprep.subr.bf16.mxu0 0
    %7484 = vmatpush1.bf16.msra.mxu0 %v5523
    %7485 = vmatprep.subr.bf16.mxu0 0
    %7486 = vmatpush1.bf16.msra.mxu0 %v5536
    %7487 = vmatprep.subr.bf16.mxu0 0
    %7488 = vmatpush1.bf16.msra.mxu0 %v5549
    %7489 = vmatprep.subr.bf16.mxu0 0
    %7490 = vmatpush1.bf16.msra.mxu0 %v5562
    %7491 = vmatprep.mubr.bf16.mxu0 %v1844
    %7492 = vmatmul.mubr.bf16.gmra.mrb[0].mxu0 %v1843
    %v7493 = vpop.f32.mrb[0].mxu0
    %v7494 = vadd.f32 %v7454, %v7493
    %v7495 = vpop.f32.mrb[0].mxu0
    %v7496 = vpop.f32.mrb[0].mxu0
    %v7497 = vpop.f32.mrb[0].mxu0
    %7498 = vdwg.mxu0
    %7499 = vmatprep.subr.bf16.mxu0 0
    %7500 = vmatpush1.bf16.msra.mxu0 %v5575
    %7501 = vmatprep.subr.bf16.mxu0 0
    %7502 = vmatpush1.bf16.msra.mxu0 %v5588
    %7503 = vmatprep.subr.bf16.mxu0 0
    %7504 = vmatpush1.bf16.msra.mxu0 %v5601
    %7505 = vmatprep.subr.bf16.mxu0 0
    %7506 = vmatpush1.bf16.msra.mxu0 %v5614
    %7507 = vmatprep.subr.bf16.mxu0 0
    %7508 = vmatpush1.bf16.msra.mxu0 %v5627
    %7509 = vmatprep.subr.bf16.mxu0 0
    %7510 = vmatpush1.bf16.msra.mxu0 %v5640
    %7511 = vmatprep.subr.bf16.mxu0 0
    %7512 = vmatpush1.bf16.msra.mxu0 %v5653
    %7513 = vmatprep.subr.bf16.mxu0 0
    %7514 = vmatpush1.bf16.msra.mxu0 %v5666
    %7515 = vmatprep.subr.bf16.mxu0 0
    %7516 = vmatpush1.bf16.msra.mxu0 0
    %7517 = vmatprep.subr.bf16.mxu0 0
    %7518 = vmatpush1.bf16.msra.mxu0 0
    %7519 = vmatprep.subr.bf16.mxu0 0
    %7520 = vmatpush1.bf16.msra.mxu0 0
    %7521 = vmatprep.subr.bf16.mxu0 0
    %7522 = vmatpush1.bf16.msra.mxu0 0
    %7523 = vmatprep.subr.bf16.mxu0 0
    %7524 = vmatpush1.bf16.msra.mxu0 0
    %7525 = vmatprep.subr.bf16.mxu0 0
    %7526 = vmatpush1.bf16.msra.mxu0 0
    %7527 = vmatprep.subr.bf16.mxu0 0
    %7528 = vmatpush1.bf16.msra.mxu0 0
    %7529 = vmatprep.subr.bf16.mxu0 0
    %7530 = vmatpush1.bf16.msra.mxu0 0
    %7531 = vmatprep.mubr.bf16.mxu0 0
    %7532 = vmatmul.mubr.bf16.gmra.mrb[0].mxu0 %v1845
    %v7533 = vpop.f32.mrb[0].mxu0
    %v7534 = vadd.f32 %v7494, %v7533
    %v7535 = vpop.f32.mrb[0].mxu0
    %v7536 = vpop.f32.mrb[0].mxu0
    %v7537 = vpop.f32.mrb[0].mxu0
    %7538 = vdwg.mxu0
    %v7539 = vmax.f32 %v6553, 0.0
    %v7540 = vmax.f32 %v6555, 0.0
    %v7541 = vmax.f32 %v6717, 0.0
    %v7542 = vmax.f32 %v6719, 0.0
    %v7543 = vmax.f32 %v6881, 0.0
    %v7544 = vmax.f32 %v6883, 0.0
    %v7545 = vmax.f32 %v7045, 0.0
    %v7546 = vmax.f32 %v7047, 0.0
    %v7547 = vmax.f32 %v7209, 0.0
    %v7548 = vmax.f32 %v7211, 0.0
    %v7549 = vmax.f32 %v7373, 0.0
    %v7550 = vmax.f32 %v7375, 0.0
    %v7551 = vmax.f32 %v7534, 0.0
    %v7552 = vpack.c.bf16 %v7539, %v7539
    %v7553 = vpack.c.bf16 %v7540, %v7540
    %v7554 = vpack.c.bf16 %v7541, %v7541
    %v7555 = vpack.c.bf16 %v7542, %v7542
    %v7556 = vpack.c.bf16 %v7543, %v7543
    %v7557 = vpack.c.bf16 %v7544, %v7544
    %v7558 = vpack.c.bf16 %v7545, %v7545
    %v7559 = vpack.c.bf16 %v7546, %v7546
    %v7560 = vpack.c.bf16 %v7547, %v7547
    %v7561 = vpack.c.bf16 %v7548, %v7548
    %v7562 = vpack.c.bf16 %v7549, %v7549
    %v7563 = vpack.c.bf16 %v7550, %v7550
    %v7564 = vpack.c.bf16 %v7551, %v7551
    %v7565 = vld [vmem:[#allocation14] sm:$0xff]
    %v7566 = vld [vmem:[#allocation14 + $0x8] sm:$0xff]
    %v7567 = vld [vmem:[#allocation14 + $0x10] sm:$0xff]
    %v7568 = vld [vmem:[#allocation14 + $0x18] sm:$0xf]
    %v7569 = vld [vmem:[#allocation14 + $0x1c] sm:$0xff]
    %v7570 = vld [vmem:[#allocation14 + $0x24] sm:$0xff]
    %v7571 = vld [vmem:[#allocation14 + $0x2c] sm:$0xff]
    %v7572 = vld [vmem:[#allocation14 + $0x34] sm:$0xf]
    %v7573 = vld [vmem:[#allocation14 + $0x38] sm:$0xff]
    %v7574 = vld [vmem:[#allocation14 + $0x40] sm:$0xff]
    %v7575 = vld [vmem:[#allocation14 + $0x48] sm:$0xff]
    %v7576 = vld [vmem:[#allocation14 + $0x50] sm:$0xf]
    %v7577 = vld [vmem:[#allocation14 + $0x54] sm:$0xff]
    %v7578 = vld [vmem:[#allocation14 + $0x5c] sm:$0xff]
    %v7579 = vld [vmem:[#allocation14 + $0x64] sm:$0xff]
    %v7580 = vld [vmem:[#allocation14 + $0x6c] sm:$0xf]
    %v7581 = vld [vmem:[#allocation14 + $0x70] sm:$0xff]
    %v7582 = vld [vmem:[#allocation14 + $0x78] sm:$0xff]
    %v7583 = vld [vmem:[#allocation14 + $0x80] sm:$0xff]
    %v7584 = vld [vmem:[#allocation14 + $0x88] sm:$0xf]
    %v7585 = vld [vmem:[#allocation14 + $0x8c] sm:$0xff]
    %v7586 = vld [vmem:[#allocation14 + $0x94] sm:$0xff]
    %v7587 = vld [vmem:[#allocation14 + $0x9c] sm:$0xff]
    %v7588 = vld [vmem:[#allocation14 + $0xa4] sm:$0xf]
    %v7589 = vld [vmem:[#allocation14 + $0xa8] sm:$0xff]
    %v7590 = vld [vmem:[#allocation14 + $0xb0] sm:$0xff]
    %v7591 = vld [vmem:[#allocation14 + $0xb8] sm:$0xff]
    %v7592 = vld [vmem:[#allocation14 + $0xc0] sm:$0xf]
    %v7593 = vld [vmem:[#allocation14 + $0xc4] sm:$0xff]
    %v7594 = vld [vmem:[#allocation14 + $0xcc] sm:$0xff]
    %v7595 = vld [vmem:[#allocation14 + $0xd4] sm:$0xff]
    %v7596 = vld [vmem:[#allocation14 + $0xdc] sm:$0xf]
    %v7597 = vld [vmem:[#allocation14 + $0xe0] sm:$0xff]
    %v7598 = vld [vmem:[#allocation14 + $0xe8] sm:$0xff]
    %v7599 = vld [vmem:[#allocation14 + $0xf0] sm:$0xff]
    %v7600 = vld [vmem:[#allocation14 + $0xf8] sm:$0xf]
    %v7601 = vld [vmem:[#allocation14 + $0xfc] sm:$0xff]
    %v7602 = vld [vmem:[#allocation14 + $0x104] sm:$0xff]
    %v7603 = vld [vmem:[#allocation14 + $0x10c] sm:$0xff]
    %v7604 = vld [vmem:[#allocation14 + $0x114] sm:$0xf]
    %v7605 = vld [vmem:[#allocation14 + $0x118] sm:$0xff]
    %v7606 = vld [vmem:[#allocation14 + $0x120] sm:$0xff]
    %v7607 = vld [vmem:[#allocation14 + $0x128] sm:$0xff]
    %v7608 = vld [vmem:[#allocation14 + $0x130] sm:$0xf]
    %v7609 = vld [vmem:[#allocation14 + $0x134] sm:$0xff]
    %v7610 = vld [vmem:[#allocation14 + $0x13c] sm:$0xff]
    %v7611 = vld [vmem:[#allocation14 + $0x144] sm:$0xff]
    %v7612 = vld [vmem:[#allocation14 + $0x14c] sm:$0xf]
    %v7613 = vld [vmem:[#allocation14 + $0x150] sm:$0xff]
    %v7614 = vld [vmem:[#allocation14 + $0x158] sm:$0xff]
    %v7615 = vld [vmem:[#allocation14 + $0x160] sm:$0xff]
    %v7616 = vld [vmem:[#allocation14 + $0x168] sm:$0xf]
    %v7617 = vld [vmem:[#allocation14 + $0x16c] sm:$0xff]
    %v7618 = vld [vmem:[#allocation14 + $0x174] sm:$0xff]
    %v7619 = vld [vmem:[#allocation14 + $0x17c] sm:$0xff]
    %v7620 = vld [vmem:[#allocation14 + $0x184] sm:$0xf]
    %v7621 = vld [vmem:[#allocation14 + $0x188] sm:$0xff]
    %v7622 = vld [vmem:[#allocation14 + $0x190] sm:$0xff]
    %v7623 = vld [vmem:[#allocation14 + $0x198] sm:$0xff]
    %v7624 = vld [vmem:[#allocation14 + $0x1a0] sm:$0xf]
    %v7625 = vld [vmem:[#allocation14 + $0x1a4] sm:$0xff]
    %v7626 = vld [vmem:[#allocation14 + $0x1ac] sm:$0xff]
    %v7627 = vld [vmem:[#allocation14 + $0x1b4] sm:$0xff]
    %v7628 = vld [vmem:[#allocation14 + $0x1bc] sm:$0xf]
    %v7629 = vld [vmem:[#allocation14 + $0x1c0] sm:$0xff]
    %v7630 = vld [vmem:[#allocation14 + $0x1c8] sm:$0xff]
    %v7631 = vld [vmem:[#allocation14 + $0x1d0] sm:$0xff]
    %v7632 = vld [vmem:[#allocation14 + $0x1d8] sm:$0xf]
    %v7633 = vld [vmem:[#allocation14 + $0x1dc] sm:$0xff]
    %v7634 = vld [vmem:[#allocation14 + $0x1e4] sm:$0xff]
    %v7635 = vld [vmem:[#allocation14 + $0x1ec] sm:$0xff]
    %v7636 = vld [vmem:[#allocation14 + $0x1f4] sm:$0xf]
    %v7637 = vld [vmem:[#allocation14 + $0x1f8] sm:$0xff]
    %v7638 = vld [vmem:[#allocation14 + $0x200] sm:$0xff]
    %v7639 = vld [vmem:[#allocation14 + $0x208] sm:$0xff]
    %v7640 = vld [vmem:[#allocation14 + $0x210] sm:$0xf]
    %v7641 = vld [vmem:[#allocation14 + $0x214] sm:$0xff]
    %v7642 = vld [vmem:[#allocation14 + $0x21c] sm:$0xff]
    %v7643 = vld [vmem:[#allocation14 + $0x224] sm:$0xff]
    %v7644 = vld [vmem:[#allocation14 + $0x22c] sm:$0xf]
    %v7645 = vld [vmem:[#allocation14 + $0x230] sm:$0xff]
    %v7646 = vld [vmem:[#allocation14 + $0x238] sm:$0xff]
    %v7647 = vld [vmem:[#allocation14 + $0x240] sm:$0xff]
    %v7648 = vld [vmem:[#allocation14 + $0x248] sm:$0xf]
    %v7649 = vld [vmem:[#allocation14 + $0x24c] sm:$0xff]
    %v7650 = vld [vmem:[#allocation14 + $0x254] sm:$0xff]
    %v7651 = vld [vmem:[#allocation14 + $0x25c] sm:$0xff]
    %v7652 = vld [vmem:[#allocation14 + $0x264] sm:$0xf]
    %v7653 = vld [vmem:[#allocation14 + $0x268] sm:$0xff]
    %v7654 = vld [vmem:[#allocation14 + $0x270] sm:$0xff]
    %v7655 = vld [vmem:[#allocation14 + $0x278] sm:$0xff]
    %v7656 = vld [vmem:[#allocation14 + $0x280] sm:$0xf]
    %v7657 = vld [vmem:[#allocation14 + $0x284] sm:$0xff]
    %v7658 = vld [vmem:[#allocation14 + $0x28c] sm:$0xff]
    %v7659 = vld [vmem:[#allocation14 + $0x294] sm:$0xff]
    %v7660 = vld [vmem:[#allocation14 + $0x29c] sm:$0xf]
    %v7661 = vld [vmem:[#allocation14 + $0x2a0] sm:$0xff]
    %v7662 = vld [vmem:[#allocation14 + $0x2a8] sm:$0xff]
    %v7663 = vld [vmem:[#allocation14 + $0x2b0] sm:$0xff]
    %v7664 = vld [vmem:[#allocation14 + $0x2b8] sm:$0xf]
    %v7665 = vld [vmem:[#allocation14 + $0x2bc] sm:$0xff]
    %v7666 = vld [vmem:[#allocation14 + $0x2c4] sm:$0xff]
    %v7667 = vld [vmem:[#allocation14 + $0x2cc] sm:$0xff]
    %v7668 = vld [vmem:[#allocation14 + $0x2d4] sm:$0xf]
    %v7669 = vld [vmem:[#allocation14 + $0x2d8] sm:$0xff]
    %v7670 = vld [vmem:[#allocation14 + $0x2e0] sm:$0xff]
    %v7671 = vld [vmem:[#allocation14 + $0x2e8] sm:$0xff]
    %v7672 = vld [vmem:[#allocation14 + $0x2f0] sm:$0xf]
    %v7673 = vld [vmem:[#allocation14 + $0x2f4] sm:$0xff]
    %v7674 = vld [vmem:[#allocation14 + $0x2fc] sm:$0xff]
    %v7675 = vld [vmem:[#allocation14 + $0x304] sm:$0xff]
    %v7676 = vld [vmem:[#allocation14 + $0x30c] sm:$0xf]
    %v7677 = vld [vmem:[#allocation14 + $0x310] sm:$0xff]
    %v7678 = vld [vmem:[#allocation14 + $0x318] sm:$0xff]
    %v7679 = vld [vmem:[#allocation14 + $0x320] sm:$0xff]
    %v7680 = vld [vmem:[#allocation14 + $0x328] sm:$0xf]
    %v7681 = vld [vmem:[#allocation14 + $0x32c] sm:$0xff]
    %v7682 = vld [vmem:[#allocation14 + $0x334] sm:$0xff]
    %v7683 = vld [vmem:[#allocation14 + $0x33c] sm:$0xff]
    %v7684 = vld [vmem:[#allocation14 + $0x344] sm:$0xf]
    %v7685 = vld [vmem:[#allocation14 + $0x348] sm:$0xff]
    %v7686 = vld [vmem:[#allocation14 + $0x350] sm:$0xff]
    %v7687 = vld [vmem:[#allocation14 + $0x358] sm:$0xff]
    %v7688 = vld [vmem:[#allocation14 + $0x360] sm:$0xf]
    %v7689 = vld [vmem:[#allocation14 + $0x364] sm:$0xff]
    %v7690 = vld [vmem:[#allocation14 + $0x36c] sm:$0xff]
    %v7691 = vld [vmem:[#allocation14 + $0x374] sm:$0xff]
    %v7692 = vld [vmem:[#allocation14 + $0x37c] sm:$0xf]
    %v7693 = vld [vmem:[#allocation14 + $0x380] sm:$0xff]
    %v7694 = vld [vmem:[#allocation14 + $0x388] sm:$0xff]
    %v7695 = vld [vmem:[#allocation14 + $0x390] sm:$0xff]
    %v7696 = vld [vmem:[#allocation14 + $0x398] sm:$0xf]
    %v7697 = vld [vmem:[#allocation14 + $0x39c] sm:$0xff]
    %v7698 = vld [vmem:[#allocation14 + $0x3a4] sm:$0xff]
    %v7699 = vld [vmem:[#allocation14 + $0x3ac] sm:$0xff]
    %v7700 = vld [vmem:[#allocation14 + $0x3b4] sm:$0xf]
    %v7701 = vld [vmem:[#allocation14 + $0x3b8] sm:$0xff]
    %v7702 = vld [vmem:[#allocation14 + $0x3c0] sm:$0xff]
    %v7703 = vld [vmem:[#allocation14 + $0x3c8] sm:$0xff]
    %v7704 = vld [vmem:[#allocation14 + $0x3d0] sm:$0xf]
    %v7705 = vld [vmem:[#allocation14 + $0x3d4] sm:$0xff]
    %v7706 = vld [vmem:[#allocation14 + $0x3dc] sm:$0xff]
    %v7707 = vld [vmem:[#allocation14 + $0x3e4] sm:$0xff]
    %v7708 = vld [vmem:[#allocation14 + $0x3ec] sm:$0xf]
    %v7709 = vld [vmem:[#allocation14 + $0x3f0] sm:$0xff]
    %v7710 = vld [vmem:[#allocation14 + $0x3f8] sm:$0xff]
    %v7711 = vld [vmem:[#allocation14 + $0x400] sm:$0xff]
    %v7712 = vld [vmem:[#allocation14 + $0x408] sm:$0xf]
    %v7713 = vld [vmem:[#allocation14 + $0x40c] sm:$0xff]
    %v7714 = vld [vmem:[#allocation14 + $0x414] sm:$0xff]
    %v7715 = vld [vmem:[#allocation14 + $0x41c] sm:$0xff]
    %v7716 = vld [vmem:[#allocation14 + $0x424] sm:$0xf]
    %v7717 = vld [vmem:[#allocation14 + $0x428] sm:$0xff]
    %v7718 = vld [vmem:[#allocation14 + $0x430] sm:$0xff]
    %v7719 = vld [vmem:[#allocation14 + $0x438] sm:$0xff]
    %v7720 = vld [vmem:[#allocation14 + $0x440] sm:$0xf]
    %v7721 = vld [vmem:[#allocation14 + $0x444] sm:$0xff]
    %v7722 = vld [vmem:[#allocation14 + $0x44c] sm:$0xff]
    %v7723 = vld [vmem:[#allocation14 + $0x454] sm:$0xff]
    %v7724 = vld [vmem:[#allocation14 + $0x45c] sm:$0xf]
    %v7725 = vld [vmem:[#allocation14 + $0x460] sm:$0xff]
    %v7726 = vld [vmem:[#allocation14 + $0x468] sm:$0xff]
    %v7727 = vld [vmem:[#allocation14 + $0x470] sm:$0xff]
    %v7728 = vld [vmem:[#allocation14 + $0x478] sm:$0xf]
    %v7729 = vld [vmem:[#allocation14 + $0x47c] sm:$0xff]
    %v7730 = vld [vmem:[#allocation14 + $0x484] sm:$0xff]
    %v7731 = vld [vmem:[#allocation14 + $0x48c] sm:$0xff]
    %v7732 = vld [vmem:[#allocation14 + $0x494] sm:$0xf]
    %v7733 = vld [vmem:[#allocation14 + $0x498] sm:$0xff]
    %v7734 = vld [vmem:[#allocation14 + $0x4a0] sm:$0xff]
    %v7735 = vld [vmem:[#allocation14 + $0x4a8] sm:$0xff]
    %v7736 = vld [vmem:[#allocation14 + $0x4b0] sm:$0xf]
    %v7737 = vld [vmem:[#allocation14 + $0x4b4] sm:$0xff]
    %v7738 = vld [vmem:[#allocation14 + $0x4bc] sm:$0xff]
    %v7739 = vld [vmem:[#allocation14 + $0x4c4] sm:$0xff]
    %v7740 = vld [vmem:[#allocation14 + $0x4cc] sm:$0xf]
    %v7741 = vld [vmem:[#allocation14 + $0x4d0] sm:$0xff]
    %v7742 = vld [vmem:[#allocation14 + $0x4d8] sm:$0xff]
    %v7743 = vld [vmem:[#allocation14 + $0x4e0] sm:$0xff]
    %v7744 = vld [vmem:[#allocation14 + $0x4e8] sm:$0xf]
    %v7745 = vld [vmem:[#allocation14 + $0x4ec] sm:$0xff]
    %v7746 = vld [vmem:[#allocation14 + $0x4f4] sm:$0xff]
    %v7747 = vld [vmem:[#allocation14 + $0x4fc] sm:$0xff]
    %v7748 = vld [vmem:[#allocation14 + $0x504] sm:$0xf]
    %v7749 = vld [vmem:[#allocation14 + $0x508] sm:$0xff]
    %v7750 = vld [vmem:[#allocation14 + $0x510] sm:$0xff]
    %v7751 = vld [vmem:[#allocation14 + $0x518] sm:$0xff]
    %v7752 = vld [vmem:[#allocation14 + $0x520] sm:$0xf]
    %v7753 = vld [vmem:[#allocation14 + $0x524] sm:$0xff]
    %v7754 = vld [vmem:[#allocation14 + $0x52c] sm:$0xff]
    %v7755 = vld [vmem:[#allocation14 + $0x534] sm:$0xff]
    %v7756 = vld [vmem:[#allocation14 + $0x53c] sm:$0xf]
    %v7757 = vld [vmem:[#allocation14 + $0x540] sm:$0xff]
    %v7758 = vld [vmem:[#allocation14 + $0x548] sm:$0xff]
    %v7759 = vld [vmem:[#allocation14 + $0x550] sm:$0xff]
    %v7760 = vld [vmem:[#allocation14 + $0x558] sm:$0xf]
    %v7761 = vld [vmem:[#allocation14 + $0x55c] sm:$0xff]
    %v7762 = vld [vmem:[#allocation14 + $0x564] sm:$0xff]
    %v7763 = vld [vmem:[#allocation14 + $0x56c] sm:$0xff]
    %v7764 = vld [vmem:[#allocation14 + $0x574] sm:$0xf]
    %v7765 = vld [vmem:[#allocation14 + $0x578] sm:$0xff]
    %v7766 = vld [vmem:[#allocation14 + $0x580] sm:$0xff]
    %v7767 = vld [vmem:[#allocation14 + $0x588] sm:$0xff]
    %v7768 = vld [vmem:[#allocation14 + $0x590] sm:$0xf]
    %v7769 = vld [vmem:[#allocation14 + $0x594] sm:$0xff]
    %v7770 = vld [vmem:[#allocation14 + $0x59c] sm:$0xff]
    %v7771 = vld [vmem:[#allocation14 + $0x5a4] sm:$0xff]
    %v7772 = vld [vmem:[#allocation14 + $0x5ac] sm:$0xf]
    %v7773 = vld [vmem:[#allocation14 + $0x5b0] sm:$0xff]
    %v7774 = vld [vmem:[#allocation14 + $0x5b8] sm:$0xff]
    %v7775 = vld [vmem:[#allocation14 + $0x5c0] sm:$0xff]
    %v7776 = vld [vmem:[#allocation14 + $0x5c8] sm:$0xf]
    %v7777 = vld [vmem:[#allocation14 + $0x5cc] sm:$0xff]
    %v7778 = vld [vmem:[#allocation14 + $0x5d4] sm:$0xff]
    %v7779 = vld [vmem:[#allocation14 + $0x5dc] sm:$0xff]
    %v7780 = vld [vmem:[#allocation14 + $0x5e4] sm:$0xf]
    %v7781 = vld [vmem:[#allocation14 + $0x5e8] sm:$0xff]
    %v7782 = vld [vmem:[#allocation14 + $0x5f0] sm:$0xff]
    %v7783 = vld [vmem:[#allocation14 + $0x5f8] sm:$0xff]
    %v7784 = vld [vmem:[#allocation14 + $0x600] sm:$0xf]
    %v7785 = vld [vmem:[#allocation14 + $0x604] sm:$0xff]
    %v7786 = vld [vmem:[#allocation14 + $0x60c] sm:$0xff]
    %v7787 = vld [vmem:[#allocation14 + $0x614] sm:$0xff]
    %v7788 = vld [vmem:[#allocation14 + $0x61c] sm:$0xf]
    %v7789 = vld [vmem:[#allocation14 + $0x620] sm:$0xff]
    %v7790 = vld [vmem:[#allocation14 + $0x628] sm:$0xff]
    %v7791 = vld [vmem:[#allocation14 + $0x630] sm:$0xff]
    %v7792 = vld [vmem:[#allocation14 + $0x638] sm:$0xf]
    %v7793 = vld [vmem:[#allocation14 + $0x63c] sm:$0xff]
    %v7794 = vld [vmem:[#allocation14 + $0x644] sm:$0xff]
    %v7795 = vld [vmem:[#allocation14 + $0x64c] sm:$0xff]
    %v7796 = vld [vmem:[#allocation14 + $0x654] sm:$0xf]
    %v7797 = vld [vmem:[#allocation14 + $0x658] sm:$0xff]
    %v7798 = vld [vmem:[#allocation14 + $0x660] sm:$0xff]
    %v7799 = vld [vmem:[#allocation14 + $0x668] sm:$0xff]
    %v7800 = vld [vmem:[#allocation14 + $0x670] sm:$0xf]
    %v7801 = vld [vmem:[#allocation14 + $0x674] sm:$0xff]
    %v7802 = vld [vmem:[#allocation14 + $0x67c] sm:$0xff]
    %v7803 = vld [vmem:[#allocation14 + $0x684] sm:$0xff]
    %v7804 = vld [vmem:[#allocation14 + $0x68c] sm:$0xf]
    %v7805 = vld [vmem:[#allocation14 + $0x690] sm:$0xff]
    %v7806 = vld [vmem:[#allocation14 + $0x698] sm:$0xff]
    %v7807 = vld [vmem:[#allocation14 + $0x6a0] sm:$0xff]
    %v7808 = vld [vmem:[#allocation14 + $0x6a8] sm:$0xf]
    %v7809 = vld [vmem:[#allocation14 + $0x6ac] sm:$0xff]
    %v7810 = vld [vmem:[#allocation14 + $0x6b4] sm:$0xff]
    %v7811 = vld [vmem:[#allocation14 + $0x6bc] sm:$0xff]
    %v7812 = vld [vmem:[#allocation14 + $0x6c4] sm:$0xf]
    %v7813 = vld [vmem:[#allocation14 + $0x6c8] sm:$0xff]
    %v7814 = vld [vmem:[#allocation14 + $0x6d0] sm:$0xff]
    %v7815 = vld [vmem:[#allocation14 + $0x6d8] sm:$0xff]
    %v7816 = vld [vmem:[#allocation14 + $0x6e0] sm:$0xf]
    %v7817 = vld [vmem:[#allocation14 + $0x6e4] sm:$0xff]
    %v7818 = vld [vmem:[#allocation14 + $0x6ec] sm:$0xff]
    %v7819 = vld [vmem:[#allocation14 + $0x6f4] sm:$0xff]
    %v7820 = vld [vmem:[#allocation14 + $0x6fc] sm:$0xf]
    %v7821 = vld [vmem:[#allocation14 + $0x700] sm:$0xff]
    %v7822 = vld [vmem:[#allocation14 + $0x708] sm:$0xff]
    %v7823 = vld [vmem:[#allocation14 + $0x710] sm:$0xff]
    %v7824 = vld [vmem:[#allocation14 + $0x718] sm:$0xf]
    %v7825 = vld [vmem:[#allocation14 + $0x71c] sm:$0xff]
    %v7826 = vld [vmem:[#allocation14 + $0x724] sm:$0xff]
    %v7827 = vld [vmem:[#allocation14 + $0x72c] sm:$0xff]
    %v7828 = vld [vmem:[#allocation14 + $0x734] sm:$0xf]
    %v7829 = vld [vmem:[#allocation14 + $0x738] sm:$0xff]
    %v7830 = vld [vmem:[#allocation14 + $0x740] sm:$0xff]
    %v7831 = vld [vmem:[#allocation14 + $0x748] sm:$0xff]
    %v7832 = vld [vmem:[#allocation14 + $0x750] sm:$0xf]
    %v7833 = vld [vmem:[#allocation14 + $0x754] sm:$0xff]
    %v7834 = vld [vmem:[#allocation14 + $0x75c] sm:$0xff]
    %v7835 = vld [vmem:[#allocation14 + $0x764] sm:$0xff]
    %v7836 = vld [vmem:[#allocation14 + $0x76c] sm:$0xf]
    %v7837 = vld [vmem:[#allocation14 + $0x770] sm:$0xff]
    %v7838 = vld [vmem:[#allocation14 + $0x778] sm:$0xff]
    %v7839 = vld [vmem:[#allocation14 + $0x780] sm:$0xff]
    %v7840 = vld [vmem:[#allocation14 + $0x788] sm:$0xf]
    %v7841 = vld [vmem:[#allocation14 + $0x78c] sm:$0xff]
    %v7842 = vld [vmem:[#allocation14 + $0x794] sm:$0xff]
    %v7843 = vld [vmem:[#allocation14 + $0x79c] sm:$0xff]
    %v7844 = vld [vmem:[#allocation14 + $0x7a4] sm:$0xf]
    %v7845 = vld [vmem:[#allocation14 + $0x7a8] sm:$0xff]
    %v7846 = vld [vmem:[#allocation14 + $0x7b0] sm:$0xff]
    %v7847 = vld [vmem:[#allocation14 + $0x7b8] sm:$0xff]
    %v7848 = vld [vmem:[#allocation14 + $0x7c0] sm:$0xf]
    %v7849 = vld [vmem:[#allocation14 + $0x7c4] sm:$0xff]
    %v7850 = vld [vmem:[#allocation14 + $0x7cc] sm:$0xff]
    %v7851 = vld [vmem:[#allocation14 + $0x7d4] sm:$0xff]
    %v7852 = vld [vmem:[#allocation14 + $0x7dc] sm:$0xf]
    %v7853 = vld [vmem:[#allocation14 + $0x7e0] sm:$0xff]
    %v7854 = vld [vmem:[#allocation14 + $0x7e8] sm:$0xff]
    %v7855 = vld [vmem:[#allocation14 + $0x7f0] sm:$0xff]
    %v7856 = vld [vmem:[#allocation14 + $0x7f8] sm:$0xf]
    %v7857 = vld [vmem:[#allocation14 + $0x7fc] sm:$0xff]
    %v7858 = vld [vmem:[#allocation14 + $0x804] sm:$0xff]
    %v7859 = vld [vmem:[#allocation14 + $0x80c] sm:$0xff]
    %v7860 = vld [vmem:[#allocation14 + $0x814] sm:$0xf]
    %v7861 = vld [vmem:[#allocation14 + $0x818] sm:$0xff]
    %v7862 = vld [vmem:[#allocation14 + $0x820] sm:$0xff]
    %v7863 = vld [vmem:[#allocation14 + $0x828] sm:$0xff]
    %v7864 = vld [vmem:[#allocation14 + $0x830] sm:$0xf]
    %v7865 = vld [vmem:[#allocation14 + $0x834] sm:$0xff]
    %v7866 = vld [vmem:[#allocation14 + $0x83c] sm:$0xff]
    %v7867 = vld [vmem:[#allocation14 + $0x844] sm:$0xff]
    %v7868 = vld [vmem:[#allocation14 + $0x84c] sm:$0xf]
    %v7869 = vld [vmem:[#allocation14 + $0x850] sm:$0xff]
    %v7870 = vld [vmem:[#allocation14 + $0x858] sm:$0xff]
    %v7871 = vld [vmem:[#allocation14 + $0x860] sm:$0xff]
    %v7872 = vld [vmem:[#allocation14 + $0x868] sm:$0xf]
    %v7873 = vld [vmem:[#allocation14 + $0x86c] sm:$0xff]
    %v7874 = vld [vmem:[#allocation14 + $0x874] sm:$0xff]
    %v7875 = vld [vmem:[#allocation14 + $0x87c] sm:$0xff]
    %v7876 = vld [vmem:[#allocation14 + $0x884] sm:$0xf]
    %v7877 = vld [vmem:[#allocation14 + $0x888] sm:$0xff]
    %v7878 = vld [vmem:[#allocation14 + $0x890] sm:$0xff]
    %v7879 = vld [vmem:[#allocation14 + $0x898] sm:$0xff]
    %v7880 = vld [vmem:[#allocation14 + $0x8a0] sm:$0xf]
    %v7881 = vld [vmem:[#allocation14 + $0x8a4] sm:$0xff]
    %v7882 = vld [vmem:[#allocation14 + $0x8ac] sm:$0xff]
    %v7883 = vld [vmem:[#allocation14 + $0x8b4] sm:$0xff]
    %v7884 = vld [vmem:[#allocation14 + $0x8bc] sm:$0xf]
    %v7885 = vld [vmem:[#allocation14 + $0x8c0] sm:$0xff]
    %v7886 = vld [vmem:[#allocation14 + $0x8c8] sm:$0xff]
    %v7887 = vld [vmem:[#allocation14 + $0x8d0] sm:$0xff]
    %v7888 = vld [vmem:[#allocation14 + $0x8d8] sm:$0xf]
    %v7889 = vld [vmem:[#allocation14 + $0x8dc] sm:$0xff]
    %v7890 = vld [vmem:[#allocation14 + $0x8e4] sm:$0xff]
    %v7891 = vld [vmem:[#allocation14 + $0x8ec] sm:$0xff]
    %v7892 = vld [vmem:[#allocation14 + $0x8f4] sm:$0xf]
    %v7893 = vld [vmem:[#allocation14 + $0x8f8] sm:$0xff]
    %v7894 = vld [vmem:[#allocation14 + $0x900] sm:$0xff]
    %v7895 = vld [vmem:[#allocation14 + $0x908] sm:$0xff]
    %v7896 = vld [vmem:[#allocation14 + $0x910] sm:$0xf]
    %v7897 = vld [vmem:[#allocation14 + $0x914] sm:$0xff]
    %v7898 = vld [vmem:[#allocation14 + $0x91c] sm:$0xff]
    %v7899 = vld [vmem:[#allocation14 + $0x924] sm:$0xff]
    %v7900 = vld [vmem:[#allocation14 + $0x92c] sm:$0xf]
    %v7901 = vld [vmem:[#allocation14 + $0x930] sm:$0xff]
    %v7902 = vld [vmem:[#allocation14 + $0x938] sm:$0xff]
    %v7903 = vld [vmem:[#allocation14 + $0x940] sm:$0xff]
    %v7904 = vld [vmem:[#allocation14 + $0x948] sm:$0xf]
    %v7905 = vld [vmem:[#allocation14 + $0x94c] sm:$0xff]
    %v7906 = vld [vmem:[#allocation14 + $0x954] sm:$0xff]
    %v7907 = vld [vmem:[#allocation14 + $0x95c] sm:$0xff]
    %v7908 = vld [vmem:[#allocation14 + $0x964] sm:$0xf]
    %v7909 = vld [vmem:[#allocation14 + $0x968] sm:$0xff]
    %v7910 = vld [vmem:[#allocation14 + $0x970] sm:$0xff]
    %v7911 = vld [vmem:[#allocation14 + $0x978] sm:$0xff]
    %v7912 = vld [vmem:[#allocation14 + $0x980] sm:$0xf]
    %v7913 = vld [vmem:[#allocation14 + $0x984] sm:$0xff]
    %v7914 = vld [vmem:[#allocation14 + $0x98c] sm:$0xff]
    %v7915 = vld [vmem:[#allocation14 + $0x994] sm:$0xff]
    %v7916 = vld [vmem:[#allocation14 + $0x99c] sm:$0xf]
    %v7917 = vld [vmem:[#allocation14 + $0x9a0] sm:$0xff]
    %v7918 = vld [vmem:[#allocation14 + $0x9a8] sm:$0xff]
    %v7919 = vld [vmem:[#allocation14 + $0x9b0] sm:$0xff]
    %v7920 = vld [vmem:[#allocation14 + $0x9b8] sm:$0xf]
    %v7921 = vld [vmem:[#allocation14 + $0x9bc] sm:$0xff]
    %v7922 = vld [vmem:[#allocation14 + $0x9c4] sm:$0xff]
    %v7923 = vld [vmem:[#allocation14 + $0x9cc] sm:$0xff]
    %v7924 = vld [vmem:[#allocation14 + $0x9d4] sm:$0xf]
    %v7925 = vld [vmem:[#allocation14 + $0x9d8] sm:$0xff]
    %v7926 = vld [vmem:[#allocation14 + $0x9e0] sm:$0xff]
    %v7927 = vld [vmem:[#allocation14 + $0x9e8] sm:$0xff]
    %v7928 = vld [vmem:[#allocation14 + $0x9f0] sm:$0xf]
    %v7929 = vld [vmem:[#allocation14 + $0x9f4] sm:$0xff]
    %v7930 = vld [vmem:[#allocation14 + $0x9fc] sm:$0xff]
    %v7931 = vld [vmem:[#allocation14 + $0xa04] sm:$0xff]
    %v7932 = vld [vmem:[#allocation14 + $0xa0c] sm:$0xf]
    %v7933 = vld [vmem:[#allocation14 + $0xa10] sm:$0xff]
    %v7934 = vld [vmem:[#allocation14 + $0xa18] sm:$0xff]
    %v7935 = vld [vmem:[#allocation14 + $0xa20] sm:$0xff]
    %v7936 = vld [vmem:[#allocation14 + $0xa28] sm:$0xf]
    %v7937 = vld [vmem:[#allocation14 + $0xa2c] sm:$0xff]
    %v7938 = vld [vmem:[#allocation14 + $0xa34] sm:$0xff]
    %v7939 = vld [vmem:[#allocation14 + $0xa3c] sm:$0xff]
    %v7940 = vld [vmem:[#allocation14 + $0xa44] sm:$0xf]
    %v7941 = vld [vmem:[#allocation14 + $0xa48] sm:$0xff]
    %v7942 = vld [vmem:[#allocation14 + $0xa50] sm:$0xff]
    %v7943 = vld [vmem:[#allocation14 + $0xa58] sm:$0xff]
    %v7944 = vld [vmem:[#allocation14 + $0xa60] sm:$0xf]
    %v7945 = vld [vmem:[#allocation14 + $0xa64] sm:$0xff]
    %v7946 = vld [vmem:[#allocation14 + $0xa6c] sm:$0xff]
    %v7947 = vld [vmem:[#allocation14 + $0xa74] sm:$0xff]
    %v7948 = vld [vmem:[#allocation14 + $0xa7c] sm:$0xf]
    %v7949 = vld [vmem:[#allocation14 + $0xa80] sm:$0xff]
    %v7950 = vld [vmem:[#allocation14 + $0xa88] sm:$0xff]
    %v7951 = vld [vmem:[#allocation14 + $0xa90] sm:$0xff]
    %v7952 = vld [vmem:[#allocation14 + $0xa98] sm:$0xf]
    %v7953 = vld [vmem:[#allocation14 + $0xa9c] sm:$0xff]
    %v7954 = vld [vmem:[#allocation14 + $0xaa4] sm:$0xff]
    %v7955 = vld [vmem:[#allocation14 + $0xaac] sm:$0xff]
    %v7956 = vld [vmem:[#allocation14 + $0xab4] sm:$0xf]
    %v7957 = vld [vmem:[#allocation14 + $0xab8] sm:$0xff]
    %v7958 = vld [vmem:[#allocation14 + $0xac0] sm:$0xff]
    %v7959 = vld [vmem:[#allocation14 + $0xac8] sm:$0xff]
    %v7960 = vld [vmem:[#allocation14 + $0xad0] sm:$0xf]
    %v7961 = vld [vmem:[#allocation14 + $0xad4] sm:$0xff]
    %v7962 = vld [vmem:[#allocation14 + $0xadc] sm:$0xff]
    %v7963 = vld [vmem:[#allocation14 + $0xae4] sm:$0xff]
    %v7964 = vld [vmem:[#allocation14 + $0xaec] sm:$0xf]
    %v7965 = vld [vmem:[#allocation14 + $0xaf0] sm:$0xff]
    %v7966 = vld [vmem:[#allocation14 + $0xaf8] sm:$0xff]
    %v7967 = vld [vmem:[#allocation14 + $0xb00] sm:$0xff]
    %v7968 = vld [vmem:[#allocation14 + $0xb08] sm:$0xf]
    %v7969 = vld [vmem:[#allocation14 + $0xb0c] sm:$0xff]
    %v7970 = vld [vmem:[#allocation14 + $0xb14] sm:$0xff]
    %v7971 = vld [vmem:[#allocation14 + $0xb1c] sm:$0xff]
    %v7972 = vld [vmem:[#allocation14 + $0xb24] sm:$0xf]
    %v7973 = vld [vmem:[#allocation14 + $0xb28] sm:$0xff]
    %v7974 = vld [vmem:[#allocation14 + $0xb30] sm:$0xff]
    %v7975 = vld [vmem:[#allocation14 + $0xb38] sm:$0xff]
    %v7976 = vld [vmem:[#allocation14 + $0xb40] sm:$0xf]
    %v7977 = vld [vmem:[#allocation14 + $0xb44] sm:$0xff]
    %v7978 = vld [vmem:[#allocation14 + $0xb4c] sm:$0xff]
    %v7979 = vld [vmem:[#allocation14 + $0xb54] sm:$0xff]
    %v7980 = vld [vmem:[#allocation14 + $0xb5c] sm:$0xf]
    %v7981 = vld [vmem:[#allocation14 + $0xb60] sm:$0xff]
    %v7982 = vld [vmem:[#allocation14 + $0xb68] sm:$0xff]
    %v7983 = vld [vmem:[#allocation14 + $0xb70] sm:$0xff]
    %v7984 = vld [vmem:[#allocation14 + $0xb78] sm:$0xf]
    %v7985 = vld [vmem:[#allocation14 + $0xb7c] sm:$0xff]
    %v7986 = vld [vmem:[#allocation14 + $0xb84] sm:$0xff]
    %v7987 = vld [vmem:[#allocation14 + $0xb8c] sm:$0xff]
    %v7988 = vld [vmem:[#allocation14 + $0xb94] sm:$0xf]
    %v7989 = vld [vmem:[#allocation14 + $0xb98] sm:$0xff]
    %v7990 = vld [vmem:[#allocation14 + $0xba0] sm:$0xff]
    %v7991 = vld [vmem:[#allocation14 + $0xba8] sm:$0xff]
    %v7992 = vld [vmem:[#allocation14 + $0xbb0] sm:$0xf]
    %v7993 = vld [vmem:[#allocation14 + $0xbb4] sm:$0xff]
    %v7994 = vld [vmem:[#allocation14 + $0xbbc] sm:$0xff]
    %v7995 = vld [vmem:[#allocation14 + $0xbc4] sm:$0xff]
    %v7996 = vld [vmem:[#allocation14 + $0xbcc] sm:$0xf]
    %v7997 = vld [vmem:[#allocation14 + $0xbd0] sm:$0xff]
    %v7998 = vld [vmem:[#allocation14 + $0xbd8] sm:$0xff]
    %v7999 = vld [vmem:[#allocation14 + $0xbe0] sm:$0xff]
    %v8000 = vld [vmem:[#allocation14 + $0xbe8] sm:$0xf]
    %v8001 = vld [vmem:[#allocation14 + $0xbec] sm:$0xff]
    %v8002 = vld [vmem:[#allocation14 + $0xbf4] sm:$0xff]
    %v8003 = vld [vmem:[#allocation14 + $0xbfc] sm:$0xff]
    %v8004 = vld [vmem:[#allocation14 + $0xc04] sm:$0xf]
    %v8005 = vld [vmem:[#allocation14 + $0xc08] sm:$0xff]
    %v8006 = vld [vmem:[#allocation14 + $0xc10] sm:$0xff]
    %v8007 = vld [vmem:[#allocation14 + $0xc18] sm:$0xff]
    %v8008 = vld [vmem:[#allocation14 + $0xc20] sm:$0xf]
    %v8009 = vld [vmem:[#allocation14 + $0xc24] sm:$0xff]
    %v8010 = vld [vmem:[#allocation14 + $0xc2c] sm:$0xff]
    %v8011 = vld [vmem:[#allocation14 + $0xc34] sm:$0xff]
    %v8012 = vld [vmem:[#allocation14 + $0xc3c] sm:$0xf]
    %v8013 = vld [vmem:[#allocation14 + $0xc40] sm:$0xff]
    %v8014 = vld [vmem:[#allocation14 + $0xc48] sm:$0xff]
    %v8015 = vld [vmem:[#allocation14 + $0xc50] sm:$0xff]
    %v8016 = vld [vmem:[#allocation14 + $0xc58] sm:$0xf]
    %v8017 = vld [vmem:[#allocation14 + $0xc5c] sm:$0xff]
    %v8018 = vld [vmem:[#allocation14 + $0xc64] sm:$0xff]
    %v8019 = vld [vmem:[#allocation14 + $0xc6c] sm:$0xff]
    %v8020 = vld [vmem:[#allocation14 + $0xc74] sm:$0xf]
    %v8021 = vld [vmem:[#allocation14 + $0xc78] sm:$0xff]
    %v8022 = vld [vmem:[#allocation14 + $0xc80] sm:$0xff]
    %v8023 = vld [vmem:[#allocation14 + $0xc88] sm:$0xff]
    %v8024 = vld [vmem:[#allocation14 + $0xc90] sm:$0xf]
    %v8025 = vld [vmem:[#allocation14 + $0xc94] sm:$0xff]
    %v8026 = vld [vmem:[#allocation14 + $0xc9c] sm:$0xff]
    %v8027 = vld [vmem:[#allocation14 + $0xca4] sm:$0xff]
    %v8028 = vld [vmem:[#allocation14 + $0xcac] sm:$0xf]
    %v8029 = vld [vmem:[#allocation14 + $0xcb0] sm:$0xff]
    %v8030 = vld [vmem:[#allocation14 + $0xcb8] sm:$0xff]
    %v8031 = vld [vmem:[#allocation14 + $0xcc0] sm:$0xff]
    %v8032 = vld [vmem:[#allocation14 + $0xcc8] sm:$0xf]
    %v8033 = vld [vmem:[#allocation14 + $0xccc] sm:$0xff]
    %v8034 = vld [vmem:[#allocation14 + $0xcd4] sm:$0xff]
    %v8035 = vld [vmem:[#allocation14 + $0xcdc] sm:$0xff]
    %v8036 = vld [vmem:[#allocation14 + $0xce4] sm:$0xf]
    %v8037 = vld [vmem:[#allocation14 + $0xce8] sm:$0xff]
    %v8038 = vld [vmem:[#allocation14 + $0xcf0] sm:$0xff]
    %v8039 = vld [vmem:[#allocation14 + $0xcf8] sm:$0xff]
    %v8040 = vld [vmem:[#allocation14 + $0xd00] sm:$0xf]
    %v8041 = vld [vmem:[#allocation14 + $0xd04] sm:$0xff]
    %v8042 = vld [vmem:[#allocation14 + $0xd0c] sm:$0xff]
    %v8043 = vld [vmem:[#allocation14 + $0xd14] sm:$0xff]
    %v8044 = vld [vmem:[#allocation14 + $0xd1c] sm:$0xf]
    %v8045 = vld [vmem:[#allocation14 + $0xd20] sm:$0xff]
    %v8046 = vld [vmem:[#allocation14 + $0xd28] sm:$0xff]
    %v8047 = vld [vmem:[#allocation14 + $0xd30] sm:$0xff]
    %v8048 = vld [vmem:[#allocation14 + $0xd38] sm:$0xf]
    %v8049 = vld [vmem:[#allocation14 + $0xd3c] sm:$0xff]
    %v8050 = vld [vmem:[#allocation14 + $0xd44] sm:$0xff]
    %v8051 = vld [vmem:[#allocation14 + $0xd4c] sm:$0xff]
    %v8052 = vld [vmem:[#allocation14 + $0xd54] sm:$0xf]
    %v8053 = vld [vmem:[#allocation14 + $0xd58] sm:$0xff]
    %v8054 = vld [vmem:[#allocation14 + $0xd60] sm:$0xff]
    %v8055 = vld [vmem:[#allocation14 + $0xd68] sm:$0xff]
    %v8056 = vld [vmem:[#allocation14 + $0xd70] sm:$0xf]
    %v8057 = vld [vmem:[#allocation14 + $0xd74] sm:$0xff]
    %v8058 = vld [vmem:[#allocation14 + $0xd7c] sm:$0xff]
    %v8059 = vld [vmem:[#allocation14 + $0xd84] sm:$0xff]
    %v8060 = vld [vmem:[#allocation14 + $0xd8c] sm:$0xf]
    %v8061 = vld [vmem:[#allocation14 + $0xd90] sm:$0xff]
    %v8062 = vld [vmem:[#allocation14 + $0xd98] sm:$0xff]
    %v8063 = vld [vmem:[#allocation14 + $0xda0] sm:$0xff]
    %v8064 = vld [vmem:[#allocation14 + $0xda8] sm:$0xf]
    %v8065 = vld [vmem:[#allocation14 + $0xdac] sm:$0xff]
    %v8066 = vld [vmem:[#allocation14 + $0xdb4] sm:$0xff]
    %v8067 = vld [vmem:[#allocation14 + $0xdbc] sm:$0xff]
    %v8068 = vld [vmem:[#allocation14 + $0xdc4] sm:$0xf]
    %v8069 = vld [vmem:[#allocation14 + $0xdc8] sm:$0xff]
    %v8070 = vld [vmem:[#allocation14 + $0xdd0] sm:$0xff]
    %v8071 = vld [vmem:[#allocation14 + $0xdd8] sm:$0xff]
    %v8072 = vld [vmem:[#allocation14 + $0xde0] sm:$0xf]
    %v8073 = vld [vmem:[#allocation14 + $0xde4] sm:$0xff]
    %v8074 = vld [vmem:[#allocation14 + $0xdec] sm:$0xff]
    %v8075 = vld [vmem:[#allocation14 + $0xdf4] sm:$0xff]
    %v8076 = vld [vmem:[#allocation14 + $0xdfc] sm:$0xf]
    %v8077 = vld [vmem:[#allocation14 + $0xe00] sm:$0xff]
    %v8078 = vld [vmem:[#allocation14 + $0xe08] sm:$0xff]
    %v8079 = vld [vmem:[#allocation14 + $0xe10] sm:$0xff]
    %v8080 = vld [vmem:[#allocation14 + $0xe18] sm:$0xf]
    %v8081 = vld [vmem:[#allocation14 + $0xe1c] sm:$0xff]
    %v8082 = vld [vmem:[#allocation14 + $0xe24] sm:$0xff]
    %v8083 = vld [vmem:[#allocation14 + $0xe2c] sm:$0xff]
    %v8084 = vld [vmem:[#allocation14 + $0xe34] sm:$0xf]
    %v8085 = vld [vmem:[#allocation14 + $0xe38] sm:$0xff]
    %v8086 = vld [vmem:[#allocation14 + $0xe40] sm:$0xff]
    %v8087 = vld [vmem:[#allocation14 + $0xe48] sm:$0xff]
    %v8088 = vld [vmem:[#allocation14 + $0xe50] sm:$0xf]
    %v8089 = vld [vmem:[#allocation14 + $0xe54] sm:$0xff]
    %v8090 = vld [vmem:[#allocation14 + $0xe5c] sm:$0xff]
    %v8091 = vld [vmem:[#allocation14 + $0xe64] sm:$0xff]
    %v8092 = vld [vmem:[#allocation14 + $0xe6c] sm:$0xf]
    %v8093 = vld [vmem:[#allocation14 + $0xe70] sm:$0xff]
    %v8094 = vld [vmem:[#allocation14 + $0xe78] sm:$0xff]
    %v8095 = vld [vmem:[#allocation14 + $0xe80] sm:$0xff]
    %v8096 = vld [vmem:[#allocation14 + $0xe88] sm:$0xf]
    %v8097 = vld [vmem:[#allocation14 + $0xe8c] sm:$0xff]
    %v8098 = vld [vmem:[#allocation14 + $0xe94] sm:$0xff]
    %v8099 = vld [vmem:[#allocation14 + $0xe9c] sm:$0xff]
    %v8100 = vld [vmem:[#allocation14 + $0xea4] sm:$0xf]
    %v8101 = vld [vmem:[#allocation14 + $0xea8] sm:$0xff]
    %v8102 = vld [vmem:[#allocation14 + $0xeb0] sm:$0xff]
    %v8103 = vld [vmem:[#allocation14 + $0xeb8] sm:$0xff]
    %v8104 = vld [vmem:[#allocation14 + $0xec0] sm:$0xf]
    %v8105 = vld [vmem:[#allocation14 + $0xec4] sm:$0xff]
    %v8106 = vld [vmem:[#allocation14 + $0xecc] sm:$0xff]
    %v8107 = vld [vmem:[#allocation14 + $0xed4] sm:$0xff]
    %v8108 = vld [vmem:[#allocation14 + $0xedc] sm:$0xf]
    %v8109 = vld [vmem:[#allocation14 + $0xee0] sm:$0xff]
    %v8110 = vld [vmem:[#allocation14 + $0xee8] sm:$0xff]
    %v8111 = vld [vmem:[#allocation14 + $0xef0] sm:$0xff]
    %v8112 = vld [vmem:[#allocation14 + $0xef8] sm:$0xf]
    %v8113 = vld [vmem:[#allocation14 + $0xefc] sm:$0xff]
    %v8114 = vld [vmem:[#allocation14 + $0xf04] sm:$0xff]
    %v8115 = vld [vmem:[#allocation14 + $0xf0c] sm:$0xff]
    %v8116 = vld [vmem:[#allocation14 + $0xf14] sm:$0xf]
    %v8117 = vld [vmem:[#allocation14 + $0xf18] sm:$0xff]
    %v8118 = vld [vmem:[#allocation14 + $0xf20] sm:$0xff]
    %v8119 = vld [vmem:[#allocation14 + $0xf28] sm:$0xff]
    %v8120 = vld [vmem:[#allocation14 + $0xf30] sm:$0xf]
    %v8121 = vld [vmem:[#allocation14 + $0xf34] sm:$0xff]
    %v8122 = vld [vmem:[#allocation14 + $0xf3c] sm:$0xff]
    %v8123 = vld [vmem:[#allocation14 + $0xf44] sm:$0xff]
    %v8124 = vld [vmem:[#allocation14 + $0xf4c] sm:$0xf]
    %v8125 = vld [vmem:[#allocation14 + $0xf50] sm:$0xff]
    %v8126 = vld [vmem:[#allocation14 + $0xf58] sm:$0xff]
    %v8127 = vld [vmem:[#allocation14 + $0xf60] sm:$0xff]
    %v8128 = vld [vmem:[#allocation14 + $0xf68] sm:$0xf]
    %v8129 = vld [vmem:[#allocation14 + $0xf6c] sm:$0xff]
    %v8130 = vld [vmem:[#allocation14 + $0xf74] sm:$0xff]
    %v8131 = vld [vmem:[#allocation14 + $0xf7c] sm:$0xff]
    %v8132 = vld [vmem:[#allocation14 + $0xf84] sm:$0xf]
    %v8133 = vld [vmem:[#allocation14 + $0xf88] sm:$0xff]
    %v8134 = vld [vmem:[#allocation14 + $0xf90] sm:$0xff]
    %v8135 = vld [vmem:[#allocation14 + $0xf98] sm:$0xff]
    %v8136 = vld [vmem:[#allocation14 + $0xfa0] sm:$0xf]
    %v8137 = vld [vmem:[#allocation14 + $0xfa4] sm:$0xff]
    %v8138 = vld [vmem:[#allocation14 + $0xfac] sm:$0xff]
    %v8139 = vld [vmem:[#allocation14 + $0xfb4] sm:$0xff]
    %v8140 = vld [vmem:[#allocation14 + $0xfbc] sm:$0xf]
    %v8141 = vld [vmem:[#allocation14 + $0xfc0] sm:$0xff]
    %v8142 = vld [vmem:[#allocation14 + $0xfc8] sm:$0xff]
    %v8143 = vld [vmem:[#allocation14 + $0xfd0] sm:$0xff]
    %v8144 = vld [vmem:[#allocation14 + $0xfd8] sm:$0xf]
    %v8145 = vld [vmem:[#allocation14 + $0xfdc] sm:$0xff]
    %v8146 = vld [vmem:[#allocation14 + $0xfe4] sm:$0xff]
    %v8147 = vld [vmem:[#allocation14 + $0xfec] sm:$0xff]
    %v8148 = vld [vmem:[#allocation14 + $0xff4] sm:$0xf]
    %v8149 = vld [vmem:[#allocation14 + $0xff8] sm:$0xff]
    %v8150 = vld [vmem:[#allocation14 + $0x1000] sm:$0xff]
    %v8151 = vld [vmem:[#allocation14 + $0x1008] sm:$0xff]
    %v8152 = vld [vmem:[#allocation14 + $0x1010] sm:$0xf]
    %v8153 = vld [vmem:[#allocation14 + $0x1014] sm:$0xff]
    %v8154 = vld [vmem:[#allocation14 + $0x101c] sm:$0xff]
    %v8155 = vld [vmem:[#allocation14 + $0x1024] sm:$0xff]
    %v8156 = vld [vmem:[#allocation14 + $0x102c] sm:$0xf]
    %v8157 = vld [vmem:[#allocation14 + $0x1030] sm:$0xff]
    %v8158 = vld [vmem:[#allocation14 + $0x1038] sm:$0xff]
    %v8159 = vld [vmem:[#allocation14 + $0x1040] sm:$0xff]
    %v8160 = vld [vmem:[#allocation14 + $0x1048] sm:$0xf]
    %v8161 = vld [vmem:[#allocation14 + $0x104c] sm:$0xff]
    %v8162 = vld [vmem:[#allocation14 + $0x1054] sm:$0xff]
    %v8163 = vld [vmem:[#allocation14 + $0x105c] sm:$0xff]
    %v8164 = vld [vmem:[#allocation14 + $0x1064] sm:$0xf]
    %v8165 = vld [vmem:[#allocation14 + $0x1068] sm:$0xff]
    %v8166 = vld [vmem:[#allocation14 + $0x1070] sm:$0xff]
    %v8167 = vld [vmem:[#allocation14 + $0x1078] sm:$0xff]
    %v8168 = vld [vmem:[#allocation14 + $0x1080] sm:$0xf]
    %v8169 = vld [vmem:[#allocation14 + $0x1084] sm:$0xff]
    %v8170 = vld [vmem:[#allocation14 + $0x108c] sm:$0xff]
    %v8171 = vld [vmem:[#allocation14 + $0x1094] sm:$0xff]
    %v8172 = vld [vmem:[#allocation14 + $0x109c] sm:$0xf]
    %v8173 = vld [vmem:[#allocation14 + $0x10a0] sm:$0xff]
    %v8174 = vld [vmem:[#allocation14 + $0x10a8] sm:$0xff]
    %v8175 = vld [vmem:[#allocation14 + $0x10b0] sm:$0xff]
    %v8176 = vld [vmem:[#allocation14 + $0x10b8] sm:$0xf]
    %v8177 = vld [vmem:[#allocation14 + $0x10bc] sm:$0xff]
    %v8178 = vld [vmem:[#allocation14 + $0x10c4] sm:$0xff]
    %v8179 = vld [vmem:[#allocation14 + $0x10cc] sm:$0xff]
    %v8180 = vld [vmem:[#allocation14 + $0x10d4] sm:$0xf]
    %v8181 = vld [vmem:[#allocation14 + $0x10d8] sm:$0xff]
    %v8182 = vld [vmem:[#allocation14 + $0x10e0] sm:$0xff]
    %v8183 = vld [vmem:[#allocation14 + $0x10e8] sm:$0xff]
    %v8184 = vld [vmem:[#allocation14 + $0x10f0] sm:$0xf]
    %v8185 = vld [vmem:[#allocation14 + $0x10f4] sm:$0xff]
    %v8186 = vld [vmem:[#allocation14 + $0x10fc] sm:$0xff]
    %v8187 = vld [vmem:[#allocation14 + $0x1104] sm:$0xff]
    %v8188 = vld [vmem:[#allocation14 + $0x110c] sm:$0xf]
    %v8189 = vld [vmem:[#allocation14 + $0x1110] sm:$0xff]
    %v8190 = vld [vmem:[#allocation14 + $0x1118] sm:$0xff]
    %v8191 = vld [vmem:[#allocation14 + $0x1120] sm:$0xff]
    %v8192 = vld [vmem:[#allocation14 + $0x1128] sm:$0xf]
    %v8193 = vld [vmem:[#allocation14 + $0x112c] sm:$0xff]
    %v8194 = vld [vmem:[#allocation14 + $0x1134] sm:$0xff]
    %v8195 = vld [vmem:[#allocation14 + $0x113c] sm:$0xff]
    %v8196 = vld [vmem:[#allocation14 + $0x1144] sm:$0xf]
    %v8197 = vld [vmem:[#allocation14 + $0x1148] sm:$0xff]
    %v8198 = vld [vmem:[#allocation14 + $0x1150] sm:$0xff]
    %v8199 = vld [vmem:[#allocation14 + $0x1158] sm:$0xff]
    %v8200 = vld [vmem:[#allocation14 + $0x1160] sm:$0xf]
    %v8201 = vld [vmem:[#allocation14 + $0x1164] sm:$0xff]
    %v8202 = vld [vmem:[#allocation14 + $0x116c] sm:$0xff]
    %v8203 = vld [vmem:[#allocation14 + $0x1174] sm:$0xff]
    %v8204 = vld [vmem:[#allocation14 + $0x117c] sm:$0xf]
    %v8205 = vld [vmem:[#allocation14 + $0x1180] sm:$0xff]
    %v8206 = vld [vmem:[#allocation14 + $0x1188] sm:$0xff]
    %v8207 = vld [vmem:[#allocation14 + $0x1190] sm:$0xff]
    %v8208 = vld [vmem:[#allocation14 + $0x1198] sm:$0xf]
    %v8209 = vld [vmem:[#allocation14 + $0x119c] sm:$0xff]
    %v8210 = vld [vmem:[#allocation14 + $0x11a4] sm:$0xff]
    %v8211 = vld [vmem:[#allocation14 + $0x11ac] sm:$0xff]
    %v8212 = vld [vmem:[#allocation14 + $0x11b4] sm:$0xf]
    %v8213 = vld [vmem:[#allocation14 + $0x11b8] sm:$0xff]
    %v8214 = vld [vmem:[#allocation14 + $0x11c0] sm:$0xff]
    %v8215 = vld [vmem:[#allocation14 + $0x11c8] sm:$0xff]
    %v8216 = vld [vmem:[#allocation14 + $0x11d0] sm:$0xf]
    %v8217 = vld [vmem:[#allocation14 + $0x11d4] sm:$0xff]
    %v8218 = vld [vmem:[#allocation14 + $0x11dc] sm:$0xff]
    %v8219 = vld [vmem:[#allocation14 + $0x11e4] sm:$0xff]
    %v8220 = vld [vmem:[#allocation14 + $0x11ec] sm:$0xf]
    %v8221 = vld [vmem:[#allocation14 + $0x11f0] sm:$0xff]
    %v8222 = vld [vmem:[#allocation14 + $0x11f8] sm:$0xff]
    %v8223 = vld [vmem:[#allocation14 + $0x1200] sm:$0xff]
    %v8224 = vld [vmem:[#allocation14 + $0x1208] sm:$0xf]
    %v8225 = vld [vmem:[#allocation14 + $0x120c] sm:$0xff]
    %v8226 = vld [vmem:[#allocation14 + $0x1214] sm:$0xff]
    %v8227 = vld [vmem:[#allocation14 + $0x121c] sm:$0xff]
    %v8228 = vld [vmem:[#allocation14 + $0x1224] sm:$0xf]
    %v8229 = vld [vmem:[#allocation14 + $0x1228] sm:$0xff]
    %v8230 = vld [vmem:[#allocation14 + $0x1230] sm:$0xff]
    %v8231 = vld [vmem:[#allocation14 + $0x1238] sm:$0xff]
    %v8232 = vld [vmem:[#allocation14 + $0x1240] sm:$0xf]
    %v8233 = vld [vmem:[#allocation14 + $0x1244] sm:$0xff]
    %v8234 = vld [vmem:[#allocation14 + $0x124c] sm:$0xff]
    %v8235 = vld [vmem:[#allocation14 + $0x1254] sm:$0xff]
    %v8236 = vld [vmem:[#allocation14 + $0x125c] sm:$0xf]
    %v8237 = vld [vmem:[#allocation14 + $0x1260] sm:$0xff]
    %v8238 = vld [vmem:[#allocation14 + $0x1268] sm:$0xff]
    %v8239 = vld [vmem:[#allocation14 + $0x1270] sm:$0xff]
    %v8240 = vld [vmem:[#allocation14 + $0x1278] sm:$0xf]
    %v8241 = vld [vmem:[#allocation14 + $0x127c] sm:$0xff]
    %v8242 = vld [vmem:[#allocation14 + $0x1284] sm:$0xff]
    %v8243 = vld [vmem:[#allocation14 + $0x128c] sm:$0xff]
    %v8244 = vld [vmem:[#allocation14 + $0x1294] sm:$0xf]
    %v8245 = vld [vmem:[#allocation14 + $0x1298] sm:$0xff]
    %v8246 = vld [vmem:[#allocation14 + $0x12a0] sm:$0xff]
    %v8247 = vld [vmem:[#allocation14 + $0x12a8] sm:$0xff]
    %v8248 = vld [vmem:[#allocation14 + $0x12b0] sm:$0xf]
    %v8249 = vld [vmem:[#allocation14 + $0x12b4] sm:$0xff]
    %v8250 = vld [vmem:[#allocation14 + $0x12bc] sm:$0xff]
    %v8251 = vld [vmem:[#allocation14 + $0x12c4] sm:$0xff]
    %v8252 = vld [vmem:[#allocation14 + $0x12cc] sm:$0xf]
    %v8253 = vld [vmem:[#allocation14 + $0x12d0] sm:$0xff]
    %v8254 = vld [vmem:[#allocation14 + $0x12d8] sm:$0xff]
    %v8255 = vld [vmem:[#allocation14 + $0x12e0] sm:$0xff]
    %v8256 = vld [vmem:[#allocation14 + $0x12e8] sm:$0xf]
    %v8257 = vld [vmem:[#allocation14 + $0x12ec] sm:$0xff]
    %v8258 = vld [vmem:[#allocation14 + $0x12f4] sm:$0xff]
    %v8259 = vld [vmem:[#allocation14 + $0x12fc] sm:$0xff]
    %v8260 = vld [vmem:[#allocation14 + $0x1304] sm:$0xf]
    %v8261 = vld [vmem:[#allocation14 + $0x1308] sm:$0xff]
    %v8262 = vld [vmem:[#allocation14 + $0x1310] sm:$0xff]
    %v8263 = vld [vmem:[#allocation14 + $0x1318] sm:$0xff]
    %v8264 = vld [vmem:[#allocation14 + $0x1320] sm:$0xf]
    %v8265 = vld [vmem:[#allocation14 + $0x1324] sm:$0xff]
    %v8266 = vld [vmem:[#allocation14 + $0x132c] sm:$0xff]
    %v8267 = vld [vmem:[#allocation14 + $0x1334] sm:$0xff]
    %v8268 = vld [vmem:[#allocation14 + $0x133c] sm:$0xf]
    %v8269 = vld [vmem:[#allocation14 + $0x1340] sm:$0xff]
    %v8270 = vld [vmem:[#allocation14 + $0x1348] sm:$0xff]
    %v8271 = vld [vmem:[#allocation14 + $0x1350] sm:$0xff]
    %v8272 = vld [vmem:[#allocation14 + $0x1358] sm:$0xf]
    %v8273 = vld [vmem:[#allocation14 + $0x135c] sm:$0xff]
    %v8274 = vld [vmem:[#allocation14 + $0x1364] sm:$0xff]
    %v8275 = vld [vmem:[#allocation14 + $0x136c] sm:$0xff]
    %v8276 = vld [vmem:[#allocation14 + $0x1374] sm:$0xf]
    %v8277 = vld [vmem:[#allocation14 + $0x1378] sm:$0xff]
    %v8278 = vld [vmem:[#allocation14 + $0x1380] sm:$0xff]
    %v8279 = vld [vmem:[#allocation14 + $0x1388] sm:$0xff]
    %v8280 = vld [vmem:[#allocation14 + $0x1390] sm:$0xf]
    %v8281 = vld [vmem:[#allocation14 + $0x1394] sm:$0xff]
    %v8282 = vld [vmem:[#allocation14 + $0x139c] sm:$0xff]
    %v8283 = vld [vmem:[#allocation14 + $0x13a4] sm:$0xff]
    %v8284 = vld [vmem:[#allocation14 + $0x13ac] sm:$0xf]
    %v8285 = vld [vmem:[#allocation14 + $0x13b0] sm:$0xff]
    %v8286 = vld [vmem:[#allocation14 + $0x13b8] sm:$0xff]
    %v8287 = vld [vmem:[#allocation14 + $0x13c0] sm:$0xff]
    %v8288 = vld [vmem:[#allocation14 + $0x13c8] sm:$0xf]
    %v8289 = vld [vmem:[#allocation14 + $0x13cc] sm:$0xff]
    %v8290 = vld [vmem:[#allocation14 + $0x13d4] sm:$0xff]
    %v8291 = vld [vmem:[#allocation14 + $0x13dc] sm:$0xff]
    %v8292 = vld [vmem:[#allocation14 + $0x13e4] sm:$0xf]
    %v8293 = vld [vmem:[#allocation14 + $0x13e8] sm:$0xff]
    %v8294 = vld [vmem:[#allocation14 + $0x13f0] sm:$0xff]
    %v8295 = vld [vmem:[#allocation14 + $0x13f8] sm:$0xff]
    %v8296 = vld [vmem:[#allocation14 + $0x1400] sm:$0xf]
    %v8297 = vld [vmem:[#allocation14 + $0x1404] sm:$0xff]
    %v8298 = vld [vmem:[#allocation14 + $0x140c] sm:$0xff]
    %v8299 = vld [vmem:[#allocation14 + $0x1414] sm:$0xff]
    %v8300 = vld [vmem:[#allocation14 + $0x141c] sm:$0xf]
    %v8301 = vld [vmem:[#allocation14 + $0x1420] sm:$0xff]
    %v8302 = vld [vmem:[#allocation14 + $0x1428] sm:$0xff]
    %v8303 = vld [vmem:[#allocation14 + $0x1430] sm:$0xff]
    %v8304 = vld [vmem:[#allocation14 + $0x1438] sm:$0xf]
    %v8305 = vld [vmem:[#allocation14 + $0x143c] sm:$0xff]
    %v8306 = vld [vmem:[#allocation14 + $0x1444] sm:$0xff]
    %v8307 = vld [vmem:[#allocation14 + $0x144c] sm:$0xff]
    %v8308 = vld [vmem:[#allocation14 + $0x1454] sm:$0xf]
    %v8309 = vld [vmem:[#allocation14 + $0x1458] sm:$0xff]
    %v8310 = vld [vmem:[#allocation14 + $0x1460] sm:$0xff]
    %v8311 = vld [vmem:[#allocation14 + $0x1468] sm:$0xff]
    %v8312 = vld [vmem:[#allocation14 + $0x1470] sm:$0xf]
    %v8313 = vld [vmem:[#allocation14 + $0x1474] sm:$0xff]
    %v8314 = vld [vmem:[#allocation14 + $0x147c] sm:$0xff]
    %v8315 = vld [vmem:[#allocation14 + $0x1484] sm:$0xff]
    %v8316 = vld [vmem:[#allocation14 + $0x148c] sm:$0xf]
    %v8317 = vld [vmem:[#allocation14 + $0x1490] sm:$0xff]
    %v8318 = vld [vmem:[#allocation14 + $0x1498] sm:$0xff]
    %v8319 = vld [vmem:[#allocation14 + $0x14a0] sm:$0xff]
    %v8320 = vld [vmem:[#allocation14 + $0x14a8] sm:$0xf]
    %v8321 = vld [vmem:[#allocation14 + $0x14ac] sm:$0xff]
    %v8322 = vld [vmem:[#allocation14 + $0x14b4] sm:$0xff]
    %v8323 = vld [vmem:[#allocation14 + $0x14bc] sm:$0xff]
    %v8324 = vld [vmem:[#allocation14 + $0x14c4] sm:$0xf]
    %v8325 = vld [vmem:[#allocation14 + $0x14c8] sm:$0xff]
    %v8326 = vld [vmem:[#allocation14 + $0x14d0] sm:$0xff]
    %v8327 = vld [vmem:[#allocation14 + $0x14d8] sm:$0xff]
    %v8328 = vld [vmem:[#allocation14 + $0x14e0] sm:$0xf]
    %v8329 = vld [vmem:[#allocation14 + $0x14e4] sm:$0xff]
    %v8330 = vld [vmem:[#allocation14 + $0x14ec] sm:$0xff]
    %v8331 = vld [vmem:[#allocation14 + $0x14f4] sm:$0xff]
    %v8332 = vld [vmem:[#allocation14 + $0x14fc] sm:$0xf]
    %v8333 = vld [vmem:[#allocation14 + $0x1500] sm:$0xff]
    %v8334 = vld [vmem:[#allocation14 + $0x1508] sm:$0xff]
    %v8335 = vld [vmem:[#allocation14 + $0x1510] sm:$0xff]
    %v8336 = vld [vmem:[#allocation14 + $0x1518] sm:$0xf]
    %v8337 = vld [vmem:[#allocation14 + $0x151c] sm:$0xff]
    %v8338 = vld [vmem:[#allocation14 + $0x1524] sm:$0xff]
    %v8339 = vld [vmem:[#allocation14 + $0x152c] sm:$0xff]
    %v8340 = vld [vmem:[#allocation14 + $0x1534] sm:$0xf]
    %v8341 = vld [vmem:[#allocation14 + $0x1538] sm:$0xff]
    %v8342 = vld [vmem:[#allocation14 + $0x1540] sm:$0xff]
    %v8343 = vld [vmem:[#allocation14 + $0x1548] sm:$0xff]
    %v8344 = vld [vmem:[#allocation14 + $0x1550] sm:$0xf]
    %v8345 = vld [vmem:[#allocation14 + $0x1554] sm:$0xff]
    %v8346 = vld [vmem:[#allocation14 + $0x155c] sm:$0xff]
    %v8347 = vld [vmem:[#allocation14 + $0x1564] sm:$0xff]
    %v8348 = vld [vmem:[#allocation14 + $0x156c] sm:$0xf]
    %v8349 = vld [vmem:[#allocation14 + $0x1570] sm:$0xff]
    %v8350 = vld [vmem:[#allocation14 + $0x1578] sm:$0xff]
    %v8351 = vld [vmem:[#allocation14 + $0x1580] sm:$0xff]
    %v8352 = vld [vmem:[#allocation14 + $0x1588] sm:$0xf]
    %v8353 = vld [vmem:[#allocation14 + $0x158c] sm:$0xff]
    %v8354 = vld [vmem:[#allocation14 + $0x1594] sm:$0xff]
    %v8355 = vld [vmem:[#allocation14 + $0x159c] sm:$0xff]
    %v8356 = vld [vmem:[#allocation14 + $0x15a4] sm:$0xf]
    %v8357 = vld [vmem:[#allocation14 + $0x15a8] sm:$0xff]
    %v8358 = vld [vmem:[#allocation14 + $0x15b0] sm:$0xff]
    %v8359 = vld [vmem:[#allocation14 + $0x15b8] sm:$0xff]
    %v8360 = vld [vmem:[#allocation14 + $0x15c0] sm:$0xf]
    %v8361 = vld [vmem:[#allocation14 + $0x15c4] sm:$0xff]
    %v8362 = vld [vmem:[#allocation14 + $0x15cc] sm:$0xff]
    %v8363 = vld [vmem:[#allocation14 + $0x15d4] sm:$0xff]
    %v8364 = vld [vmem:[#allocation14 + $0x15dc] sm:$0xf]
    %v8365 = vld [vmem:[#allocation14 + $0x15e0] sm:$0xff]
    %v8366 = vld [vmem:[#allocation14 + $0x15e8] sm:$0xff]
    %v8367 = vld [vmem:[#allocation14 + $0x15f0] sm:$0xff]
    %v8368 = vld [vmem:[#allocation14 + $0x15f8] sm:$0xf]
    %v8369 = vld [vmem:[#allocation14 + $0x15fc] sm:$0xff]
    %v8370 = vld [vmem:[#allocation14 + $0x1604] sm:$0xff]
    %v8371 = vld [vmem:[#allocation14 + $0x160c] sm:$0xff]
    %v8372 = vld [vmem:[#allocation14 + $0x1614] sm:$0xf]
    %v8373 = vld [vmem:[#allocation14 + $0x1618] sm:$0xff]
    %v8374 = vld [vmem:[#allocation14 + $0x1620] sm:$0xff]
    %v8375 = vld [vmem:[#allocation14 + $0x1628] sm:$0xff]
    %v8376 = vld [vmem:[#allocation14 + $0x1630] sm:$0xf]
    %v8377 = vld [vmem:[#allocation14 + $0x1634] sm:$0xff]
    %v8378 = vld [vmem:[#allocation14 + $0x163c] sm:$0xff]
    %v8379 = vld [vmem:[#allocation14 + $0x1644] sm:$0xff]
    %v8380 = vld [vmem:[#allocation14 + $0x164c] sm:$0xf]
    %v8381 = vld [vmem:[#allocation14 + $0x1650] sm:$0xff]
    %v8382 = vld [vmem:[#allocation14 + $0x1658] sm:$0xff]
    %v8383 = vld [vmem:[#allocation14 + $0x1660] sm:$0xff]
    %v8384 = vld [vmem:[#allocation14 + $0x1668] sm:$0xf]
    %v8385 = vld [vmem:[#allocation14 + $0x166c] sm:$0xff]
    %v8386 = vld [vmem:[#allocation14 + $0x1674] sm:$0xff]
    %v8387 = vld [vmem:[#allocation14 + $0x167c] sm:$0xff]
    %v8388 = vld [vmem:[#allocation14 + $0x1684] sm:$0xf]
    %v8389 = vld [vmem:[#allocation14 + $0x1688] sm:$0xff]
    %v8390 = vld [vmem:[#allocation14 + $0x1690] sm:$0xff]
    %v8391 = vld [vmem:[#allocation14 + $0x1698] sm:$0xff]
    %v8392 = vld [vmem:[#allocation14 + $0x16a0] sm:$0xf]
    %v8393 = vld [vmem:[#allocation14 + $0x16a4] sm:$0xff]
    %v8394 = vld [vmem:[#allocation14 + $0x16ac] sm:$0xff]
    %v8395 = vld [vmem:[#allocation14 + $0x16b4] sm:$0xff]
    %v8396 = vld [vmem:[#allocation14 + $0x16bc] sm:$0xf]
    %v8397 = vld [vmem:[#allocation16] sm:$0xff]
    %v8399 = vlaneseq
    %v8400 = vshrl.u32 %v8399, 7
    %v8401 = vsub.s32 0, %v8400
    %v8402 = vrot.slane %v8397, %v8401
    %v8403 = vlaneseq
    %v8404 = vshrl.u32 %v8403, 7
    %v8405 = vsub.s32 1, %v8404
    %v8406 = vrot.slane %v8397, %v8405
    %v8407 = vlaneseq
    %v8408 = vshrl.u32 %v8407, 7
    %v8409 = vsub.s32 2, %v8408
    %v8410 = vrot.slane %v8397, %v8409
    %v8411 = vlaneseq
    %v8412 = vshrl.u32 %v8411, 7
    %v8413 = vsub.s32 3, %v8412
    %v8414 = vrot.slane %v8397, %v8413
    %v8415 = vlaneseq
    %v8416 = vshrl.u32 %v8415, 7
    %v8417 = vsub.s32 4, %v8416
    %v8418 = vrot.slane %v8397, %v8417
    %v8419 = vlaneseq
    %v8420 = vshrl.u32 %v8419, 7
    %v8421 = vsub.s32 5, %v8420
    %v8422 = vrot.slane %v8397, %v8421
    %v8423 = vlaneseq
    %v8424 = vshrl.u32 %v8423, 7
    %v8425 = vsub.s32 6, %v8424
    %v8426 = vrot.slane %v8397, %v8425
    %v9266 = vunpack.c.l.b16 %v7565
    %v9267 = vunpack.c.h.b16 %v7565
    %v9268 = vunpack.c.l.b16 %v7566
    %v9269 = vunpack.c.h.b16 %v7566
    %v9270 = vunpack.c.l.b16 %v7567
    %v9271 = vunpack.c.h.b16 %v7567
    %v9272 = vunpack.c.l.b16 %v7568
    %v9273 = vunpack.c.l.b16 %v7569
    %v9274 = vunpack.c.h.b16 %v7569
    %v9275 = vunpack.c.l.b16 %v7570
    %v9276 = vunpack.c.h.b16 %v7570
    %v9277 = vunpack.c.l.b16 %v7571
    %v9278 = vunpack.c.h.b16 %v7571
    %v9279 = vunpack.c.l.b16 %v7572
    %v9280 = vunpack.c.l.b16 %v7573
    %v9281 = vunpack.c.h.b16 %v7573
    %v9282 = vunpack.c.l.b16 %v7574
    %v9283 = vunpack.c.h.b16 %v7574
    %v9284 = vunpack.c.l.b16 %v7575
    %v9285 = vunpack.c.h.b16 %v7575
    %v9286 = vunpack.c.l.b16 %v7576
    %v9287 = vunpack.c.l.b16 %v7577
    %v9288 = vunpack.c.h.b16 %v7577
    %v9289 = vunpack.c.l.b16 %v7578
    %v9290 = vunpack.c.h.b16 %v7578
    %v9291 = vunpack.c.l.b16 %v7579
    %v9292 = vunpack.c.h.b16 %v7579
    %v9293 = vunpack.c.l.b16 %v7580
    %v9294 = vunpack.c.l.b16 %v7581
    %v9295 = vunpack.c.h.b16 %v7581
    %v9296 = vunpack.c.l.b16 %v7582
    %v9297 = vunpack.c.h.b16 %v7582
    %v9298 = vunpack.c.l.b16 %v7583
    %v9299 = vunpack.c.h.b16 %v7583
    %v9300 = vunpack.c.l.b16 %v7584
    %v9301 = vunpack.c.l.b16 %v7585
    %v9302 = vunpack.c.h.b16 %v7585
    %v9303 = vunpack.c.l.b16 %v7586
    %v9304 = vunpack.c.h.b16 %v7586
    %v9305 = vunpack.c.l.b16 %v7587
    %v9306 = vunpack.c.h.b16 %v7587
    %v9307 = vunpack.c.l.b16 %v7588
    %v9308 = vunpack.c.l.b16 %v7589
    %v9309 = vunpack.c.h.b16 %v7589
    %v9310 = vunpack.c.l.b16 %v7590
    %v9311 = vunpack.c.h.b16 %v7590
    %v9312 = vunpack.c.l.b16 %v7591
    %v9313 = vunpack.c.h.b16 %v7591
    %v9314 = vunpack.c.l.b16 %v7592
    %v9315 = vunpack.c.l.b16 %v7593
    %v9316 = vunpack.c.h.b16 %v7593
    %v9317 = vunpack.c.l.b16 %v7594
    %v9318 = vunpack.c.h.b16 %v7594
    %v9319 = vunpack.c.l.b16 %v7595
    %v9320 = vunpack.c.h.b16 %v7595
    %v9321 = vunpack.c.l.b16 %v7596
    %v9322 = vunpack.c.l.b16 %v7597
    %v9323 = vunpack.c.h.b16 %v7597
    %v9324 = vunpack.c.l.b16 %v7598
    %v9325 = vunpack.c.h.b16 %v7598
    %v9326 = vunpack.c.l.b16 %v7599
    %v9327 = vunpack.c.h.b16 %v7599
    %v9328 = vunpack.c.l.b16 %v7600
    %v9329 = vunpack.c.l.b16 %v7601
    %v9330 = vunpack.c.h.b16 %v7601
    %v9331 = vunpack.c.l.b16 %v7602
    %v9332 = vunpack.c.h.b16 %v7602
    %v9333 = vunpack.c.l.b16 %v7603
    %v9334 = vunpack.c.h.b16 %v7603
    %v9335 = vunpack.c.l.b16 %v7604
    %v9336 = vunpack.c.l.b16 %v7605
    %v9337 = vunpack.c.h.b16 %v7605
    %v9338 = vunpack.c.l.b16 %v7606
    %v9339 = vunpack.c.h.b16 %v7606
    %v9340 = vunpack.c.l.b16 %v7607
    %v9341 = vunpack.c.h.b16 %v7607
    %v9342 = vunpack.c.l.b16 %v7608
    %v9343 = vunpack.c.l.b16 %v7609
    %v9344 = vunpack.c.h.b16 %v7609
    %v9345 = vunpack.c.l.b16 %v7610
    %v9346 = vunpack.c.h.b16 %v7610
    %v9347 = vunpack.c.l.b16 %v7611
    %v9348 = vunpack.c.h.b16 %v7611
    %v9349 = vunpack.c.l.b16 %v7612
    %v9350 = vunpack.c.l.b16 %v7613
    %v9351 = vunpack.c.h.b16 %v7613
    %v9352 = vunpack.c.l.b16 %v7614
    %v9353 = vunpack.c.h.b16 %v7614
    %v9354 = vunpack.c.l.b16 %v7615
    %v9355 = vunpack.c.h.b16 %v7615
    %v9356 = vunpack.c.l.b16 %v7616
    %v9357 = vunpack.c.l.b16 %v7617
    %v9358 = vunpack.c.h.b16 %v7617
    %v9359 = vunpack.c.l.b16 %v7618
    %v9360 = vunpack.c.h.b16 %v7618
    %v9361 = vunpack.c.l.b16 %v7619
    %v9362 = vunpack.c.h.b16 %v7619
    %v9363 = vunpack.c.l.b16 %v7620
    %v9364 = vunpack.c.l.b16 %v7621
    %v9365 = vunpack.c.h.b16 %v7621
    %v9366 = vunpack.c.l.b16 %v7622
    %v9367 = vunpack.c.h.b16 %v7622
    %v9368 = vunpack.c.l.b16 %v7623
    %v9369 = vunpack.c.h.b16 %v7623
    %v9370 = vunpack.c.l.b16 %v7624
    %v9371 = vunpack.c.l.b16 %v7625
    %v9372 = vunpack.c.h.b16 %v7625
    %v9373 = vunpack.c.l.b16 %v7626
    %v9374 = vunpack.c.h.b16 %v7626
    %v9375 = vunpack.c.l.b16 %v7627
    %v9376 = vunpack.c.h.b16 %v7627
    %v9377 = vunpack.c.l.b16 %v7628
    %v9378 = vunpack.c.l.b16 %v7629
    %v9379 = vunpack.c.h.b16 %v7629
    %v9380 = vunpack.c.l.b16 %v7630
    %v9381 = vunpack.c.h.b16 %v7630
    %v9382 = vunpack.c.l.b16 %v7631
    %v9383 = vunpack.c.h.b16 %v7631
    %v9384 = vunpack.c.l.b16 %v7632
    %v9385 = vunpack.c.l.b16 %v7633
    %v9386 = vunpack.c.h.b16 %v7633
    %v9387 = vunpack.c.l.b16 %v7634
    %v9388 = vunpack.c.h.b16 %v7634
    %v9389 = vunpack.c.l.b16 %v7635
    %v9390 = vunpack.c.h.b16 %v7635
    %v9391 = vunpack.c.l.b16 %v7636
    %v9392 = vunpack.c.l.b16 %v7637
    %v9393 = vunpack.c.h.b16 %v7637
    %v9394 = vunpack.c.l.b16 %v7638
    %v9395 = vunpack.c.h.b16 %v7638
    %v9396 = vunpack.c.l.b16 %v7639
    %v9397 = vunpack.c.h.b16 %v7639
    %v9398 = vunpack.c.l.b16 %v7640
    %v9399 = vunpack.c.l.b16 %v7641
    %v9400 = vunpack.c.h.b16 %v7641
    %v9401 = vunpack.c.l.b16 %v7642
    %v9402 = vunpack.c.h.b16 %v7642
    %v9403 = vunpack.c.l.b16 %v7643
    %v9404 = vunpack.c.h.b16 %v7643
    %v9405 = vunpack.c.l.b16 %v7644
    %v9406 = vunpack.c.l.b16 %v7645
    %v9407 = vunpack.c.h.b16 %v7645
    %v9408 = vunpack.c.l.b16 %v7646
    %v9409 = vunpack.c.h.b16 %v7646
    %v9410 = vunpack.c.l.b16 %v7647
    %v9411 = vunpack.c.h.b16 %v7647
    %v9412 = vunpack.c.l.b16 %v7648
    %v9413 = vunpack.c.l.b16 %v7649
    %v9414 = vunpack.c.h.b16 %v7649
    %v9415 = vunpack.c.l.b16 %v7650
    %v9416 = vunpack.c.h.b16 %v7650
    %v9417 = vunpack.c.l.b16 %v7651
    %v9418 = vunpack.c.h.b16 %v7651
    %v9419 = vunpack.c.l.b16 %v7652
    %v9420 = vunpack.c.l.b16 %v7653
    %v9421 = vunpack.c.h.b16 %v7653
    %v9422 = vunpack.c.l.b16 %v7654
    %v9423 = vunpack.c.h.b16 %v7654
    %v9424 = vunpack.c.l.b16 %v7655
    %v9425 = vunpack.c.h.b16 %v7655
    %v9426 = vunpack.c.l.b16 %v7656
    %v9427 = vunpack.c.l.b16 %v7657
    %v9428 = vunpack.c.h.b16 %v7657
    %v9429 = vunpack.c.l.b16 %v7658
    %v9430 = vunpack.c.h.b16 %v7658
    %v9431 = vunpack.c.l.b16 %v7659
    %v9432 = vunpack.c.h.b16 %v7659
    %v9433 = vunpack.c.l.b16 %v7660
    %v9434 = vunpack.c.l.b16 %v7661
    %v9435 = vunpack.c.h.b16 %v7661
    %v9436 = vunpack.c.l.b16 %v7662
    %v9437 = vunpack.c.h.b16 %v7662
    %v9438 = vunpack.c.l.b16 %v7663
    %v9439 = vunpack.c.h.b16 %v7663
    %v9440 = vunpack.c.l.b16 %v7664
    %v9441 = vunpack.c.l.b16 %v7665
    %v9442 = vunpack.c.h.b16 %v7665
    %v9443 = vunpack.c.l.b16 %v7666
    %v9444 = vunpack.c.h.b16 %v7666
    %v9445 = vunpack.c.l.b16 %v7667
    %v9446 = vunpack.c.h.b16 %v7667
    %v9447 = vunpack.c.l.b16 %v7668
    %v9448 = vunpack.c.l.b16 %v7669
    %v9449 = vunpack.c.h.b16 %v7669
    %v9450 = vunpack.c.l.b16 %v7670
    %v9451 = vunpack.c.h.b16 %v7670
    %v9452 = vunpack.c.l.b16 %v7671
    %v9453 = vunpack.c.h.b16 %v7671
    %v9454 = vunpack.c.l.b16 %v7672
    %v9455 = vunpack.c.l.b16 %v7673
    %v9456 = vunpack.c.h.b16 %v7673
    %v9457 = vunpack.c.l.b16 %v7674
    %v9458 = vunpack.c.h.b16 %v7674
    %v9459 = vunpack.c.l.b16 %v7675
    %v9460 = vunpack.c.h.b16 %v7675
    %v9461 = vunpack.c.l.b16 %v7676
    %v9462 = vunpack.c.l.b16 %v7677
    %v9463 = vunpack.c.h.b16 %v7677
    %v9464 = vunpack.c.l.b16 %v7678
    %v9465 = vunpack.c.h.b16 %v7678
    %v9466 = vunpack.c.l.b16 %v7679
    %v9467 = vunpack.c.h.b16 %v7679
    %v9468 = vunpack.c.l.b16 %v7680
    %v9469 = vunpack.c.l.b16 %v7681
    %v9470 = vunpack.c.h.b16 %v7681
    %v9471 = vunpack.c.l.b16 %v7682
    %v9472 = vunpack.c.h.b16 %v7682
    %v9473 = vunpack.c.l.b16 %v7683
    %v9474 = vunpack.c.h.b16 %v7683
    %v9475 = vunpack.c.l.b16 %v7684
    %v9476 = vunpack.c.l.b16 %v7685
    %v9477 = vunpack.c.h.b16 %v7685
    %v9478 = vunpack.c.l.b16 %v7686
    %v9479 = vunpack.c.h.b16 %v7686
    %v9480 = vunpack.c.l.b16 %v7687
    %v9481 = vunpack.c.h.b16 %v7687
    %v9482 = vunpack.c.l.b16 %v7688
    %v9483 = vunpack.c.l.b16 %v7689
    %v9484 = vunpack.c.h.b16 %v7689
    %v9485 = vunpack.c.l.b16 %v7690
    %v9486 = vunpack.c.h.b16 %v7690
    %v9487 = vunpack.c.l.b16 %v7691
    %v9488 = vunpack.c.h.b16 %v7691
    %v9489 = vunpack.c.l.b16 %v7692
    %v9490 = vunpack.c.l.b16 %v7693
    %v9491 = vunpack.c.h.b16 %v7693
    %v9492 = vunpack.c.l.b16 %v7694
    %v9493 = vunpack.c.h.b16 %v7694
    %v9494 = vunpack.c.l.b16 %v7695
    %v9495 = vunpack.c.h.b16 %v7695
    %v9496 = vunpack.c.l.b16 %v7696
    %v9497 = vunpack.c.l.b16 %v7697
    %v9498 = vunpack.c.h.b16 %v7697
    %v9499 = vunpack.c.l.b16 %v7698
    %v9500 = vunpack.c.h.b16 %v7698
    %v9501 = vunpack.c.l.b16 %v7699
    %v9502 = vunpack.c.h.b16 %v7699
    %v9503 = vunpack.c.l.b16 %v7700
    %v9504 = vunpack.c.l.b16 %v7701
    %v9505 = vunpack.c.h.b16 %v7701
    %v9506 = vunpack.c.l.b16 %v7702
    %v9507 = vunpack.c.h.b16 %v7702
    %v9508 = vunpack.c.l.b16 %v7703
    %v9509 = vunpack.c.h.b16 %v7703
    %v9510 = vunpack.c.l.b16 %v7704
    %v9511 = vunpack.c.l.b16 %v7705
    %v9512 = vunpack.c.h.b16 %v7705
    %v9513 = vunpack.c.l.b16 %v7706
    %v9514 = vunpack.c.h.b16 %v7706
    %v9515 = vunpack.c.l.b16 %v7707
    %v9516 = vunpack.c.h.b16 %v7707
    %v9517 = vunpack.c.l.b16 %v7708
    %v9518 = vunpack.c.l.b16 %v7709
    %v9519 = vunpack.c.h.b16 %v7709
    %v9520 = vunpack.c.l.b16 %v7710
    %v9521 = vunpack.c.h.b16 %v7710
    %v9522 = vunpack.c.l.b16 %v7711
    %v9523 = vunpack.c.h.b16 %v7711
    %v9524 = vunpack.c.l.b16 %v7712
    %v9525 = vunpack.c.l.b16 %v7713
    %v9526 = vunpack.c.h.b16 %v7713
    %v9527 = vunpack.c.l.b16 %v7714
    %v9528 = vunpack.c.h.b16 %v7714
    %v9529 = vunpack.c.l.b16 %v7715
    %v9530 = vunpack.c.h.b16 %v7715
    %v9531 = vunpack.c.l.b16 %v7716
    %v9532 = vunpack.c.l.b16 %v7717
    %v9533 = vunpack.c.h.b16 %v7717
    %v9534 = vunpack.c.l.b16 %v7718
    %v9535 = vunpack.c.h.b16 %v7718
    %v9536 = vunpack.c.l.b16 %v7719
    %v9537 = vunpack.c.h.b16 %v7719
    %v9538 = vunpack.c.l.b16 %v7720
    %v9539 = vunpack.c.l.b16 %v7721
    %v9540 = vunpack.c.h.b16 %v7721
    %v9541 = vunpack.c.l.b16 %v7722
    %v9542 = vunpack.c.h.b16 %v7722
    %v9543 = vunpack.c.l.b16 %v7723
    %v9544 = vunpack.c.h.b16 %v7723
    %v9545 = vunpack.c.l.b16 %v7724
    %v9546 = vunpack.c.l.b16 %v7725
    %v9547 = vunpack.c.h.b16 %v7725
    %v9548 = vunpack.c.l.b16 %v7726
    %v9549 = vunpack.c.h.b16 %v7726
    %v9550 = vunpack.c.l.b16 %v7727
    %v9551 = vunpack.c.h.b16 %v7727
    %v9552 = vunpack.c.l.b16 %v7728
    %v9553 = vunpack.c.l.b16 %v7729
    %v9554 = vunpack.c.h.b16 %v7729
    %v9555 = vunpack.c.l.b16 %v7730
    %v9556 = vunpack.c.h.b16 %v7730
    %v9557 = vunpack.c.l.b16 %v7731
    %v9558 = vunpack.c.h.b16 %v7731
    %v9559 = vunpack.c.l.b16 %v7732
    %v9560 = vunpack.c.l.b16 %v7733
    %v9561 = vunpack.c.h.b16 %v7733
    %v9562 = vunpack.c.l.b16 %v7734
    %v9563 = vunpack.c.h.b16 %v7734
    %v9564 = vunpack.c.l.b16 %v7735
    %v9565 = vunpack.c.h.b16 %v7735
    %v9566 = vunpack.c.l.b16 %v7736
    %v9567 = vunpack.c.l.b16 %v7737
    %v9568 = vunpack.c.h.b16 %v7737
    %v9569 = vunpack.c.l.b16 %v7738
    %v9570 = vunpack.c.h.b16 %v7738
    %v9571 = vunpack.c.l.b16 %v7739
    %v9572 = vunpack.c.h.b16 %v7739
    %v9573 = vunpack.c.l.b16 %v7740
    %v9574 = vunpack.c.l.b16 %v7741
    %v9575 = vunpack.c.h.b16 %v7741
    %v9576 = vunpack.c.l.b16 %v7742
    %v9577 = vunpack.c.h.b16 %v7742
    %v9578 = vunpack.c.l.b16 %v7743
    %v9579 = vunpack.c.h.b16 %v7743
    %v9580 = vunpack.c.l.b16 %v7744
    %v9581 = vunpack.c.l.b16 %v7745
    %v9582 = vunpack.c.h.b16 %v7745
    %v9583 = vunpack.c.l.b16 %v7746
    %v9584 = vunpack.c.h.b16 %v7746
    %v9585 = vunpack.c.l.b16 %v7747
    %v9586 = vunpack.c.h.b16 %v7747
    %v9587 = vunpack.c.l.b16 %v7748
    %v9588 = vunpack.c.l.b16 %v7749
    %v9589 = vunpack.c.h.b16 %v7749
    %v9590 = vunpack.c.l.b16 %v7750
    %v9591 = vunpack.c.h.b16 %v7750
    %v9592 = vunpack.c.l.b16 %v7751
    %v9593 = vunpack.c.h.b16 %v7751
    %v9594 = vunpack.c.l.b16 %v7752
    %v9595 = vunpack.c.l.b16 %v7753
    %v9596 = vunpack.c.h.b16 %v7753
    %v9597 = vunpack.c.l.b16 %v7754
    %v9598 = vunpack.c.h.b16 %v7754
    %v9599 = vunpack.c.l.b16 %v7755
    %v9600 = vunpack.c.h.b16 %v7755
    %v9601 = vunpack.c.l.b16 %v7756
    %v9602 = vunpack.c.l.b16 %v7757
    %v9603 = vunpack.c.h.b16 %v7757
    %v9604 = vunpack.c.l.b16 %v7758
    %v9605 = vunpack.c.h.b16 %v7758
    %v9606 = vunpack.c.l.b16 %v7759
    %v9607 = vunpack.c.h.b16 %v7759
    %v9608 = vunpack.c.l.b16 %v7760
    %v9609 = vunpack.c.l.b16 %v7761
    %v9610 = vunpack.c.h.b16 %v7761
    %v9611 = vunpack.c.l.b16 %v7762
    %v9612 = vunpack.c.h.b16 %v7762
    %v9613 = vunpack.c.l.b16 %v7763
    %v9614 = vunpack.c.h.b16 %v7763
    %v9615 = vunpack.c.l.b16 %v7764
    %v9616 = vunpack.c.l.b16 %v7765
    %v9617 = vunpack.c.h.b16 %v7765
    %v9618 = vunpack.c.l.b16 %v7766
    %v9619 = vunpack.c.h.b16 %v7766
    %v9620 = vunpack.c.l.b16 %v7767
    %v9621 = vunpack.c.h.b16 %v7767
    %v9622 = vunpack.c.l.b16 %v7768
    %v9623 = vunpack.c.l.b16 %v7769
    %v9624 = vunpack.c.h.b16 %v7769
    %v9625 = vunpack.c.l.b16 %v7770
    %v9626 = vunpack.c.h.b16 %v7770
    %v9627 = vunpack.c.l.b16 %v7771
    %v9628 = vunpack.c.h.b16 %v7771
    %v9629 = vunpack.c.l.b16 %v7772
    %v9630 = vunpack.c.l.b16 %v7773
    %v9631 = vunpack.c.h.b16 %v7773
    %v9632 = vunpack.c.l.b16 %v7774
    %v9633 = vunpack.c.h.b16 %v7774
    %v9634 = vunpack.c.l.b16 %v7775
    %v9635 = vunpack.c.h.b16 %v7775
    %v9636 = vunpack.c.l.b16 %v7776
    %v9637 = vunpack.c.l.b16 %v7777
    %v9638 = vunpack.c.h.b16 %v7777
    %v9639 = vunpack.c.l.b16 %v7778
    %v9640 = vunpack.c.h.b16 %v7778
    %v9641 = vunpack.c.l.b16 %v7779
    %v9642 = vunpack.c.h.b16 %v7779
    %v9643 = vunpack.c.l.b16 %v7780
    %v9644 = vunpack.c.l.b16 %v7781
    %v9645 = vunpack.c.h.b16 %v7781
    %v9646 = vunpack.c.l.b16 %v7782
    %v9647 = vunpack.c.h.b16 %v7782
    %v9648 = vunpack.c.l.b16 %v7783
    %v9649 = vunpack.c.h.b16 %v7783
    %v9650 = vunpack.c.l.b16 %v7784
    %v9651 = vunpack.c.l.b16 %v7785
    %v9652 = vunpack.c.h.b16 %v7785
    %v9653 = vunpack.c.l.b16 %v7786
    %v9654 = vunpack.c.h.b16 %v7786
    %v9655 = vunpack.c.l.b16 %v7787
    %v9656 = vunpack.c.h.b16 %v7787
    %v9657 = vunpack.c.l.b16 %v7788
    %v9658 = vunpack.c.l.b16 %v7789
    %v9659 = vunpack.c.h.b16 %v7789
    %v9660 = vunpack.c.l.b16 %v7790
    %v9661 = vunpack.c.h.b16 %v7790
    %v9662 = vunpack.c.l.b16 %v7791
    %v9663 = vunpack.c.h.b16 %v7791
    %v9664 = vunpack.c.l.b16 %v7792
    %v9665 = vunpack.c.l.b16 %v7793
    %v9666 = vunpack.c.h.b16 %v7793
    %v9667 = vunpack.c.l.b16 %v7794
    %v9668 = vunpack.c.h.b16 %v7794
    %v9669 = vunpack.c.l.b16 %v7795
    %v9670 = vunpack.c.h.b16 %v7795
    %v9671 = vunpack.c.l.b16 %v7796
    %v9672 = vunpack.c.l.b16 %v7797
    %v9673 = vunpack.c.h.b16 %v7797
    %v9674 = vunpack.c.l.b16 %v7798
    %v9675 = vunpack.c.h.b16 %v7798
    %v9676 = vunpack.c.l.b16 %v7799
    %v9677 = vunpack.c.h.b16 %v7799
    %v9678 = vunpack.c.l.b16 %v7800
    %v9679 = vunpack.c.l.b16 %v7801
    %v9680 = vunpack.c.h.b16 %v7801
    %v9681 = vunpack.c.l.b16 %v7802
    %v9682 = vunpack.c.h.b16 %v7802
    %v9683 = vunpack.c.l.b16 %v7803
    %v9684 = vunpack.c.h.b16 %v7803
    %v9685 = vunpack.c.l.b16 %v7804
    %v9686 = vunpack.c.l.b16 %v7805
    %v9687 = vunpack.c.h.b16 %v7805
    %v9688 = vunpack.c.l.b16 %v7806
    %v9689 = vunpack.c.h.b16 %v7806
    %v9690 = vunpack.c.l.b16 %v7807
    %v9691 = vunpack.c.h.b16 %v7807
    %v9692 = vunpack.c.l.b16 %v7808
    %v9693 = vunpack.c.l.b16 %v7809
    %v9694 = vunpack.c.h.b16 %v7809
    %v9695 = vunpack.c.l.b16 %v7810
    %v9696 = vunpack.c.h.b16 %v7810
    %v9697 = vunpack.c.l.b16 %v7811
    %v9698 = vunpack.c.h.b16 %v7811
    %v9699 = vunpack.c.l.b16 %v7812
    %v9700 = vunpack.c.l.b16 %v7813
    %v9701 = vunpack.c.h.b16 %v7813
    %v9702 = vunpack.c.l.b16 %v7814
    %v9703 = vunpack.c.h.b16 %v7814
    %v9704 = vunpack.c.l.b16 %v7815
    %v9705 = vunpack.c.h.b16 %v7815
    %v9706 = vunpack.c.l.b16 %v7816
    %v9707 = vunpack.c.l.b16 %v7817
    %v9708 = vunpack.c.h.b16 %v7817
    %v9709 = vunpack.c.l.b16 %v7818
    %v9710 = vunpack.c.h.b16 %v7818
    %v9711 = vunpack.c.l.b16 %v7819
    %v9712 = vunpack.c.h.b16 %v7819
    %v9713 = vunpack.c.l.b16 %v7820
    %v9714 = vunpack.c.l.b16 %v7821
    %v9715 = vunpack.c.h.b16 %v7821
    %v9716 = vunpack.c.l.b16 %v7822
    %v9717 = vunpack.c.h.b16 %v7822
    %v9718 = vunpack.c.l.b16 %v7823
    %v9719 = vunpack.c.h.b16 %v7823
    %v9720 = vunpack.c.l.b16 %v7824
    %v9721 = vunpack.c.l.b16 %v7825
    %v9722 = vunpack.c.h.b16 %v7825
    %v9723 = vunpack.c.l.b16 %v7826
    %v9724 = vunpack.c.h.b16 %v7826
    %v9725 = vunpack.c.l.b16 %v7827
    %v9726 = vunpack.c.h.b16 %v7827
    %v9727 = vunpack.c.l.b16 %v7828
    %v9728 = vunpack.c.l.b16 %v7829
    %v9729 = vunpack.c.h.b16 %v7829
    %v9730 = vunpack.c.l.b16 %v7830
    %v9731 = vunpack.c.h.b16 %v7830
    %v9732 = vunpack.c.l.b16 %v7831
    %v9733 = vunpack.c.h.b16 %v7831
    %v9734 = vunpack.c.l.b16 %v7832
    %v9735 = vunpack.c.l.b16 %v7833
    %v9736 = vunpack.c.h.b16 %v7833
    %v9737 = vunpack.c.l.b16 %v7834
    %v9738 = vunpack.c.h.b16 %v7834
    %v9739 = vunpack.c.l.b16 %v7835
    %v9740 = vunpack.c.h.b16 %v7835
    %v9741 = vunpack.c.l.b16 %v7836
    %v9742 = vunpack.c.l.b16 %v7837
    %v9743 = vunpack.c.h.b16 %v7837
    %v9744 = vunpack.c.l.b16 %v7838
    %v9745 = vunpack.c.h.b16 %v7838
    %v9746 = vunpack.c.l.b16 %v7839
    %v9747 = vunpack.c.h.b16 %v7839
    %v9748 = vunpack.c.l.b16 %v7840
    %v9749 = vunpack.c.l.b16 %v7841
    %v9750 = vunpack.c.h.b16 %v7841
    %v9751 = vunpack.c.l.b16 %v7842
    %v9752 = vunpack.c.h.b16 %v7842
    %v9753 = vunpack.c.l.b16 %v7843
    %v9754 = vunpack.c.h.b16 %v7843
    %v9755 = vunpack.c.l.b16 %v7844
    %v9756 = vunpack.c.l.b16 %v7845
    %v9757 = vunpack.c.h.b16 %v7845
    %v9758 = vunpack.c.l.b16 %v7846
    %v9759 = vunpack.c.h.b16 %v7846
    %v9760 = vunpack.c.l.b16 %v7847
    %v9761 = vunpack.c.h.b16 %v7847
    %v9762 = vunpack.c.l.b16 %v7848
    %v9763 = vunpack.c.l.b16 %v7849
    %v9764 = vunpack.c.h.b16 %v7849
    %v9765 = vunpack.c.l.b16 %v7850
    %v9766 = vunpack.c.h.b16 %v7850
    %v9767 = vunpack.c.l.b16 %v7851
    %v9768 = vunpack.c.h.b16 %v7851
    %v9769 = vunpack.c.l.b16 %v7852
    %v9770 = vunpack.c.l.b16 %v7853
    %v9771 = vunpack.c.h.b16 %v7853
    %v9772 = vunpack.c.l.b16 %v7854
    %v9773 = vunpack.c.h.b16 %v7854
    %v9774 = vunpack.c.l.b16 %v7855
    %v9775 = vunpack.c.h.b16 %v7855
    %v9776 = vunpack.c.l.b16 %v7856
    %v9777 = vunpack.c.l.b16 %v7857
    %v9778 = vunpack.c.h.b16 %v7857
    %v9779 = vunpack.c.l.b16 %v7858
    %v9780 = vunpack.c.h.b16 %v7858
    %v9781 = vunpack.c.l.b16 %v7859
    %v9782 = vunpack.c.h.b16 %v7859
    %v9783 = vunpack.c.l.b16 %v7860
    %v9784 = vunpack.c.l.b16 %v7861
    %v9785 = vunpack.c.h.b16 %v7861
    %v9786 = vunpack.c.l.b16 %v7862
    %v9787 = vunpack.c.h.b16 %v7862
    %v9788 = vunpack.c.l.b16 %v7863
    %v9789 = vunpack.c.h.b16 %v7863
    %v9790 = vunpack.c.l.b16 %v7864
    %v9791 = vunpack.c.l.b16 %v7865
    %v9792 = vunpack.c.h.b16 %v7865
    %v9793 = vunpack.c.l.b16 %v7866
    %v9794 = vunpack.c.h.b16 %v7866
    %v9795 = vunpack.c.l.b16 %v7867
    %v9796 = vunpack.c.h.b16 %v7867
    %v9797 = vunpack.c.l.b16 %v7868
    %v9798 = vunpack.c.l.b16 %v7869
    %v9799 = vunpack.c.h.b16 %v7869
    %v9800 = vunpack.c.l.b16 %v7870
    %v9801 = vunpack.c.h.b16 %v7870
    %v9802 = vunpack.c.l.b16 %v7871
    %v9803 = vunpack.c.h.b16 %v7871
    %v9804 = vunpack.c.l.b16 %v7872
    %v9805 = vunpack.c.l.b16 %v7873
    %v9806 = vunpack.c.h.b16 %v7873
    %v9807 = vunpack.c.l.b16 %v7874
    %v9808 = vunpack.c.h.b16 %v7874
    %v9809 = vunpack.c.l.b16 %v7875
    %v9810 = vunpack.c.h.b16 %v7875
    %v9811 = vunpack.c.l.b16 %v7876
    %v9812 = vunpack.c.l.b16 %v7877
    %v9813 = vunpack.c.h.b16 %v7877
    %v9814 = vunpack.c.l.b16 %v7878
    %v9815 = vunpack.c.h.b16 %v7878
    %v9816 = vunpack.c.l.b16 %v7879
    %v9817 = vunpack.c.h.b16 %v7879
    %v9818 = vunpack.c.l.b16 %v7880
    %v9819 = vunpack.c.l.b16 %v7881
    %v9820 = vunpack.c.h.b16 %v7881
    %v9821 = vunpack.c.l.b16 %v7882
    %v9822 = vunpack.c.h.b16 %v7882
    %v9823 = vunpack.c.l.b16 %v7883
    %v9824 = vunpack.c.h.b16 %v7883
    %v9825 = vunpack.c.l.b16 %v7884
    %v9826 = vunpack.c.l.b16 %v7885
    %v9827 = vunpack.c.h.b16 %v7885
    %v9828 = vunpack.c.l.b16 %v7886
    %v9829 = vunpack.c.h.b16 %v7886
    %v9830 = vunpack.c.l.b16 %v7887
    %v9831 = vunpack.c.h.b16 %v7887
    %v9832 = vunpack.c.l.b16 %v7888
    %v9833 = vunpack.c.l.b16 %v7889
    %v9834 = vunpack.c.h.b16 %v7889
    %v9835 = vunpack.c.l.b16 %v7890
    %v9836 = vunpack.c.h.b16 %v7890
    %v9837 = vunpack.c.l.b16 %v7891
    %v9838 = vunpack.c.h.b16 %v7891
    %v9839 = vunpack.c.l.b16 %v7892
    %v9840 = vunpack.c.l.b16 %v7893
    %v9841 = vunpack.c.h.b16 %v7893
    %v9842 = vunpack.c.l.b16 %v7894
    %v9843 = vunpack.c.h.b16 %v7894
    %v9844 = vunpack.c.l.b16 %v7895
    %v9845 = vunpack.c.h.b16 %v7895
    %v9846 = vunpack.c.l.b16 %v7896
    %v9847 = vunpack.c.l.b16 %v7897
    %v9848 = vunpack.c.h.b16 %v7897
    %v9849 = vunpack.c.l.b16 %v7898
    %v9850 = vunpack.c.h.b16 %v7898
    %v9851 = vunpack.c.l.b16 %v7899
    %v9852 = vunpack.c.h.b16 %v7899
    %v9853 = vunpack.c.l.b16 %v7900
    %v9854 = vunpack.c.l.b16 %v7901
    %v9855 = vunpack.c.h.b16 %v7901
    %v9856 = vunpack.c.l.b16 %v7902
    %v9857 = vunpack.c.h.b16 %v7902
    %v9858 = vunpack.c.l.b16 %v7903
    %v9859 = vunpack.c.h.b16 %v7903
    %v9860 = vunpack.c.l.b16 %v7904
    %v9861 = vunpack.c.l.b16 %v7905
    %v9862 = vunpack.c.h.b16 %v7905
    %v9863 = vunpack.c.l.b16 %v7906
    %v9864 = vunpack.c.h.b16 %v7906
    %v9865 = vunpack.c.l.b16 %v7907
    %v9866 = vunpack.c.h.b16 %v7907
    %v9867 = vunpack.c.l.b16 %v7908
    %v9868 = vunpack.c.l.b16 %v7909
    %v9869 = vunpack.c.h.b16 %v7909
    %v9870 = vunpack.c.l.b16 %v7910
    %v9871 = vunpack.c.h.b16 %v7910
    %v9872 = vunpack.c.l.b16 %v7911
    %v9873 = vunpack.c.h.b16 %v7911
    %v9874 = vunpack.c.l.b16 %v7912
    %v9875 = vunpack.c.l.b16 %v7913
    %v9876 = vunpack.c.h.b16 %v7913
    %v9877 = vunpack.c.l.b16 %v7914
    %v9878 = vunpack.c.h.b16 %v7914
    %v9879 = vunpack.c.l.b16 %v7915
    %v9880 = vunpack.c.h.b16 %v7915
    %v9881 = vunpack.c.l.b16 %v7916
    %v9882 = vunpack.c.l.b16 %v7917
    %v9883 = vunpack.c.h.b16 %v7917
    %v9884 = vunpack.c.l.b16 %v7918
    %v9885 = vunpack.c.h.b16 %v7918
    %v9886 = vunpack.c.l.b16 %v7919
    %v9887 = vunpack.c.h.b16 %v7919
    %v9888 = vunpack.c.l.b16 %v7920
    %v9889 = vunpack.c.l.b16 %v7921
    %v9890 = vunpack.c.h.b16 %v7921
    %v9891 = vunpack.c.l.b16 %v7922
    %v9892 = vunpack.c.h.b16 %v7922
    %v9893 = vunpack.c.l.b16 %v7923
    %v9894 = vunpack.c.h.b16 %v7923
    %v9895 = vunpack.c.l.b16 %v7924
    %v9896 = vunpack.c.l.b16 %v7925
    %v9897 = vunpack.c.h.b16 %v7925
    %v9898 = vunpack.c.l.b16 %v7926
    %v9899 = vunpack.c.h.b16 %v7926
    %v9900 = vunpack.c.l.b16 %v7927
    %v9901 = vunpack.c.h.b16 %v7927
    %v9902 = vunpack.c.l.b16 %v7928
    %v9903 = vunpack.c.l.b16 %v7929
    %v9904 = vunpack.c.h.b16 %v7929
    %v9905 = vunpack.c.l.b16 %v7930
    %v9906 = vunpack.c.h.b16 %v7930
    %v9907 = vunpack.c.l.b16 %v7931
    %v9908 = vunpack.c.h.b16 %v7931
    %v9909 = vunpack.c.l.b16 %v7932
    %v9910 = vunpack.c.l.b16 %v7933
    %v9911 = vunpack.c.h.b16 %v7933
    %v9912 = vunpack.c.l.b16 %v7934
    %v9913 = vunpack.c.h.b16 %v7934
    %v9914 = vunpack.c.l.b16 %v7935
    %v9915 = vunpack.c.h.b16 %v7935
    %v9916 = vunpack.c.l.b16 %v7936
    %v9917 = vunpack.c.l.b16 %v7937
    %v9918 = vunpack.c.h.b16 %v7937
    %v9919 = vunpack.c.l.b16 %v7938
    %v9920 = vunpack.c.h.b16 %v7938
    %v9921 = vunpack.c.l.b16 %v7939
    %v9922 = vunpack.c.h.b16 %v7939
    %v9923 = vunpack.c.l.b16 %v7940
    %v9924 = vunpack.c.l.b16 %v7941
    %v9925 = vunpack.c.h.b16 %v7941
    %v9926 = vunpack.c.l.b16 %v7942
    %v9927 = vunpack.c.h.b16 %v7942
    %v9928 = vunpack.c.l.b16 %v7943
    %v9929 = vunpack.c.h.b16 %v7943
    %v9930 = vunpack.c.l.b16 %v7944
    %v9931 = vunpack.c.l.b16 %v7945
    %v9932 = vunpack.c.h.b16 %v7945
    %v9933 = vunpack.c.l.b16 %v7946
    %v9934 = vunpack.c.h.b16 %v7946
    %v9935 = vunpack.c.l.b16 %v7947
    %v9936 = vunpack.c.h.b16 %v7947
    %v9937 = vunpack.c.l.b16 %v7948
    %v9938 = vunpack.c.l.b16 %v7949
    %v9939 = vunpack.c.h.b16 %v7949
    %v9940 = vunpack.c.l.b16 %v7950
    %v9941 = vunpack.c.h.b16 %v7950
    %v9942 = vunpack.c.l.b16 %v7951
    %v9943 = vunpack.c.h.b16 %v7951
    %v9944 = vunpack.c.l.b16 %v7952
    %v9945 = vunpack.c.l.b16 %v7953
    %v9946 = vunpack.c.h.b16 %v7953
    %v9947 = vunpack.c.l.b16 %v7954
    %v9948 = vunpack.c.h.b16 %v7954
    %v9949 = vunpack.c.l.b16 %v7955
    %v9950 = vunpack.c.h.b16 %v7955
    %v9951 = vunpack.c.l.b16 %v7956
    %v9952 = vunpack.c.l.b16 %v7957
    %v9953 = vunpack.c.h.b16 %v7957
    %v9954 = vunpack.c.l.b16 %v7958
    %v9955 = vunpack.c.h.b16 %v7958
    %v9956 = vunpack.c.l.b16 %v7959
    %v9957 = vunpack.c.h.b16 %v7959
    %v9958 = vunpack.c.l.b16 %v7960
    %v9959 = vunpack.c.l.b16 %v7961
    %v9960 = vunpack.c.h.b16 %v7961
    %v9961 = vunpack.c.l.b16 %v7962
    %v9962 = vunpack.c.h.b16 %v7962
    %v9963 = vunpack.c.l.b16 %v7963
    %v9964 = vunpack.c.h.b16 %v7963
    %v9965 = vunpack.c.l.b16 %v7964
    %v9966 = vunpack.c.l.b16 %v7965
    %v9967 = vunpack.c.h.b16 %v7965
    %v9968 = vunpack.c.l.b16 %v7966
    %v9969 = vunpack.c.h.b16 %v7966
    %v9970 = vunpack.c.l.b16 %v7967
    %v9971 = vunpack.c.h.b16 %v7967
    %v9972 = vunpack.c.l.b16 %v7968
    %v9973 = vunpack.c.l.b16 %v7969
    %v9974 = vunpack.c.h.b16 %v7969
    %v9975 = vunpack.c.l.b16 %v7970
    %v9976 = vunpack.c.h.b16 %v7970
    %v9977 = vunpack.c.l.b16 %v7971
    %v9978 = vunpack.c.h.b16 %v7971
    %v9979 = vunpack.c.l.b16 %v7972
    %v9980 = vunpack.c.l.b16 %v7973
    %v9981 = vunpack.c.h.b16 %v7973
    %v9982 = vunpack.c.l.b16 %v7974
    %v9983 = vunpack.c.h.b16 %v7974
    %v9984 = vunpack.c.l.b16 %v7975
    %v9985 = vunpack.c.h.b16 %v7975
    %v9986 = vunpack.c.l.b16 %v7976
    %v9987 = vunpack.c.l.b16 %v7977
    %v9988 = vunpack.c.h.b16 %v7977
    %v9989 = vunpack.c.l.b16 %v7978
    %v9990 = vunpack.c.h.b16 %v7978
    %v9991 = vunpack.c.l.b16 %v7979
    %v9992 = vunpack.c.h.b16 %v7979
    %v9993 = vunpack.c.l.b16 %v7980
    %v9994 = vunpack.c.l.b16 %v7981
    %v9995 = vunpack.c.h.b16 %v7981
    %v9996 = vunpack.c.l.b16 %v7982
    %v9997 = vunpack.c.h.b16 %v7982
    %v9998 = vunpack.c.l.b16 %v7983
    %v9999 = vunpack.c.h.b16 %v7983
    %v10000 = vunpack.c.l.b16 %v7984
    %v10001 = vunpack.c.l.b16 %v7985
    %v10002 = vunpack.c.h.b16 %v7985
    %v10003 = vunpack.c.l.b16 %v7986
    %v10004 = vunpack.c.h.b16 %v7986
    %v10005 = vunpack.c.l.b16 %v7987
    %v10006 = vunpack.c.h.b16 %v7987
    %v10007 = vunpack.c.l.b16 %v7988
    %v10008 = vunpack.c.l.b16 %v7989
    %v10009 = vunpack.c.h.b16 %v7989
    %v10010 = vunpack.c.l.b16 %v7990
    %v10011 = vunpack.c.h.b16 %v7990
    %v10012 = vunpack.c.l.b16 %v7991
    %v10013 = vunpack.c.h.b16 %v7991
    %v10014 = vunpack.c.l.b16 %v7992
    %v10015 = vunpack.c.l.b16 %v7993
    %v10016 = vunpack.c.h.b16 %v7993
    %v10017 = vunpack.c.l.b16 %v7994
    %v10018 = vunpack.c.h.b16 %v7994
    %v10019 = vunpack.c.l.b16 %v7995
    %v10020 = vunpack.c.h.b16 %v7995
    %v10021 = vunpack.c.l.b16 %v7996
    %v10022 = vunpack.c.l.b16 %v7997
    %v10023 = vunpack.c.h.b16 %v7997
    %v10024 = vunpack.c.l.b16 %v7998
    %v10025 = vunpack.c.h.b16 %v7998
    %v10026 = vunpack.c.l.b16 %v7999
    %v10027 = vunpack.c.h.b16 %v7999
    %v10028 = vunpack.c.l.b16 %v8000
    %v10029 = vunpack.c.l.b16 %v8001
    %v10030 = vunpack.c.h.b16 %v8001
    %v10031 = vunpack.c.l.b16 %v8002
    %v10032 = vunpack.c.h.b16 %v8002
    %v10033 = vunpack.c.l.b16 %v8003
    %v10034 = vunpack.c.h.b16 %v8003
    %v10035 = vunpack.c.l.b16 %v8004
    %v10036 = vunpack.c.l.b16 %v8005
    %v10037 = vunpack.c.h.b16 %v8005
    %v10038 = vunpack.c.l.b16 %v8006
    %v10039 = vunpack.c.h.b16 %v8006
    %v10040 = vunpack.c.l.b16 %v8007
    %v10041 = vunpack.c.h.b16 %v8007
    %v10042 = vunpack.c.l.b16 %v8008
    %v10043 = vunpack.c.l.b16 %v8009
    %v10044 = vunpack.c.h.b16 %v8009
    %v10045 = vunpack.c.l.b16 %v8010
    %v10046 = vunpack.c.h.b16 %v8010
    %v10047 = vunpack.c.l.b16 %v8011
    %v10048 = vunpack.c.h.b16 %v8011
    %v10049 = vunpack.c.l.b16 %v8012
    %v10050 = vunpack.c.l.b16 %v8013
    %v10051 = vunpack.c.h.b16 %v8013
    %v10052 = vunpack.c.l.b16 %v8014
    %v10053 = vunpack.c.h.b16 %v8014
    %v10054 = vunpack.c.l.b16 %v8015
    %v10055 = vunpack.c.h.b16 %v8015
    %v10056 = vunpack.c.l.b16 %v8016
    %v10057 = vunpack.c.l.b16 %v8017
    %v10058 = vunpack.c.h.b16 %v8017
    %v10059 = vunpack.c.l.b16 %v8018
    %v10060 = vunpack.c.h.b16 %v8018
    %v10061 = vunpack.c.l.b16 %v8019
    %v10062 = vunpack.c.h.b16 %v8019
    %v10063 = vunpack.c.l.b16 %v8020
    %v10064 = vunpack.c.l.b16 %v8021
    %v10065 = vunpack.c.h.b16 %v8021
    %v10066 = vunpack.c.l.b16 %v8022
    %v10067 = vunpack.c.h.b16 %v8022
    %v10068 = vunpack.c.l.b16 %v8023
    %v10069 = vunpack.c.h.b16 %v8023
    %v10070 = vunpack.c.l.b16 %v8024
    %v10071 = vunpack.c.l.b16 %v8025
    %v10072 = vunpack.c.h.b16 %v8025
    %v10073 = vunpack.c.l.b16 %v8026
    %v10074 = vunpack.c.h.b16 %v8026
    %v10075 = vunpack.c.l.b16 %v8027
    %v10076 = vunpack.c.h.b16 %v8027
    %v10077 = vunpack.c.l.b16 %v8028
    %v10078 = vunpack.c.l.b16 %v8029
    %v10079 = vunpack.c.h.b16 %v8029
    %v10080 = vunpack.c.l.b16 %v8030
    %v10081 = vunpack.c.h.b16 %v8030
    %v10082 = vunpack.c.l.b16 %v8031
    %v10083 = vunpack.c.h.b16 %v8031
    %v10084 = vunpack.c.l.b16 %v8032
    %v10085 = vunpack.c.l.b16 %v8033
    %v10086 = vunpack.c.h.b16 %v8033
    %v10087 = vunpack.c.l.b16 %v8034
    %v10088 = vunpack.c.h.b16 %v8034
    %v10089 = vunpack.c.l.b16 %v8035
    %v10090 = vunpack.c.h.b16 %v8035
    %v10091 = vunpack.c.l.b16 %v8036
    %v10092 = vunpack.c.l.b16 %v8037
    %v10093 = vunpack.c.h.b16 %v8037
    %v10094 = vunpack.c.l.b16 %v8038
    %v10095 = vunpack.c.h.b16 %v8038
    %v10096 = vunpack.c.l.b16 %v8039
    %v10097 = vunpack.c.h.b16 %v8039
    %v10098 = vunpack.c.l.b16 %v8040
    %v10099 = vunpack.c.l.b16 %v8041
    %v10100 = vunpack.c.h.b16 %v8041
    %v10101 = vunpack.c.l.b16 %v8042
    %v10102 = vunpack.c.h.b16 %v8042
    %v10103 = vunpack.c.l.b16 %v8043
    %v10104 = vunpack.c.h.b16 %v8043
    %v10105 = vunpack.c.l.b16 %v8044
    %v10106 = vunpack.c.l.b16 %v8045
    %v10107 = vunpack.c.h.b16 %v8045
    %v10108 = vunpack.c.l.b16 %v8046
    %v10109 = vunpack.c.h.b16 %v8046
    %v10110 = vunpack.c.l.b16 %v8047
    %v10111 = vunpack.c.h.b16 %v8047
    %v10112 = vunpack.c.l.b16 %v8048
    %v10113 = vunpack.c.l.b16 %v8049
    %v10114 = vunpack.c.h.b16 %v8049
    %v10115 = vunpack.c.l.b16 %v8050
    %v10116 = vunpack.c.h.b16 %v8050
    %v10117 = vunpack.c.l.b16 %v8051
    %v10118 = vunpack.c.h.b16 %v8051
    %v10119 = vunpack.c.l.b16 %v8052
    %v10120 = vunpack.c.l.b16 %v8053
    %v10121 = vunpack.c.h.b16 %v8053
    %v10122 = vunpack.c.l.b16 %v8054
    %v10123 = vunpack.c.h.b16 %v8054
    %v10124 = vunpack.c.l.b16 %v8055
    %v10125 = vunpack.c.h.b16 %v8055
    %v10126 = vunpack.c.l.b16 %v8056
    %v10127 = vunpack.c.l.b16 %v8057
    %v10128 = vunpack.c.h.b16 %v8057
    %v10129 = vunpack.c.l.b16 %v8058
    %v10130 = vunpack.c.h.b16 %v8058
    %v10131 = vunpack.c.l.b16 %v8059
    %v10132 = vunpack.c.h.b16 %v8059
    %v10133 = vunpack.c.l.b16 %v8060
    %v10134 = vunpack.c.l.b16 %v8061
    %v10135 = vunpack.c.h.b16 %v8061
    %v10136 = vunpack.c.l.b16 %v8062
    %v10137 = vunpack.c.h.b16 %v8062
    %v10138 = vunpack.c.l.b16 %v8063
    %v10139 = vunpack.c.h.b16 %v8063
    %v10140 = vunpack.c.l.b16 %v8064
    %v10141 = vunpack.c.l.b16 %v8065
    %v10142 = vunpack.c.h.b16 %v8065
    %v10143 = vunpack.c.l.b16 %v8066
    %v10144 = vunpack.c.h.b16 %v8066
    %v10145 = vunpack.c.l.b16 %v8067
    %v10146 = vunpack.c.h.b16 %v8067
    %v10147 = vunpack.c.l.b16 %v8068
    %v10148 = vunpack.c.l.b16 %v8069
    %v10149 = vunpack.c.h.b16 %v8069
    %v10150 = vunpack.c.l.b16 %v8070
    %v10151 = vunpack.c.h.b16 %v8070
    %v10152 = vunpack.c.l.b16 %v8071
    %v10153 = vunpack.c.h.b16 %v8071
    %v10154 = vunpack.c.l.b16 %v8072
    %v10155 = vunpack.c.l.b16 %v8073
    %v10156 = vunpack.c.h.b16 %v8073
    %v10157 = vunpack.c.l.b16 %v8074
    %v10158 = vunpack.c.h.b16 %v8074
    %v10159 = vunpack.c.l.b16 %v8075
    %v10160 = vunpack.c.h.b16 %v8075
    %v10161 = vunpack.c.l.b16 %v8076
    %v10162 = vunpack.c.l.b16 %v8077
    %v10163 = vunpack.c.h.b16 %v8077
    %v10164 = vunpack.c.l.b16 %v8078
    %v10165 = vunpack.c.h.b16 %v8078
    %v10166 = vunpack.c.l.b16 %v8079
    %v10167 = vunpack.c.h.b16 %v8079
    %v10168 = vunpack.c.l.b16 %v8080
    %v10169 = vunpack.c.l.b16 %v8081
    %v10170 = vunpack.c.h.b16 %v8081
    %v10171 = vunpack.c.l.b16 %v8082
    %v10172 = vunpack.c.h.b16 %v8082
    %v10173 = vunpack.c.l.b16 %v8083
    %v10174 = vunpack.c.h.b16 %v8083
    %v10175 = vunpack.c.l.b16 %v8084
    %v10176 = vunpack.c.l.b16 %v8085
    %v10177 = vunpack.c.h.b16 %v8085
    %v10178 = vunpack.c.l.b16 %v8086
    %v10179 = vunpack.c.h.b16 %v8086
    %v10180 = vunpack.c.l.b16 %v8087
    %v10181 = vunpack.c.h.b16 %v8087
    %v10182 = vunpack.c.l.b16 %v8088
    %v10183 = vunpack.c.l.b16 %v8089
    %v10184 = vunpack.c.h.b16 %v8089
    %v10185 = vunpack.c.l.b16 %v8090
    %v10186 = vunpack.c.h.b16 %v8090
    %v10187 = vunpack.c.l.b16 %v8091
    %v10188 = vunpack.c.h.b16 %v8091
    %v10189 = vunpack.c.l.b16 %v8092
    %v10190 = vunpack.c.l.b16 %v8093
    %v10191 = vunpack.c.h.b16 %v8093
    %v10192 = vunpack.c.l.b16 %v8094
    %v10193 = vunpack.c.h.b16 %v8094
    %v10194 = vunpack.c.l.b16 %v8095
    %v10195 = vunpack.c.h.b16 %v8095
    %v10196 = vunpack.c.l.b16 %v8096
    %v10197 = vunpack.c.l.b16 %v8097
    %v10198 = vunpack.c.h.b16 %v8097
    %v10199 = vunpack.c.l.b16 %v8098
    %v10200 = vunpack.c.h.b16 %v8098
    %v10201 = vunpack.c.l.b16 %v8099
    %v10202 = vunpack.c.h.b16 %v8099
    %v10203 = vunpack.c.l.b16 %v8100
    %v10204 = vunpack.c.l.b16 %v8101
    %v10205 = vunpack.c.h.b16 %v8101
    %v10206 = vunpack.c.l.b16 %v8102
    %v10207 = vunpack.c.h.b16 %v8102
    %v10208 = vunpack.c.l.b16 %v8103
    %v10209 = vunpack.c.h.b16 %v8103
    %v10210 = vunpack.c.l.b16 %v8104
    %v10211 = vunpack.c.l.b16 %v8105
    %v10212 = vunpack.c.h.b16 %v8105
    %v10213 = vunpack.c.l.b16 %v8106
    %v10214 = vunpack.c.h.b16 %v8106
    %v10215 = vunpack.c.l.b16 %v8107
    %v10216 = vunpack.c.h.b16 %v8107
    %v10217 = vunpack.c.l.b16 %v8108
    %v10218 = vunpack.c.l.b16 %v8109
    %v10219 = vunpack.c.h.b16 %v8109
    %v10220 = vunpack.c.l.b16 %v8110
    %v10221 = vunpack.c.h.b16 %v8110
    %v10222 = vunpack.c.l.b16 %v8111
    %v10223 = vunpack.c.h.b16 %v8111
    %v10224 = vunpack.c.l.b16 %v8112
    %v10225 = vunpack.c.l.b16 %v8113
    %v10226 = vunpack.c.h.b16 %v8113
    %v10227 = vunpack.c.l.b16 %v8114
    %v10228 = vunpack.c.h.b16 %v8114
    %v10229 = vunpack.c.l.b16 %v8115
    %v10230 = vunpack.c.h.b16 %v8115
    %v10231 = vunpack.c.l.b16 %v8116
    %v10232 = vunpack.c.l.b16 %v8117
    %v10233 = vunpack.c.h.b16 %v8117
    %v10234 = vunpack.c.l.b16 %v8118
    %v10235 = vunpack.c.h.b16 %v8118
    %v10236 = vunpack.c.l.b16 %v8119
    %v10237 = vunpack.c.h.b16 %v8119
    %v10238 = vunpack.c.l.b16 %v8120
    %v10239 = vunpack.c.l.b16 %v8121
    %v10240 = vunpack.c.h.b16 %v8121
    %v10241 = vunpack.c.l.b16 %v8122
    %v10242 = vunpack.c.h.b16 %v8122
    %v10243 = vunpack.c.l.b16 %v8123
    %v10244 = vunpack.c.h.b16 %v8123
    %v10245 = vunpack.c.l.b16 %v8124
    %v10246 = vunpack.c.l.b16 %v8125
    %v10247 = vunpack.c.h.b16 %v8125
    %v10248 = vunpack.c.l.b16 %v8126
    %v10249 = vunpack.c.h.b16 %v8126
    %v10250 = vunpack.c.l.b16 %v8127
    %v10251 = vunpack.c.h.b16 %v8127
    %v10252 = vunpack.c.l.b16 %v8128
    %v10253 = vunpack.c.l.b16 %v8129
    %v10254 = vunpack.c.h.b16 %v8129
    %v10255 = vunpack.c.l.b16 %v8130
    %v10256 = vunpack.c.h.b16 %v8130
    %v10257 = vunpack.c.l.b16 %v8131
    %v10258 = vunpack.c.h.b16 %v8131
    %v10259 = vunpack.c.l.b16 %v8132
    %v10260 = vunpack.c.l.b16 %v8133
    %v10261 = vunpack.c.h.b16 %v8133
    %v10262 = vunpack.c.l.b16 %v8134
    %v10263 = vunpack.c.h.b16 %v8134
    %v10264 = vunpack.c.l.b16 %v8135
    %v10265 = vunpack.c.h.b16 %v8135
    %v10266 = vunpack.c.l.b16 %v8136
    %v10267 = vunpack.c.l.b16 %v8137
    %v10268 = vunpack.c.h.b16 %v8137
    %v10269 = vunpack.c.l.b16 %v8138
    %v10270 = vunpack.c.h.b16 %v8138
    %v10271 = vunpack.c.l.b16 %v8139
    %v10272 = vunpack.c.h.b16 %v8139
    %v10273 = vunpack.c.l.b16 %v8140
    %v10274 = vunpack.c.l.b16 %v8141
    %v10275 = vunpack.c.h.b16 %v8141
    %v10276 = vunpack.c.l.b16 %v8142
    %v10277 = vunpack.c.h.b16 %v8142
    %v10278 = vunpack.c.l.b16 %v8143
    %v10279 = vunpack.c.h.b16 %v8143
    %v10280 = vunpack.c.l.b16 %v8144
    %v10281 = vunpack.c.l.b16 %v8145
    %v10282 = vunpack.c.h.b16 %v8145
    %v10283 = vunpack.c.l.b16 %v8146
    %v10284 = vunpack.c.h.b16 %v8146
    %v10285 = vunpack.c.l.b16 %v8147
    %v10286 = vunpack.c.h.b16 %v8147
    %v10287 = vunpack.c.l.b16 %v8148
    %v10288 = vunpack.c.l.b16 %v8149
    %v10289 = vunpack.c.h.b16 %v8149
    %v10290 = vunpack.c.l.b16 %v8150
    %v10291 = vunpack.c.h.b16 %v8150
    %v10292 = vunpack.c.l.b16 %v8151
    %v10293 = vunpack.c.h.b16 %v8151
    %v10294 = vunpack.c.l.b16 %v8152
    %v10295 = vunpack.c.l.b16 %v8153
    %v10296 = vunpack.c.h.b16 %v8153
    %v10297 = vunpack.c.l.b16 %v8154
    %v10298 = vunpack.c.h.b16 %v8154
    %v10299 = vunpack.c.l.b16 %v8155
    %v10300 = vunpack.c.h.b16 %v8155
    %v10301 = vunpack.c.l.b16 %v8156
    %v10302 = vunpack.c.l.b16 %v8157
    %v10303 = vunpack.c.h.b16 %v8157
    %v10304 = vunpack.c.l.b16 %v8158
    %v10305 = vunpack.c.h.b16 %v8158
    %v10306 = vunpack.c.l.b16 %v8159
    %v10307 = vunpack.c.h.b16 %v8159
    %v10308 = vunpack.c.l.b16 %v8160
    %v10309 = vunpack.c.l.b16 %v8161
    %v10310 = vunpack.c.h.b16 %v8161
    %v10311 = vunpack.c.l.b16 %v8162
    %v10312 = vunpack.c.h.b16 %v8162
    %v10313 = vunpack.c.l.b16 %v8163
    %v10314 = vunpack.c.h.b16 %v8163
    %v10315 = vunpack.c.l.b16 %v8164
    %v10316 = vunpack.c.l.b16 %v8165
    %v10317 = vunpack.c.h.b16 %v8165
    %v10318 = vunpack.c.l.b16 %v8166
    %v10319 = vunpack.c.h.b16 %v8166
    %v10320 = vunpack.c.l.b16 %v8167
    %v10321 = vunpack.c.h.b16 %v8167
    %v10322 = vunpack.c.l.b16 %v8168
    %v10323 = vunpack.c.l.b16 %v8169
    %v10324 = vunpack.c.h.b16 %v8169
    %v10325 = vunpack.c.l.b16 %v8170
    %v10326 = vunpack.c.h.b16 %v8170
    %v10327 = vunpack.c.l.b16 %v8171
    %v10328 = vunpack.c.h.b16 %v8171
    %v10329 = vunpack.c.l.b16 %v8172
    %v10330 = vunpack.c.l.b16 %v8173
    %v10331 = vunpack.c.h.b16 %v8173
    %v10332 = vunpack.c.l.b16 %v8174
    %v10333 = vunpack.c.h.b16 %v8174
    %v10334 = vunpack.c.l.b16 %v8175
    %v10335 = vunpack.c.h.b16 %v8175
    %v10336 = vunpack.c.l.b16 %v8176
    %v10337 = vunpack.c.l.b16 %v8177
    %v10338 = vunpack.c.h.b16 %v8177
    %v10339 = vunpack.c.l.b16 %v8178
    %v10340 = vunpack.c.h.b16 %v8178
    %v10341 = vunpack.c.l.b16 %v8179
    %v10342 = vunpack.c.h.b16 %v8179
    %v10343 = vunpack.c.l.b16 %v8180
    %v10344 = vunpack.c.l.b16 %v8181
    %v10345 = vunpack.c.h.b16 %v8181
    %v10346 = vunpack.c.l.b16 %v8182
    %v10347 = vunpack.c.h.b16 %v8182
    %v10348 = vunpack.c.l.b16 %v8183
    %v10349 = vunpack.c.h.b16 %v8183
    %v10350 = vunpack.c.l.b16 %v8184
    %v10351 = vunpack.c.l.b16 %v8185
    %v10352 = vunpack.c.h.b16 %v8185
    %v10353 = vunpack.c.l.b16 %v8186
    %v10354 = vunpack.c.h.b16 %v8186
    %v10355 = vunpack.c.l.b16 %v8187
    %v10356 = vunpack.c.h.b16 %v8187
    %v10357 = vunpack.c.l.b16 %v8188
    %v10358 = vunpack.c.l.b16 %v8189
    %v10359 = vunpack.c.h.b16 %v8189
    %v10360 = vunpack.c.l.b16 %v8190
    %v10361 = vunpack.c.h.b16 %v8190
    %v10362 = vunpack.c.l.b16 %v8191
    %v10363 = vunpack.c.h.b16 %v8191
    %v10364 = vunpack.c.l.b16 %v8192
    %v10365 = vunpack.c.l.b16 %v8193
    %v10366 = vunpack.c.h.b16 %v8193
    %v10367 = vunpack.c.l.b16 %v8194
    %v10368 = vunpack.c.h.b16 %v8194
    %v10369 = vunpack.c.l.b16 %v8195
    %v10370 = vunpack.c.h.b16 %v8195
    %v10371 = vunpack.c.l.b16 %v8196
    %v10372 = vunpack.c.l.b16 %v8197
    %v10373 = vunpack.c.h.b16 %v8197
    %v10374 = vunpack.c.l.b16 %v8198
    %v10375 = vunpack.c.h.b16 %v8198
    %v10376 = vunpack.c.l.b16 %v8199
    %v10377 = vunpack.c.h.b16 %v8199
    %v10378 = vunpack.c.l.b16 %v8200
    %v10379 = vunpack.c.l.b16 %v8201
    %v10380 = vunpack.c.h.b16 %v8201
    %v10381 = vunpack.c.l.b16 %v8202
    %v10382 = vunpack.c.h.b16 %v8202
    %v10383 = vunpack.c.l.b16 %v8203
    %v10384 = vunpack.c.h.b16 %v8203
    %v10385 = vunpack.c.l.b16 %v8204
    %v10386 = vunpack.c.l.b16 %v8205
    %v10387 = vunpack.c.h.b16 %v8205
    %v10388 = vunpack.c.l.b16 %v8206
    %v10389 = vunpack.c.h.b16 %v8206
    %v10390 = vunpack.c.l.b16 %v8207
    %v10391 = vunpack.c.h.b16 %v8207
    %v10392 = vunpack.c.l.b16 %v8208
    %v10393 = vunpack.c.l.b16 %v8209
    %v10394 = vunpack.c.h.b16 %v8209
    %v10395 = vunpack.c.l.b16 %v8210
    %v10396 = vunpack.c.h.b16 %v8210
    %v10397 = vunpack.c.l.b16 %v8211
    %v10398 = vunpack.c.h.b16 %v8211
    %v10399 = vunpack.c.l.b16 %v8212
    %v10400 = vunpack.c.l.b16 %v8213
    %v10401 = vunpack.c.h.b16 %v8213
    %v10402 = vunpack.c.l.b16 %v8214
    %v10403 = vunpack.c.h.b16 %v8214
    %v10404 = vunpack.c.l.b16 %v8215
    %v10405 = vunpack.c.h.b16 %v8215
    %v10406 = vunpack.c.l.b16 %v8216
    %v10407 = vunpack.c.l.b16 %v8217
    %v10408 = vunpack.c.h.b16 %v8217
    %v10409 = vunpack.c.l.b16 %v8218
    %v10410 = vunpack.c.h.b16 %v8218
    %v10411 = vunpack.c.l.b16 %v8219
    %v10412 = vunpack.c.h.b16 %v8219
    %v10413 = vunpack.c.l.b16 %v8220
    %v10414 = vunpack.c.l.b16 %v8221
    %v10415 = vunpack.c.h.b16 %v8221
    %v10416 = vunpack.c.l.b16 %v8222
    %v10417 = vunpack.c.h.b16 %v8222
    %v10418 = vunpack.c.l.b16 %v8223
    %v10419 = vunpack.c.h.b16 %v8223
    %v10420 = vunpack.c.l.b16 %v8224
    %v10421 = vunpack.c.l.b16 %v8225
    %v10422 = vunpack.c.h.b16 %v8225
    %v10423 = vunpack.c.l.b16 %v8226
    %v10424 = vunpack.c.h.b16 %v8226
    %v10425 = vunpack.c.l.b16 %v8227
    %v10426 = vunpack.c.h.b16 %v8227
    %v10427 = vunpack.c.l.b16 %v8228
    %v10428 = vunpack.c.l.b16 %v8229
    %v10429 = vunpack.c.h.b16 %v8229
    %v10430 = vunpack.c.l.b16 %v8230
    %v10431 = vunpack.c.h.b16 %v8230
    %v10432 = vunpack.c.l.b16 %v8231
    %v10433 = vunpack.c.h.b16 %v8231
    %v10434 = vunpack.c.l.b16 %v8232
    %v10435 = vunpack.c.l.b16 %v8233
    %v10436 = vunpack.c.h.b16 %v8233
    %v10437 = vunpack.c.l.b16 %v8234
    %v10438 = vunpack.c.h.b16 %v8234
    %v10439 = vunpack.c.l.b16 %v8235
    %v10440 = vunpack.c.h.b16 %v8235
    %v10441 = vunpack.c.l.b16 %v8236
    %v10442 = vunpack.c.l.b16 %v8237
    %v10443 = vunpack.c.h.b16 %v8237
    %v10444 = vunpack.c.l.b16 %v8238
    %v10445 = vunpack.c.h.b16 %v8238
    %v10446 = vunpack.c.l.b16 %v8239
    %v10447 = vunpack.c.h.b16 %v8239
    %v10448 = vunpack.c.l.b16 %v8240
    %v10449 = vunpack.c.l.b16 %v8241
    %v10450 = vunpack.c.h.b16 %v8241
    %v10451 = vunpack.c.l.b16 %v8242
    %v10452 = vunpack.c.h.b16 %v8242
    %v10453 = vunpack.c.l.b16 %v8243
    %v10454 = vunpack.c.h.b16 %v8243
    %v10455 = vunpack.c.l.b16 %v8244
    %v10456 = vunpack.c.l.b16 %v8245
    %v10457 = vunpack.c.h.b16 %v8245
    %v10458 = vunpack.c.l.b16 %v8246
    %v10459 = vunpack.c.h.b16 %v8246
    %v10460 = vunpack.c.l.b16 %v8247
    %v10461 = vunpack.c.h.b16 %v8247
    %v10462 = vunpack.c.l.b16 %v8248
    %v10463 = vunpack.c.l.b16 %v8249
    %v10464 = vunpack.c.h.b16 %v8249
    %v10465 = vunpack.c.l.b16 %v8250
    %v10466 = vunpack.c.h.b16 %v8250
    %v10467 = vunpack.c.l.b16 %v8251
    %v10468 = vunpack.c.h.b16 %v8251
    %v10469 = vunpack.c.l.b16 %v8252
    %v10470 = vunpack.c.l.b16 %v8253
    %v10471 = vunpack.c.h.b16 %v8253
    %v10472 = vunpack.c.l.b16 %v8254
    %v10473 = vunpack.c.h.b16 %v8254
    %v10474 = vunpack.c.l.b16 %v8255
    %v10475 = vunpack.c.h.b16 %v8255
    %v10476 = vunpack.c.l.b16 %v8256
    %v10477 = vunpack.c.l.b16 %v8257
    %v10478 = vunpack.c.h.b16 %v8257
    %v10479 = vunpack.c.l.b16 %v8258
    %v10480 = vunpack.c.h.b16 %v8258
    %v10481 = vunpack.c.l.b16 %v8259
    %v10482 = vunpack.c.h.b16 %v8259
    %v10483 = vunpack.c.l.b16 %v8260
    %v10484 = vunpack.c.l.b16 %v8261
    %v10485 = vunpack.c.h.b16 %v8261
    %v10486 = vunpack.c.l.b16 %v8262
    %v10487 = vunpack.c.h.b16 %v8262
    %v10488 = vunpack.c.l.b16 %v8263
    %v10489 = vunpack.c.h.b16 %v8263
    %v10490 = vunpack.c.l.b16 %v8264
    %v10491 = vunpack.c.l.b16 %v8265
    %v10492 = vunpack.c.h.b16 %v8265
    %v10493 = vunpack.c.l.b16 %v8266
    %v10494 = vunpack.c.h.b16 %v8266
    %v10495 = vunpack.c.l.b16 %v8267
    %v10496 = vunpack.c.h.b16 %v8267
    %v10497 = vunpack.c.l.b16 %v8268
    %v10498 = vunpack.c.l.b16 %v8269
    %v10499 = vunpack.c.h.b16 %v8269
    %v10500 = vunpack.c.l.b16 %v8270
    %v10501 = vunpack.c.h.b16 %v8270
    %v10502 = vunpack.c.l.b16 %v8271
    %v10503 = vunpack.c.h.b16 %v8271
    %v10504 = vunpack.c.l.b16 %v8272
    %v10505 = vunpack.c.l.b16 %v8273
    %v10506 = vunpack.c.h.b16 %v8273
    %v10507 = vunpack.c.l.b16 %v8274
    %v10508 = vunpack.c.h.b16 %v8274
    %v10509 = vunpack.c.l.b16 %v8275
    %v10510 = vunpack.c.h.b16 %v8275
    %v10511 = vunpack.c.l.b16 %v8276
    %v10512 = vunpack.c.l.b16 %v8277
    %v10513 = vunpack.c.h.b16 %v8277
    %v10514 = vunpack.c.l.b16 %v8278
    %v10515 = vunpack.c.h.b16 %v8278
    %v10516 = vunpack.c.l.b16 %v8279
    %v10517 = vunpack.c.h.b16 %v8279
    %v10518 = vunpack.c.l.b16 %v8280
    %v10519 = vunpack.c.l.b16 %v8281
    %v10520 = vunpack.c.h.b16 %v8281
    %v10521 = vunpack.c.l.b16 %v8282
    %v10522 = vunpack.c.h.b16 %v8282
    %v10523 = vunpack.c.l.b16 %v8283
    %v10524 = vunpack.c.h.b16 %v8283
    %v10525 = vunpack.c.l.b16 %v8284
    %v10526 = vunpack.c.l.b16 %v8285
    %v10527 = vunpack.c.h.b16 %v8285
    %v10528 = vunpack.c.l.b16 %v8286
    %v10529 = vunpack.c.h.b16 %v8286
    %v10530 = vunpack.c.l.b16 %v8287
    %v10531 = vunpack.c.h.b16 %v8287
    %v10532 = vunpack.c.l.b16 %v8288
    %v10533 = vunpack.c.l.b16 %v8289
    %v10534 = vunpack.c.h.b16 %v8289
    %v10535 = vunpack.c.l.b16 %v8290
    %v10536 = vunpack.c.h.b16 %v8290
    %v10537 = vunpack.c.l.b16 %v8291
    %v10538 = vunpack.c.h.b16 %v8291
    %v10539 = vunpack.c.l.b16 %v8292
    %v10540 = vunpack.c.l.b16 %v8293
    %v10541 = vunpack.c.h.b16 %v8293
    %v10542 = vunpack.c.l.b16 %v8294
    %v10543 = vunpack.c.h.b16 %v8294
    %v10544 = vunpack.c.l.b16 %v8295
    %v10545 = vunpack.c.h.b16 %v8295
    %v10546 = vunpack.c.l.b16 %v8296
    %v10547 = vunpack.c.l.b16 %v8297
    %v10548 = vunpack.c.h.b16 %v8297
    %v10549 = vunpack.c.l.b16 %v8298
    %v10550 = vunpack.c.h.b16 %v8298
    %v10551 = vunpack.c.l.b16 %v8299
    %v10552 = vunpack.c.h.b16 %v8299
    %v10553 = vunpack.c.l.b16 %v8300
    %v10554 = vunpack.c.l.b16 %v8301
    %v10555 = vunpack.c.h.b16 %v8301
    %v10556 = vunpack.c.l.b16 %v8302
    %v10557 = vunpack.c.h.b16 %v8302
    %v10558 = vunpack.c.l.b16 %v8303
    %v10559 = vunpack.c.h.b16 %v8303
    %v10560 = vunpack.c.l.b16 %v8304
    %v10561 = vunpack.c.l.b16 %v8305
    %v10562 = vunpack.c.h.b16 %v8305
    %v10563 = vunpack.c.l.b16 %v8306
    %v10564 = vunpack.c.h.b16 %v8306
    %v10565 = vunpack.c.l.b16 %v8307
    %v10566 = vunpack.c.h.b16 %v8307
    %v10567 = vunpack.c.l.b16 %v8308
    %v10568 = vunpack.c.l.b16 %v8309
    %v10569 = vunpack.c.h.b16 %v8309
    %v10570 = vunpack.c.l.b16 %v8310
    %v10571 = vunpack.c.h.b16 %v8310
    %v10572 = vunpack.c.l.b16 %v8311
    %v10573 = vunpack.c.h.b16 %v8311
    %v10574 = vunpack.c.l.b16 %v8312
    %v10575 = vunpack.c.l.b16 %v8313
    %v10576 = vunpack.c.h.b16 %v8313
    %v10577 = vunpack.c.l.b16 %v8314
    %v10578 = vunpack.c.h.b16 %v8314
    %v10579 = vunpack.c.l.b16 %v8315
    %v10580 = vunpack.c.h.b16 %v8315
    %v10581 = vunpack.c.l.b16 %v8316
    %v10582 = vunpack.c.l.b16 %v8317
    %v10583 = vunpack.c.h.b16 %v8317
    %v10584 = vunpack.c.l.b16 %v8318
    %v10585 = vunpack.c.h.b16 %v8318
    %v10586 = vunpack.c.l.b16 %v8319
    %v10587 = vunpack.c.h.b16 %v8319
    %v10588 = vunpack.c.l.b16 %v8320
    %v10589 = vunpack.c.l.b16 %v8321
    %v10590 = vunpack.c.h.b16 %v8321
    %v10591 = vunpack.c.l.b16 %v8322
    %v10592 = vunpack.c.h.b16 %v8322
    %v10593 = vunpack.c.l.b16 %v8323
    %v10594 = vunpack.c.h.b16 %v8323
    %v10595 = vunpack.c.l.b16 %v8324
    %v10596 = vunpack.c.l.b16 %v8325
    %v10597 = vunpack.c.h.b16 %v8325
    %v10598 = vunpack.c.l.b16 %v8326
    %v10599 = vunpack.c.h.b16 %v8326
    %v10600 = vunpack.c.l.b16 %v8327
    %v10601 = vunpack.c.h.b16 %v8327
    %v10602 = vunpack.c.l.b16 %v8328
    %v10603 = vunpack.c.l.b16 %v8329
    %v10604 = vunpack.c.h.b16 %v8329
    %v10605 = vunpack.c.l.b16 %v8330
    %v10606 = vunpack.c.h.b16 %v8330
    %v10607 = vunpack.c.l.b16 %v8331
    %v10608 = vunpack.c.h.b16 %v8331
    %v10609 = vunpack.c.l.b16 %v8332
    %v10610 = vunpack.c.l.b16 %v8333
    %v10611 = vunpack.c.h.b16 %v8333
    %v10612 = vunpack.c.l.b16 %v8334
    %v10613 = vunpack.c.h.b16 %v8334
    %v10614 = vunpack.c.l.b16 %v8335
    %v10615 = vunpack.c.h.b16 %v8335
    %v10616 = vunpack.c.l.b16 %v8336
    %v10617 = vunpack.c.l.b16 %v8337
    %v10618 = vunpack.c.h.b16 %v8337
    %v10619 = vunpack.c.l.b16 %v8338
    %v10620 = vunpack.c.h.b16 %v8338
    %v10621 = vunpack.c.l.b16 %v8339
    %v10622 = vunpack.c.h.b16 %v8339
    %v10623 = vunpack.c.l.b16 %v8340
    %v10624 = vunpack.c.l.b16 %v8341
    %v10625 = vunpack.c.h.b16 %v8341
    %v10626 = vunpack.c.l.b16 %v8342
    %v10627 = vunpack.c.h.b16 %v8342
    %v10628 = vunpack.c.l.b16 %v8343
    %v10629 = vunpack.c.h.b16 %v8343
    %v10630 = vunpack.c.l.b16 %v8344
    %v10631 = vunpack.c.l.b16 %v8345
    %v10632 = vunpack.c.h.b16 %v8345
    %v10633 = vunpack.c.l.b16 %v8346
    %v10634 = vunpack.c.h.b16 %v8346
    %v10635 = vunpack.c.l.b16 %v8347
    %v10636 = vunpack.c.h.b16 %v8347
    %v10637 = vunpack.c.l.b16 %v8348
    %v10638 = vunpack.c.l.b16 %v8349
    %v10639 = vunpack.c.h.b16 %v8349
    %v10640 = vunpack.c.l.b16 %v8350
    %v10641 = vunpack.c.h.b16 %v8350
    %v10642 = vunpack.c.l.b16 %v8351
    %v10643 = vunpack.c.h.b16 %v8351
    %v10644 = vunpack.c.l.b16 %v8352
    %v10645 = vunpack.c.l.b16 %v8353
    %v10646 = vunpack.c.h.b16 %v8353
    %v10647 = vunpack.c.l.b16 %v8354
    %v10648 = vunpack.c.h.b16 %v8354
    %v10649 = vunpack.c.l.b16 %v8355
    %v10650 = vunpack.c.h.b16 %v8355
    %v10651 = vunpack.c.l.b16 %v8356
    %v10652 = vunpack.c.l.b16 %v8357
    %v10653 = vunpack.c.h.b16 %v8357
    %v10654 = vunpack.c.l.b16 %v8358
    %v10655 = vunpack.c.h.b16 %v8358
    %v10656 = vunpack.c.l.b16 %v8359
    %v10657 = vunpack.c.h.b16 %v8359
    %v10658 = vunpack.c.l.b16 %v8360
    %v10659 = vunpack.c.l.b16 %v8361
    %v10660 = vunpack.c.h.b16 %v8361
    %v10661 = vunpack.c.l.b16 %v8362
    %v10662 = vunpack.c.h.b16 %v8362
    %v10663 = vunpack.c.l.b16 %v8363
    %v10664 = vunpack.c.h.b16 %v8363
    %v10665 = vunpack.c.l.b16 %v8364
    %v10666 = vunpack.c.l.b16 %v8365
    %v10667 = vunpack.c.h.b16 %v8365
    %v10668 = vunpack.c.l.b16 %v8366
    %v10669 = vunpack.c.h.b16 %v8366
    %v10670 = vunpack.c.l.b16 %v8367
    %v10671 = vunpack.c.h.b16 %v8367
    %v10672 = vunpack.c.l.b16 %v8368
    %v10673 = vunpack.c.l.b16 %v8369
    %v10674 = vunpack.c.h.b16 %v8369
    %v10675 = vunpack.c.l.b16 %v8370
    %v10676 = vunpack.c.h.b16 %v8370
    %v10677 = vunpack.c.l.b16 %v8371
    %v10678 = vunpack.c.h.b16 %v8371
    %v10679 = vunpack.c.l.b16 %v8372
    %v10680 = vunpack.c.l.b16 %v8373
    %v10681 = vunpack.c.h.b16 %v8373
    %v10682 = vunpack.c.l.b16 %v8374
    %v10683 = vunpack.c.h.b16 %v8374
    %v10684 = vunpack.c.l.b16 %v8375
    %v10685 = vunpack.c.h.b16 %v8375
    %v10686 = vunpack.c.l.b16 %v8376
    %v10687 = vunpack.c.l.b16 %v8377
    %v10688 = vunpack.c.h.b16 %v8377
    %v10689 = vunpack.c.l.b16 %v8378
    %v10690 = vunpack.c.h.b16 %v8378
    %v10691 = vunpack.c.l.b16 %v8379
    %v10692 = vunpack.c.h.b16 %v8379
    %v10693 = vunpack.c.l.b16 %v8380
    %v10694 = vunpack.c.l.b16 %v8381
    %v10695 = vunpack.c.h.b16 %v8381
    %v10696 = vunpack.c.l.b16 %v8382
    %v10697 = vunpack.c.h.b16 %v8382
    %v10698 = vunpack.c.l.b16 %v8383
    %v10699 = vunpack.c.h.b16 %v8383
    %v10700 = vunpack.c.l.b16 %v8384
    %v10701 = vunpack.c.l.b16 %v8385
    %v10702 = vunpack.c.h.b16 %v8385
    %v10703 = vunpack.c.l.b16 %v8386
    %v10704 = vunpack.c.h.b16 %v8386
    %v10705 = vunpack.c.l.b16 %v8387
    %v10706 = vunpack.c.h.b16 %v8387
    %v10707 = vunpack.c.l.b16 %v8388
    %v10708 = vunpack.c.l.b16 %v8389
    %v10709 = vunpack.c.h.b16 %v8389
    %v10710 = vunpack.c.l.b16 %v8390
    %v10711 = vunpack.c.h.b16 %v8390
    %v10712 = vunpack.c.l.b16 %v8391
    %v10713 = vunpack.c.h.b16 %v8391
    %v10714 = vunpack.c.l.b16 %v8392
    %v10715 = vunpack.c.l.b16 %v8393
    %v10716 = vunpack.c.h.b16 %v8393
    %v10717 = vunpack.c.l.b16 %v8394
    %v10718 = vunpack.c.h.b16 %v8394
    %v10719 = vunpack.c.l.b16 %v8395
    %v10720 = vunpack.c.h.b16 %v8395
    %v10721 = vunpack.c.l.b16 %v8396
    %v10722 = vpack.c.b16 %v9273, %v9266
    %v10723 = vpack.c.b16 %v9274, %v9267
    %v10724 = vpack.c.b16 %v9275, %v9268
    %v10725 = vpack.c.b16 %v9276, %v9269
    %v10726 = vpack.c.b16 %v9277, %v9270
    %v10727 = vpack.c.b16 %v9278, %v9271
    %v10728 = vpack.c.b16 %v9279, %v9272
    %v10729 = vpack.c.b16 %v9287, %v9280
    %v10730 = vpack.c.b16 %v9288, %v9281
    %v10731 = vpack.c.b16 %v9289, %v9282
    %v10732 = vpack.c.b16 %v9290, %v9283
    %v10733 = vpack.c.b16 %v9291, %v9284
    %v10734 = vpack.c.b16 %v9292, %v9285
    %v10735 = vpack.c.b16 %v9293, %v9286
    %v10736 = vpack.c.b16 %v9301, %v9294
    %v10737 = vpack.c.b16 %v9302, %v9295
    %v10738 = vpack.c.b16 %v9303, %v9296
    %v10739 = vpack.c.b16 %v9304, %v9297
    %v10740 = vpack.c.b16 %v9305, %v9298
    %v10741 = vpack.c.b16 %v9306, %v9299
    %v10742 = vpack.c.b16 %v9307, %v9300
    %v10743 = vpack.c.b16 %v9315, %v9308
    %v10744 = vpack.c.b16 %v9316, %v9309
    %v10745 = vpack.c.b16 %v9317, %v9310
    %v10746 = vpack.c.b16 %v9318, %v9311
    %v10747 = vpack.c.b16 %v9319, %v9312
    %v10748 = vpack.c.b16 %v9320, %v9313
    %v10749 = vpack.c.b16 %v9321, %v9314
    %v10750 = vpack.c.b16 %v9329, %v9322
    %v10751 = vpack.c.b16 %v9330, %v9323
    %v10752 = vpack.c.b16 %v9331, %v9324
    %v10753 = vpack.c.b16 %v9332, %v9325
    %v10754 = vpack.c.b16 %v9333, %v9326
    %v10755 = vpack.c.b16 %v9334, %v9327
    %v10756 = vpack.c.b16 %v9335, %v9328
    %v10757 = vpack.c.b16 %v9343, %v9336
    %v10758 = vpack.c.b16 %v9344, %v9337
    %v10759 = vpack.c.b16 %v9345, %v9338
    %v10760 = vpack.c.b16 %v9346, %v9339
    %v10761 = vpack.c.b16 %v9347, %v9340
    %v10762 = vpack.c.b16 %v9348, %v9341
    %v10763 = vpack.c.b16 %v9349, %v9342
    %v10764 = vpack.c.b16 %v9357, %v9350
    %v10765 = vpack.c.b16 %v9358, %v9351
    %v10766 = vpack.c.b16 %v9359, %v9352
    %v10767 = vpack.c.b16 %v9360, %v9353
    %v10768 = vpack.c.b16 %v9361, %v9354
    %v10769 = vpack.c.b16 %v9362, %v9355
    %v10770 = vpack.c.b16 %v9363, %v9356
    %v10771 = vpack.c.b16 %v9371, %v9364
    %v10772 = vpack.c.b16 %v9372, %v9365
    %v10773 = vpack.c.b16 %v9373, %v9366
    %v10774 = vpack.c.b16 %v9374, %v9367
    %v10775 = vpack.c.b16 %v9375, %v9368
    %v10776 = vpack.c.b16 %v9376, %v9369
    %v10777 = vpack.c.b16 %v9377, %v9370
    %v10778 = vpack.c.b16 %v9385, %v9378
    %v10779 = vpack.c.b16 %v9386, %v9379
    %v10780 = vpack.c.b16 %v9387, %v9380
    %v10781 = vpack.c.b16 %v9388, %v9381
    %v10782 = vpack.c.b16 %v9389, %v9382
    %v10783 = vpack.c.b16 %v9390, %v9383
    %v10784 = vpack.c.b16 %v9391, %v9384
    %v10785 = vpack.c.b16 %v9399, %v9392
    %v10786 = vpack.c.b16 %v9400, %v9393
    %v10787 = vpack.c.b16 %v9401, %v9394
    %v10788 = vpack.c.b16 %v9402, %v9395
    %v10789 = vpack.c.b16 %v9403, %v9396
    %v10790 = vpack.c.b16 %v9404, %v9397
    %v10791 = vpack.c.b16 %v9405, %v9398
    %v10792 = vpack.c.b16 %v9413, %v9406
    %v10793 = vpack.c.b16 %v9414, %v9407
    %v10794 = vpack.c.b16 %v9415, %v9408
    %v10795 = vpack.c.b16 %v9416, %v9409
    %v10796 = vpack.c.b16 %v9417, %v9410
    %v10797 = vpack.c.b16 %v9418, %v9411
    %v10798 = vpack.c.b16 %v9419, %v9412
    %v10799 = vpack.c.b16 %v9427, %v9420
    %v10800 = vpack.c.b16 %v9428, %v9421
    %v10801 = vpack.c.b16 %v9429, %v9422
    %v10802 = vpack.c.b16 %v9430, %v9423
    %v10803 = vpack.c.b16 %v9431, %v9424
    %v10804 = vpack.c.b16 %v9432, %v9425
    %v10805 = vpack.c.b16 %v9433, %v9426
    %v10806 = vpack.c.b16 %v9441, %v9434
    %v10807 = vpack.c.b16 %v9442, %v9435
    %v10808 = vpack.c.b16 %v9443, %v9436
    %v10809 = vpack.c.b16 %v9444, %v9437
    %v10810 = vpack.c.b16 %v9445, %v9438
    %v10811 = vpack.c.b16 %v9446, %v9439
    %v10812 = vpack.c.b16 %v9447, %v9440
    %v10813 = vpack.c.b16 %v9455, %v9448
    %v10814 = vpack.c.b16 %v9456, %v9449
    %v10815 = vpack.c.b16 %v9457, %v9450
    %v10816 = vpack.c.b16 %v9458, %v9451
    %v10817 = vpack.c.b16 %v9459, %v9452
    %v10818 = vpack.c.b16 %v9460, %v9453
    %v10819 = vpack.c.b16 %v9461, %v9454
    %v10820 = vpack.c.b16 %v9469, %v9462
    %v10821 = vpack.c.b16 %v9470, %v9463
    %v10822 = vpack.c.b16 %v9471, %v9464
    %v10823 = vpack.c.b16 %v9472, %v9465
    %v10824 = vpack.c.b16 %v9473, %v9466
    %v10825 = vpack.c.b16 %v9474, %v9467
    %v10826 = vpack.c.b16 %v9475, %v9468
    %v10827 = vpack.c.b16 %v9483, %v9476
    %v10828 = vpack.c.b16 %v9484, %v9477
    %v10829 = vpack.c.b16 %v9485, %v9478
    %v10830 = vpack.c.b16 %v9486, %v9479
    %v10831 = vpack.c.b16 %v9487, %v9480
    %v10832 = vpack.c.b16 %v9488, %v9481
    %v10833 = vpack.c.b16 %v9489, %v9482
    %v10834 = vpack.c.b16 %v9497, %v9490
    %v10835 = vpack.c.b16 %v9498, %v9491
    %v10836 = vpack.c.b16 %v9499, %v9492
    %v10837 = vpack.c.b16 %v9500, %v9493
    %v10838 = vpack.c.b16 %v9501, %v9494
    %v10839 = vpack.c.b16 %v9502, %v9495
    %v10840 = vpack.c.b16 %v9503, %v9496
    %v10841 = vpack.c.b16 %v9511, %v9504
    %v10842 = vpack.c.b16 %v9512, %v9505
    %v10843 = vpack.c.b16 %v9513, %v9506
    %v10844 = vpack.c.b16 %v9514, %v9507
    %v10845 = vpack.c.b16 %v9515, %v9508
    %v10846 = vpack.c.b16 %v9516, %v9509
    %v10847 = vpack.c.b16 %v9517, %v9510
    %v10848 = vpack.c.b16 %v9525, %v9518
    %v10849 = vpack.c.b16 %v9526, %v9519
    %v10850 = vpack.c.b16 %v9527, %v9520
    %v10851 = vpack.c.b16 %v9528, %v9521
    %v10852 = vpack.c.b16 %v9529, %v9522
    %v10853 = vpack.c.b16 %v9530, %v9523
    %v10854 = vpack.c.b16 %v9531, %v9524
    %v10855 = vpack.c.b16 %v9539, %v9532
    %v10856 = vpack.c.b16 %v9540, %v9533
    %v10857 = vpack.c.b16 %v9541, %v9534
    %v10858 = vpack.c.b16 %v9542, %v9535
    %v10859 = vpack.c.b16 %v9543, %v9536
    %v10860 = vpack.c.b16 %v9544, %v9537
    %v10861 = vpack.c.b16 %v9545, %v9538
    %v10862 = vpack.c.b16 %v9553, %v9546
    %v10863 = vpack.c.b16 %v9554, %v9547
    %v10864 = vpack.c.b16 %v9555, %v9548
    %v10865 = vpack.c.b16 %v9556, %v9549
    %v10866 = vpack.c.b16 %v9557, %v9550
    %v10867 = vpack.c.b16 %v9558, %v9551
    %v10868 = vpack.c.b16 %v9559, %v9552
    %v10869 = vpack.c.b16 %v9567, %v9560
    %v10870 = vpack.c.b16 %v9568, %v9561
    %v10871 = vpack.c.b16 %v9569, %v9562
    %v10872 = vpack.c.b16 %v9570, %v9563
    %v10873 = vpack.c.b16 %v9571, %v9564
    %v10874 = vpack.c.b16 %v9572, %v9565
    %v10875 = vpack.c.b16 %v9573, %v9566
    %v10876 = vpack.c.b16 %v9581, %v9574
    %v10877 = vpack.c.b16 %v9582, %v9575
    %v10878 = vpack.c.b16 %v9583, %v9576
    %v10879 = vpack.c.b16 %v9584, %v9577
    %v10880 = vpack.c.b16 %v9585, %v9578
    %v10881 = vpack.c.b16 %v9586, %v9579
    %v10882 = vpack.c.b16 %v9587, %v9580
    %v10883 = vpack.c.b16 %v9595, %v9588
    %v10884 = vpack.c.b16 %v9596, %v9589
    %v10885 = vpack.c.b16 %v9597, %v9590
    %v10886 = vpack.c.b16 %v9598, %v9591
    %v10887 = vpack.c.b16 %v9599, %v9592
    %v10888 = vpack.c.b16 %v9600, %v9593
    %v10889 = vpack.c.b16 %v9601, %v9594
    %v10890 = vpack.c.b16 %v9609, %v9602
    %v10891 = vpack.c.b16 %v9610, %v9603
    %v10892 = vpack.c.b16 %v9611, %v9604
    %v10893 = vpack.c.b16 %v9612, %v9605
    %v10894 = vpack.c.b16 %v9613, %v9606
    %v10895 = vpack.c.b16 %v9614, %v9607
    %v10896 = vpack.c.b16 %v9615, %v9608
    %v10897 = vpack.c.b16 %v9623, %v9616
    %v10898 = vpack.c.b16 %v9624, %v9617
    %v10899 = vpack.c.b16 %v9625, %v9618
    %v10900 = vpack.c.b16 %v9626, %v9619
    %v10901 = vpack.c.b16 %v9627, %v9620
    %v10902 = vpack.c.b16 %v9628, %v9621
    %v10903 = vpack.c.b16 %v9629, %v9622
    %v10904 = vpack.c.b16 %v9637, %v9630
    %v10905 = vpack.c.b16 %v9638, %v9631
    %v10906 = vpack.c.b16 %v9639, %v9632
    %v10907 = vpack.c.b16 %v9640, %v9633
    %v10908 = vpack.c.b16 %v9641, %v9634
    %v10909 = vpack.c.b16 %v9642, %v9635
    %v10910 = vpack.c.b16 %v9643, %v9636
    %v10911 = vpack.c.b16 %v9651, %v9644
    %v10912 = vpack.c.b16 %v9652, %v9645
    %v10913 = vpack.c.b16 %v9653, %v9646
    %v10914 = vpack.c.b16 %v9654, %v9647
    %v10915 = vpack.c.b16 %v9655, %v9648
    %v10916 = vpack.c.b16 %v9656, %v9649
    %v10917 = vpack.c.b16 %v9657, %v9650
    %v10918 = vpack.c.b16 %v9665, %v9658
    %v10919 = vpack.c.b16 %v9666, %v9659
    %v10920 = vpack.c.b16 %v9667, %v9660
    %v10921 = vpack.c.b16 %v9668, %v9661
    %v10922 = vpack.c.b16 %v9669, %v9662
    %v10923 = vpack.c.b16 %v9670, %v9663
    %v10924 = vpack.c.b16 %v9671, %v9664
    %v10925 = vpack.c.b16 %v9679, %v9672
    %v10926 = vpack.c.b16 %v9680, %v9673
    %v10927 = vpack.c.b16 %v9681, %v9674
    %v10928 = vpack.c.b16 %v9682, %v9675
    %v10929 = vpack.c.b16 %v9683, %v9676
    %v10930 = vpack.c.b16 %v9684, %v9677
    %v10931 = vpack.c.b16 %v9685, %v9678
    %v10932 = vpack.c.b16 %v9693, %v9686
    %v10933 = vpack.c.b16 %v9694, %v9687
    %v10934 = vpack.c.b16 %v9695, %v9688
    %v10935 = vpack.c.b16 %v9696, %v9689
    %v10936 = vpack.c.b16 %v9697, %v9690
    %v10937 = vpack.c.b16 %v9698, %v9691
    %v10938 = vpack.c.b16 %v9699, %v9692
    %v10939 = vpack.c.b16 %v9707, %v9700
    %v10940 = vpack.c.b16 %v9708, %v9701
    %v10941 = vpack.c.b16 %v9709, %v9702
    %v10942 = vpack.c.b16 %v9710, %v9703
    %v10943 = vpack.c.b16 %v9711, %v9704
    %v10944 = vpack.c.b16 %v9712, %v9705
    %v10945 = vpack.c.b16 %v9713, %v9706
    %v10946 = vpack.c.b16 %v9721, %v9714
    %v10947 = vpack.c.b16 %v9722, %v9715
    %v10948 = vpack.c.b16 %v9723, %v9716
    %v10949 = vpack.c.b16 %v9724, %v9717
    %v10950 = vpack.c.b16 %v9725, %v9718
    %v10951 = vpack.c.b16 %v9726, %v9719
    %v10952 = vpack.c.b16 %v9727, %v9720
    %v10953 = vpack.c.b16 %v9735, %v9728
    %v10954 = vpack.c.b16 %v9736, %v9729
    %v10955 = vpack.c.b16 %v9737, %v9730
    %v10956 = vpack.c.b16 %v9738, %v9731
    %v10957 = vpack.c.b16 %v9739, %v9732
    %v10958 = vpack.c.b16 %v9740, %v9733
    %v10959 = vpack.c.b16 %v9741, %v9734
    %v10960 = vpack.c.b16 %v9749, %v9742
    %v10961 = vpack.c.b16 %v9750, %v9743
    %v10962 = vpack.c.b16 %v9751, %v9744
    %v10963 = vpack.c.b16 %v9752, %v9745
    %v10964 = vpack.c.b16 %v9753, %v9746
    %v10965 = vpack.c.b16 %v9754, %v9747
    %v10966 = vpack.c.b16 %v9755, %v9748
    %v10967 = vpack.c.b16 %v9763, %v9756
    %v10968 = vpack.c.b16 %v9764, %v9757
    %v10969 = vpack.c.b16 %v9765, %v9758
    %v10970 = vpack.c.b16 %v9766, %v9759
    %v10971 = vpack.c.b16 %v9767, %v9760
    %v10972 = vpack.c.b16 %v9768, %v9761
    %v10973 = vpack.c.b16 %v9769, %v9762
    %v10974 = vpack.c.b16 %v9777, %v9770
    %v10975 = vpack.c.b16 %v9778, %v9771
    %v10976 = vpack.c.b16 %v9779, %v9772
    %v10977 = vpack.c.b16 %v9780, %v9773
    %v10978 = vpack.c.b16 %v9781, %v9774
    %v10979 = vpack.c.b16 %v9782, %v9775
    %v10980 = vpack.c.b16 %v9783, %v9776
    %v10981 = vpack.c.b16 %v9791, %v9784
    %v10982 = vpack.c.b16 %v9792, %v9785
    %v10983 = vpack.c.b16 %v9793, %v9786
    %v10984 = vpack.c.b16 %v9794, %v9787
    %v10985 = vpack.c.b16 %v9795, %v9788
    %v10986 = vpack.c.b16 %v9796, %v9789
    %v10987 = vpack.c.b16 %v9797, %v9790
    %v10988 = vpack.c.b16 %v9805, %v9798
    %v10989 = vpack.c.b16 %v9806, %v9799
    %v10990 = vpack.c.b16 %v9807, %v9800
    %v10991 = vpack.c.b16 %v9808, %v9801
    %v10992 = vpack.c.b16 %v9809, %v9802
    %v10993 = vpack.c.b16 %v9810, %v9803
    %v10994 = vpack.c.b16 %v9811, %v9804
    %v10995 = vpack.c.b16 %v9819, %v9812
    %v10996 = vpack.c.b16 %v9820, %v9813
    %v10997 = vpack.c.b16 %v9821, %v9814
    %v10998 = vpack.c.b16 %v9822, %v9815
    %v10999 = vpack.c.b16 %v9823, %v9816
    %v11000 = vpack.c.b16 %v9824, %v9817
    %v11001 = vpack.c.b16 %v9825, %v9818
    %v11002 = vpack.c.b16 %v9833, %v9826
    %v11003 = vpack.c.b16 %v9834, %v9827
    %v11004 = vpack.c.b16 %v9835, %v9828
    %v11005 = vpack.c.b16 %v9836, %v9829
    %v11006 = vpack.c.b16 %v9837, %v9830
    %v11007 = vpack.c.b16 %v9838, %v9831
    %v11008 = vpack.c.b16 %v9839, %v9832
    %v11009 = vpack.c.b16 %v9847, %v9840
    %v11010 = vpack.c.b16 %v9848, %v9841
    %v11011 = vpack.c.b16 %v9849, %v9842
    %v11012 = vpack.c.b16 %v9850, %v9843
    %v11013 = vpack.c.b16 %v9851, %v9844
    %v11014 = vpack.c.b16 %v9852, %v9845
    %v11015 = vpack.c.b16 %v9853, %v9846
    %v11016 = vpack.c.b16 %v9861, %v9854
    %v11017 = vpack.c.b16 %v9862, %v9855
    %v11018 = vpack.c.b16 %v9863, %v9856
    %v11019 = vpack.c.b16 %v9864, %v9857
    %v11020 = vpack.c.b16 %v9865, %v9858
    %v11021 = vpack.c.b16 %v9866, %v9859
    %v11022 = vpack.c.b16 %v9867, %v9860
    %v11023 = vpack.c.b16 %v9875, %v9868
    %v11024 = vpack.c.b16 %v9876, %v9869
    %v11025 = vpack.c.b16 %v9877, %v9870
    %v11026 = vpack.c.b16 %v9878, %v9871
    %v11027 = vpack.c.b16 %v9879, %v9872
    %v11028 = vpack.c.b16 %v9880, %v9873
    %v11029 = vpack.c.b16 %v9881, %v9874
    %v11030 = vpack.c.b16 %v9889, %v9882
    %v11031 = vpack.c.b16 %v9890, %v9883
    %v11032 = vpack.c.b16 %v9891, %v9884
    %v11033 = vpack.c.b16 %v9892, %v9885
    %v11034 = vpack.c.b16 %v9893, %v9886
    %v11035 = vpack.c.b16 %v9894, %v9887
    %v11036 = vpack.c.b16 %v9895, %v9888
    %v11037 = vpack.c.b16 %v9903, %v9896
    %v11038 = vpack.c.b16 %v9904, %v9897
    %v11039 = vpack.c.b16 %v9905, %v9898
    %v11040 = vpack.c.b16 %v9906, %v9899
    %v11041 = vpack.c.b16 %v9907, %v9900
    %v11042 = vpack.c.b16 %v9908, %v9901
    %v11043 = vpack.c.b16 %v9909, %v9902
    %v11044 = vpack.c.b16 %v9917, %v9910
    %v11045 = vpack.c.b16 %v9918, %v9911
    %v11046 = vpack.c.b16 %v9919, %v9912
    %v11047 = vpack.c.b16 %v9920, %v9913
    %v11048 = vpack.c.b16 %v9921, %v9914
    %v11049 = vpack.c.b16 %v9922, %v9915
    %v11050 = vpack.c.b16 %v9923, %v9916
    %v11051 = vpack.c.b16 %v9931, %v9924
    %v11052 = vpack.c.b16 %v9932, %v9925
    %v11053 = vpack.c.b16 %v9933, %v9926
    %v11054 = vpack.c.b16 %v9934, %v9927
    %v11055 = vpack.c.b16 %v9935, %v9928
    %v11056 = vpack.c.b16 %v9936, %v9929
    %v11057 = vpack.c.b16 %v9937, %v9930
    %v11058 = vpack.c.b16 %v9945, %v9938
    %v11059 = vpack.c.b16 %v9946, %v9939
    %v11060 = vpack.c.b16 %v9947, %v9940
    %v11061 = vpack.c.b16 %v9948, %v9941
    %v11062 = vpack.c.b16 %v9949, %v9942
    %v11063 = vpack.c.b16 %v9950, %v9943
    %v11064 = vpack.c.b16 %v9951, %v9944
    %v11065 = vpack.c.b16 %v9959, %v9952
    %v11066 = vpack.c.b16 %v9960, %v9953
    %v11067 = vpack.c.b16 %v9961, %v9954
    %v11068 = vpack.c.b16 %v9962, %v9955
    %v11069 = vpack.c.b16 %v9963, %v9956
    %v11070 = vpack.c.b16 %v9964, %v9957
    %v11071 = vpack.c.b16 %v9965, %v9958
    %v11072 = vpack.c.b16 %v9973, %v9966
    %v11073 = vpack.c.b16 %v9974, %v9967
    %v11074 = vpack.c.b16 %v9975, %v9968
    %v11075 = vpack.c.b16 %v9976, %v9969
    %v11076 = vpack.c.b16 %v9977, %v9970
    %v11077 = vpack.c.b16 %v9978, %v9971
    %v11078 = vpack.c.b16 %v9979, %v9972
    %v11079 = vpack.c.b16 %v9987, %v9980
    %v11080 = vpack.c.b16 %v9988, %v9981
    %v11081 = vpack.c.b16 %v9989, %v9982
    %v11082 = vpack.c.b16 %v9990, %v9983
    %v11083 = vpack.c.b16 %v9991, %v9984
    %v11084 = vpack.c.b16 %v9992, %v9985
    %v11085 = vpack.c.b16 %v9993, %v9986
    %v11086 = vpack.c.b16 %v10001, %v9994
    %v11087 = vpack.c.b16 %v10002, %v9995
    %v11088 = vpack.c.b16 %v10003, %v9996
    %v11089 = vpack.c.b16 %v10004, %v9997
    %v11090 = vpack.c.b16 %v10005, %v9998
    %v11091 = vpack.c.b16 %v10006, %v9999
    %v11092 = vpack.c.b16 %v10007, %v10000
    %v11093 = vpack.c.b16 %v10015, %v10008
    %v11094 = vpack.c.b16 %v10016, %v10009
    %v11095 = vpack.c.b16 %v10017, %v10010
    %v11096 = vpack.c.b16 %v10018, %v10011
    %v11097 = vpack.c.b16 %v10019, %v10012
    %v11098 = vpack.c.b16 %v10020, %v10013
    %v11099 = vpack.c.b16 %v10021, %v10014
    %v11100 = vpack.c.b16 %v10029, %v10022
    %v11101 = vpack.c.b16 %v10030, %v10023
    %v11102 = vpack.c.b16 %v10031, %v10024
    %v11103 = vpack.c.b16 %v10032, %v10025
    %v11104 = vpack.c.b16 %v10033, %v10026
    %v11105 = vpack.c.b16 %v10034, %v10027
    %v11106 = vpack.c.b16 %v10035, %v10028
    %v11107 = vpack.c.b16 %v10043, %v10036
    %v11108 = vpack.c.b16 %v10044, %v10037
    %v11109 = vpack.c.b16 %v10045, %v10038
    %v11110 = vpack.c.b16 %v10046, %v10039
    %v11111 = vpack.c.b16 %v10047, %v10040
    %v11112 = vpack.c.b16 %v10048, %v10041
    %v11113 = vpack.c.b16 %v10049, %v10042
    %v11114 = vpack.c.b16 %v10057, %v10050
    %v11115 = vpack.c.b16 %v10058, %v10051
    %v11116 = vpack.c.b16 %v10059, %v10052
    %v11117 = vpack.c.b16 %v10060, %v10053
    %v11118 = vpack.c.b16 %v10061, %v10054
    %v11119 = vpack.c.b16 %v10062, %v10055
    %v11120 = vpack.c.b16 %v10063, %v10056
    %v11121 = vpack.c.b16 %v10071, %v10064
    %v11122 = vpack.c.b16 %v10072, %v10065
    %v11123 = vpack.c.b16 %v10073, %v10066
    %v11124 = vpack.c.b16 %v10074, %v10067
    %v11125 = vpack.c.b16 %v10075, %v10068
    %v11126 = vpack.c.b16 %v10076, %v10069
    %v11127 = vpack.c.b16 %v10077, %v10070
    %v11128 = vpack.c.b16 %v10085, %v10078
    %v11129 = vpack.c.b16 %v10086, %v10079
    %v11130 = vpack.c.b16 %v10087, %v10080
    %v11131 = vpack.c.b16 %v10088, %v10081
    %v11132 = vpack.c.b16 %v10089, %v10082
    %v11133 = vpack.c.b16 %v10090, %v10083
    %v11134 = vpack.c.b16 %v10091, %v10084
    %v11135 = vpack.c.b16 %v10099, %v10092
    %v11136 = vpack.c.b16 %v10100, %v10093
    %v11137 = vpack.c.b16 %v10101, %v10094
    %v11138 = vpack.c.b16 %v10102, %v10095
    %v11139 = vpack.c.b16 %v10103, %v10096
    %v11140 = vpack.c.b16 %v10104, %v10097
    %v11141 = vpack.c.b16 %v10105, %v10098
    %v11142 = vpack.c.b16 %v10113, %v10106
    %v11143 = vpack.c.b16 %v10114, %v10107
    %v11144 = vpack.c.b16 %v10115, %v10108
    %v11145 = vpack.c.b16 %v10116, %v10109
    %v11146 = vpack.c.b16 %v10117, %v10110
    %v11147 = vpack.c.b16 %v10118, %v10111
    %v11148 = vpack.c.b16 %v10119, %v10112
    %v11149 = vpack.c.b16 %v10127, %v10120
    %v11150 = vpack.c.b16 %v10128, %v10121
    %v11151 = vpack.c.b16 %v10129, %v10122
    %v11152 = vpack.c.b16 %v10130, %v10123
    %v11153 = vpack.c.b16 %v10131, %v10124
    %v11154 = vpack.c.b16 %v10132, %v10125
    %v11155 = vpack.c.b16 %v10133, %v10126
    %v11156 = vpack.c.b16 %v10141, %v10134
    %v11157 = vpack.c.b16 %v10142, %v10135
    %v11158 = vpack.c.b16 %v10143, %v10136
    %v11159 = vpack.c.b16 %v10144, %v10137
    %v11160 = vpack.c.b16 %v10145, %v10138
    %v11161 = vpack.c.b16 %v10146, %v10139
    %v11162 = vpack.c.b16 %v10147, %v10140
    %v11163 = vpack.c.b16 %v10155, %v10148
    %v11164 = vpack.c.b16 %v10156, %v10149
    %v11165 = vpack.c.b16 %v10157, %v10150
    %v11166 = vpack.c.b16 %v10158, %v10151
    %v11167 = vpack.c.b16 %v10159, %v10152
    %v11168 = vpack.c.b16 %v10160, %v10153
    %v11169 = vpack.c.b16 %v10161, %v10154
    %v11170 = vpack.c.b16 %v10169, %v10162
    %v11171 = vpack.c.b16 %v10170, %v10163
    %v11172 = vpack.c.b16 %v10171, %v10164
    %v11173 = vpack.c.b16 %v10172, %v10165
    %v11174 = vpack.c.b16 %v10173, %v10166
    %v11175 = vpack.c.b16 %v10174, %v10167
    %v11176 = vpack.c.b16 %v10175, %v10168
    %v11177 = vpack.c.b16 %v10183, %v10176
    %v11178 = vpack.c.b16 %v10184, %v10177
    %v11179 = vpack.c.b16 %v10185, %v10178
    %v11180 = vpack.c.b16 %v10186, %v10179
    %v11181 = vpack.c.b16 %v10187, %v10180
    %v11182 = vpack.c.b16 %v10188, %v10181
    %v11183 = vpack.c.b16 %v10189, %v10182
    %v11184 = vpack.c.b16 %v10197, %v10190
    %v11185 = vpack.c.b16 %v10198, %v10191
    %v11186 = vpack.c.b16 %v10199, %v10192
    %v11187 = vpack.c.b16 %v10200, %v10193
    %v11188 = vpack.c.b16 %v10201, %v10194
    %v11189 = vpack.c.b16 %v10202, %v10195
    %v11190 = vpack.c.b16 %v10203, %v10196
    %v11191 = vpack.c.b16 %v10211, %v10204
    %v11192 = vpack.c.b16 %v10212, %v10205
    %v11193 = vpack.c.b16 %v10213, %v10206
    %v11194 = vpack.c.b16 %v10214, %v10207
    %v11195 = vpack.c.b16 %v10215, %v10208
    %v11196 = vpack.c.b16 %v10216, %v10209
    %v11197 = vpack.c.b16 %v10217, %v10210
    %v11198 = vpack.c.b16 %v10225, %v10218
    %v11199 = vpack.c.b16 %v10226, %v10219
    %v11200 = vpack.c.b16 %v10227, %v10220
    %v11201 = vpack.c.b16 %v10228, %v10221
    %v11202 = vpack.c.b16 %v10229, %v10222
    %v11203 = vpack.c.b16 %v10230, %v10223
    %v11204 = vpack.c.b16 %v10231, %v10224
    %v11205 = vpack.c.b16 %v10239, %v10232
    %v11206 = vpack.c.b16 %v10240, %v10233
    %v11207 = vpack.c.b16 %v10241, %v10234
    %v11208 = vpack.c.b16 %v10242, %v10235
    %v11209 = vpack.c.b16 %v10243, %v10236
    %v11210 = vpack.c.b16 %v10244, %v10237
    %v11211 = vpack.c.b16 %v10245, %v10238
    %v11212 = vpack.c.b16 %v10253, %v10246
    %v11213 = vpack.c.b16 %v10254, %v10247
    %v11214 = vpack.c.b16 %v10255, %v10248
    %v11215 = vpack.c.b16 %v10256, %v10249
    %v11216 = vpack.c.b16 %v10257, %v10250
    %v11217 = vpack.c.b16 %v10258, %v10251
    %v11218 = vpack.c.b16 %v10259, %v10252
    %v11219 = vpack.c.b16 %v10267, %v10260
    %v11220 = vpack.c.b16 %v10268, %v10261
    %v11221 = vpack.c.b16 %v10269, %v10262
    %v11222 = vpack.c.b16 %v10270, %v10263
    %v11223 = vpack.c.b16 %v10271, %v10264
    %v11224 = vpack.c.b16 %v10272, %v10265
    %v11225 = vpack.c.b16 %v10273, %v10266
    %v11226 = vpack.c.b16 %v10281, %v10274
    %v11227 = vpack.c.b16 %v10282, %v10275
    %v11228 = vpack.c.b16 %v10283, %v10276
    %v11229 = vpack.c.b16 %v10284, %v10277
    %v11230 = vpack.c.b16 %v10285, %v10278
    %v11231 = vpack.c.b16 %v10286, %v10279
    %v11232 = vpack.c.b16 %v10287, %v10280
    %v11233 = vpack.c.b16 %v10295, %v10288
    %v11234 = vpack.c.b16 %v10296, %v10289
    %v11235 = vpack.c.b16 %v10297, %v10290
    %v11236 = vpack.c.b16 %v10298, %v10291
    %v11237 = vpack.c.b16 %v10299, %v10292
    %v11238 = vpack.c.b16 %v10300, %v10293
    %v11239 = vpack.c.b16 %v10301, %v10294
    %v11240 = vpack.c.b16 %v10309, %v10302
    %v11241 = vpack.c.b16 %v10310, %v10303
    %v11242 = vpack.c.b16 %v10311, %v10304
    %v11243 = vpack.c.b16 %v10312, %v10305
    %v11244 = vpack.c.b16 %v10313, %v10306
    %v11245 = vpack.c.b16 %v10314, %v10307
    %v11246 = vpack.c.b16 %v10315, %v10308
    %v11247 = vpack.c.b16 %v10323, %v10316
    %v11248 = vpack.c.b16 %v10324, %v10317
    %v11249 = vpack.c.b16 %v10325, %v10318
    %v11250 = vpack.c.b16 %v10326, %v10319
    %v11251 = vpack.c.b16 %v10327, %v10320
    %v11252 = vpack.c.b16 %v10328, %v10321
    %v11253 = vpack.c.b16 %v10329, %v10322
    %v11254 = vpack.c.b16 %v10337, %v10330
    %v11255 = vpack.c.b16 %v10338, %v10331
    %v11256 = vpack.c.b16 %v10339, %v10332
    %v11257 = vpack.c.b16 %v10340, %v10333
    %v11258 = vpack.c.b16 %v10341, %v10334
    %v11259 = vpack.c.b16 %v10342, %v10335
    %v11260 = vpack.c.b16 %v10343, %v10336
    %v11261 = vpack.c.b16 %v10351, %v10344
    %v11262 = vpack.c.b16 %v10352, %v10345
    %v11263 = vpack.c.b16 %v10353, %v10346
    %v11264 = vpack.c.b16 %v10354, %v10347
    %v11265 = vpack.c.b16 %v10355, %v10348
    %v11266 = vpack.c.b16 %v10356, %v10349
    %v11267 = vpack.c.b16 %v10357, %v10350
    %v11268 = vpack.c.b16 %v10365, %v10358
    %v11269 = vpack.c.b16 %v10366, %v10359
    %v11270 = vpack.c.b16 %v10367, %v10360
    %v11271 = vpack.c.b16 %v10368, %v10361
    %v11272 = vpack.c.b16 %v10369, %v10362
    %v11273 = vpack.c.b16 %v10370, %v10363
    %v11274 = vpack.c.b16 %v10371, %v10364
    %v11275 = vpack.c.b16 %v10379, %v10372
    %v11276 = vpack.c.b16 %v10380, %v10373
    %v11277 = vpack.c.b16 %v10381, %v10374
    %v11278 = vpack.c.b16 %v10382, %v10375
    %v11279 = vpack.c.b16 %v10383, %v10376
    %v11280 = vpack.c.b16 %v10384, %v10377
    %v11281 = vpack.c.b16 %v10385, %v10378
    %v11282 = vpack.c.b16 %v10393, %v10386
    %v11283 = vpack.c.b16 %v10394, %v10387
    %v11284 = vpack.c.b16 %v10395, %v10388
    %v11285 = vpack.c.b16 %v10396, %v10389
    %v11286 = vpack.c.b16 %v10397, %v10390
    %v11287 = vpack.c.b16 %v10398, %v10391
    %v11288 = vpack.c.b16 %v10399, %v10392
    %v11289 = vpack.c.b16 %v10407, %v10400
    %v11290 = vpack.c.b16 %v10408, %v10401
    %v11291 = vpack.c.b16 %v10409, %v10402
    %v11292 = vpack.c.b16 %v10410, %v10403
    %v11293 = vpack.c.b16 %v10411, %v10404
    %v11294 = vpack.c.b16 %v10412, %v10405
    %v11295 = vpack.c.b16 %v10413, %v10406
    %v11296 = vpack.c.b16 %v10421, %v10414
    %v11297 = vpack.c.b16 %v10422, %v10415
    %v11298 = vpack.c.b16 %v10423, %v10416
    %v11299 = vpack.c.b16 %v10424, %v10417
    %v11300 = vpack.c.b16 %v10425, %v10418
    %v11301 = vpack.c.b16 %v10426, %v10419
    %v11302 = vpack.c.b16 %v10427, %v10420
    %v11303 = vpack.c.b16 %v10435, %v10428
    %v11304 = vpack.c.b16 %v10436, %v10429
    %v11305 = vpack.c.b16 %v10437, %v10430
    %v11306 = vpack.c.b16 %v10438, %v10431
    %v11307 = vpack.c.b16 %v10439, %v10432
    %v11308 = vpack.c.b16 %v10440, %v10433
    %v11309 = vpack.c.b16 %v10441, %v10434
    %v11310 = vpack.c.b16 %v10449, %v10442
    %v11311 = vpack.c.b16 %v10450, %v10443
    %v11312 = vpack.c.b16 %v10451, %v10444
    %v11313 = vpack.c.b16 %v10452, %v10445
    %v11314 = vpack.c.b16 %v10453, %v10446
    %v11315 = vpack.c.b16 %v10454, %v10447
    %v11316 = vpack.c.b16 %v10455, %v10448
    %v11317 = vpack.c.b16 %v10463, %v10456
    %v11318 = vpack.c.b16 %v10464, %v10457
    %v11319 = vpack.c.b16 %v10465, %v10458
    %v11320 = vpack.c.b16 %v10466, %v10459
    %v11321 = vpack.c.b16 %v10467, %v10460
    %v11322 = vpack.c.b16 %v10468, %v10461
    %v11323 = vpack.c.b16 %v10469, %v10462
    %v11324 = vpack.c.b16 %v10477, %v10470
    %v11325 = vpack.c.b16 %v10478, %v10471
    %v11326 = vpack.c.b16 %v10479, %v10472
    %v11327 = vpack.c.b16 %v10480, %v10473
    %v11328 = vpack.c.b16 %v10481, %v10474
    %v11329 = vpack.c.b16 %v10482, %v10475
    %v11330 = vpack.c.b16 %v10483, %v10476
    %v11331 = vpack.c.b16 %v10491, %v10484
    %v11332 = vpack.c.b16 %v10492, %v10485
    %v11333 = vpack.c.b16 %v10493, %v10486
    %v11334 = vpack.c.b16 %v10494, %v10487
    %v11335 = vpack.c.b16 %v10495, %v10488
    %v11336 = vpack.c.b16 %v10496, %v10489
    %v11337 = vpack.c.b16 %v10497, %v10490
    %v11338 = vpack.c.b16 %v10505, %v10498
    %v11339 = vpack.c.b16 %v10506, %v10499
    %v11340 = vpack.c.b16 %v10507, %v10500
    %v11341 = vpack.c.b16 %v10508, %v10501
    %v11342 = vpack.c.b16 %v10509, %v10502
    %v11343 = vpack.c.b16 %v10510, %v10503
    %v11344 = vpack.c.b16 %v10511, %v10504
    %v11345 = vpack.c.b16 %v10519, %v10512
    %v11346 = vpack.c.b16 %v10520, %v10513
    %v11347 = vpack.c.b16 %v10521, %v10514
    %v11348 = vpack.c.b16 %v10522, %v10515
    %v11349 = vpack.c.b16 %v10523, %v10516
    %v11350 = vpack.c.b16 %v10524, %v10517
    %v11351 = vpack.c.b16 %v10525, %v10518
    %v11352 = vpack.c.b16 %v10533, %v10526
    %v11353 = vpack.c.b16 %v10534, %v10527
    %v11354 = vpack.c.b16 %v10535, %v10528
    %v11355 = vpack.c.b16 %v10536, %v10529
    %v11356 = vpack.c.b16 %v10537, %v10530
    %v11357 = vpack.c.b16 %v10538, %v10531
    %v11358 = vpack.c.b16 %v10539, %v10532
    %v11359 = vpack.c.b16 %v10547, %v10540
    %v11360 = vpack.c.b16 %v10548, %v10541
    %v11361 = vpack.c.b16 %v10549, %v10542
    %v11362 = vpack.c.b16 %v10550, %v10543
    %v11363 = vpack.c.b16 %v10551, %v10544
    %v11364 = vpack.c.b16 %v10552, %v10545
    %v11365 = vpack.c.b16 %v10553, %v10546
    %v11366 = vpack.c.b16 %v10561, %v10554
    %v11367 = vpack.c.b16 %v10562, %v10555
    %v11368 = vpack.c.b16 %v10563, %v10556
    %v11369 = vpack.c.b16 %v10564, %v10557
    %v11370 = vpack.c.b16 %v10565, %v10558
    %v11371 = vpack.c.b16 %v10566, %v10559
    %v11372 = vpack.c.b16 %v10567, %v10560
    %v11373 = vpack.c.b16 %v10575, %v10568
    %v11374 = vpack.c.b16 %v10576, %v10569
    %v11375 = vpack.c.b16 %v10577, %v10570
    %v11376 = vpack.c.b16 %v10578, %v10571
    %v11377 = vpack.c.b16 %v10579, %v10572
    %v11378 = vpack.c.b16 %v10580, %v10573
    %v11379 = vpack.c.b16 %v10581, %v10574
    %v11380 = vpack.c.b16 %v10589, %v10582
    %v11381 = vpack.c.b16 %v10590, %v10583
    %v11382 = vpack.c.b16 %v10591, %v10584
    %v11383 = vpack.c.b16 %v10592, %v10585
    %v11384 = vpack.c.b16 %v10593, %v10586
    %v11385 = vpack.c.b16 %v10594, %v10587
    %v11386 = vpack.c.b16 %v10595, %v10588
    %v11387 = vpack.c.b16 %v10603, %v10596
    %v11388 = vpack.c.b16 %v10604, %v10597
    %v11389 = vpack.c.b16 %v10605, %v10598
    %v11390 = vpack.c.b16 %v10606, %v10599
    %v11391 = vpack.c.b16 %v10607, %v10600
    %v11392 = vpack.c.b16 %v10608, %v10601
    %v11393 = vpack.c.b16 %v10609, %v10602
    %v11394 = vpack.c.b16 %v10617, %v10610
    %v11395 = vpack.c.b16 %v10618, %v10611
    %v11396 = vpack.c.b16 %v10619, %v10612
    %v11397 = vpack.c.b16 %v10620, %v10613
    %v11398 = vpack.c.b16 %v10621, %v10614
    %v11399 = vpack.c.b16 %v10622, %v10615
    %v11400 = vpack.c.b16 %v10623, %v10616
    %v11401 = vpack.c.b16 %v10631, %v10624
    %v11402 = vpack.c.b16 %v10632, %v10625
    %v11403 = vpack.c.b16 %v10633, %v10626
    %v11404 = vpack.c.b16 %v10634, %v10627
    %v11405 = vpack.c.b16 %v10635, %v10628
    %v11406 = vpack.c.b16 %v10636, %v10629
    %v11407 = vpack.c.b16 %v10637, %v10630
    %v11408 = vpack.c.b16 %v10645, %v10638
    %v11409 = vpack.c.b16 %v10646, %v10639
    %v11410 = vpack.c.b16 %v10647, %v10640
    %v11411 = vpack.c.b16 %v10648, %v10641
    %v11412 = vpack.c.b16 %v10649, %v10642
    %v11413 = vpack.c.b16 %v10650, %v10643
    %v11414 = vpack.c.b16 %v10651, %v10644
    %v11415 = vpack.c.b16 %v10659, %v10652
    %v11416 = vpack.c.b16 %v10660, %v10653
    %v11417 = vpack.c.b16 %v10661, %v10654
    %v11418 = vpack.c.b16 %v10662, %v10655
    %v11419 = vpack.c.b16 %v10663, %v10656
    %v11420 = vpack.c.b16 %v10664, %v10657
    %v11421 = vpack.c.b16 %v10665, %v10658
    %v11422 = vpack.c.b16 %v10673, %v10666
    %v11423 = vpack.c.b16 %v10674, %v10667
    %v11424 = vpack.c.b16 %v10675, %v10668
    %v11425 = vpack.c.b16 %v10676, %v10669
    %v11426 = vpack.c.b16 %v10677, %v10670
    %v11427 = vpack.c.b16 %v10678, %v10671
    %v11428 = vpack.c.b16 %v10679, %v10672
    %v11429 = vpack.c.b16 %v10687, %v10680
    %v11430 = vpack.c.b16 %v10688, %v10681
    %v11431 = vpack.c.b16 %v10689, %v10682
    %v11432 = vpack.c.b16 %v10690, %v10683
    %v11433 = vpack.c.b16 %v10691, %v10684
    %v11434 = vpack.c.b16 %v10692, %v10685
    %v11435 = vpack.c.b16 %v10693, %v10686
    %v11436 = vpack.c.b16 %v10701, %v10694
    %v11437 = vpack.c.b16 %v10702, %v10695
    %v11438 = vpack.c.b16 %v10703, %v10696
    %v11439 = vpack.c.b16 %v10704, %v10697
    %v11440 = vpack.c.b16 %v10705, %v10698
    %v11441 = vpack.c.b16 %v10706, %v10699
    %v11442 = vpack.c.b16 %v10707, %v10700
    %v11443 = vpack.c.b16 %v10715, %v10708
    %v11444 = vpack.c.b16 %v10716, %v10709
    %v11445 = vpack.c.b16 %v10717, %v10710
    %v11446 = vpack.c.b16 %v10718, %v10711
    %v11447 = vpack.c.b16 %v10719, %v10712
    %v11448 = vpack.c.b16 %v10720, %v10713
    %v11449 = vpack.c.b16 %v10721, %v10714
    %12178 = vmatprep.subr.bf16.mxu0 %v10723
    %12179 = vmatpush1.bf16.msra.mxu0 %v10722
    %12180 = vmatprep.subr.bf16.mxu0 %v10730
    %12181 = vmatpush1.bf16.msra.mxu0 %v10729
    %12182 = vmatprep.subr.bf16.mxu0 %v10737
    %12183 = vmatpush1.bf16.msra.mxu0 %v10736
    %12184 = vmatprep.subr.bf16.mxu0 %v10744
    %12185 = vmatpush1.bf16.msra.mxu0 %v10743
    %12186 = vmatprep.subr.bf16.mxu0 %v10751
    %12187 = vmatpush1.bf16.msra.mxu0 %v10750
    %12188 = vmatprep.subr.bf16.mxu0 %v10758
    %12189 = vmatpush1.bf16.msra.mxu0 %v10757
    %12190 = vmatprep.subr.bf16.mxu0 %v10765
    %12191 = vmatpush1.bf16.msra.mxu0 %v10764
    %12192 = vmatprep.subr.bf16.mxu0 %v10772
    %12193 = vmatpush1.bf16.msra.mxu0 %v10771
    %12194 = vmatprep.subr.bf16.mxu0 %v10779
    %12195 = vmatpush1.bf16.msra.mxu0 %v10778
    %12196 = vmatprep.subr.bf16.mxu0 %v10786
    %12197 = vmatpush1.bf16.msra.mxu0 %v10785
    %12198 = vmatprep.subr.bf16.mxu0 %v10793
    %12199 = vmatpush1.bf16.msra.mxu0 %v10792
    %12200 = vmatprep.subr.bf16.mxu0 %v10800
    %12201 = vmatpush1.bf16.msra.mxu0 %v10799
    %12202 = vmatprep.subr.bf16.mxu0 %v10807
    %12203 = vmatpush1.bf16.msra.mxu0 %v10806
    %12204 = vmatprep.subr.bf16.mxu0 %v10814
    %12205 = vmatpush1.bf16.msra.mxu0 %v10813
    %12206 = vmatprep.subr.bf16.mxu0 %v10821
    %12207 = vmatpush1.bf16.msra.mxu0 %v10820
    %12208 = vmatprep.subr.bf16.mxu0 %v10828
    %12209 = vmatpush1.bf16.msra.mxu0 %v10827
    %12210 = vmatprep.mubr.bf16.mxu0 %v7553
    %12211 = vmatmul.mubr.bf16.gmra.mrb[0].mxu0 %v7552
    %v12212 = vpop.f32.mrb[0].mxu0
    %v12213 = vadd.f32 %v8402, %v12212
    %v12214 = vpop.f32.mrb[0].mxu0
    %v12215 = vadd.f32 %v8406, %v12214
    %v12216 = vpop.f32.mrb[0].mxu0
    %v12217 = vpop.f32.mrb[0].mxu0
    %12218 = vdwg.mxu0
    %12219 = vmatprep.subr.bf16.mxu0 %v10835
    %12220 = vmatpush1.bf16.msra.mxu0 %v10834
    %12221 = vmatprep.subr.bf16.mxu0 %v10842
    %12222 = vmatpush1.bf16.msra.mxu0 %v10841
    %12223 = vmatprep.subr.bf16.mxu0 %v10849
    %12224 = vmatpush1.bf16.msra.mxu0 %v10848
    %12225 = vmatprep.subr.bf16.mxu0 %v10856
    %12226 = vmatpush1.bf16.msra.mxu0 %v10855
    %12227 = vmatprep.subr.bf16.mxu0 %v10863
    %12228 = vmatpush1.bf16.msra.mxu0 %v10862
    %12229 = vmatprep.subr.bf16.mxu0 %v10870
    %12230 = vmatpush1.bf16.msra.mxu0 %v10869
    %12231 = vmatprep.subr.bf16.mxu0 %v10877
    %12232 = vmatpush1.bf16.msra.mxu0 %v10876
    %12233 = vmatprep.subr.bf16.mxu0 %v10884
    %12234 = vmatpush1.bf16.msra.mxu0 %v10883
    %12235 = vmatprep.subr.bf16.mxu0 %v10891
    %12236 = vmatpush1.bf16.msra.mxu0 %v10890
    %12237 = vmatprep.subr.bf16.mxu0 %v10898
    %12238 = vmatpush1.bf16.msra.mxu0 %v10897
    %12239 = vmatprep.subr.bf16.mxu0 %v10905
    %12240 = vmatpush1.bf16.msra.mxu0 %v10904
    %12241 = vmatprep.subr.bf16.mxu0 %v10912
    %12242 = vmatpush1.bf16.msra.mxu0 %v10911
    %12243 = vmatprep.subr.bf16.mxu0 %v10919
    %12244 = vmatpush1.bf16.msra.mxu0 %v10918
    %12245 = vmatprep.subr.bf16.mxu0 %v10926
    %12246 = vmatpush1.bf16.msra.mxu0 %v10925
    %12247 = vmatprep.subr.bf16.mxu0 %v10933
    %12248 = vmatpush1.bf16.msra.mxu0 %v10932
    %12249 = vmatprep.subr.bf16.mxu0 %v10940
    %12250 = vmatpush1.bf16.msra.mxu0 %v10939
    %12251 = vmatprep.mubr.bf16.mxu0 %v7555
    %12252 = vmatmul.mubr.bf16.gmra.mrb[0].mxu0 %v7554
    %v12253 = vpop.f32.mrb[0].mxu0
    %v12254 = vadd.f32 %v12213, %v12253
    %v12255 = vpop.f32.mrb[0].mxu0
    %v12256 = vadd.f32 %v12215, %v12255
    %v12257 = vpop.f32.mrb[0].mxu0
    %v12258 = vpop.f32.mrb[0].mxu0
    %12259 = vdwg.mxu0
    %12260 = vmatprep.subr.bf16.mxu0 %v10947
    %12261 = vmatpush1.bf16.msra.mxu0 %v10946
    %12262 = vmatprep.subr.bf16.mxu0 %v10954
    %12263 = vmatpush1.bf16.msra.mxu0 %v10953
    %12264 = vmatprep.subr.bf16.mxu0 %v10961
    %12265 = vmatpush1.bf16.msra.mxu0 %v10960
    %12266 = vmatprep.subr.bf16.mxu0 %v10968
    %12267 = vmatpush1.bf16.msra.mxu0 %v10967
    %12268 = vmatprep.subr.bf16.mxu0 %v10975
    %12269 = vmatpush1.bf16.msra.mxu0 %v10974
    %12270 = vmatprep.subr.bf16.mxu0 %v10982
    %12271 = vmatpush1.bf16.msra.mxu0 %v10981
    %12272 = vmatprep.subr.bf16.mxu0 %v10989
    %12273 = vmatpush1.bf16.msra.mxu0 %v10988
    %12274 = vmatprep.subr.bf16.mxu0 %v10996
    %12275 = vmatpush1.bf16.msra.mxu0 %v10995
    %12276 = vmatprep.subr.bf16.mxu0 %v11003
    %12277 = vmatpush1.bf16.msra.mxu0 %v11002
    %12278 = vmatprep.subr.bf16.mxu0 %v11010
    %12279 = vmatpush1.bf16.msra.mxu0 %v11009
    %12280 = vmatprep.subr.bf16.mxu0 %v11017
    %12281 = vmatpush1.bf16.msra.mxu0 %v11016
    %12282 = vmatprep.subr.bf16.mxu0 %v11024
    %12283 = vmatpush1.bf16.msra.mxu0 %v11023
    %12284 = vmatprep.subr.bf16.mxu0 %v11031
    %12285 = vmatpush1.bf16.msra.mxu0 %v11030
    %12286 = vmatprep.subr.bf16.mxu0 %v11038
    %12287 = vmatpush1.bf16.msra.mxu0 %v11037
    %12288 = vmatprep.subr.bf16.mxu0 %v11045
    %12289 = vmatpush1.bf16.msra.mxu0 %v11044
    %12290 = vmatprep.subr.bf16.mxu0 %v11052
    %12291 = vmatpush1.bf16.msra.mxu0 %v11051
    %12292 = vmatprep.mubr.bf16.mxu0 %v7557
    %12293 = vmatmul.mubr.bf16.gmra.mrb[0].mxu0 %v7556
    %v12294 = vpop.f32.mrb[0].mxu0
    %v12295 = vadd.f32 %v12254, %v12294
    %v12296 = vpop.f32.mrb[0].mxu0
    %v12297 = vadd.f32 %v12256, %v12296
    %v12298 = vpop.f32.mrb[0].mxu0
    %v12299 = vpop.f32.mrb[0].mxu0
    %12300 = vdwg.mxu0
    %12301 = vmatprep.subr.bf16.mxu0 %v11059
    %12302 = vmatpush1.bf16.msra.mxu0 %v11058
    %12303 = vmatprep.subr.bf16.mxu0 %v11066
    %12304 = vmatpush1.bf16.msra.mxu0 %v11065
    %12305 = vmatprep.subr.bf16.mxu0 %v11073
    %12306 = vmatpush1.bf16.msra.mxu0 %v11072
    %12307 = vmatprep.subr.bf16.mxu0 %v11080
    %12308 = vmatpush1.bf16.msra.mxu0 %v11079
    %12309 = vmatprep.subr.bf16.mxu0 %v11087
    %12310 = vmatpush1.bf16.msra.mxu0 %v11086
    %12311 = vmatprep.subr.bf16.mxu0 %v11094
    %12312 = vmatpush1.bf16.msra.mxu0 %v11093
    %12313 = vmatprep.subr.bf16.mxu0 %v11101
    %12314 = vmatpush1.bf16.msra.mxu0 %v11100
    %12315 = vmatprep.subr.bf16.mxu0 %v11108
    %12316 = vmatpush1.bf16.msra.mxu0 %v11107
    %12317 = vmatprep.subr.bf16.mxu0 %v11115
    %12318 = vmatpush1.bf16.msra.mxu0 %v11114
    %12319 = vmatprep.subr.bf16.mxu0 %v11122
    %12320 = vmatpush1.bf16.msra.mxu0 %v11121
    %12321 = vmatprep.subr.bf16.mxu0 %v11129
    %12322 = vmatpush1.bf16.msra.mxu0 %v11128
    %12323 = vmatprep.subr.bf16.mxu0 %v11136
    %12324 = vmatpush1.bf16.msra.mxu0 %v11135
    %12325 = vmatprep.subr.bf16.mxu0 %v11143
    %12326 = vmatpush1.bf16.msra.mxu0 %v11142
    %12327 = vmatprep.subr.bf16.mxu0 %v11150
    %12328 = vmatpush1.bf16.msra.mxu0 %v11149
    %12329 = vmatprep.subr.bf16.mxu0 %v11157
    %12330 = vmatpush1.bf16.msra.mxu0 %v11156
    %12331 = vmatprep.subr.bf16.mxu0 %v11164
    %12332 = vmatpush1.bf16.msra.mxu0 %v11163
    %12333 = vmatprep.mubr.bf16.mxu0 %v7559
    %12334 = vmatmul.mubr.bf16.gmra.mrb[0].mxu0 %v7558
    %v12335 = vpop.f32.mrb[0].mxu0
    %v12336 = vadd.f32 %v12295, %v12335
    %v12337 = vpop.f32.mrb[0].mxu0
    %v12338 = vadd.f32 %v12297, %v12337
    %v12339 = vpop.f32.mrb[0].mxu0
    %v12340 = vpop.f32.mrb[0].mxu0
    %12341 = vdwg.mxu0
    %12342 = vmatprep.subr.bf16.mxu0 %v11171
    %12343 = vmatpush1.bf16.msra.mxu0 %v11170
    %12344 = vmatprep.subr.bf16.mxu0 %v11178
    %12345 = vmatpush1.bf16.msra.mxu0 %v11177
    %12346 = vmatprep.subr.bf16.mxu0 %v11185
    %12347 = vmatpush1.bf16.msra.mxu0 %v11184
    %12348 = vmatprep.subr.bf16.mxu0 %v11192
    %12349 = vmatpush1.bf16.msra.mxu0 %v11191
    %12350 = vmatprep.subr.bf16.mxu0 %v11199
    %12351 = vmatpush1.bf16.msra.mxu0 %v11198
    %12352 = vmatprep.subr.bf16.mxu0 %v11206
    %12353 = vmatpush1.bf16.msra.mxu0 %v11205
    %12354 = vmatprep.subr.bf16.mxu0 %v11213
    %12355 = vmatpush1.bf16.msra.mxu0 %v11212
    %12356 = vmatprep.subr.bf16.mxu0 %v11220
    %12357 = vmatpush1.bf16.msra.mxu0 %v11219
    %12358 = vmatprep.subr.bf16.mxu0 %v11227
    %12359 = vmatpush1.bf16.msra.mxu0 %v11226
    %12360 = vmatprep.subr.bf16.mxu0 %v11234
    %12361 = vmatpush1.bf16.msra.mxu0 %v11233
    %12362 = vmatprep.subr.bf16.mxu0 %v11241
    %12363 = vmatpush1.bf16.msra.mxu0 %v11240
    %12364 = vmatprep.subr.bf16.mxu0 %v11248
    %12365 = vmatpush1.bf16.msra.mxu0 %v11247
    %12366 = vmatprep.subr.bf16.mxu0 %v11255
    %12367 = vmatpush1.bf16.msra.mxu0 %v11254
    %12368 = vmatprep.subr.bf16.mxu0 %v11262
    %12369 = vmatpush1.bf16.msra.mxu0 %v11261
    %12370 = vmatprep.subr.bf16.mxu0 %v11269
    %12371 = vmatpush1.bf16.msra.mxu0 %v11268
    %12372 = vmatprep.subr.bf16.mxu0 %v11276
    %12373 = vmatpush1.bf16.msra.mxu0 %v11275
    %12374 = vmatprep.mubr.bf16.mxu0 %v7561
    %12375 = vmatmul.mubr.bf16.gmra.mrb[0].mxu0 %v7560
    %v12376 = vpop.f32.mrb[0].mxu0
    %v12377 = vadd.f32 %v12336, %v12376
    %v12378 = vpop.f32.mrb[0].mxu0
    %v12379 = vadd.f32 %v12338, %v12378
    %v12380 = vpop.f32.mrb[0].mxu0
    %v12381 = vpop.f32.mrb[0].mxu0
    %12382 = vdwg.mxu0
    %12383 = vmatprep.subr.bf16.mxu0 %v11283
    %12384 = vmatpush1.bf16.msra.mxu0 %v11282
    %12385 = vmatprep.subr.bf16.mxu0 %v11290
    %12386 = vmatpush1.bf16.msra.mxu0 %v11289
    %12387 = vmatprep.subr.bf16.mxu0 %v11297
    %12388 = vmatpush1.bf16.msra.mxu0 %v11296
    %12389 = vmatprep.subr.bf16.mxu0 %v11304
    %12390 = vmatpush1.bf16.msra.mxu0 %v11303
    %12391 = vmatprep.subr.bf16.mxu0 %v11311
    %12392 = vmatpush1.bf16.msra.mxu0 %v11310
    %12393 = vmatprep.subr.bf16.mxu0 %v11318
    %12394 = vmatpush1.bf16.msra.mxu0 %v11317
    %12395 = vmatprep.subr.bf16.mxu0 %v11325
    %12396 = vmatpush1.bf16.msra.mxu0 %v11324
    %12397 = vmatprep.subr.bf16.mxu0 %v11332
    %12398 = vmatpush1.bf16.msra.mxu0 %v11331
    %12399 = vmatprep.subr.bf16.mxu0 %v11339
    %12400 = vmatpush1.bf16.msra.mxu0 %v11338
    %12401 = vmatprep.subr.bf16.mxu0 %v11346
    %12402 = vmatpush1.bf16.msra.mxu0 %v11345
    %12403 = vmatprep.subr.bf16.mxu0 %v11353
    %12404 = vmatpush1.bf16.msra.mxu0 %v11352
    %12405 = vmatprep.subr.bf16.mxu0 %v11360
    %12406 = vmatpush1.bf16.msra.mxu0 %v11359
    %12407 = vmatprep.subr.bf16.mxu0 %v11367
    %12408 = vmatpush1.bf16.msra.mxu0 %v11366
    %12409 = vmatprep.subr.bf16.mxu0 %v11374
    %12410 = vmatpush1.bf16.msra.mxu0 %v11373
    %12411 = vmatprep.subr.bf16.mxu0 %v11381
    %12412 = vmatpush1.bf16.msra.mxu0 %v11380
    %12413 = vmatprep.subr.bf16.mxu0 %v11388
    %12414 = vmatpush1.bf16.msra.mxu0 %v11387
    %12415 = vmatprep.mubr.bf16.mxu0 %v7563
    %12416 = vmatmul.mubr.bf16.gmra.mrb[0].mxu0 %v7562
    %v12417 = vpop.f32.mrb[0].mxu0
    %v12418 = vadd.f32 %v12377, %v12417
    %v12419 = vpop.f32.mrb[0].mxu0
    %v12420 = vadd.f32 %v12379, %v12419
    %v12421 = vpop.f32.mrb[0].mxu0
    %v12422 = vpop.f32.mrb[0].mxu0
    %12423 = vdwg.mxu0
    %12424 = vmatprep.subr.bf16.mxu0 %v11395
    %12425 = vmatpush1.bf16.msra.mxu0 %v11394
    %12426 = vmatprep.subr.bf16.mxu0 %v11402
    %12427 = vmatpush1.bf16.msra.mxu0 %v11401
    %12428 = vmatprep.subr.bf16.mxu0 %v11409
    %12429 = vmatpush1.bf16.msra.mxu0 %v11408
    %12430 = vmatprep.subr.bf16.mxu0 %v11416
    %12431 = vmatpush1.bf16.msra.mxu0 %v11415
    %12432 = vmatprep.subr.bf16.mxu0 %v11423
    %12433 = vmatpush1.bf16.msra.mxu0 %v11422
    %12434 = vmatprep.subr.bf16.mxu0 %v11430
    %12435 = vmatpush1.bf16.msra.mxu0 %v11429
    %12436 = vmatprep.subr.bf16.mxu0 %v11437
    %12437 = vmatpush1.bf16.msra.mxu0 %v11436
    %12438 = vmatprep.subr.bf16.mxu0 %v11444
    %12439 = vmatpush1.bf16.msra.mxu0 %v11443
    %12440 = vmatprep.subr.bf16.mxu0 0
    %12441 = vmatpush1.bf16.msra.mxu0 0
    %12442 = vmatprep.subr.bf16.mxu0 0
    %12443 = vmatpush1.bf16.msra.mxu0 0
    %12444 = vmatprep.subr.bf16.mxu0 0
    %12445 = vmatpush1.bf16.msra.mxu0 0
    %12446 = vmatprep.subr.bf16.mxu0 0
    %12447 = vmatpush1.bf16.msra.mxu0 0
    %12448 = vmatprep.subr.bf16.mxu0 0
    %12449 = vmatpush1.bf16.msra.mxu0 0
    %12450 = vmatprep.subr.bf16.mxu0 0
    %12451 = vmatpush1.bf16.msra.mxu0 0
    %12452 = vmatprep.subr.bf16.mxu0 0
    %12453 = vmatpush1.bf16.msra.mxu0 0
    %12454 = vmatprep.subr.bf16.mxu0 0
    %12455 = vmatpush1.bf16.msra.mxu0 0
    %12456 = vmatprep.mubr.bf16.mxu0 0
    %12457 = vmatmul.mubr.bf16.gmra.mrb[0].mxu0 %v7564
    %v12458 = vpop.f32.mrb[0].mxu0
    %v12459 = vadd.f32 %v12418, %v12458
    %v12460 = vpop.f32.mrb[0].mxu0
    %v12461 = vadd.f32 %v12420, %v12460
    %v12462 = vpop.f32.mrb[0].mxu0
    %v12463 = vpop.f32.mrb[0].mxu0
    %12464 = vdwg.mxu0
    %12465 = vmatprep.subr.bf16.mxu0 %v10725
    %12466 = vmatpush1.bf16.msra.mxu0 %v10724
    %12467 = vmatprep.subr.bf16.mxu0 %v10732
    %12468 = vmatpush1.bf16.msra.mxu0 %v10731
    %12469 = vmatprep.subr.bf16.mxu0 %v10739
    %12470 = vmatpush1.bf16.msra.mxu0 %v10738
    %12471 = vmatprep.subr.bf16.mxu0 %v10746
    %12472 = vmatpush1.bf16.msra.mxu0 %v10745
    %12473 = vmatprep.subr.bf16.mxu0 %v10753
    %12474 = vmatpush1.bf16.msra.mxu0 %v10752
    %12475 = vmatprep.subr.bf16.mxu0 %v10760
    %12476 = vmatpush1.bf16.msra.mxu0 %v10759
    %12477 = vmatprep.subr.bf16.mxu0 %v10767
    %12478 = vmatpush1.bf16.msra.mxu0 %v10766
    %12479 = vmatprep.subr.bf16.mxu0 %v10774
    %12480 = vmatpush1.bf16.msra.mxu0 %v10773
    %12481 = vmatprep.subr.bf16.mxu0 %v10781
    %12482 = vmatpush1.bf16.msra.mxu0 %v10780
    %12483 = vmatprep.subr.bf16.mxu0 %v10788
    %12484 = vmatpush1.bf16.msra.mxu0 %v10787
    %12485 = vmatprep.subr.bf16.mxu0 %v10795
    %12486 = vmatpush1.bf16.msra.mxu0 %v10794
    %12487 = vmatprep.subr.bf16.mxu0 %v10802
    %12488 = vmatpush1.bf16.msra.mxu0 %v10801
    %12489 = vmatprep.subr.bf16.mxu0 %v10809
    %12490 = vmatpush1.bf16.msra.mxu0 %v10808
    %12491 = vmatprep.subr.bf16.mxu0 %v10816
    %12492 = vmatpush1.bf16.msra.mxu0 %v10815
    %12493 = vmatprep.subr.bf16.mxu0 %v10823
    %12494 = vmatpush1.bf16.msra.mxu0 %v10822
    %12495 = vmatprep.subr.bf16.mxu0 %v10830
    %12496 = vmatpush1.bf16.msra.mxu0 %v10829
    %12497 = vmatprep.mubr.bf16.mxu0 %v7553
    %12498 = vmatmul.mubr.bf16.gmra.mrb[0].mxu0 %v7552
    %v12499 = vpop.f32.mrb[0].mxu0
    %v12500 = vadd.f32 %v8410, %v12499
    %v12501 = vpop.f32.mrb[0].mxu0
    %v12502 = vadd.f32 %v8414, %v12501
    %v12503 = vpop.f32.mrb[0].mxu0
    %v12504 = vpop.f32.mrb[0].mxu0
    %12505 = vdwg.mxu0
    %12506 = vmatprep.subr.bf16.mxu0 %v10837
    %12507 = vmatpush1.bf16.msra.mxu0 %v10836
    %12508 = vmatprep.subr.bf16.mxu0 %v10844
    %12509 = vmatpush1.bf16.msra.mxu0 %v10843
    %12510 = vmatprep.subr.bf16.mxu0 %v10851
    %12511 = vmatpush1.bf16.msra.mxu0 %v10850
    %12512 = vmatprep.subr.bf16.mxu0 %v10858
    %12513 = vmatpush1.bf16.msra.mxu0 %v10857
    %12514 = vmatprep.subr.bf16.mxu0 %v10865
    %12515 = vmatpush1.bf16.msra.mxu0 %v10864
    %12516 = vmatprep.subr.bf16.mxu0 %v10872
    %12517 = vmatpush1.bf16.msra.mxu0 %v10871
    %12518 = vmatprep.subr.bf16.mxu0 %v10879
    %12519 = vmatpush1.bf16.msra.mxu0 %v10878
    %12520 = vmatprep.subr.bf16.mxu0 %v10886
    %12521 = vmatpush1.bf16.msra.mxu0 %v10885
    %12522 = vmatprep.subr.bf16.mxu0 %v10893
    %12523 = vmatpush1.bf16.msra.mxu0 %v10892
    %12524 = vmatprep.subr.bf16.mxu0 %v10900
    %12525 = vmatpush1.bf16.msra.mxu0 %v10899
    %12526 = vmatprep.subr.bf16.mxu0 %v10907
    %12527 = vmatpush1.bf16.msra.mxu0 %v10906
    %12528 = vmatprep.subr.bf16.mxu0 %v10914
    %12529 = vmatpush1.bf16.msra.mxu0 %v10913
    %12530 = vmatprep.subr.bf16.mxu0 %v10921
    %12531 = vmatpush1.bf16.msra.mxu0 %v10920
    %12532 = vmatprep.subr.bf16.mxu0 %v10928
    %12533 = vmatpush1.bf16.msra.mxu0 %v10927
    %12534 = vmatprep.subr.bf16.mxu0 %v10935
    %12535 = vmatpush1.bf16.msra.mxu0 %v10934
    %12536 = vmatprep.subr.bf16.mxu0 %v10942
    %12537 = vmatpush1.bf16.msra.mxu0 %v10941
    %12538 = vmatprep.mubr.bf16.mxu0 %v7555
    %12539 = vmatmul.mubr.bf16.gmra.mrb[0].mxu0 %v7554
    %v12540 = vpop.f32.mrb[0].mxu0
    %v12541 = vadd.f32 %v12500, %v12540
    %v12542 = vpop.f32.mrb[0].mxu0
    %v12543 = vadd.f32 %v12502, %v12542
    %v12544 = vpop.f32.mrb[0].mxu0
    %v12545 = vpop.f32.mrb[0].mxu0
    %12546 = vdwg.mxu0
    %12547 = vmatprep.subr.bf16.mxu0 %v10949
    %12548 = vmatpush1.bf16.msra.mxu0 %v10948
    %12549 = vmatprep.subr.bf16.mxu0 %v10956
    %12550 = vmatpush1.bf16.msra.mxu0 %v10955
    %12551 = vmatprep.subr.bf16.mxu0 %v10963
    %12552 = vmatpush1.bf16.msra.mxu0 %v10962
    %12553 = vmatprep.subr.bf16.mxu0 %v10970
    %12554 = vmatpush1.bf16.msra.mxu0 %v10969
    %12555 = vmatprep.subr.bf16.mxu0 %v10977
    %12556 = vmatpush1.bf16.msra.mxu0 %v10976
    %12557 = vmatprep.subr.bf16.mxu0 %v10984
    %12558 = vmatpush1.bf16.msra.mxu0 %v10983
    %12559 = vmatprep.subr.bf16.mxu0 %v10991
    %12560 = vmatpush1.bf16.msra.mxu0 %v10990
    %12561 = vmatprep.subr.bf16.mxu0 %v10998
    %12562 = vmatpush1.bf16.msra.mxu0 %v10997
    %12563 = vmatprep.subr.bf16.mxu0 %v11005
    %12564 = vmatpush1.bf16.msra.mxu0 %v11004
    %12565 = vmatprep.subr.bf16.mxu0 %v11012
    %12566 = vmatpush1.bf16.msra.mxu0 %v11011
    %12567 = vmatprep.subr.bf16.mxu0 %v11019
    %12568 = vmatpush1.bf16.msra.mxu0 %v11018
    %12569 = vmatprep.subr.bf16.mxu0 %v11026
    %12570 = vmatpush1.bf16.msra.mxu0 %v11025
    %12571 = vmatprep.subr.bf16.mxu0 %v11033
    %12572 = vmatpush1.bf16.msra.mxu0 %v11032
    %12573 = vmatprep.subr.bf16.mxu0 %v11040
    %12574 = vmatpush1.bf16.msra.mxu0 %v11039
    %12575 = vmatprep.subr.bf16.mxu0 %v11047
    %12576 = vmatpush1.bf16.msra.mxu0 %v11046
    %12577 = vmatprep.subr.bf16.mxu0 %v11054
    %12578 = vmatpush1.bf16.msra.mxu0 %v11053
    %12579 = vmatprep.mubr.bf16.mxu0 %v7557
    %12580 = vmatmul.mubr.bf16.gmra.mrb[0].mxu0 %v7556
    %v12581 = vpop.f32.mrb[0].mxu0
    %v12582 = vadd.f32 %v12541, %v12581
    %v12583 = vpop.f32.mrb[0].mxu0
    %v12584 = vadd.f32 %v12543, %v12583
    %v12585 = vpop.f32.mrb[0].mxu0
    %v12586 = vpop.f32.mrb[0].mxu0
    %12587 = vdwg.mxu0
    %12588 = vmatprep.subr.bf16.mxu0 %v11061
    %12589 = vmatpush1.bf16.msra.mxu0 %v11060
    %12590 = vmatprep.subr.bf16.mxu0 %v11068
    %12591 = vmatpush1.bf16.msra.mxu0 %v11067
    %12592 = vmatprep.subr.bf16.mxu0 %v11075
    %12593 = vmatpush1.bf16.msra.mxu0 %v11074
    %12594 = vmatprep.subr.bf16.mxu0 %v11082
    %12595 = vmatpush1.bf16.msra.mxu0 %v11081
    %12596 = vmatprep.subr.bf16.mxu0 %v11089
    %12597 = vmatpush1.bf16.msra.mxu0 %v11088
    %12598 = vmatprep.subr.bf16.mxu0 %v11096
    %12599 = vmatpush1.bf16.msra.mxu0 %v11095
    %12600 = vmatprep.subr.bf16.mxu0 %v11103
    %12601 = vmatpush1.bf16.msra.mxu0 %v11102
    %12602 = vmatprep.subr.bf16.mxu0 %v11110
    %12603 = vmatpush1.bf16.msra.mxu0 %v11109
    %12604 = vmatprep.subr.bf16.mxu0 %v11117
    %12605 = vmatpush1.bf16.msra.mxu0 %v11116
    %12606 = vmatprep.subr.bf16.mxu0 %v11124
    %12607 = vmatpush1.bf16.msra.mxu0 %v11123
    %12608 = vmatprep.subr.bf16.mxu0 %v11131
    %12609 = vmatpush1.bf16.msra.mxu0 %v11130
    %12610 = vmatprep.subr.bf16.mxu0 %v11138
    %12611 = vmatpush1.bf16.msra.mxu0 %v11137
    %12612 = vmatprep.subr.bf16.mxu0 %v11145
    %12613 = vmatpush1.bf16.msra.mxu0 %v11144
    %12614 = vmatprep.subr.bf16.mxu0 %v11152
    %12615 = vmatpush1.bf16.msra.mxu0 %v11151
    %12616 = vmatprep.subr.bf16.mxu0 %v11159
    %12617 = vmatpush1.bf16.msra.mxu0 %v11158
    %12618 = vmatprep.subr.bf16.mxu0 %v11166
    %12619 = vmatpush1.bf16.msra.mxu0 %v11165
    %12620 = vmatprep.mubr.bf16.mxu0 %v7559
    %12621 = vmatmul.mubr.bf16.gmra.mrb[0].mxu0 %v7558
    %v12622 = vpop.f32.mrb[0].mxu0
    %v12623 = vadd.f32 %v12582, %v12622
    %v12624 = vpop.f32.mrb[0].mxu0
    %v12625 = vadd.f32 %v12584, %v12624
    %v12626 = vpop.f32.mrb[0].mxu0
    %v12627 = vpop.f32.mrb[0].mxu0
    %12628 = vdwg.mxu0
    %12629 = vmatprep.subr.bf16.mxu0 %v11173
    %12630 = vmatpush1.bf16.msra.mxu0 %v11172
    %12631 = vmatprep.subr.bf16.mxu0 %v11180
    %12632 = vmatpush1.bf16.msra.mxu0 %v11179
    %12633 = vmatprep.subr.bf16.mxu0 %v11187
    %12634 = vmatpush1.bf16.msra.mxu0 %v11186
    %12635 = vmatprep.subr.bf16.mxu0 %v11194
    %12636 = vmatpush1.bf16.msra.mxu0 %v11193
    %12637 = vmatprep.subr.bf16.mxu0 %v11201
    %12638 = vmatpush1.bf16.msra.mxu0 %v11200
    %12639 = vmatprep.subr.bf16.mxu0 %v11208
    %12640 = vmatpush1.bf16.msra.mxu0 %v11207
    %12641 = vmatprep.subr.bf16.mxu0 %v11215
    %12642 = vmatpush1.bf16.msra.mxu0 %v11214
    %12643 = vmatprep.subr.bf16.mxu0 %v11222
    %12644 = vmatpush1.bf16.msra.mxu0 %v11221
    %12645 = vmatprep.subr.bf16.mxu0 %v11229
    %12646 = vmatpush1.bf16.msra.mxu0 %v11228
    %12647 = vmatprep.subr.bf16.mxu0 %v11236
    %12648 = vmatpush1.bf16.msra.mxu0 %v11235
    %12649 = vmatprep.subr.bf16.mxu0 %v11243
    %12650 = vmatpush1.bf16.msra.mxu0 %v11242
    %12651 = vmatprep.subr.bf16.mxu0 %v11250
    %12652 = vmatpush1.bf16.msra.mxu0 %v11249
    %12653 = vmatprep.subr.bf16.mxu0 %v11257
    %12654 = vmatpush1.bf16.msra.mxu0 %v11256
    %12655 = vmatprep.subr.bf16.mxu0 %v11264
    %12656 = vmatpush1.bf16.msra.mxu0 %v11263
    %12657 = vmatprep.subr.bf16.mxu0 %v11271
    %12658 = vmatpush1.bf16.msra.mxu0 %v11270
    %12659 = vmatprep.subr.bf16.mxu0 %v11278
    %12660 = vmatpush1.bf16.msra.mxu0 %v11277
    %12661 = vmatprep.mubr.bf16.mxu0 %v7561
    %12662 = vmatmul.mubr.bf16.gmra.mrb[0].mxu0 %v7560
    %v12663 = vpop.f32.mrb[0].mxu0
    %v12664 = vadd.f32 %v12623, %v12663
    %v12665 = vpop.f32.mrb[0].mxu0
    %v12666 = vadd.f32 %v12625, %v12665
    %v12667 = vpop.f32.mrb[0].mxu0
    %v12668 = vpop.f32.mrb[0].mxu0
    %12669 = vdwg.mxu0
    %12670 = vmatprep.subr.bf16.mxu0 %v11285
    %12671 = vmatpush1.bf16.msra.mxu0 %v11284
    %12672 = vmatprep.subr.bf16.mxu0 %v11292
    %12673 = vmatpush1.bf16.msra.mxu0 %v11291
    %12674 = vmatprep.subr.bf16.mxu0 %v11299
    %12675 = vmatpush1.bf16.msra.mxu0 %v11298
    %12676 = vmatprep.subr.bf16.mxu0 %v11306
    %12677 = vmatpush1.bf16.msra.mxu0 %v11305
    %12678 = vmatprep.subr.bf16.mxu0 %v11313
    %12679 = vmatpush1.bf16.msra.mxu0 %v11312
    %12680 = vmatprep.subr.bf16.mxu0 %v11320
    %12681 = vmatpush1.bf16.msra.mxu0 %v11319
    %12682 = vmatprep.subr.bf16.mxu0 %v11327
    %12683 = vmatpush1.bf16.msra.mxu0 %v11326
    %12684 = vmatprep.subr.bf16.mxu0 %v11334
    %12685 = vmatpush1.bf16.msra.mxu0 %v11333
    %12686 = vmatprep.subr.bf16.mxu0 %v11341
    %12687 = vmatpush1.bf16.msra.mxu0 %v11340
    %12688 = vmatprep.subr.bf16.mxu0 %v11348
    %12689 = vmatpush1.bf16.msra.mxu0 %v11347
    %12690 = vmatprep.subr.bf16.mxu0 %v11355
    %12691 = vmatpush1.bf16.msra.mxu0 %v11354
    %12692 = vmatprep.subr.bf16.mxu0 %v11362
    %12693 = vmatpush1.bf16.msra.mxu0 %v11361
    %12694 = vmatprep.subr.bf16.mxu0 %v11369
    %12695 = vmatpush1.bf16.msra.mxu0 %v11368
    %12696 = vmatprep.subr.bf16.mxu0 %v11376
    %12697 = vmatpush1.bf16.msra.mxu0 %v11375
    %12698 = vmatprep.subr.bf16.mxu0 %v11383
    %12699 = vmatpush1.bf16.msra.mxu0 %v11382
    %12700 = vmatprep.subr.bf16.mxu0 %v11390
    %12701 = vmatpush1.bf16.msra.mxu0 %v11389
    %12702 = vmatprep.mubr.bf16.mxu0 %v7563
    %12703 = vmatmul.mubr.bf16.gmra.mrb[0].mxu0 %v7562
    %v12704 = vpop.f32.mrb[0].mxu0
    %v12705 = vadd.f32 %v12664, %v12704
    %v12706 = vpop.f32.mrb[0].mxu0
    %v12707 = vadd.f32 %v12666, %v12706
    %v12708 = vpop.f32.mrb[0].mxu0
    %v12709 = vpop.f32.mrb[0].mxu0
    %12710 = vdwg.mxu0
    %12711 = vmatprep.subr.bf16.mxu0 %v11397
    %12712 = vmatpush1.bf16.msra.mxu0 %v11396
    %12713 = vmatprep.subr.bf16.mxu0 %v11404
    %12714 = vmatpush1.bf16.msra.mxu0 %v11403
    %12715 = vmatprep.subr.bf16.mxu0 %v11411
    %12716 = vmatpush1.bf16.msra.mxu0 %v11410
    %12717 = vmatprep.subr.bf16.mxu0 %v11418
    %12718 = vmatpush1.bf16.msra.mxu0 %v11417
    %12719 = vmatprep.subr.bf16.mxu0 %v11425
    %12720 = vmatpush1.bf16.msra.mxu0 %v11424
    %12721 = vmatprep.subr.bf16.mxu0 %v11432
    %12722 = vmatpush1.bf16.msra.mxu0 %v11431
    %12723 = vmatprep.subr.bf16.mxu0 %v11439
    %12724 = vmatpush1.bf16.msra.mxu0 %v11438
    %12725 = vmatprep.subr.bf16.mxu0 %v11446
    %12726 = vmatpush1.bf16.msra.mxu0 %v11445
    %12727 = vmatprep.subr.bf16.mxu0 0
    %12728 = vmatpush1.bf16.msra.mxu0 0
    %12729 = vmatprep.subr.bf16.mxu0 0
    %12730 = vmatpush1.bf16.msra.mxu0 0
    %12731 = vmatprep.subr.bf16.mxu0 0
    %12732 = vmatpush1.bf16.msra.mxu0 0
    %12733 = vmatprep.subr.bf16.mxu0 0
    %12734 = vmatpush1.bf16.msra.mxu0 0
    %12735 = vmatprep.subr.bf16.mxu0 0
    %12736 = vmatpush1.bf16.msra.mxu0 0
    %12737 = vmatprep.subr.bf16.mxu0 0
    %12738 = vmatpush1.bf16.msra.mxu0 0
    %12739 = vmatprep.subr.bf16.mxu0 0
    %12740 = vmatpush1.bf16.msra.mxu0 0
    %12741 = vmatprep.subr.bf16.mxu0 0
    %12742 = vmatpush1.bf16.msra.mxu0 0
    %12743 = vmatprep.mubr.bf16.mxu0 0
    %12744 = vmatmul.mubr.bf16.gmra.mrb[0].mxu0 %v7564
    %v12745 = vpop.f32.mrb[0].mxu0
    %v12746 = vadd.f32 %v12705, %v12745
    %v12747 = vpop.f32.mrb[0].mxu0
    %v12748 = vadd.f32 %v12707, %v12747
    %v12749 = vpop.f32.mrb[0].mxu0
    %v12750 = vpop.f32.mrb[0].mxu0
    %12751 = vdwg.mxu0
    %12752 = vmatprep.subr.bf16.mxu0 %v10727
    %12753 = vmatpush1.bf16.msra.mxu0 %v10726
    %12754 = vmatprep.subr.bf16.mxu0 %v10734
    %12755 = vmatpush1.bf16.msra.mxu0 %v10733
    %12756 = vmatprep.subr.bf16.mxu0 %v10741
    %12757 = vmatpush1.bf16.msra.mxu0 %v10740
    %12758 = vmatprep.subr.bf16.mxu0 %v10748
    %12759 = vmatpush1.bf16.msra.mxu0 %v10747
    %12760 = vmatprep.subr.bf16.mxu0 %v10755
    %12761 = vmatpush1.bf16.msra.mxu0 %v10754
    %12762 = vmatprep.subr.bf16.mxu0 %v10762
    %12763 = vmatpush1.bf16.msra.mxu0 %v10761
    %12764 = vmatprep.subr.bf16.mxu0 %v10769
    %12765 = vmatpush1.bf16.msra.mxu0 %v10768
    %12766 = vmatprep.subr.bf16.mxu0 %v10776
    %12767 = vmatpush1.bf16.msra.mxu0 %v10775
    %12768 = vmatprep.subr.bf16.mxu0 %v10783
    %12769 = vmatpush1.bf16.msra.mxu0 %v10782
    %12770 = vmatprep.subr.bf16.mxu0 %v10790
    %12771 = vmatpush1.bf16.msra.mxu0 %v10789
    %12772 = vmatprep.subr.bf16.mxu0 %v10797
    %12773 = vmatpush1.bf16.msra.mxu0 %v10796
    %12774 = vmatprep.subr.bf16.mxu0 %v10804
    %12775 = vmatpush1.bf16.msra.mxu0 %v10803
    %12776 = vmatprep.subr.bf16.mxu0 %v10811
    %12777 = vmatpush1.bf16.msra.mxu0 %v10810
    %12778 = vmatprep.subr.bf16.mxu0 %v10818
    %12779 = vmatpush1.bf16.msra.mxu0 %v10817
    %12780 = vmatprep.subr.bf16.mxu0 %v10825
    %12781 = vmatpush1.bf16.msra.mxu0 %v10824
    %12782 = vmatprep.subr.bf16.mxu0 %v10832
    %12783 = vmatpush1.bf16.msra.mxu0 %v10831
    %12784 = vmatprep.mubr.bf16.mxu0 %v7553
    %12785 = vmatmul.mubr.bf16.gmra.mrb[0].mxu0 %v7552
    %v12786 = vpop.f32.mrb[0].mxu0
    %v12787 = vadd.f32 %v8418, %v12786
    %v12788 = vpop.f32.mrb[0].mxu0
    %v12789 = vadd.f32 %v8422, %v12788
    %v12790 = vpop.f32.mrb[0].mxu0
    %v12791 = vpop.f32.mrb[0].mxu0
    %12792 = vdwg.mxu0
    %12793 = vmatprep.subr.bf16.mxu0 %v10839
    %12794 = vmatpush1.bf16.msra.mxu0 %v10838
    %12795 = vmatprep.subr.bf16.mxu0 %v10846
    %12796 = vmatpush1.bf16.msra.mxu0 %v10845
    %12797 = vmatprep.subr.bf16.mxu0 %v10853
    %12798 = vmatpush1.bf16.msra.mxu0 %v10852
    %12799 = vmatprep.subr.bf16.mxu0 %v10860
    %12800 = vmatpush1.bf16.msra.mxu0 %v10859
    %12801 = vmatprep.subr.bf16.mxu0 %v10867
    %12802 = vmatpush1.bf16.msra.mxu0 %v10866
    %12803 = vmatprep.subr.bf16.mxu0 %v10874
    %12804 = vmatpush1.bf16.msra.mxu0 %v10873
    %12805 = vmatprep.subr.bf16.mxu0 %v10881
    %12806 = vmatpush1.bf16.msra.mxu0 %v10880
    %12807 = vmatprep.subr.bf16.mxu0 %v10888
    %12808 = vmatpush1.bf16.msra.mxu0 %v10887
    %12809 = vmatprep.subr.bf16.mxu0 %v10895
    %12810 = vmatpush1.bf16.msra.mxu0 %v10894
    %12811 = vmatprep.subr.bf16.mxu0 %v10902
    %12812 = vmatpush1.bf16.msra.mxu0 %v10901
    %12813 = vmatprep.subr.bf16.mxu0 %v10909
    %12814 = vmatpush1.bf16.msra.mxu0 %v10908
    %12815 = vmatprep.subr.bf16.mxu0 %v10916
    %12816 = vmatpush1.bf16.msra.mxu0 %v10915
    %12817 = vmatprep.subr.bf16.mxu0 %v10923
    %12818 = vmatpush1.bf16.msra.mxu0 %v10922
    %12819 = vmatprep.subr.bf16.mxu0 %v10930
    %12820 = vmatpush1.bf16.msra.mxu0 %v10929
    %12821 = vmatprep.subr.bf16.mxu0 %v10937
    %12822 = vmatpush1.bf16.msra.mxu0 %v10936
    %12823 = vmatprep.subr.bf16.mxu0 %v10944
    %12824 = vmatpush1.bf16.msra.mxu0 %v10943
    %12825 = vmatprep.mubr.bf16.mxu0 %v7555
    %12826 = vmatmul.mubr.bf16.gmra.mrb[0].mxu0 %v7554
    %v12827 = vpop.f32.mrb[0].mxu0
    %v12828 = vadd.f32 %v12787, %v12827
    %v12829 = vpop.f32.mrb[0].mxu0
    %v12830 = vadd.f32 %v12789, %v12829
    %v12831 = vpop.f32.mrb[0].mxu0
    %v12832 = vpop.f32.mrb[0].mxu0
    %12833 = vdwg.mxu0
    %12834 = vmatprep.subr.bf16.mxu0 %v10951
    %12835 = vmatpush1.bf16.msra.mxu0 %v10950
    %12836 = vmatprep.subr.bf16.mxu0 %v10958
    %12837 = vmatpush1.bf16.msra.mxu0 %v10957
    %12838 = vmatprep.subr.bf16.mxu0 %v10965
    %12839 = vmatpush1.bf16.msra.mxu0 %v10964
    %12840 = vmatprep.subr.bf16.mxu0 %v10972
    %12841 = vmatpush1.bf16.msra.mxu0 %v10971
    %12842 = vmatprep.subr.bf16.mxu0 %v10979
    %12843 = vmatpush1.bf16.msra.mxu0 %v10978
    %12844 = vmatprep.subr.bf16.mxu0 %v10986
    %12845 = vmatpush1.bf16.msra.mxu0 %v10985
    %12846 = vmatprep.subr.bf16.mxu0 %v10993
    %12847 = vmatpush1.bf16.msra.mxu0 %v10992
    %12848 = vmatprep.subr.bf16.mxu0 %v11000
    %12849 = vmatpush1.bf16.msra.mxu0 %v10999
    %12850 = vmatprep.subr.bf16.mxu0 %v11007
    %12851 = vmatpush1.bf16.msra.mxu0 %v11006
    %12852 = vmatprep.subr.bf16.mxu0 %v11014
    %12853 = vmatpush1.bf16.msra.mxu0 %v11013
    %12854 = vmatprep.subr.bf16.mxu0 %v11021
    %12855 = vmatpush1.bf16.msra.mxu0 %v11020
    %12856 = vmatprep.subr.bf16.mxu0 %v11028
    %12857 = vmatpush1.bf16.msra.mxu0 %v11027
    %12858 = vmatprep.subr.bf16.mxu0 %v11035
    %12859 = vmatpush1.bf16.msra.mxu0 %v11034
    %12860 = vmatprep.subr.bf16.mxu0 %v11042
    %12861 = vmatpush1.bf16.msra.mxu0 %v11041
    %12862 = vmatprep.subr.bf16.mxu0 %v11049
    %12863 = vmatpush1.bf16.msra.mxu0 %v11048
    %12864 = vmatprep.subr.bf16.mxu0 %v11056
    %12865 = vmatpush1.bf16.msra.mxu0 %v11055
    %12866 = vmatprep.mubr.bf16.mxu0 %v7557
    %12867 = vmatmul.mubr.bf16.gmra.mrb[0].mxu0 %v7556
    %v12868 = vpop.f32.mrb[0].mxu0
    %v12869 = vadd.f32 %v12828, %v12868
    %v12870 = vpop.f32.mrb[0].mxu0
    %v12871 = vadd.f32 %v12830, %v12870
    %v12872 = vpop.f32.mrb[0].mxu0
    %v12873 = vpop.f32.mrb[0].mxu0
    %12874 = vdwg.mxu0
    %12875 = vmatprep.subr.bf16.mxu0 %v11063
    %12876 = vmatpush1.bf16.msra.mxu0 %v11062
    %12877 = vmatprep.subr.bf16.mxu0 %v11070
    %12878 = vmatpush1.bf16.msra.mxu0 %v11069
    %12879 = vmatprep.subr.bf16.mxu0 %v11077
    %12880 = vmatpush1.bf16.msra.mxu0 %v11076
    %12881 = vmatprep.subr.bf16.mxu0 %v11084
    %12882 = vmatpush1.bf16.msra.mxu0 %v11083
    %12883 = vmatprep.subr.bf16.mxu0 %v11091
    %12884 = vmatpush1.bf16.msra.mxu0 %v11090
    %12885 = vmatprep.subr.bf16.mxu0 %v11098
    %12886 = vmatpush1.bf16.msra.mxu0 %v11097
    %12887 = vmatprep.subr.bf16.mxu0 %v11105
    %12888 = vmatpush1.bf16.msra.mxu0 %v11104
    %12889 = vmatprep.subr.bf16.mxu0 %v11112
    %12890 = vmatpush1.bf16.msra.mxu0 %v11111
    %12891 = vmatprep.subr.bf16.mxu0 %v11119
    %12892 = vmatpush1.bf16.msra.mxu0 %v11118
    %12893 = vmatprep.subr.bf16.mxu0 %v11126
    %12894 = vmatpush1.bf16.msra.mxu0 %v11125
    %12895 = vmatprep.subr.bf16.mxu0 %v11133
    %12896 = vmatpush1.bf16.msra.mxu0 %v11132
    %12897 = vmatprep.subr.bf16.mxu0 %v11140
    %12898 = vmatpush1.bf16.msra.mxu0 %v11139
    %12899 = vmatprep.subr.bf16.mxu0 %v11147
    %12900 = vmatpush1.bf16.msra.mxu0 %v11146
    %12901 = vmatprep.subr.bf16.mxu0 %v11154
    %12902 = vmatpush1.bf16.msra.mxu0 %v11153
    %12903 = vmatprep.subr.bf16.mxu0 %v11161
    %12904 = vmatpush1.bf16.msra.mxu0 %v11160
    %12905 = vmatprep.subr.bf16.mxu0 %v11168
    %12906 = vmatpush1.bf16.msra.mxu0 %v11167
    %12907 = vmatprep.mubr.bf16.mxu0 %v7559
    %12908 = vmatmul.mubr.bf16.gmra.mrb[0].mxu0 %v7558
    %v12909 = vpop.f32.mrb[0].mxu0
    %v12910 = vadd.f32 %v12869, %v12909
    %v12911 = vpop.f32.mrb[0].mxu0
    %v12912 = vadd.f32 %v12871, %v12911
    %v12913 = vpop.f32.mrb[0].mxu0
    %v12914 = vpop.f32.mrb[0].mxu0
    %12915 = vdwg.mxu0
    %12916 = vmatprep.subr.bf16.mxu0 %v11175
    %12917 = vmatpush1.bf16.msra.mxu0 %v11174
    %12918 = vmatprep.subr.bf16.mxu0 %v11182
    %12919 = vmatpush1.bf16.msra.mxu0 %v11181
    %12920 = vmatprep.subr.bf16.mxu0 %v11189
    %12921 = vmatpush1.bf16.msra.mxu0 %v11188
    %12922 = vmatprep.subr.bf16.mxu0 %v11196
    %12923 = vmatpush1.bf16.msra.mxu0 %v11195
    %12924 = vmatprep.subr.bf16.mxu0 %v11203
    %12925 = vmatpush1.bf16.msra.mxu0 %v11202
    %12926 = vmatprep.subr.bf16.mxu0 %v11210
    %12927 = vmatpush1.bf16.msra.mxu0 %v11209
    %12928 = vmatprep.subr.bf16.mxu0 %v11217
    %12929 = vmatpush1.bf16.msra.mxu0 %v11216
    %12930 = vmatprep.subr.bf16.mxu0 %v11224
    %12931 = vmatpush1.bf16.msra.mxu0 %v11223
    %12932 = vmatprep.subr.bf16.mxu0 %v11231
    %12933 = vmatpush1.bf16.msra.mxu0 %v11230
    %12934 = vmatprep.subr.bf16.mxu0 %v11238
    %12935 = vmatpush1.bf16.msra.mxu0 %v11237
    %12936 = vmatprep.subr.bf16.mxu0 %v11245
    %12937 = vmatpush1.bf16.msra.mxu0 %v11244
    %12938 = vmatprep.subr.bf16.mxu0 %v11252
    %12939 = vmatpush1.bf16.msra.mxu0 %v11251
    %12940 = vmatprep.subr.bf16.mxu0 %v11259
    %12941 = vmatpush1.bf16.msra.mxu0 %v11258
    %12942 = vmatprep.subr.bf16.mxu0 %v11266
    %12943 = vmatpush1.bf16.msra.mxu0 %v11265
    %12944 = vmatprep.subr.bf16.mxu0 %v11273
    %12945 = vmatpush1.bf16.msra.mxu0 %v11272
    %12946 = vmatprep.subr.bf16.mxu0 %v11280
    %12947 = vmatpush1.bf16.msra.mxu0 %v11279
    %12948 = vmatprep.mubr.bf16.mxu0 %v7561
    %12949 = vmatmul.mubr.bf16.gmra.mrb[0].mxu0 %v7560
    %v12950 = vpop.f32.mrb[0].mxu0
    %v12951 = vadd.f32 %v12910, %v12950
    %v12952 = vpop.f32.mrb[0].mxu0
    %v12953 = vadd.f32 %v12912, %v12952
    %v12954 = vpop.f32.mrb[0].mxu0
    %v12955 = vpop.f32.mrb[0].mxu0
    %12956 = vdwg.mxu0
    %12957 = vmatprep.subr.bf16.mxu0 %v11287
    %12958 = vmatpush1.bf16.msra.mxu0 %v11286
    %12959 = vmatprep.subr.bf16.mxu0 %v11294
    %12960 = vmatpush1.bf16.msra.mxu0 %v11293
    %12961 = vmatprep.subr.bf16.mxu0 %v11301
    %12962 = vmatpush1.bf16.msra.mxu0 %v11300
    %12963 = vmatprep.subr.bf16.mxu0 %v11308
    %12964 = vmatpush1.bf16.msra.mxu0 %v11307
    %12965 = vmatprep.subr.bf16.mxu0 %v11315
    %12966 = vmatpush1.bf16.msra.mxu0 %v11314
    %12967 = vmatprep.subr.bf16.mxu0 %v11322
    %12968 = vmatpush1.bf16.msra.mxu0 %v11321
    %12969 = vmatprep.subr.bf16.mxu0 %v11329
    %12970 = vmatpush1.bf16.msra.mxu0 %v11328
    %12971 = vmatprep.subr.bf16.mxu0 %v11336
    %12972 = vmatpush1.bf16.msra.mxu0 %v11335
    %12973 = vmatprep.subr.bf16.mxu0 %v11343
    %12974 = vmatpush1.bf16.msra.mxu0 %v11342
    %12975 = vmatprep.subr.bf16.mxu0 %v11350
    %12976 = vmatpush1.bf16.msra.mxu0 %v11349
    %12977 = vmatprep.subr.bf16.mxu0 %v11357
    %12978 = vmatpush1.bf16.msra.mxu0 %v11356
    %12979 = vmatprep.subr.bf16.mxu0 %v11364
    %12980 = vmatpush1.bf16.msra.mxu0 %v11363
    %12981 = vmatprep.subr.bf16.mxu0 %v11371
    %12982 = vmatpush1.bf16.msra.mxu0 %v11370
    %12983 = vmatprep.subr.bf16.mxu0 %v11378
    %12984 = vmatpush1.bf16.msra.mxu0 %v11377
    %12985 = vmatprep.subr.bf16.mxu0 %v11385
    %12986 = vmatpush1.bf16.msra.mxu0 %v11384
    %12987 = vmatprep.subr.bf16.mxu0 %v11392
    %12988 = vmatpush1.bf16.msra.mxu0 %v11391
    %12989 = vmatprep.mubr.bf16.mxu0 %v7563
    %12990 = vmatmul.mubr.bf16.gmra.mrb[0].mxu0 %v7562
    %v12991 = vpop.f32.mrb[0].mxu0
    %v12992 = vadd.f32 %v12951, %v12991
    %v12993 = vpop.f32.mrb[0].mxu0
    %v12994 = vadd.f32 %v12953, %v12993
    %v12995 = vpop.f32.mrb[0].mxu0
    %v12996 = vpop.f32.mrb[0].mxu0
    %12997 = vdwg.mxu0
    %12998 = vmatprep.subr.bf16.mxu0 %v11399
    %12999 = vmatpush1.bf16.msra.mxu0 %v11398
    %13000 = vmatprep.subr.bf16.mxu0 %v11406
    %13001 = vmatpush1.bf16.msra.mxu0 %v11405
    %13002 = vmatprep.subr.bf16.mxu0 %v11413
    %13003 = vmatpush1.bf16.msra.mxu0 %v11412
    %13004 = vmatprep.subr.bf16.mxu0 %v11420
    %13005 = vmatpush1.bf16.msra.mxu0 %v11419
    %13006 = vmatprep.subr.bf16.mxu0 %v11427
    %13007 = vmatpush1.bf16.msra.mxu0 %v11426
    %13008 = vmatprep.subr.bf16.mxu0 %v11434
    %13009 = vmatpush1.bf16.msra.mxu0 %v11433
    %13010 = vmatprep.subr.bf16.mxu0 %v11441
    %13011 = vmatpush1.bf16.msra.mxu0 %v11440
    %13012 = vmatprep.subr.bf16.mxu0 %v11448
    %13013 = vmatpush1.bf16.msra.mxu0 %v11447
    %13014 = vmatprep.subr.bf16.mxu0 0
    %13015 = vmatpush1.bf16.msra.mxu0 0
    %13016 = vmatprep.subr.bf16.mxu0 0
    %13017 = vmatpush1.bf16.msra.mxu0 0
    %13018 = vmatprep.subr.bf16.mxu0 0
    %13019 = vmatpush1.bf16.msra.mxu0 0
    %13020 = vmatprep.subr.bf16.mxu0 0
    %13021 = vmatpush1.bf16.msra.mxu0 0
    %13022 = vmatprep.subr.bf16.mxu0 0
    %13023 = vmatpush1.bf16.msra.mxu0 0
    %13024 = vmatprep.subr.bf16.mxu0 0
    %13025 = vmatpush1.bf16.msra.mxu0 0
    %13026 = vmatprep.subr.bf16.mxu0 0
    %13027 = vmatpush1.bf16.msra.mxu0 0
    %13028 = vmatprep.subr.bf16.mxu0 0
    %13029 = vmatpush1.bf16.msra.mxu0 0
    %13030 = vmatprep.mubr.bf16.mxu0 0
    %13031 = vmatmul.mubr.bf16.gmra.mrb[0].mxu0 %v7564
    %v13032 = vpop.f32.mrb[0].mxu0
    %v13033 = vadd.f32 %v12992, %v13032
    %v13034 = vpop.f32.mrb[0].mxu0
    %v13035 = vadd.f32 %v12994, %v13034
    %v13036 = vpop.f32.mrb[0].mxu0
    %v13037 = vpop.f32.mrb[0].mxu0
    %13038 = vdwg.mxu0
    %13039 = vmatprep.subr.bf16.mxu0 0
    %13040 = vmatpush1.bf16.msra.mxu0 %v10728
    %13041 = vmatprep.subr.bf16.mxu0 0
    %13042 = vmatpush1.bf16.msra.mxu0 %v10735
    %13043 = vmatprep.subr.bf16.mxu0 0
    %13044 = vmatpush1.bf16.msra.mxu0 %v10742
    %13045 = vmatprep.subr.bf16.mxu0 0
    %13046 = vmatpush1.bf16.msra.mxu0 %v10749
    %13047 = vmatprep.subr.bf16.mxu0 0
    %13048 = vmatpush1.bf16.msra.mxu0 %v10756
    %13049 = vmatprep.subr.bf16.mxu0 0
    %13050 = vmatpush1.bf16.msra.mxu0 %v10763
    %13051 = vmatprep.subr.bf16.mxu0 0
    %13052 = vmatpush1.bf16.msra.mxu0 %v10770
    %13053 = vmatprep.subr.bf16.mxu0 0
    %13054 = vmatpush1.bf16.msra.mxu0 %v10777
    %13055 = vmatprep.subr.bf16.mxu0 0
    %13056 = vmatpush1.bf16.msra.mxu0 %v10784
    %13057 = vmatprep.subr.bf16.mxu0 0
    %13058 = vmatpush1.bf16.msra.mxu0 %v10791
    %13059 = vmatprep.subr.bf16.mxu0 0
    %13060 = vmatpush1.bf16.msra.mxu0 %v10798
    %13061 = vmatprep.subr.bf16.mxu0 0
    %13062 = vmatpush1.bf16.msra.mxu0 %v10805
    %13063 = vmatprep.subr.bf16.mxu0 0
    %13064 = vmatpush1.bf16.msra.mxu0 %v10812
    %13065 = vmatprep.subr.bf16.mxu0 0
    %13066 = vmatpush1.bf16.msra.mxu0 %v10819
    %13067 = vmatprep.subr.bf16.mxu0 0
    %13068 = vmatpush1.bf16.msra.mxu0 %v10826
    %13069 = vmatprep.subr.bf16.mxu0 0
    %13070 = vmatpush1.bf16.msra.mxu0 %v10833
    %13071 = vmatprep.mubr.bf16.mxu0 %v7553
    %13072 = vmatmul.mubr.bf16.gmra.mrb[0].mxu0 %v7552
    %v13073 = vpop.f32.mrb[0].mxu0
    %v13074 = vadd.f32 %v8426, %v13073
    %v13075 = vpop.f32.mrb[0].mxu0
    %v13076 = vpop.f32.mrb[0].mxu0
    %v13077 = vpop.f32.mrb[0].mxu0
    %13078 = vdwg.mxu0
    %13079 = vmatprep.subr.bf16.mxu0 0
    %13080 = vmatpush1.bf16.msra.mxu0 %v10840
    %13081 = vmatprep.subr.bf16.mxu0 0
    %13082 = vmatpush1.bf16.msra.mxu0 %v10847
    %13083 = vmatprep.subr.bf16.mxu0 0
    %13084 = vmatpush1.bf16.msra.mxu0 %v10854
    %13085 = vmatprep.subr.bf16.mxu0 0
    %13086 = vmatpush1.bf16.msra.mxu0 %v10861
    %13087 = vmatprep.subr.bf16.mxu0 0
    %13088 = vmatpush1.bf16.msra.mxu0 %v10868
    %13089 = vmatprep.subr.bf16.mxu0 0
    %13090 = vmatpush1.bf16.msra.mxu0 %v10875
    %13091 = vmatprep.subr.bf16.mxu0 0
    %13092 = vmatpush1.bf16.msra.mxu0 %v10882
    %13093 = vmatprep.subr.bf16.mxu0 0
    %13094 = vmatpush1.bf16.msra.mxu0 %v10889
    %13095 = vmatprep.subr.bf16.mxu0 0
    %13096 = vmatpush1.bf16.msra.mxu0 %v10896
    %13097 = vmatprep.subr.bf16.mxu0 0
    %13098 = vmatpush1.bf16.msra.mxu0 %v10903
    %13099 = vmatprep.subr.bf16.mxu0 0
    %13100 = vmatpush1.bf16.msra.mxu0 %v10910
    %13101 = vmatprep.subr.bf16.mxu0 0
    %13102 = vmatpush1.bf16.msra.mxu0 %v10917
    %13103 = vmatprep.subr.bf16.mxu0 0
    %13104 = vmatpush1.bf16.msra.mxu0 %v10924
    %13105 = vmatprep.subr.bf16.mxu0 0
    %13106 = vmatpush1.bf16.msra.mxu0 %v10931
    %13107 = vmatprep.subr.bf16.mxu0 0
    %13108 = vmatpush1.bf16.msra.mxu0 %v10938
    %13109 = vmatprep.subr.bf16.mxu0 0
    %13110 = vmatpush1.bf16.msra.mxu0 %v10945
    %13111 = vmatprep.mubr.bf16.mxu0 %v7555
    %13112 = vmatmul.mubr.bf16.gmra.mrb[0].mxu0 %v7554
    %v13113 = vpop.f32.mrb[0].mxu0
    %v13114 = vadd.f32 %v13074, %v13113
    %v13115 = vpop.f32.mrb[0].mxu0
    %v13116 = vpop.f32.mrb[0].mxu0
    %v13117 = vpop.f32.mrb[0].mxu0
    %13118 = vdwg.mxu0
    %13119 = vmatprep.subr.bf16.mxu0 0
    %13120 = vmatpush1.bf16.msra.mxu0 %v10952
    %13121 = vmatprep.subr.bf16.mxu0 0
    %13122 = vmatpush1.bf16.msra.mxu0 %v10959
    %13123 = vmatprep.subr.bf16.mxu0 0
    %13124 = vmatpush1.bf16.msra.mxu0 %v10966
    %13125 = vmatprep.subr.bf16.mxu0 0
    %13126 = vmatpush1.bf16.msra.mxu0 %v10973
    %13127 = vmatprep.subr.bf16.mxu0 0
    %13128 = vmatpush1.bf16.msra.mxu0 %v10980
    %13129 = vmatprep.subr.bf16.mxu0 0
    %13130 = vmatpush1.bf16.msra.mxu0 %v10987
    %13131 = vmatprep.subr.bf16.mxu0 0
    %13132 = vmatpush1.bf16.msra.mxu0 %v10994
    %13133 = vmatprep.subr.bf16.mxu0 0
    %13134 = vmatpush1.bf16.msra.mxu0 %v11001
    %13135 = vmatprep.subr.bf16.mxu0 0
    %13136 = vmatpush1.bf16.msra.mxu0 %v11008
    %13137 = vmatprep.subr.bf16.mxu0 0
    %13138 = vmatpush1.bf16.msra.mxu0 %v11015
    %13139 = vmatprep.subr.bf16.mxu0 0
    %13140 = vmatpush1.bf16.msra.mxu0 %v11022
    %13141 = vmatprep.subr.bf16.mxu0 0
    %13142 = vmatpush1.bf16.msra.mxu0 %v11029
    %13143 = vmatprep.subr.bf16.mxu0 0
    %13144 = vmatpush1.bf16.msra.mxu0 %v11036
    %13145 = vmatprep.subr.bf16.mxu0 0
    %13146 = vmatpush1.bf16.msra.mxu0 %v11043
    %13147 = vmatprep.subr.bf16.mxu0 0
    %13148 = vmatpush1.bf16.msra.mxu0 %v11050
    %13149 = vmatprep.subr.bf16.mxu0 0
    %13150 = vmatpush1.bf16.msra.mxu0 %v11057
    %13151 = vmatprep.mubr.bf16.mxu0 %v7557
    %13152 = vmatmul.mubr.bf16.gmra.mrb[0].mxu0 %v7556
    %v13153 = vpop.f32.mrb[0].mxu0
    %v13154 = vadd.f32 %v13114, %v13153
    %v13155 = vpop.f32.mrb[0].mxu0
    %v13156 = vpop.f32.mrb[0].mxu0
    %v13157 = vpop.f32.mrb[0].mxu0
    %13158 = vdwg.mxu0
    %13159 = vmatprep.subr.bf16.mxu0 0
    %13160 = vmatpush1.bf16.msra.mxu0 %v11064
    %13161 = vmatprep.subr.bf16.mxu0 0
    %13162 = vmatpush1.bf16.msra.mxu0 %v11071
    %13163 = vmatprep.subr.bf16.mxu0 0
    %13164 = vmatpush1.bf16.msra.mxu0 %v11078
    %13165 = vmatprep.subr.bf16.mxu0 0
    %13166 = vmatpush1.bf16.msra.mxu0 %v11085
    %13167 = vmatprep.subr.bf16.mxu0 0
    %13168 = vmatpush1.bf16.msra.mxu0 %v11092
    %13169 = vmatprep.subr.bf16.mxu0 0
    %13170 = vmatpush1.bf16.msra.mxu0 %v11099
    %13171 = vmatprep.subr.bf16.mxu0 0
    %13172 = vmatpush1.bf16.msra.mxu0 %v11106
    %13173 = vmatprep.subr.bf16.mxu0 0
    %13174 = vmatpush1.bf16.msra.mxu0 %v11113
    %13175 = vmatprep.subr.bf16.mxu0 0
    %13176 = vmatpush1.bf16.msra.mxu0 %v11120
    %13177 = vmatprep.subr.bf16.mxu0 0
    %13178 = vmatpush1.bf16.msra.mxu0 %v11127
    %13179 = vmatprep.subr.bf16.mxu0 0
    %13180 = vmatpush1.bf16.msra.mxu0 %v11134
    %13181 = vmatprep.subr.bf16.mxu0 0
    %13182 = vmatpush1.bf16.msra.mxu0 %v11141
    %13183 = vmatprep.subr.bf16.mxu0 0
    %13184 = vmatpush1.bf16.msra.mxu0 %v11148
    %13185 = vmatprep.subr.bf16.mxu0 0
    %13186 = vmatpush1.bf16.msra.mxu0 %v11155
    %13187 = vmatprep.subr.bf16.mxu0 0
    %13188 = vmatpush1.bf16.msra.mxu0 %v11162
    %13189 = vmatprep.subr.bf16.mxu0 0
    %13190 = vmatpush1.bf16.msra.mxu0 %v11169
    %13191 = vmatprep.mubr.bf16.mxu0 %v7559
    %13192 = vmatmul.mubr.bf16.gmra.mrb[0].mxu0 %v7558
    %v13193 = vpop.f32.mrb[0].mxu0
    %v13194 = vadd.f32 %v13154, %v13193
    %v13195 = vpop.f32.mrb[0].mxu0
    %v13196 = vpop.f32.mrb[0].mxu0
    %v13197 = vpop.f32.mrb[0].mxu0
    %13198 = vdwg.mxu0
    %13199 = vmatprep.subr.bf16.mxu0 0
    %13200 = vmatpush1.bf16.msra.mxu0 %v11176
    %13201 = vmatprep.subr.bf16.mxu0 0
    %13202 = vmatpush1.bf16.msra.mxu0 %v11183
    %13203 = vmatprep.subr.bf16.mxu0 0
    %13204 = vmatpush1.bf16.msra.mxu0 %v11190
    %13205 = vmatprep.subr.bf16.mxu0 0
    %13206 = vmatpush1.bf16.msra.mxu0 %v11197
    %13207 = vmatprep.subr.bf16.mxu0 0
    %13208 = vmatpush1.bf16.msra.mxu0 %v11204
    %13209 = vmatprep.subr.bf16.mxu0 0
    %13210 = vmatpush1.bf16.msra.mxu0 %v11211
    %13211 = vmatprep.subr.bf16.mxu0 0
    %13212 = vmatpush1.bf16.msra.mxu0 %v11218
    %13213 = vmatprep.subr.bf16.mxu0 0
    %13214 = vmatpush1.bf16.msra.mxu0 %v11225
    %13215 = vmatprep.subr.bf16.mxu0 0
    %13216 = vmatpush1.bf16.msra.mxu0 %v11232
    %13217 = vmatprep.subr.bf16.mxu0 0
    %13218 = vmatpush1.bf16.msra.mxu0 %v11239
    %13219 = vmatprep.subr.bf16.mxu0 0
    %13220 = vmatpush1.bf16.msra.mxu0 %v11246
    %13221 = vmatprep.subr.bf16.mxu0 0
    %13222 = vmatpush1.bf16.msra.mxu0 %v11253
    %13223 = vmatprep.subr.bf16.mxu0 0
    %13224 = vmatpush1.bf16.msra.mxu0 %v11260
    %13225 = vmatprep.subr.bf16.mxu0 0
    %13226 = vmatpush1.bf16.msra.mxu0 %v11267
    %13227 = vmatprep.subr.bf16.mxu0 0
    %13228 = vmatpush1.bf16.msra.mxu0 %v11274
    %13229 = vmatprep.subr.bf16.mxu0 0
    %13230 = vmatpush1.bf16.msra.mxu0 %v11281
    %13231 = vmatprep.mubr.bf16.mxu0 %v7561
    %13232 = vmatmul.mubr.bf16.gmra.mrb[0].mxu0 %v7560
    %v13233 = vpop.f32.mrb[0].mxu0
    %v13234 = vadd.f32 %v13194, %v13233
    %v13235 = vpop.f32.mrb[0].mxu0
    %v13236 = vpop.f32.mrb[0].mxu0
    %v13237 = vpop.f32.mrb[0].mxu0
    %13238 = vdwg.mxu0
    %13239 = vmatprep.subr.bf16.mxu0 0
    %13240 = vmatpush1.bf16.msra.mxu0 %v11288
    %13241 = vmatprep.subr.bf16.mxu0 0
    %13242 = vmatpush1.bf16.msra.mxu0 %v11295
    %13243 = vmatprep.subr.bf16.mxu0 0
    %13244 = vmatpush1.bf16.msra.mxu0 %v11302
    %13245 = vmatprep.subr.bf16.mxu0 0
    %13246 = vmatpush1.bf16.msra.mxu0 %v11309
    %13247 = vmatprep.subr.bf16.mxu0 0
    %13248 = vmatpush1.bf16.msra.mxu0 %v11316
    %13249 = vmatprep.subr.bf16.mxu0 0
    %13250 = vmatpush1.bf16.msra.mxu0 %v11323
    %13251 = vmatprep.subr.bf16.mxu0 0
    %13252 = vmatpush1.bf16.msra.mxu0 %v11330
    %13253 = vmatprep.subr.bf16.mxu0 0
    %13254 = vmatpush1.bf16.msra.mxu0 %v11337
    %13255 = vmatprep.subr.bf16.mxu0 0
    %13256 = vmatpush1.bf16.msra.mxu0 %v11344
    %13257 = vmatprep.subr.bf16.mxu0 0
    %13258 = vmatpush1.bf16.msra.mxu0 %v11351
    %13259 = vmatprep.subr.bf16.mxu0 0
    %13260 = vmatpush1.bf16.msra.mxu0 %v11358
    %13261 = vmatprep.subr.bf16.mxu0 0
    %13262 = vmatpush1.bf16.msra.mxu0 %v11365
    %13263 = vmatprep.subr.bf16.mxu0 0
    %13264 = vmatpush1.bf16.msra.mxu0 %v11372
    %13265 = vmatprep.subr.bf16.mxu0 0
    %13266 = vmatpush1.bf16.msra.mxu0 %v11379
    %13267 = vmatprep.subr.bf16.mxu0 0
    %13268 = vmatpush1.bf16.msra.mxu0 %v11386
    %13269 = vmatprep.subr.bf16.mxu0 0
    %13270 = vmatpush1.bf16.msra.mxu0 %v11393
    %13271 = vmatprep.mubr.bf16.mxu0 %v7563
    %13272 = vmatmul.mubr.bf16.gmra.mrb[0].mxu0 %v7562
    %v13273 = vpop.f32.mrb[0].mxu0
    %v13274 = vadd.f32 %v13234, %v13273
    %v13275 = vpop.f32.mrb[0].mxu0
    %v13276 = vpop.f32.mrb[0].mxu0
    %v13277 = vpop.f32.mrb[0].mxu0
    %13278 = vdwg.mxu0
    %13279 = vmatprep.subr.bf16.mxu0 0
    %13280 = vmatpush1.bf16.msra.mxu0 %v11400
    %13281 = vmatprep.subr.bf16.mxu0 0
    %13282 = vmatpush1.bf16.msra.mxu0 %v11407
    %13283 = vmatprep.subr.bf16.mxu0 0
    %13284 = vmatpush1.bf16.msra.mxu0 %v11414
    %13285 = vmatprep.subr.bf16.mxu0 0
    %13286 = vmatpush1.bf16.msra.mxu0 %v11421
    %13287 = vmatprep.subr.bf16.mxu0 0
    %13288 = vmatpush1.bf16.msra.mxu0 %v11428
    %13289 = vmatprep.subr.bf16.mxu0 0
    %13290 = vmatpush1.bf16.msra.mxu0 %v11435
    %13291 = vmatprep.subr.bf16.mxu0 0
    %13292 = vmatpush1.bf16.msra.mxu0 %v11442
    %13293 = vmatprep.subr.bf16.mxu0 0
    %13294 = vmatpush1.bf16.msra.mxu0 %v11449
    %13295 = vmatprep.subr.bf16.mxu0 0
    %13296 = vmatpush1.bf16.msra.mxu0 0
    %13297 = vmatprep.subr.bf16.mxu0 0
    %13298 = vmatpush1.bf16.msra.mxu0 0
    %13299 = vmatprep.subr.bf16.mxu0 0
    %13300 = vmatpush1.bf16.msra.mxu0 0
    %13301 = vmatprep.subr.bf16.mxu0 0
    %13302 = vmatpush1.bf16.msra.mxu0 0
    %13303 = vmatprep.subr.bf16.mxu0 0
    %13304 = vmatpush1.bf16.msra.mxu0 0
    %13305 = vmatprep.subr.bf16.mxu0 0
    %13306 = vmatpush1.bf16.msra.mxu0 0
    %13307 = vmatprep.subr.bf16.mxu0 0
    %13308 = vmatpush1.bf16.msra.mxu0 0
    %13309 = vmatprep.subr.bf16.mxu0 0
    %13310 = vmatpush1.bf16.msra.mxu0 0
    %13311 = vmatprep.mubr.bf16.mxu0 0
    %13312 = vmatmul.mubr.bf16.gmra.mrb[0].mxu0 %v7564
    %v13313 = vpop.f32.mrb[0].mxu0
    %v13314 = vadd.f32 %v13274, %v13313
    %v13315 = vpop.f32.mrb[0].mxu0
    %v13316 = vpop.f32.mrb[0].mxu0
    %v13317 = vpop.f32.mrb[0].mxu0
    %13318 = vdwg.mxu0
    %v13319 = vxor.u32 %v12459, 2147483648
    %v13320 = vxor.u32 %v12461, 2147483648
    %v13321 = vxor.u32 %v12746, 2147483648
    %v13322 = vxor.u32 %v12748, 2147483648
    %v13323 = vxor.u32 %v13033, 2147483648
    %v13324 = vxor.u32 %v13035, 2147483648
    %v13325 = vxor.u32 %v13314, 2147483648
    %v13326 = vmul.f32 %v13319, 1.442695
    %v13327 = vpow.pop %v13326
    %v13328 = vmul.f32 %v13320, 1.442695
    %v13329 = vpow.pop %v13328
    %v13330 = vmul.f32 %v13321, 1.442695
    %v13331 = vpow.pop %v13330
    %v13332 = vmul.f32 %v13322, 1.442695
    %v13333 = vpow.pop %v13332
    %v13334 = vmul.f32 %v13323, 1.442695
    %v13335 = vpow.pop %v13334
    %v13336 = vmul.f32 %v13324, 1.442695
    %v13337 = vpow.pop %v13336
    %v13338 = vmul.f32 %v13325, 1.442695
    %v13339 = vpow.pop %v13338
    %v13340 = vadd.f32 %v13327, 1.0
    %v13341 = vadd.f32 %v13329, 1.0
    %v13342 = vadd.f32 %v13331, 1.0
    %v13343 = vadd.f32 %v13333, 1.0
    %v13344 = vadd.f32 %v13335, 1.0
    %v13345 = vadd.f32 %v13337, 1.0
    %v13346 = vadd.f32 %v13339, 1.0
    %v13347 = vrcp.pop %v13340
    %v13348 = vmul.f32 1.0, %v13347
    %v13349 = vrcp.pop %v13341
    %v13350 = vmul.f32 1.0, %v13349
    %v13351 = vrcp.pop %v13342
    %v13352 = vmul.f32 1.0, %v13351
    %v13353 = vrcp.pop %v13343
    %v13354 = vmul.f32 1.0, %v13353
    %v13355 = vrcp.pop %v13344
    %v13356 = vmul.f32 1.0, %v13355
    %v13357 = vrcp.pop %v13345
    %v13358 = vmul.f32 1.0, %v13357
    %v13359 = vrcp.pop %v13346
    %v13360 = vmul.f32 1.0, %v13359
    %13361 = vst [vmem:[#allocation17] sm:$0xff] %v13348
    %13362 = vst [vmem:[#allocation17 + $0x8] sm:$0xff] %v13350
    %13363 = vst [vmem:[#allocation17 + $0x10] sm:$0xff] %v13352
    %13364 = vst [vmem:[#allocation17 + $0x18] sm:$0xff] %v13354
    %13365 = vst [vmem:[#allocation17 + $0x20] sm:$0xff] %v13356
    %13366 = vst [vmem:[#allocation17 + $0x28] sm:$0xff] %v13358
    %13367 = vst [vmem:[#allocation17 + $0x30] sm:$0xff] %v13360
    // Predicated region
    $region74: #{tpu_custom_call.1} parent=1 // pred_check
      _
    $region75: #{tpu_custom_call.1} parent=1 // pred_check_branch
      %13369 = sbr.rel (0) target = $region77
    $region76: #{tpu_custom_call.1} parent=1 // pred_region
      %s13371 = ssub.s32 896, 896
      %13372 = vsyncadd [#allocation4], %s13371
      %s13374 = sshll.u32 [#allocation17], 4
      %s13375 = int_to_ptr.vmem [resolvable:$true] %s13374
      %13377 = dma.vmem_to_hbm [thread:$0]  %s13375, 896, %s9, [#allocation4]
    $region77: #{tpu_custom_call.1} parent=1 // pred_fallthru
      _
    // Predicated region
    $region78: #{tpu_custom_call.1} parent=1 // pred_check
      _
    $region79: #{tpu_custom_call.1} parent=1 // pred_check_branch
      %13379 = sbr.rel (0) target = $region81
    $region80: #{tpu_custom_call.1} parent=1 // pred_region
      %13380 = dma.done [#allocation4], 896
    $region81: #{tpu_custom_call.1} parent=1 // pred_fallthru
      _
    %13381 = vsyncpa [#allocation3], 1
    %13382 = vsyncpa [#allocation6], 1
    %13383 = vsyncpa [#allocation9], 1
    %13384 = vsyncpa [#allocation12], 1
    %13385 = vsyncpa [#allocation15], 1
    %13386 = vsyncpa [#allocation4], 1

</llo_original>
